<compile_context>
chip_gen: v7x
topology: tpu7x:2x2x1
jax: 0.10.0
libtpu: 0.0.40
codegen_flags: <defaults>
</compile_context>

<pallas_src>
import functools

import jax
import jax.numpy as jnp
import numpy as np
from jax.experimental import pallas as pl
from jax.experimental.pallas import tpu as pltpu

VMEM_LIMIT_BYTES = 32 * 1024 * 1024            # explicit scoped-VMEM guard (v7x-safe)
_VMEM = pl.BlockSpec(memory_space=pltpu.MemorySpace.VMEM)
_EPS = 1e-5                                    # PyTorch BatchNorm2d default


# ---------------------------------------------------------------------------
# In-kernel helpers
# ---------------------------------------------------------------------------
def _lrelu(z):
    return jnp.where(z >= 0, z, 0.2 * z)


def _bn_lrelu(y, g, b):
    """BatchNorm2d (training-mode batch stats, biased variance, like PyTorch)
    + LeakyReLU(0.2).  y is (C, M) with M = N*H*W.  One-pass statistics and the
    per-channel scale/shift are folded to (C, 1) vectors before broadcasting."""
    inv_m = 1.0 / y.shape[1]
    mean = jnp.sum(y, axis=1, keepdims=True) * inv_m            # (C, 1)
    ex2 = jnp.sum(y * y, axis=1, keepdims=True) * inv_m         # (C, 1)
    scale = jax.lax.rsqrt(ex2 - mean * mean + _EPS) * g         # (C, 1)
    shift = b - mean * scale                                    # (C, 1)
    return _lrelu(y * scale + shift)


# ---------------------------------------------------------------------------
# Pallas kernels
# ---------------------------------------------------------------------------
def _conv_lrelu_kernel(w_ref, a_ref, o_ref):
    """(C_out, K) @ (K, M) on the MXU + fused LeakyReLU(0.2); lane-dense output."""
    y = jnp.dot(w_ref[...], a_ref[...], preferred_element_type=jnp.float32)
    o_ref[...] = _lrelu(y)


def _conv_bn_lrelu_kernel(w_ref, a_ref, g_ref, b_ref, o_ref):
    """Full-slab (C_out, K) @ (K, M) + BatchNorm2d + LeakyReLU, VMEM-resident."""
    y = jnp.dot(w_ref[...], a_ref[...], preferred_element_type=jnp.float32)
    o_ref[...] = _bn_lrelu(y, g_ref[...], b_ref[...])


def _tail_kernel(a3_ref, w3_ref, g3_ref, b3_ref, w4p_ref, s3_ref, g4_ref,
                 b4_ref, w5e_ref, gm_ref, o_ref, *, n_kpos):
    """conv3+BN+LReLU -> conv4+BN+LReLU -> conv5 head, all fused in VMEM.

    The layer3->layer4 im2col is done in-kernel as `n_kpos` selection GEMMs:
    act3 @ S_ij gathers the (zero-padded, stride-2) input columns for kernel
    offset (i, j) and W4[:, :, i, j] @ (...) accumulates the conv.  The MXU cost
    of the gathers is ~8 MFLOP (free at this size) and no intermediate ever
    touches HBM."""
    # ---- layer 3 ----
    y3 = jnp.dot(w3_ref[...], a3_ref[...], preferred_element_type=jnp.float32)
    act3 = _bn_lrelu(y3, g3_ref[...], b3_ref[...])               # (C3, M3)

    # ---- layer 4 (in-kernel im2col via 0/1 selection matmuls) ----
    y4 = None
    for ij in range(n_kpos):                                     # static unroll (16)
        cols = jnp.dot(act3, s3_ref[ij], preferred_element_type=jnp.float32)
        term = jnp.dot(w4p_ref[ij], cols, preferred_element_type=jnp.float32)
        y4 = term if y4 is None else y4 + term                   # (C4, M4)
    act4 = _bn_lrelu(y4, g4_ref[...], b4_ref[...])               # (C4, M4)

    # ---- conv5 head: per-sample <act4, w5> contraction ----
    t = jnp.sum(act4 * w5e_ref[...], axis=0, keepdims=True)      # (1, M4)
    o_ref[...] = jnp.dot(t, gm_ref[...], preferred_element_type=jnp.float32)


# ---------------------------------------------------------------------------
# pallas_call wrappers (all single-block, gridless, full-VMEM operands)
# ---------------------------------------------------------------------------
def conv_lrelu_pallas(wt, a):
    c_out, _ = wt.shape
    _, m = a.shape
    return pl.pallas_call(
        _conv_lrelu_kernel,
        out_shape=jax.ShapeDtypeStruct((c_out, m), jnp.float32),
        in_specs=[_VMEM, _VMEM],
        out_specs=_VMEM,
        compiler_params=pltpu.CompilerParams(vmem_limit_bytes=VMEM_LIMIT_BYTES),
    )(wt, a)


def conv_bn_lrelu_pallas(wt, a, gamma, beta):
    c_out, _ = wt.shape
    _, m = a.shape
    return pl.pallas_call(
        _conv_bn_lrelu_kernel,
        out_shape=jax.ShapeDtypeStruct((c_out, m), jnp.float32),
        in_specs=[_VMEM] * 4,
        out_specs=_VMEM,
        compiler_params=pltpu.CompilerParams(vmem_limit_bytes=VMEM_LIMIT_BYTES),
    )(wt, a, gamma.reshape(c_out, 1), beta.reshape(c_out, 1))


def tail_fused_pallas(a3, w3t, g3, b3, w4p, s3, g4, b4, w5e, gm):
    batch = gm.shape[1]
    c3 = w3t.shape[0]
    c4 = w4p.shape[1]
    return pl.pallas_call(
        functools.partial(_tail_kernel, n_kpos=s3.shape[0]),
        out_shape=jax.ShapeDtypeStruct((1, batch), jnp.float32),
        in_specs=[_VMEM] * 10,
        out_specs=_VMEM,
        compiler_params=pltpu.CompilerParams(vmem_limit_bytes=VMEM_LIMIT_BYTES),
    )(a3, w3t, g3.reshape(c3, 1), b3.reshape(c3, 1), w4p, s3,
      g4.reshape(c4, 1), b4.reshape(c4, 1), w5e, gm)


# ---------------------------------------------------------------------------
# Glue: channel-major im2col + constant builders
# ---------------------------------------------------------------------------
def _im2col_t(x_cnhw, kh, kw, stride, pad):
    """Channel-major im2col: (C, N, H, W) -> (C*kh*kw, N*Ho*Wo).
    Feature index = c*(kh*kw) + i*kw + j (matches w.reshape(C_out, -1));
    column index  = (n*Ho + oh)*Wo + ow."""
    c, n, h, w = x_cnhw.shape
    xp = jnp.pad(x_cnhw, ((0, 0), (0, 0), (pad, pad), (pad, pad)))
    ho = (h + 2 * pad - kh) // stride + 1
    wo = (w + 2 * pad - kw) // stride + 1
    cols = []
    for i in range(kh):
        for j in range(kw):
            cols.append(xp[:, :, i:i + stride * ho:stride, j:j + stride * wo:stride])
    pat = jnp.stack(cols, axis=1)                          # (c, kh*kw, n, ho, wo)
    return pat.reshape(c * kh * kw, n * ho * wo), (n, ho, wo)


def _wmat_t(w_oihw):
    return w_oihw.reshape(w_oihw.shape[0], -1).astype(jnp.float32)   # (C_out, K)


def _build_sel(n, h_in, w_in, h_out, w_out, kh, kw, stride, pad):
    """0/1 selection matrices turning the stride/pad patch extraction into GEMMs.
    sel[i*kw+j, m_in, m_out] = 1 iff input position m_in feeds output m_out at
    kernel offset (i, j); all-zero columns encode the conv zero padding."""
    sel = np.zeros((kh * kw, n * h_in * w_in, n * h_out * w_out), np.float32)
    for i in range(kh):
        for j in range(kw):
            for b in range(n):
                for oh in range(h_out):
                    for ow in range(w_out):
                        hh = stride * oh + i - pad
                        ww = stride * ow + j - pad
                        if 0 <= hh < h_in and 0 <= ww < w_in:
                            sel[i * kw + j,
                                (b * h_in + hh) * w_in + ww,
                                (b * h_out + oh) * w_out + ow] = 1.0
    return jnp.asarray(sel)


# ---------------------------------------------------------------------------
# ConvDiscriminator forward
# ---------------------------------------------------------------------------
def conv_discriminator_forward(x_nchw, p):
    n = x_nchw.shape[0]
    x = jnp.transpose(x_nchw, (1, 0, 2, 3)).astype(jnp.float32)   # (C, N, H, W)

    # layer 1: conv(4,2,1) + LeakyReLU -- single block, lane-dense (16, N*32*32)
    a1, (n, h1, w1) = _im2col_t(x, 4, 4, 2, 1)
    y1 = conv_lrelu_pallas(_wmat_t(p["w1"]), a1)

    # layer 2: conv(4,2,1) + BatchNorm2d + LeakyReLU, one fused kernel
    a2, (n, h2, w2) = _im2col_t(y1.reshape(-1, n, h1, w1), 4, 4, 2, 1)
    y2 = conv_bn_lrelu_pallas(_wmat_t(p["w2"]), a2, p["g2"], p["b2"])

    # layers 3+4 + conv5 head: fully fused; the 3->4 im2col happens in-kernel.
    a3, (n, h3, w3) = _im2col_t(y2.reshape(-1, n, h2, w2), 4, 4, 2, 1)
    ho4, wo4 = (h3 + 2 - 4) // 2 + 1, (w3 + 2 - 4) // 2 + 1
    assert (ho4, wo4) == (4, 4), "final feature map must be 4x4 (input spatial = 64)"

    c4, c3 = p["w4"].shape[0], p["w4"].shape[1]
    c5 = p["w5"].shape[1]
    # w4p[i*4+j] = W4[:, :, i, j]  -> (16, C4, C3)
    w4p = jnp.transpose(p["w4"], (2, 3, 0, 1)).reshape(16, c4, c3).astype(jnp.float32)
    s3 = _build_sel(n, h3, w3, ho4, wo4, 4, 4, 2, 1)              # (16, M3, M4) 0/1
    # w5e[c, b*16 + (oh*4+ow)] = W5[0, c, oh, ow]
    w5e = jnp.tile(p["w5"].reshape(c5, ho4 * wo4).astype(jnp.float32), (1, n))
    gm = jnp.repeat(jnp.eye(n, dtype=jnp.float32), ho4 * wo4, axis=0)   # (M4, N)

    out = tail_fused_pallas(a3, _wmat_t(p["w3"]), p["g3"], p["b3"],
                            w4p, s3, p["g4"], p["b4"], w5e, gm)   # (1, N)
    return out.reshape(-1, 1)                                     # .view(-1, 1)


# ---------------------------------------------------------------------------
# Pure-JAX reference (same semantics) for the correctness check
# ---------------------------------------------------------------------------
def reference_forward(x, p):
    def conv(x, w, s, pad):
        return jax.lax.conv_general_dilated(
            x, w, (s, s), ((pad, pad), (pad, pad)),
            dimension_numbers=("NCHW", "OIHW", "NCHW"))

    def lrelu(z):
        return jnp.where(z >= 0, z, 0.2 * z)

    def bn(z, g, b):
        mean = jnp.mean(z, axis=(0, 2, 3), keepdims=True)
        var = jnp.mean((z - mean) ** 2, axis=(0, 2, 3), keepdims=True)
        zn = (z - mean) * jax.lax.rsqrt(var + 1e-5)
        return zn * g.reshape(1, -1, 1, 1) + b.reshape(1, -1, 1, 1)

    x = lrelu(conv(x, p["w1"], 2, 1))
    x = lrelu(bn(conv(x, p["w2"], 2, 1), p["g2"], p["b2"]))
    x = lrelu(bn(conv(x, p["w3"], 2, 1), p["g3"], p["b3"]))
    x = lrelu(bn(conv(x, p["w4"], 2, 1), p["g4"], p["b4"]))
    x = conv(x, p["w5"], 1, 0)
    return x.reshape(-1, 1)


# ---------------------------------------------------------------------------
# main
# ---------------------------------------------------------------------------
if __name__ == "__main__":
    # Small config: n_ch=3, img_size=16 (channel widths 16/32/64/128),
    # input spatial 64x64 so the final 4x4 valid conv reduces to 1x1.
    n_ch, img_size = 3, 16
    batch, spatial = 2, 64

    key = jax.random.PRNGKey(0)
    k = iter(jax.random.split(key, 8))

    def winit(kk, shape):
        return (0.02 * jax.random.normal(kk, shape)).astype(jnp.float32)

    params = {
        "w1": winit(next(k), (img_size, n_ch, 4, 4)),
        "w2": winit(next(k), (img_size * 2, img_size, 4, 4)),
        "w3": winit(next(k), (img_size * 4, img_size * 2, 4, 4)),
        "w4": winit(next(k), (img_size * 8, img_size * 4, 4, 4)),
        "w5": winit(next(k), (1, img_size * 8, 4, 4)),
        # BatchNorm2d default init: gamma=1, beta=0
        "g2": jnp.ones((img_size * 2,), jnp.float32),
        "b2": jnp.zeros((img_size * 2,), jnp.float32),
        "g3": jnp.ones((img_size * 4,), jnp.float32),
        "b3": jnp.zeros((img_size * 4,), jnp.float32),
        "g4": jnp.ones((img_size * 8,), jnp.float32),
        "b4": jnp.zeros((img_size * 8,), jnp.float32),
    }

    x = jax.random.normal(next(k), (batch, n_ch, spatial, spatial), dtype=jnp.float32)

    out = jax.jit(conv_discriminator_forward)(x, params)
    out = jax.block_until_ready(out)

    ref = jax.block_until_ready(reference_forward(x, params))

    assert out.shape == (batch, 1), out.shape
    np.testing.assert_allclose(np.asarray(out), np.asarray(ref), rtol=2e-3, atol=2e-3)

    print("KERNEL_OK")
</pallas_src>

<mosaic_0001>
module attributes {stable_mosaic.version = 11 : i64} {
  func.func @_conv_lrelu_kernel(%arg0: memref<16x48xf32, #tpu.memory_space<vmem>>, %arg1: memref<48x2048xf32, #tpu.memory_space<vmem>>, %arg2: memref<16x2048xf32, #tpu.memory_space<vmem>>) attributes {dimension_semantics = [], scalar_prefetch = 0 : i64, scratch_operands = 0 : i64, tpu.core_type = #tpu.core_type<tc>} {
    %c0 = arith.constant 0 : index
    %c0_0 = arith.constant 0 : index
    %0 = vector.load %arg0[%c0, %c0_0] : memref<16x48xf32, #tpu.memory_space<vmem>>, vector<16x48xf32>
    %c0_1 = arith.constant 0 : index
    %c0_2 = arith.constant 0 : index
    %1 = vector.load %arg1[%c0_1, %c0_2] : memref<48x2048xf32, #tpu.memory_space<vmem>>, vector<48x2048xf32>
    %cst = arith.constant dense<0.000000e+00> : vector<16x2048xf32>
    %2 = tpu.matmul %0, %1, %cst {dimension_numbers = #tpu.dot_dimension_numbers<[1], [0], [0], [1], [0, 0, 1, 1], [], []>} : vector<16x48xf32>, vector<48x2048xf32>, vector<16x2048xf32> -> vector<16x2048xf32>
    %cst_3 = arith.constant 0.000000e+00 : f32
    %3 = vector.broadcast %cst_3 : f32 to vector<16x2048xf32>
    %4 = arith.cmpf oge, %2, %3 : vector<16x2048xf32>
    %cst_4 = arith.constant 2.000000e-01 : f32
    %5 = vector.broadcast %cst_4 : f32 to vector<16x2048xf32>
    %6 = arith.mulf %5, %2 : vector<16x2048xf32>
    %7 = arith.select %4, %2, %6 : vector<16x2048xi1>, vector<16x2048xf32>
    %c0_5 = arith.constant 0 : index
    %c0_6 = arith.constant 0 : index
    %8 = vector.load %arg2[%c0_5, %c0_6] : memref<16x2048xf32, #tpu.memory_space<vmem>>, vector<16x2048xf32>
    tpu.vector_store %arg2[%c0_5, %c0_6], %7 {strides = array<i32>} : memref<16x2048xf32, #tpu.memory_space<vmem>>, vector<16x2048xf32>,
    return
  }
}

module attributes {stable_mosaic.version = 11 : i64} {
  func.func @_conv_bn_lrelu_kernel(%arg0: memref<32x256xf32, #tpu.memory_space<vmem>>, %arg1: memref<256x512xf32, #tpu.memory_space<vmem>>, %arg2: memref<32x1xf32, #tpu.memory_space<vmem>>, %arg3: memref<32x1xf32, #tpu.memory_space<vmem>>, %arg4: memref<32x512xf32, #tpu.memory_space<vmem>>) attributes {dimension_semantics = [], scalar_prefetch = 0 : i64, scratch_operands = 0 : i64, tpu.core_type = #tpu.core_type<tc>} {
    %c0 = arith.constant 0 : index
    %c0_0 = arith.constant 0 : index
    %0 = vector.load %arg0[%c0, %c0_0] : memref<32x256xf32, #tpu.memory_space<vmem>>, vector<32x256xf32>
    %c0_1 = arith.constant 0 : index
    %c0_2 = arith.constant 0 : index
    %1 = vector.load %arg1[%c0_1, %c0_2] : memref<256x512xf32, #tpu.memory_space<vmem>>, vector<256x512xf32>
    %cst = arith.constant dense<0.000000e+00> : vector<32x512xf32>
    %2 = tpu.matmul %0, %1, %cst {dimension_numbers = #tpu.dot_dimension_numbers<[1], [0], [0], [1], [0, 0, 1, 1], [], []>} : vector<32x256xf32>, vector<256x512xf32>, vector<32x512xf32> -> vector<32x512xf32>
    %c0_3 = arith.constant 0 : index
    %c0_4 = arith.constant 0 : index
    %3 = vector.load %arg2[%c0_3, %c0_4] : memref<32x1xf32, #tpu.memory_space<vmem>>, vector<32x1xf32>
    %c0_5 = arith.constant 0 : index
    %c0_6 = arith.constant 0 : index
    %4 = vector.load %arg3[%c0_5, %c0_6] : memref<32x1xf32, #tpu.memory_space<vmem>>, vector<32x1xf32>
    %cst_7 = arith.constant dense<0.000000e+00> : vector<32xf32>
    %5 = vector.multi_reduction <add>, %2, %cst_7 [1] : vector<32x512xf32> to vector<32xf32>
    %6 = vector.shape_cast %5 : vector<32xf32> to vector<32x1xf32>
    %cst_8 = arith.constant 0.001953125 : f32
    %7 = vector.broadcast %cst_8 : f32 to vector<32x1xf32>
    %8 = arith.mulf %6, %7 : vector<32x1xf32>
    %9 = arith.mulf %2, %2 : vector<32x512xf32>
    %cst_9 = arith.constant dense<0.000000e+00> : vector<32xf32>
    %10 = vector.multi_reduction <add>, %9, %cst_9 [1] : vector<32x512xf32> to vector<32xf32>
    %11 = vector.shape_cast %10 : vector<32xf32> to vector<32x1xf32>
    %cst_10 = arith.constant 0.001953125 : f32
    %12 = vector.broadcast %cst_10 : f32 to vector<32x1xf32>
    %13 = arith.mulf %11, %12 : vector<32x1xf32>
    %14 = arith.mulf %8, %8 : vector<32x1xf32>
    %15 = arith.subf %13, %14 : vector<32x1xf32>
    %cst_11 = arith.constant 9.99999974E-6 : f32
    %16 = vector.broadcast %cst_11 : f32 to vector<32x1xf32>
    %17 = arith.addf %15, %16 : vector<32x1xf32>
    %18 = math.rsqrt %17 : vector<32x1xf32>
    %19 = arith.mulf %18, %3 : vector<32x1xf32>
    %20 = arith.mulf %8, %19 : vector<32x1xf32>
    %21 = arith.subf %4, %20 : vector<32x1xf32>
    %22 = vector.broadcast %19 : vector<32x1xf32> to vector<32x512xf32>
    %23 = arith.mulf %2, %22 : vector<32x512xf32>
    %24 = vector.broadcast %21 : vector<32x1xf32> to vector<32x512xf32>
    %25 = arith.addf %23, %24 : vector<32x512xf32>
    %cst_12 = arith.constant 0.000000e+00 : f32
    %26 = vector.broadcast %cst_12 : f32 to vector<32x512xf32>
    %27 = arith.cmpf oge, %25, %26 : vector<32x512xf32>
    %cst_13 = arith.constant 2.000000e-01 : f32
    %28 = vector.broadcast %cst_13 : f32 to vector<32x512xf32>
    %29 = arith.mulf %28, %25 : vector<32x512xf32>
    %30 = arith.select %27, %25, %29 : vector<32x512xi1>, vector<32x512xf32>
    %c0_14 = arith.constant 0 : index
    %c0_15 = arith.constant 0 : index
    %31 = vector.load %arg4[%c0_14, %c0_15] : memref<32x512xf32, #tpu.memory_space<vmem>>, vector<32x512xf32>
    tpu.vector_store %arg4[%c0_14, %c0_15], %30 {strides = array<i32>} : memref<32x512xf32, #tpu.memory_space<vmem>>, vector<32x512xf32>,
    return
  }
}

module attributes {stable_mosaic.version = 11 : i64} {
  func.func @_tail_kernel(%arg0: memref<512x128xf32, #tpu.memory_space<vmem>>, %arg1: memref<64x512xf32, #tpu.memory_space<vmem>>, %arg2: memref<64x1xf32, #tpu.memory_space<vmem>>, %arg3: memref<64x1xf32, #tpu.memory_space<vmem>>, %arg4: memref<16x128x64xf32, #tpu.memory_space<vmem>>, %arg5: memref<16x128x32xf32, #tpu.memory_space<vmem>>, %arg6: memref<128x1xf32, #tpu.memory_space<vmem>>, %arg7: memref<128x1xf32, #tpu.memory_space<vmem>>, %arg8: memref<128x32xf32, #tpu.memory_space<vmem>>, %arg9: memref<32x2xf32, #tpu.memory_space<vmem>>, %arg10: memref<1x2xf32, #tpu.memory_space<vmem>>) attributes {dimension_semantics = [], scalar_prefetch = 0 : i64, scratch_operands = 0 : i64, tpu.core_type = #tpu.core_type<tc>} {
    %c0 = arith.constant 0 : index
    %c0_0 = arith.constant 0 : index
    %0 = vector.load %arg1[%c0, %c0_0] : memref<64x512xf32, #tpu.memory_space<vmem>>, vector<64x512xf32>
    %c0_1 = arith.constant 0 : index
    %c0_2 = arith.constant 0 : index
    %1 = vector.load %arg0[%c0_1, %c0_2] : memref<512x128xf32, #tpu.memory_space<vmem>>, vector<512x128xf32>
    %cst = arith.constant dense<0.000000e+00> : vector<64x128xf32>
    %2 = tpu.matmul %0, %1, %cst {dimension_numbers = #tpu.dot_dimension_numbers<[1], [0], [0], [1], [0, 0, 1, 1], [], []>} : vector<64x512xf32>, vector<512x128xf32>, vector<64x128xf32> -> vector<64x128xf32>
    %c0_3 = arith.constant 0 : index
    %c0_4 = arith.constant 0 : index
    %3 = vector.load %arg2[%c0_3, %c0_4] : memref<64x1xf32, #tpu.memory_space<vmem>>, vector<64x1xf32>
    %c0_5 = arith.constant 0 : index
    %c0_6 = arith.constant 0 : index
    %4 = vector.load %arg3[%c0_5, %c0_6] : memref<64x1xf32, #tpu.memory_space<vmem>>, vector<64x1xf32>
    %cst_7 = arith.constant dense<0.000000e+00> : vector<64xf32>
    %5 = vector.multi_reduction <add>, %2, %cst_7 [1] : vector<64x128xf32> to vector<64xf32>
    %6 = vector.shape_cast %5 : vector<64xf32> to vector<64x1xf32>
    %cst_8 = arith.constant 7.812500e-03 : f32
    %7 = vector.broadcast %cst_8 : f32 to vector<64x1xf32>
    %8 = arith.mulf %6, %7 : vector<64x1xf32>
    %9 = arith.mulf %2, %2 : vector<64x128xf32>
    %cst_9 = arith.constant dense<0.000000e+00> : vector<64xf32>
    %10 = vector.multi_reduction <add>, %9, %cst_9 [1] : vector<64x128xf32> to vector<64xf32>
    %11 = vector.shape_cast %10 : vector<64xf32> to vector<64x1xf32>
    %cst_10 = arith.constant 7.812500e-03 : f32
    %12 = vector.broadcast %cst_10 : f32 to vector<64x1xf32>
    %13 = arith.mulf %11, %12 : vector<64x1xf32>
    %14 = arith.mulf %8, %8 : vector<64x1xf32>
    %15 = arith.subf %13, %14 : vector<64x1xf32>
    %cst_11 = arith.constant 9.99999974E-6 : f32
    %16 = vector.broadcast %cst_11 : f32 to vector<64x1xf32>
    %17 = arith.addf %15, %16 : vector<64x1xf32>
    %18 = math.rsqrt %17 : vector<64x1xf32>
    %19 = arith.mulf %18, %3 : vector<64x1xf32>
    %20 = arith.mulf %8, %19 : vector<64x1xf32>
    %21 = arith.subf %4, %20 : vector<64x1xf32>
    %22 = vector.broadcast %19 : vector<64x1xf32> to vector<64x128xf32>
    %23 = arith.mulf %2, %22 : vector<64x128xf32>
    %24 = vector.broadcast %21 : vector<64x1xf32> to vector<64x128xf32>
    %25 = arith.addf %23, %24 : vector<64x128xf32>
    %cst_12 = arith.constant 0.000000e+00 : f32
    %26 = vector.broadcast %cst_12 : f32 to vector<64x128xf32>
    %27 = arith.cmpf oge, %25, %26 : vector<64x128xf32>
    %cst_13 = arith.constant 2.000000e-01 : f32
    %28 = vector.broadcast %cst_13 : f32 to vector<64x128xf32>
    %29 = arith.mulf %28, %25 : vector<64x128xf32>
    %30 = arith.select %27, %25, %29 : vector<64x128xi1>, vector<64x128xf32>
    %c0_14 = arith.constant 0 : index
    %c0_15 = arith.constant 0 : index
    %c0_16 = arith.constant 0 : index
    %31 = vector.load %arg5[%c0_14, %c0_15, %c0_16] : memref<16x128x32xf32, #tpu.memory_space<vmem>>, vector<1x128x32xf32>
    %32 = vector.shape_cast %31 : vector<1x128x32xf32> to vector<128x32xf32>
    %cst_17 = arith.constant dense<0.000000e+00> : vector<64x32xf32>
    %33 = tpu.matmul %30, %32, %cst_17 {dimension_numbers = #tpu.dot_dimension_numbers<[1], [0], [0], [1], [0, 0, 1, 1], [], []>} : vector<64x128xf32>, vector<128x32xf32>, vector<64x32xf32> -> vector<64x32xf32>
    %c0_18 = arith.constant 0 : index
    %c0_19 = arith.constant 0 : index
    %c0_20 = arith.constant 0 : index
    %34 = vector.load %arg4[%c0_18, %c0_19, %c0_20] : memref<16x128x64xf32, #tpu.memory_space<vmem>>, vector<1x128x64xf32>
    %35 = vector.shape_cast %34 : vector<1x128x64xf32> to vector<128x64xf32>
    %cst_21 = arith.constant dense<0.000000e+00> : vector<128x32xf32>
    %36 = tpu.matmul %35, %33, %cst_21 {dimension_numbers = #tpu.dot_dimension_numbers<[1], [0], [0], [1], [0, 0, 1, 1], [], []>} : vector<128x64xf32>, vector<64x32xf32>, vector<128x32xf32> -> vector<128x32xf32>
    %c1 = arith.constant 1 : index
    %c0_22 = arith.constant 0 : index
    %c0_23 = arith.constant 0 : index
    %37 = vector.load %arg5[%c1, %c0_22, %c0_23] : memref<16x128x32xf32, #tpu.memory_space<vmem>>, vector<1x128x32xf32>
    %38 = vector.shape_cast %37 : vector<1x128x32xf32> to vector<128x32xf32>
    %cst_24 = arith.constant dense<0.000000e+00> : vector<64x32xf32>
    %39 = tpu.matmul %30, %38, %cst_24 {dimension_numbers = #tpu.dot_dimension_numbers<[1], [0], [0], [1], [0, 0, 1, 1], [], []>} : vector<64x128xf32>, vector<128x32xf32>, vector<64x32xf32> -> vector<64x32xf32>
    %c1_25 = arith.constant 1 : index
    %c0_26 = arith.constant 0 : index
    %c0_27 = arith.constant 0 : index
    %40 = vector.load %arg4[%c1_25, %c0_26, %c0_27] : memref<16x128x64xf32, #tpu.memory_space<vmem>>, vector<1x128x64xf32>
    %41 = vector.shape_cast %40 : vector<1x128x64xf32> to vector<128x64xf32>
    %cst_28 = arith.constant dense<0.000000e+00> : vector<128x32xf32>
    %42 = tpu.matmul %41, %39, %cst_28 {dimension_numbers = #tpu.dot_dimension_numbers<[1], [0], [0], [1], [0, 0, 1, 1], [], []>} : vector<128x64xf32>, vector<64x32xf32>, vector<128x32xf32> -> vector<128x32xf32>
    %43 = arith.addf %36, %42 : vector<128x32xf32>
    %c2 = arith.constant 2 : index
    %c0_29 = arith.constant 0 : index
    %c0_30 = arith.constant 0 : index
    %44 = vector.load %arg5[%c2, %c0_29, %c0_30] : memref<16x128x32xf32, #tpu.memory_space<vmem>>, vector<1x128x32xf32>
    %45 = vector.shape_cast %44 : vector<1x128x32xf32> to vector<128x32xf32>
    %cst_31 = arith.constant dense<0.000000e+00> : vector<64x32xf32>
    %46 = tpu.matmul %30, %45, %cst_31 {dimension_numbers = #tpu.dot_dimension_numbers<[1], [0], [0], [1], [0, 0, 1, 1], [], []>} : vector<64x128xf32>, vector<128x32xf32>, vector<64x32xf32> -> vector<64x32xf32>
    %c2_32 = arith.constant 2 : index
    %c0_33 = arith.constant 0 : index
    %c0_34 = arith.constant 0 : index
    %47 = vector.load %arg4[%c2_32, %c0_33, %c0_34] : memref<16x128x64xf32, #tpu.memory_space<vmem>>, vector<1x128x64xf32>
    %48 = vector.shape_cast %47 : vector<1x128x64xf32> to vector<128x64xf32>
    %cst_35 = arith.constant dense<0.000000e+00> : vector<128x32xf32>
    %49 = tpu.matmul %48, %46, %cst_35 {dimension_numbers = #tpu.dot_dimension_numbers<[1], [0], [0], [1], [0, 0, 1, 1], [], []>} : vector<128x64xf32>, vector<64x32xf32>, vector<128x32xf32> -> vector<128x32xf32>
    %50 = arith.addf %43, %49 : vector<128x32xf32>
    %c3 = arith.constant 3 : index
    %c0_36 = arith.constant 0 : index
    %c0_37 = arith.constant 0 : index
    %51 = vector.load %arg5[%c3, %c0_36, %c0_37] : memref<16x128x32xf32, #tpu.memory_space<vmem>>, vector<1x128x32xf32>
    %52 = vector.shape_cast %51 : vector<1x128x32xf32> to vector<128x32xf32>
    %cst_38 = arith.constant dense<0.000000e+00> : vector<64x32xf32>
    %53 = tpu.matmul %30, %52, %cst_38 {dimension_numbers = #tpu.dot_dimension_numbers<[1], [0], [0], [1], [0, 0, 1, 1], [], []>} : vector<64x128xf32>, vector<128x32xf32>, vector<64x32xf32> -> vector<64x32xf32>
    %c3_39 = arith.constant 3 : index
    %c0_40 = arith.constant 0 : index
    %c0_41 = arith.constant 0 : index
    %54 = vector.load %arg4[%c3_39, %c0_40, %c0_41] : memref<16x128x64xf32, #tpu.memory_space<vmem>>, vector<1x128x64xf32>
    %55 = vector.shape_cast %54 : vector<1x128x64xf32> to vector<128x64xf32>
    %cst_42 = arith.constant dense<0.000000e+00> : vector<128x32xf32>
    %56 = tpu.matmul %55, %53, %cst_42 {dimension_numbers = #tpu.dot_dimension_numbers<[1], [0], [0], [1], [0, 0, 1, 1], [], []>} : vector<128x64xf32>, vector<64x32xf32>, vector<128x32xf32> -> vector<128x32xf32>
    %57 = arith.addf %50, %56 : vector<128x32xf32>
    %c4 = arith.constant 4 : index
    %c0_43 = arith.constant 0 : index
    %c0_44 = arith.constant 0 : index
    %58 = vector.load %arg5[%c4, %c0_43, %c0_44] : memref<16x128x32xf32, #tpu.memory_space<vmem>>, vector<1x128x32xf32>
    %59 = vector.shape_cast %58 : vector<1x128x32xf32> to vector<128x32xf32>
    %cst_45 = arith.constant dense<0.000000e+00> : vector<64x32xf32>
    %60 = tpu.matmul %30, %59, %cst_45 {dimension_numbers = #tpu.dot_dimension_numbers<[1], [0], [0], [1], [0, 0, 1, 1], [], []>} : vector<64x128xf32>, vector<128x32xf32>, vector<64x32xf32> -> vector<64x32xf32>
    %c4_46 = arith.constant 4 : index
    %c0_47 = arith.constant 0 : index
    %c0_48 = arith.constant 0 : index
    %61 = vector.load %arg4[%c4_46, %c0_47, %c0_48] : memref<16x128x64xf32, #tpu.memory_space<vmem>>, vector<1x128x64xf32>
    %62 = vector.shape_cast %61 : vector<1x128x64xf32> to vector<128x64xf32>
    %cst_49 = arith.constant dense<0.000000e+00> : vector<128x32xf32>
    %63 = tpu.matmul %62, %60, %cst_49 {dimension_numbers = #tpu.dot_dimension_numbers<[1], [0], [0], [1], [0, 0, 1, 1], [], []>} : vector<128x64xf32>, vector<64x32xf32>, vector<128x32xf32> -> vector<128x32xf32>
    %64 = arith.addf %57, %63 : vector<128x32xf32>
    %c5 = arith.constant 5 : index
    %c0_50 = arith.constant 0 : index
    %c0_51 = arith.constant 0 : index
    %65 = vector.load %arg5[%c5, %c0_50, %c0_51] : memref<16x128x32xf32, #tpu.memory_space<vmem>>, vector<1x128x32xf32>
    %66 = vector.shape_cast %65 : vector<1x128x32xf32> to vector<128x32xf32>
    %cst_52 = arith.constant dense<0.000000e+00> : vector<64x32xf32>
    %67 = tpu.matmul %30, %66, %cst_52 {dimension_numbers = #tpu.dot_dimension_numbers<[1], [0], [0], [1], [0, 0, 1, 1], [], []>} : vector<64x128xf32>, vector<128x32xf32>, vector<64x32xf32> -> vector<64x32xf32>
    %c5_53 = arith.constant 5 : index
    %c0_54 = arith.constant 0 : index
    %c0_55 = arith.constant 0 : index
    %68 = vector.load %arg4[%c5_53, %c0_54, %c0_55] : memref<16x128x64xf32, #tpu.memory_space<vmem>>, vector<1x128x64xf32>
    %69 = vector.shape_cast %68 : vector<1x128x64xf32> to vector<128x64xf32>
    %cst_56 = arith.constant dense<0.000000e+00> : vector<128x32xf32>
    %70 = tpu.matmul %69, %67, %cst_56 {dimension_numbers = #tpu.dot_dimension_numbers<[1], [0], [0], [1], [0, 0, 1, 1], [], []>} : vector<128x64xf32>, vector<64x32xf32>, vector<128x32xf32> -> vector<128x32xf32>
    %71 = arith.addf %64, %70 : vector<128x32xf32>
    %c6 = arith.constant 6 : index
    %c0_57 = arith.constant 0 : index
    %c0_58 = arith.constant 0 : index
    %72 = vector.load %arg5[%c6, %c0_57, %c0_58] : memref<16x128x32xf32, #tpu.memory_space<vmem>>, vector<1x128x32xf32>
    %73 = vector.shape_cast %72 : vector<1x128x32xf32> to vector<128x32xf32>
    %cst_59 = arith.constant dense<0.000000e+00> : vector<64x32xf32>
    %74 = tpu.matmul %30, %73, %cst_59 {dimension_numbers = #tpu.dot_dimension_numbers<[1], [0], [0], [1], [0, 0, 1, 1], [], []>} : vector<64x128xf32>, vector<128x32xf32>, vector<64x32xf32> -> vector<64x32xf32>
    %c6_60 = arith.constant 6 : index
    %c0_61 = arith.constant 0 : index
    %c0_62 = arith.constant 0 : index
    %75 = vector.load %arg4[%c6_60, %c0_61, %c0_62] : memref<16x128x64xf32, #tpu.memory_space<vmem>>, vector<1x128x64xf32>
    %76 = vector.shape_cast %75 : vector<1x128x64xf32> to vector<128x64xf32>
    %cst_63 = arith.constant dense<0.000000e+00> : vector<128x32xf32>
    %77 = tpu.matmul %76, %74, %cst_63 {dimension_numbers = #tpu.dot_dimension_numbers<[1], [0], [0], [1], [0, 0, 1, 1], [], []>} : vector<128x64xf32>, vector<64x32xf32>, vector<128x32xf32> -> vector<128x32xf32>
    %78 = arith.addf %71, %77 : vector<128x32xf32>
    %c7 = arith.constant 7 : index
    %c0_64 = arith.constant 0 : index
    %c0_65 = arith.constant 0 : index
    %79 = vector.load %arg5[%c7, %c0_64, %c0_65] : memref<16x128x32xf32, #tpu.memory_space<vmem>>, vector<1x128x32xf32>
    %80 = vector.shape_cast %79 : vector<1x128x32xf32> to vector<128x32xf32>
    %cst_66 = arith.constant dense<0.000000e+00> : vector<64x32xf32>
    %81 = tpu.matmul %30, %80, %cst_66 {dimension_numbers = #tpu.dot_dimension_numbers<[1], [0], [0], [1], [0, 0, 1, 1], [], []>} : vector<64x128xf32>, vector<128x32xf32>, vector<64x32xf32> -> vector<64x32xf32>
    %c7_67 = arith.constant 7 : index
    %c0_68 = arith.constant 0 : index
    %c0_69 = arith.constant 0 : index
    %82 = vector.load %arg4[%c7_67, %c0_68, %c0_69] : memref<16x128x64xf32, #tpu.memory_space<vmem>>, vector<1x128x64xf32>
    %83 = vector.shape_cast %82 : vector<1x128x64xf32> to vector<128x64xf32>
    %cst_70 = arith.constant dense<0.000000e+00> : vector<128x32xf32>
    %84 = tpu.matmul %83, %81, %cst_70 {dimension_numbers = #tpu.dot_dimension_numbers<[1], [0], [0], [1], [0, 0, 1, 1], [], []>} : vector<128x64xf32>, vector<64x32xf32>, vector<128x32xf32> -> vector<128x32xf32>
    %85 = arith.addf %78, %84 : vector<128x32xf32>
    %c8 = arith.constant 8 : index
    %c0_71 = arith.constant 0 : index
    %c0_72 = arith.constant 0 : index
    %86 = vector.load %arg5[%c8, %c0_71, %c0_72] : memref<16x128x32xf32, #tpu.memory_space<vmem>>, vector<1x128x32xf32>
    %87 = vector.shape_cast %86 : vector<1x128x32xf32> to vector<128x32xf32>
    %cst_73 = arith.constant dense<0.000000e+00> : vector<64x32xf32>
    %88 = tpu.matmul %30, %87, %cst_73 {dimension_numbers = #tpu.dot_dimension_numbers<[1], [0], [0], [1], [0, 0, 1, 1], [], []>} : vector<64x128xf32>, vector<128x32xf32>, vector<64x32xf32> -> vector<64x32xf32>
    %c8_74 = arith.constant 8 : index
    %c0_75 = arith.constant 0 : index
    %c0_76 = arith.constant 0 : index
    %89 = vector.load %arg4[%c8_74, %c0_75, %c0_76] : memref<16x128x64xf32, #tpu.memory_space<vmem>>, vector<1x128x64xf32>
    %90 = vector.shape_cast %89 : vector<1x128x64xf32> to vector<128x64xf32>
    %cst_77 = arith.constant dense<0.000000e+00> : vector<128x32xf32>
    %91 = tpu.matmul %90, %88, %cst_77 {dimension_numbers = #tpu.dot_dimension_numbers<[1], [0], [0], [1], [0, 0, 1, 1], [], []>} : vector<128x64xf32>, vector<64x32xf32>, vector<128x32xf32> -> vector<128x32xf32>
    %92 = arith.addf %85, %91 : vector<128x32xf32>
    %c9 = arith.constant 9 : index
    %c0_78 = arith.constant 0 : index
    %c0_79 = arith.constant 0 : index
    %93 = vector.load %arg5[%c9, %c0_78, %c0_79] : memref<16x128x32xf32, #tpu.memory_space<vmem>>, vector<1x128x32xf32>
    %94 = vector.shape_cast %93 : vector<1x128x32xf32> to vector<128x32xf32>
    %cst_80 = arith.constant dense<0.000000e+00> : vector<64x32xf32>
    %95 = tpu.matmul %30, %94, %cst_80 {dimension_numbers = #tpu.dot_dimension_numbers<[1], [0], [0], [1], [0, 0, 1, 1], [], []>} : vector<64x128xf32>, vector<128x32xf32>, vector<64x32xf32> -> vector<64x32xf32>
    %c9_81 = arith.constant 9 : index
    %c0_82 = arith.constant 0 : index
    %c0_83 = arith.constant 0 : index
    %96 = vector.load %arg4[%c9_81, %c0_82, %c0_83] : memref<16x128x64xf32, #tpu.memory_space<vmem>>, vector<1x128x64xf32>
    %97 = vector.shape_cast %96 : vector<1x128x64xf32> to vector<128x64xf32>
    %cst_84 = arith.constant dense<0.000000e+00> : vector<128x32xf32>
    %98 = tpu.matmul %97, %95, %cst_84 {dimension_numbers = #tpu.dot_dimension_numbers<[1], [0], [0], [1], [0, 0, 1, 1], [], []>} : vector<128x64xf32>, vector<64x32xf32>, vector<128x32xf32> -> vector<128x32xf32>
    %99 = arith.addf %92, %98 : vector<128x32xf32>
    %c10 = arith.constant 10 : index
    %c0_85 = arith.constant 0 : index
    %c0_86 = arith.constant 0 : index
    %100 = vector.load %arg5[%c10, %c0_85, %c0_86] : memref<16x128x32xf32, #tpu.memory_space<vmem>>, vector<1x128x32xf32>
    %101 = vector.shape_cast %100 : vector<1x128x32xf32> to vector<128x32xf32>
    %cst_87 = arith.constant dense<0.000000e+00> : vector<64x32xf32>
    %102 = tpu.matmul %30, %101, %cst_87 {dimension_numbers = #tpu.dot_dimension_numbers<[1], [0], [0], [1], [0, 0, 1, 1], [], []>} : vector<64x128xf32>, vector<128x32xf32>, vector<64x32xf32> -> vector<64x32xf32>
    %c10_88 = arith.constant 10 : index
    %c0_89 = arith.constant 0 : index
    %c0_90 = arith.constant 0 : index
    %103 = vector.load %arg4[%c10_88, %c0_89, %c0_90] : memref<16x128x64xf32, #tpu.memory_space<vmem>>, vector<1x128x64xf32>
    %104 = vector.shape_cast %103 : vector<1x128x64xf32> to vector<128x64xf32>
    %cst_91 = arith.constant dense<0.000000e+00> : vector<128x32xf32>
    %105 = tpu.matmul %104, %102, %cst_91 {dimension_numbers = #tpu.dot_dimension_numbers<[1], [0], [0], [1], [0, 0, 1, 1], [], []>} : vector<128x64xf32>, vector<64x32xf32>, vector<128x32xf32> -> vector<128x32xf32>
    %106 = arith.addf %99, %105 : vector<128x32xf32>
    %c11 = arith.constant 11 : index
    %c0_92 = arith.constant 0 : index
    %c0_93 = arith.constant 0 : index
    %107 = vector.load %arg5[%c11, %c0_92, %c0_93] : memref<16x128x32xf32, #tpu.memory_space<vmem>>, vector<1x128x32xf32>
    %108 = vector.shape_cast %107 : vector<1x128x32xf32> to vector<128x32xf32>
    %cst_94 = arith.constant dense<0.000000e+00> : vector<64x32xf32>
    %109 = tpu.matmul %30, %108, %cst_94 {dimension_numbers = #tpu.dot_dimension_numbers<[1], [0], [0], [1], [0, 0, 1, 1], [], []>} : vector<64x128xf32>, vector<128x32xf32>, vector<64x32xf32> -> vector<64x32xf32>
    %c11_95 = arith.constant 11 : index
    %c0_96 = arith.constant 0 : index
    %c0_97 = arith.constant 0 : index
    %110 = vector.load %arg4[%c11_95, %c0_96, %c0_97] : memref<16x128x64xf32, #tpu.memory_space<vmem>>, vector<1x128x64xf32>
    %111 = vector.shape_cast %110 : vector<1x128x64xf32> to vector<128x64xf32>
    %cst_98 = arith.constant dense<0.000000e+00> : vector<128x32xf32>
    %112 = tpu.matmul %111, %109, %cst_98 {dimension_numbers = #tpu.dot_dimension_numbers<[1], [0], [0], [1], [0, 0, 1, 1], [], []>} : vector<128x64xf32>, vector<64x32xf32>, vector<128x32xf32> -> vector<128x32xf32>
    %113 = arith.addf %106, %112 : vector<128x32xf32>
    %c12 = arith.constant 12 : index
    %c0_99 = arith.constant 0 : index
    %c0_100 = arith.constant 0 : index
    %114 = vector.load %arg5[%c12, %c0_99, %c0_100] : memref<16x128x32xf32, #tpu.memory_space<vmem>>, vector<1x128x32xf32>
    %115 = vector.shape_cast %114 : vector<1x128x32xf32> to vector<128x32xf32>
    %cst_101 = arith.constant dense<0.000000e+00> : vector<64x32xf32>
    %116 = tpu.matmul %30, %115, %cst_101 {dimension_numbers = #tpu.dot_dimension_numbers<[1], [0], [0], [1], [0, 0, 1, 1], [], []>} : vector<64x128xf32>, vector<128x32xf32>, vector<64x32xf32> -> vector<64x32xf32>
    %c12_102 = arith.constant 12 : index
    %c0_103 = arith.constant 0 : index
    %c0_104 = arith.constant 0 : index
    %117 = vector.load %arg4[%c12_102, %c0_103, %c0_104] : memref<16x128x64xf32, #tpu.memory_space<vmem>>, vector<1x128x64xf32>
    %118 = vector.shape_cast %117 : vector<1x128x64xf32> to vector<128x64xf32>
    %cst_105 = arith.constant dense<0.000000e+00> : vector<128x32xf32>
    %119 = tpu.matmul %118, %116, %cst_105 {dimension_numbers = #tpu.dot_dimension_numbers<[1], [0], [0], [1], [0, 0, 1, 1], [], []>} : vector<128x64xf32>, vector<64x32xf32>, vector<128x32xf32> -> vector<128x32xf32>
    %120 = arith.addf %113, %119 : vector<128x32xf32>
    %c13 = arith.constant 13 : index
    %c0_106 = arith.constant 0 : index
    %c0_107 = arith.constant 0 : index
    %121 = vector.load %arg5[%c13, %c0_106, %c0_107] : memref<16x128x32xf32, #tpu.memory_space<vmem>>, vector<1x128x32xf32>
    %122 = vector.shape_cast %121 : vector<1x128x32xf32> to vector<128x32xf32>
    %cst_108 = arith.constant dense<0.000000e+00> : vector<64x32xf32>
    %123 = tpu.matmul %30, %122, %cst_108 {dimension_numbers = #tpu.dot_dimension_numbers<[1], [0], [0], [1], [0, 0, 1, 1], [], []>} : vector<64x128xf32>, vector<128x32xf32>, vector<64x32xf32> -> vector<64x32xf32>
    %c13_109 = arith.constant 13 : index
    %c0_110 = arith.constant 0 : index
    %c0_111 = arith.constant 0 : index
    %124 = vector.load %arg4[%c13_109, %c0_110, %c0_111] : memref<16x128x64xf32, #tpu.memory_space<vmem>>, vector<1x128x64xf32>
    %125 = vector.shape_cast %124 : vector<1x128x64xf32> to vector<128x64xf32>
    %cst_112 = arith.constant dense<0.000000e+00> : vector<128x32xf32>
    %126 = tpu.matmul %125, %123, %cst_112 {dimension_numbers = #tpu.dot_dimension_numbers<[1], [0], [0], [1], [0, 0, 1, 1], [], []>} : vector<128x64xf32>, vector<64x32xf32>, vector<128x32xf32> -> vector<128x32xf32>
    %127 = arith.addf %120, %126 : vector<128x32xf32>
    %c14 = arith.constant 14 : index
    %c0_113 = arith.constant 0 : index
    %c0_114 = arith.constant 0 : index
    %128 = vector.load %arg5[%c14, %c0_113, %c0_114] : memref<16x128x32xf32, #tpu.memory_space<vmem>>, vector<1x128x32xf32>
    %129 = vector.shape_cast %128 : vector<1x128x32xf32> to vector<128x32xf32>
    %cst_115 = arith.constant dense<0.000000e+00> : vector<64x32xf32>
    %130 = tpu.matmul %30, %129, %cst_115 {dimension_numbers = #tpu.dot_dimension_numbers<[1], [0], [0], [1], [0, 0, 1, 1], [], []>} : vector<64x128xf32>, vector<128x32xf32>, vector<64x32xf32> -> vector<64x32xf32>
    %c14_116 = arith.constant 14 : index
    %c0_117 = arith.constant 0 : index
    %c0_118 = arith.constant 0 : index
    %131 = vector.load %arg4[%c14_116, %c0_117, %c0_118] : memref<16x128x64xf32, #tpu.memory_space<vmem>>, vector<1x128x64xf32>
    %132 = vector.shape_cast %131 : vector<1x128x64xf32> to vector<128x64xf32>
    %cst_119 = arith.constant dense<0.000000e+00> : vector<128x32xf32>
    %133 = tpu.matmul %132, %130, %cst_119 {dimension_numbers = #tpu.dot_dimension_numbers<[1], [0], [0], [1], [0, 0, 1, 1], [], []>} : vector<128x64xf32>, vector<64x32xf32>, vector<128x32xf32> -> vector<128x32xf32>
    %134 = arith.addf %127, %133 : vector<128x32xf32>
    %c15 = arith.constant 15 : index
    %c0_120 = arith.constant 0 : index
    %c0_121 = arith.constant 0 : index
    %135 = vector.load %arg5[%c15, %c0_120, %c0_121] : memref<16x128x32xf32, #tpu.memory_space<vmem>>, vector<1x128x32xf32>
    %136 = vector.shape_cast %135 : vector<1x128x32xf32> to vector<128x32xf32>
    %cst_122 = arith.constant dense<0.000000e+00> : vector<64x32xf32>
    %137 = tpu.matmul %30, %136, %cst_122 {dimension_numbers = #tpu.dot_dimension_numbers<[1], [0], [0], [1], [0, 0, 1, 1], [], []>} : vector<64x128xf32>, vector<128x32xf32>, vector<64x32xf32> -> vector<64x32xf32>
    %c15_123 = arith.constant 15 : index
    %c0_124 = arith.constant 0 : index
    %c0_125 = arith.constant 0 : index
    %138 = vector.load %arg4[%c15_123, %c0_124, %c0_125] : memref<16x128x64xf32, #tpu.memory_space<vmem>>, vector<1x128x64xf32>
    %139 = vector.shape_cast %138 : vector<1x128x64xf32> to vector<128x64xf32>
    %cst_126 = arith.constant dense<0.000000e+00> : vector<128x32xf32>
    %140 = tpu.matmul %139, %137, %cst_126 {dimension_numbers = #tpu.dot_dimension_numbers<[1], [0], [0], [1], [0, 0, 1, 1], [], []>} : vector<128x64xf32>, vector<64x32xf32>, vector<128x32xf32> -> vector<128x32xf32>
    %141 = arith.addf %134, %140 : vector<128x32xf32>
    %c0_127 = arith.constant 0 : index
    %c0_128 = arith.constant 0 : index
    %142 = vector.load %arg6[%c0_127, %c0_128] : memref<128x1xf32, #tpu.memory_space<vmem>>, vector<128x1xf32>
    %c0_129 = arith.constant 0 : index
    %c0_130 = arith.constant 0 : index
    %143 = vector.load %arg7[%c0_129, %c0_130] : memref<128x1xf32, #tpu.memory_space<vmem>>, vector<128x1xf32>
    %cst_131 = arith.constant dense<0.000000e+00> : vector<128xf32>
    %144 = vector.multi_reduction <add>, %141, %cst_131 [1] : vector<128x32xf32> to vector<128xf32>
    %145 = vector.shape_cast %144 : vector<128xf32> to vector<128x1xf32>
    %cst_132 = arith.constant 3.125000e-02 : f32
    %146 = vector.broadcast %cst_132 : f32 to vector<128x1xf32>
    %147 = arith.mulf %145, %146 : vector<128x1xf32>
    %148 = arith.mulf %141, %141 : vector<128x32xf32>
    %cst_133 = arith.constant dense<0.000000e+00> : vector<128xf32>
    %149 = vector.multi_reduction <add>, %148, %cst_133 [1] : vector<128x32xf32> to vector<128xf32>
    %150 = vector.shape_cast %149 : vector<128xf32> to vector<128x1xf32>
    %cst_134 = arith.constant 3.125000e-02 : f32
    %151 = vector.broadcast %cst_134 : f32 to vector<128x1xf32>
    %152 = arith.mulf %150, %151 : vector<128x1xf32>
    %153 = arith.mulf %147, %147 : vector<128x1xf32>
    %154 = arith.subf %152, %153 : vector<128x1xf32>
    %cst_135 = arith.constant 9.99999974E-6 : f32
    %155 = vector.broadcast %cst_135 : f32 to vector<128x1xf32>
    %156 = arith.addf %154, %155 : vector<128x1xf32>
    %157 = math.rsqrt %156 : vector<128x1xf32>
    %158 = arith.mulf %157, %142 : vector<128x1xf32>
    %159 = arith.mulf %147, %158 : vector<128x1xf32>
    %160 = arith.subf %143, %159 : vector<128x1xf32>
    %161 = vector.broadcast %158 : vector<128x1xf32> to vector<128x32xf32>
    %162 = arith.mulf %141, %161 : vector<128x32xf32>
    %163 = vector.broadcast %160 : vector<128x1xf32> to vector<128x32xf32>
    %164 = arith.addf %162, %163 : vector<128x32xf32>
    %cst_136 = arith.constant 0.000000e+00 : f32
    %165 = vector.broadcast %cst_136 : f32 to vector<128x32xf32>
    %166 = arith.cmpf oge, %164, %165 : vector<128x32xf32>
    %cst_137 = arith.constant 2.000000e-01 : f32
    %167 = vector.broadcast %cst_137 : f32 to vector<128x32xf32>
    %168 = arith.mulf %167, %164 : vector<128x32xf32>
    %169 = arith.select %166, %164, %168 : vector<128x32xi1>, vector<128x32xf32>
    %c0_138 = arith.constant 0 : index
    %c0_139 = arith.constant 0 : index
    %170 = vector.load %arg8[%c0_138, %c0_139] : memref<128x32xf32, #tpu.memory_space<vmem>>, vector<128x32xf32>
    %171 = arith.mulf %169, %170 : vector<128x32xf32>
    %cst_140 = arith.constant dense<0.000000e+00> : vector<32xf32>
    %172 = vector.multi_reduction <add>, %171, %cst_140 [0] : vector<128x32xf32> to vector<32xf32>
    %173 = vector.shape_cast %172 : vector<32xf32> to vector<1x32xf32>
    %c0_141 = arith.constant 0 : index
    %c0_142 = arith.constant 0 : index
    %174 = vector.load %arg9[%c0_141, %c0_142] : memref<32x2xf32, #tpu.memory_space<vmem>>, vector<32x2xf32>
    %cst_143 = arith.constant dense<0.000000e+00> : vector<1x2xf32>
    %175 = tpu.matmul %173, %174, %cst_143 {dimension_numbers = #tpu.dot_dimension_numbers<[1], [0], [0], [1], [0, 0, 1, 1], [], []>} : vector<1x32xf32>, vector<32x2xf32>, vector<1x2xf32> -> vector<1x2xf32>
    %c0_144 = arith.constant 0 : index
    %c0_145 = arith.constant 0 : index
    %176 = vector.load %arg10[%c0_144, %c0_145] : memref<1x2xf32, #tpu.memory_space<vmem>>, vector<1x2xf32>
    tpu.vector_store %arg10[%c0_144, %c0_145], %175 {strides = array<i32>} : memref<1x2xf32, #tpu.memory_space<vmem>>, vector<1x2xf32>,
    return
  }
}

</mosaic_0001>

<llo_original>
// kernel: conv_discriminator_forward.3
$region0: #{conv_discriminator_forward.3}
  #allocation0 [shape = 'u32[]', space=smem, size = 0x4, offset = 0x4, fixed_abs, tag = 'smem constant byte address 0x4 - core index']
  #allocation1 [shape = 'u32[144,128]{1,0:T(1,128)}', space=vmem, size = 0x12000, scoped, tag = 'internal scratch']
  %s0 = inlined_call_operand.vmem [shape: f32[16,48], index: 0, kind: input, shape index: {}]
  %s1 = inlined_call_operand.vmem [shape: f32[48,2048], index: 1, kind: input, shape index: {}]
  %s2 = inlined_call_operand.vmem [shape: f32[16,2048], index: 2, kind: output, shape index: {}]
  %s3 = sld [smem:[#allocation0]]
  $region18: #{conv_discriminator_forward.3} parent=0
    _
  %s5 = ssub.s32 1, %s3
  %s6 = scalar_select 0, %s5, %s3
  // Predicated region
  $region2: #{conv_discriminator_forward.3} parent=0 // pred_check
    _
  $region3: #{conv_discriminator_forward.3} parent=0 // pred_check_branch
    %8 = sbr.rel (0) target = $region5
  $region4: #{conv_discriminator_forward.3} parent=0 // pred_region
    _
  $region5: #{conv_discriminator_forward.3} parent=0 // pred_fallthru
    _
  // Predicated region
  $region6: #{conv_discriminator_forward.3} parent=0 // pred_check
    _
  $region7: #{conv_discriminator_forward.3} parent=0 // pred_check_branch
    %10 = sbr.rel (0) target = $region9
  $region8: #{conv_discriminator_forward.3} parent=0 // pred_region
    _
  $region9: #{conv_discriminator_forward.3} parent=0 // pred_fallthru
    _
  %v11 = vld [vmem:[%s0] sm:$0xff]
  %v12 = vld [vmem:[%s0 + $0x8] sm:$0xff]
  %v13 = vld [vmem:[%s1] sm:$0xff]
  %v14 = vld [vmem:[%s1 + $0x8] sm:$0xff]
  %v15 = vld [vmem:[%s1 + $0x10] sm:$0xff]
  %v16 = vld [vmem:[%s1 + $0x18] sm:$0xff]
  %v17 = vld [vmem:[%s1 + $0x20] sm:$0xff]
  %v18 = vld [vmem:[%s1 + $0x28] sm:$0xff]
  %v19 = vld [vmem:[%s1 + $0x30] sm:$0xff]
  %v20 = vld [vmem:[%s1 + $0x38] sm:$0xff]
  %v21 = vld [vmem:[%s1 + $0x40] sm:$0xff]
  %v22 = vld [vmem:[%s1 + $0x48] sm:$0xff]
  %v23 = vld [vmem:[%s1 + $0x50] sm:$0xff]
  %v24 = vld [vmem:[%s1 + $0x58] sm:$0xff]
  %v25 = vld [vmem:[%s1 + $0x60] sm:$0xff]
  %v26 = vld [vmem:[%s1 + $0x68] sm:$0xff]
  %v27 = vld [vmem:[%s1 + $0x70] sm:$0xff]
  %v28 = vld [vmem:[%s1 + $0x78] sm:$0xff]
  %v29 = vld [vmem:[%s1 + $0x80] sm:$0xff]
  %v30 = vld [vmem:[%s1 + $0x88] sm:$0xff]
  %v31 = vld [vmem:[%s1 + $0x90] sm:$0xff]
  %v32 = vld [vmem:[%s1 + $0x98] sm:$0xff]
  %v33 = vld [vmem:[%s1 + $0xa0] sm:$0xff]
  %v34 = vld [vmem:[%s1 + $0xa8] sm:$0xff]
  %v35 = vld [vmem:[%s1 + $0xb0] sm:$0xff]
  %v36 = vld [vmem:[%s1 + $0xb8] sm:$0xff]
  %v37 = vld [vmem:[%s1 + $0xc0] sm:$0xff]
  %v38 = vld [vmem:[%s1 + $0xc8] sm:$0xff]
  %v39 = vld [vmem:[%s1 + $0xd0] sm:$0xff]
  %v40 = vld [vmem:[%s1 + $0xd8] sm:$0xff]
  %v41 = vld [vmem:[%s1 + $0xe0] sm:$0xff]
  %v42 = vld [vmem:[%s1 + $0xe8] sm:$0xff]
  %v43 = vld [vmem:[%s1 + $0xf0] sm:$0xff]
  %v44 = vld [vmem:[%s1 + $0xf8] sm:$0xff]
  %v45 = vld [vmem:[%s1 + $0x100] sm:$0xff]
  %v46 = vld [vmem:[%s1 + $0x108] sm:$0xff]
  %v47 = vld [vmem:[%s1 + $0x110] sm:$0xff]
  %v48 = vld [vmem:[%s1 + $0x118] sm:$0xff]
  %v49 = vld [vmem:[%s1 + $0x120] sm:$0xff]
  %v50 = vld [vmem:[%s1 + $0x128] sm:$0xff]
  %v51 = vld [vmem:[%s1 + $0x130] sm:$0xff]
  %v52 = vld [vmem:[%s1 + $0x138] sm:$0xff]
  %v53 = vld [vmem:[%s1 + $0x140] sm:$0xff]
  %v54 = vld [vmem:[%s1 + $0x148] sm:$0xff]
  %v55 = vld [vmem:[%s1 + $0x150] sm:$0xff]
  %v56 = vld [vmem:[%s1 + $0x158] sm:$0xff]
  %v57 = vld [vmem:[%s1 + $0x160] sm:$0xff]
  %v58 = vld [vmem:[%s1 + $0x168] sm:$0xff]
  %v59 = vld [vmem:[%s1 + $0x170] sm:$0xff]
  %v60 = vld [vmem:[%s1 + $0x178] sm:$0xff]
  %v61 = vld [vmem:[%s1 + $0x180] sm:$0xff]
  %v62 = vld [vmem:[%s1 + $0x188] sm:$0xff]
  %v63 = vld [vmem:[%s1 + $0x190] sm:$0xff]
  %v64 = vld [vmem:[%s1 + $0x198] sm:$0xff]
  %v65 = vld [vmem:[%s1 + $0x1a0] sm:$0xff]
  %v66 = vld [vmem:[%s1 + $0x1a8] sm:$0xff]
  %v67 = vld [vmem:[%s1 + $0x1b0] sm:$0xff]
  %v68 = vld [vmem:[%s1 + $0x1b8] sm:$0xff]
  %v69 = vld [vmem:[%s1 + $0x1c0] sm:$0xff]
  %v70 = vld [vmem:[%s1 + $0x1c8] sm:$0xff]
  %v71 = vld [vmem:[%s1 + $0x1d0] sm:$0xff]
  %v72 = vld [vmem:[%s1 + $0x1d8] sm:$0xff]
  %v73 = vld [vmem:[%s1 + $0x1e0] sm:$0xff]
  %v74 = vld [vmem:[%s1 + $0x1e8] sm:$0xff]
  %v75 = vld [vmem:[%s1 + $0x1f0] sm:$0xff]
  %v76 = vld [vmem:[%s1 + $0x1f8] sm:$0xff]
  %v77 = vld [vmem:[%s1 + $0x200] sm:$0xff]
  %v78 = vld [vmem:[%s1 + $0x208] sm:$0xff]
  %v79 = vld [vmem:[%s1 + $0x210] sm:$0xff]
  %v80 = vld [vmem:[%s1 + $0x218] sm:$0xff]
  %v81 = vld [vmem:[%s1 + $0x220] sm:$0xff]
  %v82 = vld [vmem:[%s1 + $0x228] sm:$0xff]
  %v83 = vld [vmem:[%s1 + $0x230] sm:$0xff]
  %v84 = vld [vmem:[%s1 + $0x238] sm:$0xff]
  %v85 = vld [vmem:[%s1 + $0x240] sm:$0xff]
  %v86 = vld [vmem:[%s1 + $0x248] sm:$0xff]
  %v87 = vld [vmem:[%s1 + $0x250] sm:$0xff]
  %v88 = vld [vmem:[%s1 + $0x258] sm:$0xff]
  %v89 = vld [vmem:[%s1 + $0x260] sm:$0xff]
  %v90 = vld [vmem:[%s1 + $0x268] sm:$0xff]
  %v91 = vld [vmem:[%s1 + $0x270] sm:$0xff]
  %v92 = vld [vmem:[%s1 + $0x278] sm:$0xff]
  %v93 = vld [vmem:[%s1 + $0x280] sm:$0xff]
  %v94 = vld [vmem:[%s1 + $0x288] sm:$0xff]
  %v95 = vld [vmem:[%s1 + $0x290] sm:$0xff]
  %v96 = vld [vmem:[%s1 + $0x298] sm:$0xff]
  %v97 = vld [vmem:[%s1 + $0x2a0] sm:$0xff]
  %v98 = vld [vmem:[%s1 + $0x2a8] sm:$0xff]
  %v99 = vld [vmem:[%s1 + $0x2b0] sm:$0xff]
  %v100 = vld [vmem:[%s1 + $0x2b8] sm:$0xff]
  %v101 = vld [vmem:[%s1 + $0x2c0] sm:$0xff]
  %v102 = vld [vmem:[%s1 + $0x2c8] sm:$0xff]
  %v103 = vld [vmem:[%s1 + $0x2d0] sm:$0xff]
  %v104 = vld [vmem:[%s1 + $0x2d8] sm:$0xff]
  %v105 = vld [vmem:[%s1 + $0x2e0] sm:$0xff]
  %v106 = vld [vmem:[%s1 + $0x2e8] sm:$0xff]
  %v107 = vld [vmem:[%s1 + $0x2f0] sm:$0xff]
  %v108 = vld [vmem:[%s1 + $0x2f8] sm:$0xff]
  %vm109 = vcmask 392192
  %v111 = vsel %vm109, %v11, 0
  %v114 = vsel %vm109, %v12, 0
  %116 = vmatprep.subr.mxu0 %v14
  %117 = vmatpush1.msra.mxu0 %v13
  %118 = vmatprep.subr.mxu0 %v30
  %119 = vmatpush1.msra.mxu0 %v29
  %120 = vmatprep.subr.mxu0 %v46
  %121 = vmatpush1.msra.mxu0 %v45
  %122 = vmatprep.subr.mxu0 %v62
  %123 = vmatpush1.msra.mxu0 %v61
  %124 = vmatprep.subr.mxu0 %v78
  %125 = vmatpush1.msra.mxu0 %v77
  %126 = vmatprep.subr.mxu0 %v94
  %127 = vmatpush1.msra.mxu0 %v93
  %128 = vmatprep.subr.mxu0 0.0
  %129 = vmatpush1.msra.mxu0 0.0
  %130 = vmatprep.subr.mxu0 0.0
  %131 = vmatpush1.msra.mxu0 0.0
  %132 = vmatprep.subr.mxu0 0.0
  %133 = vmatpush1.msra.mxu0 0.0
  %134 = vmatprep.subr.mxu0 0.0
  %135 = vmatpush1.msra.mxu0 0.0
  %136 = vmatprep.subr.mxu0 0.0
  %137 = vmatpush1.msra.mxu0 0.0
  %138 = vmatprep.subr.mxu0 0.0
  %139 = vmatpush1.msra.mxu0 0.0
  %140 = vmatprep.subr.mxu0 0.0
  %141 = vmatpush1.msra.mxu0 0.0
  %142 = vmatprep.subr.mxu0 0.0
  %143 = vmatpush1.msra.mxu0 0.0
  %144 = vmatprep.subr.mxu0 0.0
  %145 = vmatpush1.msra.mxu0 0.0
  %146 = vmatprep.subr.mxu0 0.0
  %147 = vmatpush1.msra.mxu0 0.0
  %148 = vmatprep.subr.mxu0 0.0
  %149 = vmatpush1.msra.mxu0 0.0
  %150 = vmatprep.subr.mxu0 0.0
  %151 = vmatpush1.msra.mxu0 0.0
  %152 = vmatprep.subr.mxu0 0.0
  %153 = vmatpush1.msra.mxu0 0.0
  %154 = vmatprep.subr.mxu0 0.0
  %155 = vmatpush1.msra.mxu0 0.0
  %156 = vmatprep.subr.mxu0 0.0
  %157 = vmatpush1.msra.mxu0 0.0
  %158 = vmatprep.subr.mxu0 0.0
  %159 = vmatpush1.msra.mxu0 0.0
  %160 = vmatprep.subr.mxu0 0.0
  %161 = vmatpush1.msra.mxu0 0.0
  %162 = vmatprep.subr.mxu0 0.0
  %163 = vmatpush1.msra.mxu0 0.0
  %164 = vmatprep.subr.mxu0 0.0
  %165 = vmatpush1.msra.mxu0 0.0
  %166 = vmatprep.subr.mxu0 0.0
  %167 = vmatpush1.msra.mxu0 0.0
  %168 = vmatprep.subr.mxu0 0.0
  %169 = vmatpush1.msra.mxu0 0.0
  %170 = vmatprep.subr.mxu0 0.0
  %171 = vmatpush1.msra.mxu0 0.0
  %172 = vmatprep.subr.mxu0 0.0
  %173 = vmatpush1.msra.mxu0 0.0
  %174 = vmatprep.subr.mxu0 0.0
  %175 = vmatpush1.msra.mxu0 0.0
  %176 = vmatprep.subr.mxu0 0.0
  %177 = vmatpush1.msra.mxu0 0.0
  %178 = vmatprep.subr.mxu0 0.0
  %179 = vmatpush1.msra.mxu0 0.0
  %180 = vmatprep.mubr.f32.mxu0 0.0
  %181 = vmatmul.mubr.f32.gmra.mrb[0].mxu0 %v111
  %v182 = vpop.f32.mrb[0].mxu0
  %v183 = vadd.f32 0.0, %v182
  %v184 = vpop.f32.mrb[0].mxu0
  %v185 = vadd.f32 0.0, %v184
  %186 = vmatprep.mubr.f32.mxu0 0.0
  %187 = vmatmul.mubr.f32.gmra.mrb[0].mxu0 %v114
  %v188 = vpop.f32.mrb[0].mxu0
  %v189 = vadd.f32 0.0, %v188
  %v190 = vpop.f32.mrb[0].mxu0
  %v191 = vadd.f32 0.0, %v190
  %192 = vdwg.mxu0
  %193 = vmatprep.subr.mxu0 %v16
  %194 = vmatpush1.msra.mxu0 %v15
  %195 = vmatprep.subr.mxu0 %v32
  %196 = vmatpush1.msra.mxu0 %v31
  %197 = vmatprep.subr.mxu0 %v48
  %198 = vmatpush1.msra.mxu0 %v47
  %199 = vmatprep.subr.mxu0 %v64
  %200 = vmatpush1.msra.mxu0 %v63
  %201 = vmatprep.subr.mxu0 %v80
  %202 = vmatpush1.msra.mxu0 %v79
  %203 = vmatprep.subr.mxu0 %v96
  %204 = vmatpush1.msra.mxu0 %v95
  %205 = vmatprep.subr.mxu0 0.0
  %206 = vmatpush1.msra.mxu0 0.0
  %207 = vmatprep.subr.mxu0 0.0
  %208 = vmatpush1.msra.mxu0 0.0
  %209 = vmatprep.subr.mxu0 0.0
  %210 = vmatpush1.msra.mxu0 0.0
  %211 = vmatprep.subr.mxu0 0.0
  %212 = vmatpush1.msra.mxu0 0.0
  %213 = vmatprep.subr.mxu0 0.0
  %214 = vmatpush1.msra.mxu0 0.0
  %215 = vmatprep.subr.mxu0 0.0
  %216 = vmatpush1.msra.mxu0 0.0
  %217 = vmatprep.subr.mxu0 0.0
  %218 = vmatpush1.msra.mxu0 0.0
  %219 = vmatprep.subr.mxu0 0.0
  %220 = vmatpush1.msra.mxu0 0.0
  %221 = vmatprep.subr.mxu0 0.0
  %222 = vmatpush1.msra.mxu0 0.0
  %223 = vmatprep.subr.mxu0 0.0
  %224 = vmatpush1.msra.mxu0 0.0
  %225 = vmatprep.subr.mxu0 0.0
  %226 = vmatpush1.msra.mxu0 0.0
  %227 = vmatprep.subr.mxu0 0.0
  %228 = vmatpush1.msra.mxu0 0.0
  %229 = vmatprep.subr.mxu0 0.0
  %230 = vmatpush1.msra.mxu0 0.0
  %231 = vmatprep.subr.mxu0 0.0
  %232 = vmatpush1.msra.mxu0 0.0
  %233 = vmatprep.subr.mxu0 0.0
  %234 = vmatpush1.msra.mxu0 0.0
  %235 = vmatprep.subr.mxu0 0.0
  %236 = vmatpush1.msra.mxu0 0.0
  %237 = vmatprep.subr.mxu0 0.0
  %238 = vmatpush1.msra.mxu0 0.0
  %239 = vmatprep.subr.mxu0 0.0
  %240 = vmatpush1.msra.mxu0 0.0
  %241 = vmatprep.subr.mxu0 0.0
  %242 = vmatpush1.msra.mxu0 0.0
  %243 = vmatprep.subr.mxu0 0.0
  %244 = vmatpush1.msra.mxu0 0.0
  %245 = vmatprep.subr.mxu0 0.0
  %246 = vmatpush1.msra.mxu0 0.0
  %247 = vmatprep.subr.mxu0 0.0
  %248 = vmatpush1.msra.mxu0 0.0
  %249 = vmatprep.subr.mxu0 0.0
  %250 = vmatpush1.msra.mxu0 0.0
  %251 = vmatprep.subr.mxu0 0.0
  %252 = vmatpush1.msra.mxu0 0.0
  %253 = vmatprep.subr.mxu0 0.0
  %254 = vmatpush1.msra.mxu0 0.0
  %255 = vmatprep.subr.mxu0 0.0
  %256 = vmatpush1.msra.mxu0 0.0
  %257 = vmatprep.mubr.f32.mxu0 0.0
  %258 = vmatmul.mubr.f32.gmra.mrb[0].mxu0 %v111
  %v259 = vpop.f32.mrb[0].mxu0
  %v260 = vadd.f32 0.0, %v259
  %v261 = vpop.f32.mrb[0].mxu0
  %v262 = vadd.f32 0.0, %v261
  %263 = vmatprep.mubr.f32.mxu0 0.0
  %264 = vmatmul.mubr.f32.gmra.mrb[0].mxu0 %v114
  %v265 = vpop.f32.mrb[0].mxu0
  %v266 = vadd.f32 0.0, %v265
  %v267 = vpop.f32.mrb[0].mxu0
  %v268 = vadd.f32 0.0, %v267
  %269 = vdwg.mxu0
  %270 = vmatprep.subr.mxu0 %v18
  %271 = vmatpush1.msra.mxu0 %v17
  %272 = vmatprep.subr.mxu0 %v34
  %273 = vmatpush1.msra.mxu0 %v33
  %274 = vmatprep.subr.mxu0 %v50
  %275 = vmatpush1.msra.mxu0 %v49
  %276 = vmatprep.subr.mxu0 %v66
  %277 = vmatpush1.msra.mxu0 %v65
  %278 = vmatprep.subr.mxu0 %v82
  %279 = vmatpush1.msra.mxu0 %v81
  %280 = vmatprep.subr.mxu0 %v98
  %281 = vmatpush1.msra.mxu0 %v97
  %282 = vmatprep.subr.mxu0 0.0
  %283 = vmatpush1.msra.mxu0 0.0
  %284 = vmatprep.subr.mxu0 0.0
  %285 = vmatpush1.msra.mxu0 0.0
  %286 = vmatprep.subr.mxu0 0.0
  %287 = vmatpush1.msra.mxu0 0.0
  %288 = vmatprep.subr.mxu0 0.0
  %289 = vmatpush1.msra.mxu0 0.0
  %290 = vmatprep.subr.mxu0 0.0
  %291 = vmatpush1.msra.mxu0 0.0
  %292 = vmatprep.subr.mxu0 0.0
  %293 = vmatpush1.msra.mxu0 0.0
  %294 = vmatprep.subr.mxu0 0.0
  %295 = vmatpush1.msra.mxu0 0.0
  %296 = vmatprep.subr.mxu0 0.0
  %297 = vmatpush1.msra.mxu0 0.0
  %298 = vmatprep.subr.mxu0 0.0
  %299 = vmatpush1.msra.mxu0 0.0
  %300 = vmatprep.subr.mxu0 0.0
  %301 = vmatpush1.msra.mxu0 0.0
  %302 = vmatprep.subr.mxu0 0.0
  %303 = vmatpush1.msra.mxu0 0.0
  %304 = vmatprep.subr.mxu0 0.0
  %305 = vmatpush1.msra.mxu0 0.0
  %306 = vmatprep.subr.mxu0 0.0
  %307 = vmatpush1.msra.mxu0 0.0
  %308 = vmatprep.subr.mxu0 0.0
  %309 = vmatpush1.msra.mxu0 0.0
  %310 = vmatprep.subr.mxu0 0.0
  %311 = vmatpush1.msra.mxu0 0.0
  %312 = vmatprep.subr.mxu0 0.0
  %313 = vmatpush1.msra.mxu0 0.0
  %314 = vmatprep.subr.mxu0 0.0
  %315 = vmatpush1.msra.mxu0 0.0
  %316 = vmatprep.subr.mxu0 0.0
  %317 = vmatpush1.msra.mxu0 0.0
  %318 = vmatprep.subr.mxu0 0.0
  %319 = vmatpush1.msra.mxu0 0.0
  %320 = vmatprep.subr.mxu0 0.0
  %321 = vmatpush1.msra.mxu0 0.0
  %322 = vmatprep.subr.mxu0 0.0
  %323 = vmatpush1.msra.mxu0 0.0
  %324 = vmatprep.subr.mxu0 0.0
  %325 = vmatpush1.msra.mxu0 0.0
  %326 = vmatprep.subr.mxu0 0.0
  %327 = vmatpush1.msra.mxu0 0.0
  %328 = vmatprep.subr.mxu0 0.0
  %329 = vmatpush1.msra.mxu0 0.0
  %330 = vmatprep.subr.mxu0 0.0
  %331 = vmatpush1.msra.mxu0 0.0
  %332 = vmatprep.subr.mxu0 0.0
  %333 = vmatpush1.msra.mxu0 0.0
  %334 = vmatprep.mubr.f32.mxu0 0.0
  %335 = vmatmul.mubr.f32.gmra.mrb[0].mxu0 %v111
  %v336 = vpop.f32.mrb[0].mxu0
  %v337 = vadd.f32 0.0, %v336
  %v338 = vpop.f32.mrb[0].mxu0
  %v339 = vadd.f32 0.0, %v338
  %340 = vmatprep.mubr.f32.mxu0 0.0
  %341 = vmatmul.mubr.f32.gmra.mrb[0].mxu0 %v114
  %v342 = vpop.f32.mrb[0].mxu0
  %v343 = vadd.f32 0.0, %v342
  %v344 = vpop.f32.mrb[0].mxu0
  %v345 = vadd.f32 0.0, %v344
  %346 = vdwg.mxu0
  %347 = vmatprep.subr.mxu0 %v20
  %348 = vmatpush1.msra.mxu0 %v19
  %349 = vmatprep.subr.mxu0 %v36
  %350 = vmatpush1.msra.mxu0 %v35
  %351 = vmatprep.subr.mxu0 %v52
  %352 = vmatpush1.msra.mxu0 %v51
  %353 = vmatprep.subr.mxu0 %v68
  %354 = vmatpush1.msra.mxu0 %v67
  %355 = vmatprep.subr.mxu0 %v84
  %356 = vmatpush1.msra.mxu0 %v83
  %357 = vmatprep.subr.mxu0 %v100
  %358 = vmatpush1.msra.mxu0 %v99
  %359 = vmatprep.subr.mxu0 0.0
  %360 = vmatpush1.msra.mxu0 0.0
  %361 = vmatprep.subr.mxu0 0.0
  %362 = vmatpush1.msra.mxu0 0.0
  %363 = vmatprep.subr.mxu0 0.0
  %364 = vmatpush1.msra.mxu0 0.0
  %365 = vmatprep.subr.mxu0 0.0
  %366 = vmatpush1.msra.mxu0 0.0
  %367 = vmatprep.subr.mxu0 0.0
  %368 = vmatpush1.msra.mxu0 0.0
  %369 = vmatprep.subr.mxu0 0.0
  %370 = vmatpush1.msra.mxu0 0.0
  %371 = vmatprep.subr.mxu0 0.0
  %372 = vmatpush1.msra.mxu0 0.0
  %373 = vmatprep.subr.mxu0 0.0
  %374 = vmatpush1.msra.mxu0 0.0
  %375 = vmatprep.subr.mxu0 0.0
  %376 = vmatpush1.msra.mxu0 0.0
  %377 = vmatprep.subr.mxu0 0.0
  %378 = vmatpush1.msra.mxu0 0.0
  %379 = vmatprep.subr.mxu0 0.0
  %380 = vmatpush1.msra.mxu0 0.0
  %381 = vmatprep.subr.mxu0 0.0
  %382 = vmatpush1.msra.mxu0 0.0
  %383 = vmatprep.subr.mxu0 0.0
  %384 = vmatpush1.msra.mxu0 0.0
  %385 = vmatprep.subr.mxu0 0.0
  %386 = vmatpush1.msra.mxu0 0.0
  %387 = vmatprep.subr.mxu0 0.0
  %388 = vmatpush1.msra.mxu0 0.0
  %389 = vmatprep.subr.mxu0 0.0
  %390 = vmatpush1.msra.mxu0 0.0
  %391 = vmatprep.subr.mxu0 0.0
  %392 = vmatpush1.msra.mxu0 0.0
  %393 = vmatprep.subr.mxu0 0.0
  %394 = vmatpush1.msra.mxu0 0.0
  %395 = vmatprep.subr.mxu0 0.0
  %396 = vmatpush1.msra.mxu0 0.0
  %397 = vmatprep.subr.mxu0 0.0
  %398 = vmatpush1.msra.mxu0 0.0
  %399 = vmatprep.subr.mxu0 0.0
  %400 = vmatpush1.msra.mxu0 0.0
  %401 = vmatprep.subr.mxu0 0.0
  %402 = vmatpush1.msra.mxu0 0.0
  %403 = vmatprep.subr.mxu0 0.0
  %404 = vmatpush1.msra.mxu0 0.0
  %405 = vmatprep.subr.mxu0 0.0
  %406 = vmatpush1.msra.mxu0 0.0
  %407 = vmatprep.subr.mxu0 0.0
  %408 = vmatpush1.msra.mxu0 0.0
  %409 = vmatprep.subr.mxu0 0.0
  %410 = vmatpush1.msra.mxu0 0.0
  %411 = vmatprep.mubr.f32.mxu0 0.0
  %412 = vmatmul.mubr.f32.gmra.mrb[0].mxu0 %v111
  %v413 = vpop.f32.mrb[0].mxu0
  %v414 = vadd.f32 0.0, %v413
  %v415 = vpop.f32.mrb[0].mxu0
  %v416 = vadd.f32 0.0, %v415
  %417 = vmatprep.mubr.f32.mxu0 0.0
  %418 = vmatmul.mubr.f32.gmra.mrb[0].mxu0 %v114
  %v419 = vpop.f32.mrb[0].mxu0
  %v420 = vadd.f32 0.0, %v419
  %v421 = vpop.f32.mrb[0].mxu0
  %v422 = vadd.f32 0.0, %v421
  %423 = vdwg.mxu0
  %424 = vmatprep.subr.mxu0 %v22
  %425 = vmatpush1.msra.mxu0 %v21
  %426 = vmatprep.subr.mxu0 %v38
  %427 = vmatpush1.msra.mxu0 %v37
  %428 = vmatprep.subr.mxu0 %v54
  %429 = vmatpush1.msra.mxu0 %v53
  %430 = vmatprep.subr.mxu0 %v70
  %431 = vmatpush1.msra.mxu0 %v69
  %432 = vmatprep.subr.mxu0 %v86
  %433 = vmatpush1.msra.mxu0 %v85
  %434 = vmatprep.subr.mxu0 %v102
  %435 = vmatpush1.msra.mxu0 %v101
  %436 = vmatprep.subr.mxu0 0.0
  %437 = vmatpush1.msra.mxu0 0.0
  %438 = vmatprep.subr.mxu0 0.0
  %439 = vmatpush1.msra.mxu0 0.0
  %440 = vmatprep.subr.mxu0 0.0
  %441 = vmatpush1.msra.mxu0 0.0
  %442 = vmatprep.subr.mxu0 0.0
  %443 = vmatpush1.msra.mxu0 0.0
  %444 = vmatprep.subr.mxu0 0.0
  %445 = vmatpush1.msra.mxu0 0.0
  %446 = vmatprep.subr.mxu0 0.0
  %447 = vmatpush1.msra.mxu0 0.0
  %448 = vmatprep.subr.mxu0 0.0
  %449 = vmatpush1.msra.mxu0 0.0
  %450 = vmatprep.subr.mxu0 0.0
  %451 = vmatpush1.msra.mxu0 0.0
  %452 = vmatprep.subr.mxu0 0.0
  %453 = vmatpush1.msra.mxu0 0.0
  %454 = vmatprep.subr.mxu0 0.0
  %455 = vmatpush1.msra.mxu0 0.0
  %456 = vmatprep.subr.mxu0 0.0
  %457 = vmatpush1.msra.mxu0 0.0
  %458 = vmatprep.subr.mxu0 0.0
  %459 = vmatpush1.msra.mxu0 0.0
  %460 = vmatprep.subr.mxu0 0.0
  %461 = vmatpush1.msra.mxu0 0.0
  %462 = vmatprep.subr.mxu0 0.0
  %463 = vmatpush1.msra.mxu0 0.0
  %464 = vmatprep.subr.mxu0 0.0
  %465 = vmatpush1.msra.mxu0 0.0
  %466 = vmatprep.subr.mxu0 0.0
  %467 = vmatpush1.msra.mxu0 0.0
  %468 = vmatprep.subr.mxu0 0.0
  %469 = vmatpush1.msra.mxu0 0.0
  %470 = vmatprep.subr.mxu0 0.0
  %471 = vmatpush1.msra.mxu0 0.0
  %472 = vmatprep.subr.mxu0 0.0
  %473 = vmatpush1.msra.mxu0 0.0
  %474 = vmatprep.subr.mxu0 0.0
  %475 = vmatpush1.msra.mxu0 0.0
  %476 = vmatprep.subr.mxu0 0.0
  %477 = vmatpush1.msra.mxu0 0.0
  %478 = vmatprep.subr.mxu0 0.0
  %479 = vmatpush1.msra.mxu0 0.0
  %480 = vmatprep.subr.mxu0 0.0
  %481 = vmatpush1.msra.mxu0 0.0
  %482 = vmatprep.subr.mxu0 0.0
  %483 = vmatpush1.msra.mxu0 0.0
  %484 = vmatprep.subr.mxu0 0.0
  %485 = vmatpush1.msra.mxu0 0.0
  %486 = vmatprep.subr.mxu0 0.0
  %487 = vmatpush1.msra.mxu0 0.0
  %488 = vmatprep.mubr.f32.mxu0 0.0
  %489 = vmatmul.mubr.f32.gmra.mrb[0].mxu0 %v111
  %v490 = vpop.f32.mrb[0].mxu0
  %v491 = vadd.f32 0.0, %v490
  %v492 = vpop.f32.mrb[0].mxu0
  %v493 = vadd.f32 0.0, %v492
  %494 = vmatprep.mubr.f32.mxu0 0.0
  %495 = vmatmul.mubr.f32.gmra.mrb[0].mxu0 %v114
  %v496 = vpop.f32.mrb[0].mxu0
  %v497 = vadd.f32 0.0, %v496
  %v498 = vpop.f32.mrb[0].mxu0
  %v499 = vadd.f32 0.0, %v498
  %500 = vdwg.mxu0
  %501 = vmatprep.subr.mxu0 %v24
  %502 = vmatpush1.msra.mxu0 %v23
  %503 = vmatprep.subr.mxu0 %v40
  %504 = vmatpush1.msra.mxu0 %v39
  %505 = vmatprep.subr.mxu0 %v56
  %506 = vmatpush1.msra.mxu0 %v55
  %507 = vmatprep.subr.mxu0 %v72
  %508 = vmatpush1.msra.mxu0 %v71
  %509 = vmatprep.subr.mxu0 %v88
  %510 = vmatpush1.msra.mxu0 %v87
  %511 = vmatprep.subr.mxu0 %v104
  %512 = vmatpush1.msra.mxu0 %v103
  %513 = vmatprep.subr.mxu0 0.0
  %514 = vmatpush1.msra.mxu0 0.0
  %515 = vmatprep.subr.mxu0 0.0
  %516 = vmatpush1.msra.mxu0 0.0
  %517 = vmatprep.subr.mxu0 0.0
  %518 = vmatpush1.msra.mxu0 0.0
  %519 = vmatprep.subr.mxu0 0.0
  %520 = vmatpush1.msra.mxu0 0.0
  %521 = vmatprep.subr.mxu0 0.0
  %522 = vmatpush1.msra.mxu0 0.0
  %523 = vmatprep.subr.mxu0 0.0
  %524 = vmatpush1.msra.mxu0 0.0
  %525 = vmatprep.subr.mxu0 0.0
  %526 = vmatpush1.msra.mxu0 0.0
  %527 = vmatprep.subr.mxu0 0.0
  %528 = vmatpush1.msra.mxu0 0.0
  %529 = vmatprep.subr.mxu0 0.0
  %530 = vmatpush1.msra.mxu0 0.0
  %531 = vmatprep.subr.mxu0 0.0
  %532 = vmatpush1.msra.mxu0 0.0
  %533 = vmatprep.subr.mxu0 0.0
  %534 = vmatpush1.msra.mxu0 0.0
  %535 = vmatprep.subr.mxu0 0.0
  %536 = vmatpush1.msra.mxu0 0.0
  %537 = vmatprep.subr.mxu0 0.0
  %538 = vmatpush1.msra.mxu0 0.0
  %539 = vmatprep.subr.mxu0 0.0
  %540 = vmatpush1.msra.mxu0 0.0
  %541 = vmatprep.subr.mxu0 0.0
  %542 = vmatpush1.msra.mxu0 0.0
  %543 = vmatprep.subr.mxu0 0.0
  %544 = vmatpush1.msra.mxu0 0.0
  %545 = vmatprep.subr.mxu0 0.0
  %546 = vmatpush1.msra.mxu0 0.0
  %547 = vmatprep.subr.mxu0 0.0
  %548 = vmatpush1.msra.mxu0 0.0
  %549 = vmatprep.subr.mxu0 0.0
  %550 = vmatpush1.msra.mxu0 0.0
  %551 = vmatprep.subr.mxu0 0.0
  %552 = vmatpush1.msra.mxu0 0.0
  %553 = vmatprep.subr.mxu0 0.0
  %554 = vmatpush1.msra.mxu0 0.0
  %555 = vmatprep.subr.mxu0 0.0
  %556 = vmatpush1.msra.mxu0 0.0
  %557 = vmatprep.subr.mxu0 0.0
  %558 = vmatpush1.msra.mxu0 0.0
  %559 = vmatprep.subr.mxu0 0.0
  %560 = vmatpush1.msra.mxu0 0.0
  %561 = vmatprep.subr.mxu0 0.0
  %562 = vmatpush1.msra.mxu0 0.0
  %563 = vmatprep.subr.mxu0 0.0
  %564 = vmatpush1.msra.mxu0 0.0
  %565 = vmatprep.mubr.f32.mxu0 0.0
  %566 = vmatmul.mubr.f32.gmra.mrb[0].mxu0 %v111
  %v567 = vpop.f32.mrb[0].mxu0
  %v568 = vadd.f32 0.0, %v567
  %v569 = vpop.f32.mrb[0].mxu0
  %v570 = vadd.f32 0.0, %v569
  %571 = vmatprep.mubr.f32.mxu0 0.0
  %572 = vmatmul.mubr.f32.gmra.mrb[0].mxu0 %v114
  %v573 = vpop.f32.mrb[0].mxu0
  %v574 = vadd.f32 0.0, %v573
  %v575 = vpop.f32.mrb[0].mxu0
  %v576 = vadd.f32 0.0, %v575
  %577 = vdwg.mxu0
  %578 = vmatprep.subr.mxu0 %v26
  %579 = vmatpush1.msra.mxu0 %v25
  %580 = vmatprep.subr.mxu0 %v42
  %581 = vmatpush1.msra.mxu0 %v41
  %582 = vmatprep.subr.mxu0 %v58
  %583 = vmatpush1.msra.mxu0 %v57
  %584 = vmatprep.subr.mxu0 %v74
  %585 = vmatpush1.msra.mxu0 %v73
  %586 = vmatprep.subr.mxu0 %v90
  %587 = vmatpush1.msra.mxu0 %v89
  %588 = vmatprep.subr.mxu0 %v106
  %589 = vmatpush1.msra.mxu0 %v105
  %590 = vmatprep.subr.mxu0 0.0
  %591 = vmatpush1.msra.mxu0 0.0
  %592 = vmatprep.subr.mxu0 0.0
  %593 = vmatpush1.msra.mxu0 0.0
  %594 = vmatprep.subr.mxu0 0.0
  %595 = vmatpush1.msra.mxu0 0.0
  %596 = vmatprep.subr.mxu0 0.0
  %597 = vmatpush1.msra.mxu0 0.0
  %598 = vmatprep.subr.mxu0 0.0
  %599 = vmatpush1.msra.mxu0 0.0
  %600 = vmatprep.subr.mxu0 0.0
  %601 = vmatpush1.msra.mxu0 0.0
  %602 = vmatprep.subr.mxu0 0.0
  %603 = vmatpush1.msra.mxu0 0.0
  %604 = vmatprep.subr.mxu0 0.0
  %605 = vmatpush1.msra.mxu0 0.0
  %606 = vmatprep.subr.mxu0 0.0
  %607 = vmatpush1.msra.mxu0 0.0
  %608 = vmatprep.subr.mxu0 0.0
  %609 = vmatpush1.msra.mxu0 0.0
  %610 = vmatprep.subr.mxu0 0.0
  %611 = vmatpush1.msra.mxu0 0.0
  %612 = vmatprep.subr.mxu0 0.0
  %613 = vmatpush1.msra.mxu0 0.0
  %614 = vmatprep.subr.mxu0 0.0
  %615 = vmatpush1.msra.mxu0 0.0
  %616 = vmatprep.subr.mxu0 0.0
  %617 = vmatpush1.msra.mxu0 0.0
  %618 = vmatprep.subr.mxu0 0.0
  %619 = vmatpush1.msra.mxu0 0.0
  %620 = vmatprep.subr.mxu0 0.0
  %621 = vmatpush1.msra.mxu0 0.0
  %622 = vmatprep.subr.mxu0 0.0
  %623 = vmatpush1.msra.mxu0 0.0
  %624 = vmatprep.subr.mxu0 0.0
  %625 = vmatpush1.msra.mxu0 0.0
  %626 = vmatprep.subr.mxu0 0.0
  %627 = vmatpush1.msra.mxu0 0.0
  %628 = vmatprep.subr.mxu0 0.0
  %629 = vmatpush1.msra.mxu0 0.0
  %630 = vmatprep.subr.mxu0 0.0
  %631 = vmatpush1.msra.mxu0 0.0
  %632 = vmatprep.subr.mxu0 0.0
  %633 = vmatpush1.msra.mxu0 0.0
  %634 = vmatprep.subr.mxu0 0.0
  %635 = vmatpush1.msra.mxu0 0.0
  %636 = vmatprep.subr.mxu0 0.0
  %637 = vmatpush1.msra.mxu0 0.0
  %638 = vmatprep.subr.mxu0 0.0
  %639 = vmatpush1.msra.mxu0 0.0
  %640 = vmatprep.subr.mxu0 0.0
  %641 = vmatpush1.msra.mxu0 0.0
  %642 = vmatprep.mubr.f32.mxu0 0.0
  %643 = vmatmul.mubr.f32.gmra.mrb[0].mxu0 %v111
  %v644 = vpop.f32.mrb[0].mxu0
  %v645 = vadd.f32 0.0, %v644
  %v646 = vpop.f32.mrb[0].mxu0
  %v647 = vadd.f32 0.0, %v646
  %648 = vmatprep.mubr.f32.mxu0 0.0
  %649 = vmatmul.mubr.f32.gmra.mrb[0].mxu0 %v114
  %v650 = vpop.f32.mrb[0].mxu0
  %v651 = vadd.f32 0.0, %v650
  %v652 = vpop.f32.mrb[0].mxu0
  %v653 = vadd.f32 0.0, %v652
  %654 = vdwg.mxu0
  %655 = vmatprep.subr.mxu0 %v28
  %656 = vmatpush1.msra.mxu0 %v27
  %657 = vmatprep.subr.mxu0 %v44
  %658 = vmatpush1.msra.mxu0 %v43
  %659 = vmatprep.subr.mxu0 %v60
  %660 = vmatpush1.msra.mxu0 %v59
  %661 = vmatprep.subr.mxu0 %v76
  %662 = vmatpush1.msra.mxu0 %v75
  %663 = vmatprep.subr.mxu0 %v92
  %664 = vmatpush1.msra.mxu0 %v91
  %665 = vmatprep.subr.mxu0 %v108
  %666 = vmatpush1.msra.mxu0 %v107
  %667 = vmatprep.subr.mxu0 0.0
  %668 = vmatpush1.msra.mxu0 0.0
  %669 = vmatprep.subr.mxu0 0.0
  %670 = vmatpush1.msra.mxu0 0.0
  %671 = vmatprep.subr.mxu0 0.0
  %672 = vmatpush1.msra.mxu0 0.0
  %673 = vmatprep.subr.mxu0 0.0
  %674 = vmatpush1.msra.mxu0 0.0
  %675 = vmatprep.subr.mxu0 0.0
  %676 = vmatpush1.msra.mxu0 0.0
  %677 = vmatprep.subr.mxu0 0.0
  %678 = vmatpush1.msra.mxu0 0.0
  %679 = vmatprep.subr.mxu0 0.0
  %680 = vmatpush1.msra.mxu0 0.0
  %681 = vmatprep.subr.mxu0 0.0
  %682 = vmatpush1.msra.mxu0 0.0
  %683 = vmatprep.subr.mxu0 0.0
  %684 = vmatpush1.msra.mxu0 0.0
  %685 = vmatprep.subr.mxu0 0.0
  %686 = vmatpush1.msra.mxu0 0.0
  %687 = vmatprep.subr.mxu0 0.0
  %688 = vmatpush1.msra.mxu0 0.0
  %689 = vmatprep.subr.mxu0 0.0
  %690 = vmatpush1.msra.mxu0 0.0
  %691 = vmatprep.subr.mxu0 0.0
  %692 = vmatpush1.msra.mxu0 0.0
  %693 = vmatprep.subr.mxu0 0.0
  %694 = vmatpush1.msra.mxu0 0.0
  %695 = vmatprep.subr.mxu0 0.0
  %696 = vmatpush1.msra.mxu0 0.0
  %697 = vmatprep.subr.mxu0 0.0
  %698 = vmatpush1.msra.mxu0 0.0
  %699 = vmatprep.subr.mxu0 0.0
  %700 = vmatpush1.msra.mxu0 0.0
  %701 = vmatprep.subr.mxu0 0.0
  %702 = vmatpush1.msra.mxu0 0.0
  %703 = vmatprep.subr.mxu0 0.0
  %704 = vmatpush1.msra.mxu0 0.0
  %705 = vmatprep.subr.mxu0 0.0
  %706 = vmatpush1.msra.mxu0 0.0
  %707 = vmatprep.subr.mxu0 0.0
  %708 = vmatpush1.msra.mxu0 0.0
  %709 = vmatprep.subr.mxu0 0.0
  %710 = vmatpush1.msra.mxu0 0.0
  %711 = vmatprep.subr.mxu0 0.0
  %712 = vmatpush1.msra.mxu0 0.0
  %713 = vmatprep.subr.mxu0 0.0
  %714 = vmatpush1.msra.mxu0 0.0
  %715 = vmatprep.subr.mxu0 0.0
  %716 = vmatpush1.msra.mxu0 0.0
  %717 = vmatprep.subr.mxu0 0.0
  %718 = vmatpush1.msra.mxu0 0.0
  %719 = vmatprep.mubr.f32.mxu0 0.0
  %720 = vmatmul.mubr.f32.gmra.mrb[0].mxu0 %v111
  %v721 = vpop.f32.mrb[0].mxu0
  %v722 = vadd.f32 0.0, %v721
  %v723 = vpop.f32.mrb[0].mxu0
  %v724 = vadd.f32 0.0, %v723
  %725 = vmatprep.mubr.f32.mxu0 0.0
  %726 = vmatmul.mubr.f32.gmra.mrb[0].mxu0 %v114
  %v727 = vpop.f32.mrb[0].mxu0
  %v728 = vadd.f32 0.0, %v727
  %v729 = vpop.f32.mrb[0].mxu0
  %v730 = vadd.f32 0.0, %v729
  %731 = vdwg.mxu0
  %vm732 = vcmp.ge.f32.partialorder %v183, 0.0
  %vm733 = vcmp.ge.f32.partialorder %v185, 0.0
  %vm734 = vcmp.ge.f32.partialorder %v260, 0.0
  %vm735 = vcmp.ge.f32.partialorder %v262, 0.0
  %vm736 = vcmp.ge.f32.partialorder %v337, 0.0
  %vm737 = vcmp.ge.f32.partialorder %v339, 0.0
  %vm738 = vcmp.ge.f32.partialorder %v414, 0.0
  %vm739 = vcmp.ge.f32.partialorder %v416, 0.0
  %vm740 = vcmp.ge.f32.partialorder %v491, 0.0
  %vm741 = vcmp.ge.f32.partialorder %v493, 0.0
  %vm742 = vcmp.ge.f32.partialorder %v568, 0.0
  %vm743 = vcmp.ge.f32.partialorder %v570, 0.0
  %vm744 = vcmp.ge.f32.partialorder %v645, 0.0
  %vm745 = vcmp.ge.f32.partialorder %v647, 0.0
  %vm746 = vcmp.ge.f32.partialorder %v722, 0.0
  %vm747 = vcmp.ge.f32.partialorder %v724, 0.0
  %vm748 = vcmp.ge.f32.partialorder %v189, 0.0
  %vm749 = vcmp.ge.f32.partialorder %v191, 0.0
  %vm750 = vcmp.ge.f32.partialorder %v266, 0.0
  %vm751 = vcmp.ge.f32.partialorder %v268, 0.0
  %vm752 = vcmp.ge.f32.partialorder %v343, 0.0
  %vm753 = vcmp.ge.f32.partialorder %v345, 0.0
  %vm754 = vcmp.ge.f32.partialorder %v420, 0.0
  %vm755 = vcmp.ge.f32.partialorder %v422, 0.0
  %vm756 = vcmp.ge.f32.partialorder %v497, 0.0
  %vm757 = vcmp.ge.f32.partialorder %v499, 0.0
  %vm758 = vcmp.ge.f32.partialorder %v574, 0.0
  %vm759 = vcmp.ge.f32.partialorder %v576, 0.0
  %vm760 = vcmp.ge.f32.partialorder %v651, 0.0
  %vm761 = vcmp.ge.f32.partialorder %v653, 0.0
  %vm762 = vcmp.ge.f32.partialorder %v728, 0.0
  %vm763 = vcmp.ge.f32.partialorder %v730, 0.0
  %v764 = vmul.f32 %v183, 0.2
  %v765 = vmul.f32 %v185, 0.2
  %v766 = vmul.f32 %v260, 0.2
  %v767 = vmul.f32 %v262, 0.2
  %v768 = vmul.f32 %v337, 0.2
  %v769 = vmul.f32 %v339, 0.2
  %v770 = vmul.f32 %v414, 0.2
  %v771 = vmul.f32 %v416, 0.2
  %v772 = vmul.f32 %v491, 0.2
  %v773 = vmul.f32 %v493, 0.2
  %v774 = vmul.f32 %v568, 0.2
  %v775 = vmul.f32 %v570, 0.2
  %v776 = vmul.f32 %v645, 0.2
  %v777 = vmul.f32 %v647, 0.2
  %v778 = vmul.f32 %v722, 0.2
  %v779 = vmul.f32 %v724, 0.2
  %v780 = vmul.f32 %v189, 0.2
  %v781 = vmul.f32 %v191, 0.2
  %v782 = vmul.f32 %v266, 0.2
  %v783 = vmul.f32 %v268, 0.2
  %v784 = vmul.f32 %v343, 0.2
  %v785 = vmul.f32 %v345, 0.2
  %v786 = vmul.f32 %v420, 0.2
  %v787 = vmul.f32 %v422, 0.2
  %v788 = vmul.f32 %v497, 0.2
  %v789 = vmul.f32 %v499, 0.2
  %v790 = vmul.f32 %v574, 0.2
  %v791 = vmul.f32 %v576, 0.2
  %v792 = vmul.f32 %v651, 0.2
  %v793 = vmul.f32 %v653, 0.2
  %v794 = vmul.f32 %v728, 0.2
  %v795 = vmul.f32 %v730, 0.2
  %v796 = vsel %vm732, %v183, %v764
  %v797 = vsel %vm733, %v185, %v765
  %v798 = vsel %vm734, %v260, %v766
  %v799 = vsel %vm735, %v262, %v767
  %v800 = vsel %vm736, %v337, %v768
  %v801 = vsel %vm737, %v339, %v769
  %v802 = vsel %vm738, %v414, %v770
  %v803 = vsel %vm739, %v416, %v771
  %v804 = vsel %vm740, %v491, %v772
  %v805 = vsel %vm741, %v493, %v773
  %v806 = vsel %vm742, %v568, %v774
  %v807 = vsel %vm743, %v570, %v775
  %v808 = vsel %vm744, %v645, %v776
  %v809 = vsel %vm745, %v647, %v777
  %v810 = vsel %vm746, %v722, %v778
  %v811 = vsel %vm747, %v724, %v779
  %v812 = vsel %vm748, %v189, %v780
  %v813 = vsel %vm749, %v191, %v781
  %v814 = vsel %vm750, %v266, %v782
  %v815 = vsel %vm751, %v268, %v783
  %v816 = vsel %vm752, %v343, %v784
  %v817 = vsel %vm753, %v345, %v785
  %v818 = vsel %vm754, %v420, %v786
  %v819 = vsel %vm755, %v422, %v787
  %v820 = vsel %vm756, %v497, %v788
  %v821 = vsel %vm757, %v499, %v789
  %v822 = vsel %vm758, %v574, %v790
  %v823 = vsel %vm759, %v576, %v791
  %v824 = vsel %vm760, %v651, %v792
  %v825 = vsel %vm761, %v653, %v793
  %v826 = vsel %vm762, %v728, %v794
  %v827 = vsel %vm763, %v730, %v795
  %828 = vst [vmem:[%s2] sm:$0xff] %v796
  %829 = vst [vmem:[%s2 + $0x8] sm:$0xff] %v797
  %830 = vst [vmem:[%s2 + $0x10] sm:$0xff] %v798
  %831 = vst [vmem:[%s2 + $0x18] sm:$0xff] %v799
  %832 = vst [vmem:[%s2 + $0x20] sm:$0xff] %v800
  %833 = vst [vmem:[%s2 + $0x28] sm:$0xff] %v801
  %834 = vst [vmem:[%s2 + $0x30] sm:$0xff] %v802
  %835 = vst [vmem:[%s2 + $0x38] sm:$0xff] %v803
  %836 = vst [vmem:[%s2 + $0x40] sm:$0xff] %v804
  %837 = vst [vmem:[%s2 + $0x48] sm:$0xff] %v805
  %838 = vst [vmem:[%s2 + $0x50] sm:$0xff] %v806
  %839 = vst [vmem:[%s2 + $0x58] sm:$0xff] %v807
  %840 = vst [vmem:[%s2 + $0x60] sm:$0xff] %v808
  %841 = vst [vmem:[%s2 + $0x68] sm:$0xff] %v809
  %842 = vst [vmem:[%s2 + $0x70] sm:$0xff] %v810
  %843 = vst [vmem:[%s2 + $0x78] sm:$0xff] %v811
  %844 = vst [vmem:[%s2 + $0x80] sm:$0xff] %v812
  %845 = vst [vmem:[%s2 + $0x88] sm:$0xff] %v813
  %846 = vst [vmem:[%s2 + $0x90] sm:$0xff] %v814
  %847 = vst [vmem:[%s2 + $0x98] sm:$0xff] %v815
  %848 = vst [vmem:[%s2 + $0xa0] sm:$0xff] %v816
  %849 = vst [vmem:[%s2 + $0xa8] sm:$0xff] %v817
  %850 = vst [vmem:[%s2 + $0xb0] sm:$0xff] %v818
  %851 = vst [vmem:[%s2 + $0xb8] sm:$0xff] %v819
  %852 = vst [vmem:[%s2 + $0xc0] sm:$0xff] %v820
  %853 = vst [vmem:[%s2 + $0xc8] sm:$0xff] %v821
  %854 = vst [vmem:[%s2 + $0xd0] sm:$0xff] %v822
  %855 = vst [vmem:[%s2 + $0xd8] sm:$0xff] %v823
  %856 = vst [vmem:[%s2 + $0xe0] sm:$0xff] %v824
  %857 = vst [vmem:[%s2 + $0xe8] sm:$0xff] %v825
  %858 = vst [vmem:[%s2 + $0xf0] sm:$0xff] %v826
  %859 = vst [vmem:[%s2 + $0xf8] sm:$0xff] %v827
  // Predicated region
  $region10: #{conv_discriminator_forward.3} parent=0 // pred_check
    _
  $region11: #{conv_discriminator_forward.3} parent=0 // pred_check_branch
    %861 = sbr.rel (0) target = $region13
  $region12: #{conv_discriminator_forward.3} parent=0 // pred_region
    _
  $region13: #{conv_discriminator_forward.3} parent=0 // pred_fallthru
    _
  // Predicated region
  $region14: #{conv_discriminator_forward.3} parent=0 // pred_check
    _
  $region15: #{conv_discriminator_forward.3} parent=0 // pred_check_branch
    %863 = sbr.rel (0) target = $region17
  $region16: #{conv_discriminator_forward.3} parent=0 // pred_region
    _
  $region17: #{conv_discriminator_forward.3} parent=0 // pred_fallthru
    _

// kernel: conv_discriminator_forward.4
$region0: #{conv_discriminator_forward.4}
  #allocation0 [shape = 'u32[]', space=smem, size = 0x4, offset = 0x4, fixed_abs, tag = 'smem constant byte address 0x4 - core index']
  #allocation1 [shape = 'u32[144,128]{1,0:T(1,128)}', space=vmem, size = 0x12000, scoped, tag = 'internal scratch']
  %s0 = inlined_call_operand.vmem [shape: f32[32,256], index: 0, kind: input, shape index: {}]
  %s1 = inlined_call_operand.vmem [shape: f32[256,512], index: 1, kind: input, shape index: {}]
  %s2 = inlined_call_operand.vmem [shape: f32[32,1], index: 2, kind: input, shape index: {}]
  %s3 = inlined_call_operand.vmem [shape: f32[32,1], index: 3, kind: input, shape index: {}]
  %s4 = inlined_call_operand.vmem [shape: f32[32,512], index: 4, kind: output, shape index: {}]
  %s5 = sld [smem:[#allocation0]]
  $region26: #{conv_discriminator_forward.4} parent=0
    _
  %s7 = ssub.s32 1, %s5
  %s8 = scalar_select 0, %s7, %s5
  // Predicated region
  $region2: #{conv_discriminator_forward.4} parent=0 // pred_check
    _
  $region3: #{conv_discriminator_forward.4} parent=0 // pred_check_branch
    %10 = sbr.rel (0) target = $region5
  $region4: #{conv_discriminator_forward.4} parent=0 // pred_region
    _
  $region5: #{conv_discriminator_forward.4} parent=0 // pred_fallthru
    _
  // Predicated region
  $region6: #{conv_discriminator_forward.4} parent=0 // pred_check
    _
  $region7: #{conv_discriminator_forward.4} parent=0 // pred_check_branch
    %12 = sbr.rel (0) target = $region9
  $region8: #{conv_discriminator_forward.4} parent=0 // pred_region
    _
  $region9: #{conv_discriminator_forward.4} parent=0 // pred_fallthru
    _
  // Predicated region
  $region10: #{conv_discriminator_forward.4} parent=0 // pred_check
    _
  $region11: #{conv_discriminator_forward.4} parent=0 // pred_check_branch
    %14 = sbr.rel (0) target = $region13
  $region12: #{conv_discriminator_forward.4} parent=0 // pred_region
    _
  $region13: #{conv_discriminator_forward.4} parent=0 // pred_fallthru
    _
  // Predicated region
  $region14: #{conv_discriminator_forward.4} parent=0 // pred_check
    _
  $region15: #{conv_discriminator_forward.4} parent=0 // pred_check_branch
    %16 = sbr.rel (0) target = $region17
  $region16: #{conv_discriminator_forward.4} parent=0 // pred_region
    _
  $region17: #{conv_discriminator_forward.4} parent=0 // pred_fallthru
    _
  %v17 = vld [vmem:[%s0] sm:$0xff]
  %v18 = vld [vmem:[%s0 + $0x8] sm:$0xff]
  %v19 = vld [vmem:[%s0 + $0x10] sm:$0xff]
  %v20 = vld [vmem:[%s0 + $0x18] sm:$0xff]
  %v21 = vld [vmem:[%s0 + $0x20] sm:$0xff]
  %v22 = vld [vmem:[%s0 + $0x28] sm:$0xff]
  %v23 = vld [vmem:[%s0 + $0x30] sm:$0xff]
  %v24 = vld [vmem:[%s0 + $0x38] sm:$0xff]
  %v25 = vld [vmem:[%s1] sm:$0xff]
  %v26 = vld [vmem:[%s1 + $0x8] sm:$0xff]
  %v27 = vld [vmem:[%s1 + $0x10] sm:$0xff]
  %v28 = vld [vmem:[%s1 + $0x18] sm:$0xff]
  %v29 = vld [vmem:[%s1 + $0x20] sm:$0xff]
  %v30 = vld [vmem:[%s1 + $0x28] sm:$0xff]
  %v31 = vld [vmem:[%s1 + $0x30] sm:$0xff]
  %v32 = vld [vmem:[%s1 + $0x38] sm:$0xff]
  %v33 = vld [vmem:[%s1 + $0x40] sm:$0xff]
  %v34 = vld [vmem:[%s1 + $0x48] sm:$0xff]
  %v35 = vld [vmem:[%s1 + $0x50] sm:$0xff]
  %v36 = vld [vmem:[%s1 + $0x58] sm:$0xff]
  %v37 = vld [vmem:[%s1 + $0x60] sm:$0xff]
  %v38 = vld [vmem:[%s1 + $0x68] sm:$0xff]
  %v39 = vld [vmem:[%s1 + $0x70] sm:$0xff]
  %v40 = vld [vmem:[%s1 + $0x78] sm:$0xff]
  %v41 = vld [vmem:[%s1 + $0x80] sm:$0xff]
  %v42 = vld [vmem:[%s1 + $0x88] sm:$0xff]
  %v43 = vld [vmem:[%s1 + $0x90] sm:$0xff]
  %v44 = vld [vmem:[%s1 + $0x98] sm:$0xff]
  %v45 = vld [vmem:[%s1 + $0xa0] sm:$0xff]
  %v46 = vld [vmem:[%s1 + $0xa8] sm:$0xff]
  %v47 = vld [vmem:[%s1 + $0xb0] sm:$0xff]
  %v48 = vld [vmem:[%s1 + $0xb8] sm:$0xff]
  %v49 = vld [vmem:[%s1 + $0xc0] sm:$0xff]
  %v50 = vld [vmem:[%s1 + $0xc8] sm:$0xff]
  %v51 = vld [vmem:[%s1 + $0xd0] sm:$0xff]
  %v52 = vld [vmem:[%s1 + $0xd8] sm:$0xff]
  %v53 = vld [vmem:[%s1 + $0xe0] sm:$0xff]
  %v54 = vld [vmem:[%s1 + $0xe8] sm:$0xff]
  %v55 = vld [vmem:[%s1 + $0xf0] sm:$0xff]
  %v56 = vld [vmem:[%s1 + $0xf8] sm:$0xff]
  %v57 = vld [vmem:[%s1 + $0x100] sm:$0xff]
  %v58 = vld [vmem:[%s1 + $0x108] sm:$0xff]
  %v59 = vld [vmem:[%s1 + $0x110] sm:$0xff]
  %v60 = vld [vmem:[%s1 + $0x118] sm:$0xff]
  %v61 = vld [vmem:[%s1 + $0x120] sm:$0xff]
  %v62 = vld [vmem:[%s1 + $0x128] sm:$0xff]
  %v63 = vld [vmem:[%s1 + $0x130] sm:$0xff]
  %v64 = vld [vmem:[%s1 + $0x138] sm:$0xff]
  %v65 = vld [vmem:[%s1 + $0x140] sm:$0xff]
  %v66 = vld [vmem:[%s1 + $0x148] sm:$0xff]
  %v67 = vld [vmem:[%s1 + $0x150] sm:$0xff]
  %v68 = vld [vmem:[%s1 + $0x158] sm:$0xff]
  %v69 = vld [vmem:[%s1 + $0x160] sm:$0xff]
  %v70 = vld [vmem:[%s1 + $0x168] sm:$0xff]
  %v71 = vld [vmem:[%s1 + $0x170] sm:$0xff]
  %v72 = vld [vmem:[%s1 + $0x178] sm:$0xff]
  %v73 = vld [vmem:[%s1 + $0x180] sm:$0xff]
  %v74 = vld [vmem:[%s1 + $0x188] sm:$0xff]
  %v75 = vld [vmem:[%s1 + $0x190] sm:$0xff]
  %v76 = vld [vmem:[%s1 + $0x198] sm:$0xff]
  %v77 = vld [vmem:[%s1 + $0x1a0] sm:$0xff]
  %v78 = vld [vmem:[%s1 + $0x1a8] sm:$0xff]
  %v79 = vld [vmem:[%s1 + $0x1b0] sm:$0xff]
  %v80 = vld [vmem:[%s1 + $0x1b8] sm:$0xff]
  %v81 = vld [vmem:[%s1 + $0x1c0] sm:$0xff]
  %v82 = vld [vmem:[%s1 + $0x1c8] sm:$0xff]
  %v83 = vld [vmem:[%s1 + $0x1d0] sm:$0xff]
  %v84 = vld [vmem:[%s1 + $0x1d8] sm:$0xff]
  %v85 = vld [vmem:[%s1 + $0x1e0] sm:$0xff]
  %v86 = vld [vmem:[%s1 + $0x1e8] sm:$0xff]
  %v87 = vld [vmem:[%s1 + $0x1f0] sm:$0xff]
  %v88 = vld [vmem:[%s1 + $0x1f8] sm:$0xff]
  %v89 = vld [vmem:[%s1 + $0x200] sm:$0xff]
  %v90 = vld [vmem:[%s1 + $0x208] sm:$0xff]
  %v91 = vld [vmem:[%s1 + $0x210] sm:$0xff]
  %v92 = vld [vmem:[%s1 + $0x218] sm:$0xff]
  %v93 = vld [vmem:[%s1 + $0x220] sm:$0xff]
  %v94 = vld [vmem:[%s1 + $0x228] sm:$0xff]
  %v95 = vld [vmem:[%s1 + $0x230] sm:$0xff]
  %v96 = vld [vmem:[%s1 + $0x238] sm:$0xff]
  %v97 = vld [vmem:[%s1 + $0x240] sm:$0xff]
  %v98 = vld [vmem:[%s1 + $0x248] sm:$0xff]
  %v99 = vld [vmem:[%s1 + $0x250] sm:$0xff]
  %v100 = vld [vmem:[%s1 + $0x258] sm:$0xff]
  %v101 = vld [vmem:[%s1 + $0x260] sm:$0xff]
  %v102 = vld [vmem:[%s1 + $0x268] sm:$0xff]
  %v103 = vld [vmem:[%s1 + $0x270] sm:$0xff]
  %v104 = vld [vmem:[%s1 + $0x278] sm:$0xff]
  %v105 = vld [vmem:[%s1 + $0x280] sm:$0xff]
  %v106 = vld [vmem:[%s1 + $0x288] sm:$0xff]
  %v107 = vld [vmem:[%s1 + $0x290] sm:$0xff]
  %v108 = vld [vmem:[%s1 + $0x298] sm:$0xff]
  %v109 = vld [vmem:[%s1 + $0x2a0] sm:$0xff]
  %v110 = vld [vmem:[%s1 + $0x2a8] sm:$0xff]
  %v111 = vld [vmem:[%s1 + $0x2b0] sm:$0xff]
  %v112 = vld [vmem:[%s1 + $0x2b8] sm:$0xff]
  %v113 = vld [vmem:[%s1 + $0x2c0] sm:$0xff]
  %v114 = vld [vmem:[%s1 + $0x2c8] sm:$0xff]
  %v115 = vld [vmem:[%s1 + $0x2d0] sm:$0xff]
  %v116 = vld [vmem:[%s1 + $0x2d8] sm:$0xff]
  %v117 = vld [vmem:[%s1 + $0x2e0] sm:$0xff]
  %v118 = vld [vmem:[%s1 + $0x2e8] sm:$0xff]
  %v119 = vld [vmem:[%s1 + $0x2f0] sm:$0xff]
  %v120 = vld [vmem:[%s1 + $0x2f8] sm:$0xff]
  %v121 = vld [vmem:[%s1 + $0x300] sm:$0xff]
  %v122 = vld [vmem:[%s1 + $0x308] sm:$0xff]
  %v123 = vld [vmem:[%s1 + $0x310] sm:$0xff]
  %v124 = vld [vmem:[%s1 + $0x318] sm:$0xff]
  %v125 = vld [vmem:[%s1 + $0x320] sm:$0xff]
  %v126 = vld [vmem:[%s1 + $0x328] sm:$0xff]
  %v127 = vld [vmem:[%s1 + $0x330] sm:$0xff]
  %v128 = vld [vmem:[%s1 + $0x338] sm:$0xff]
  %v129 = vld [vmem:[%s1 + $0x340] sm:$0xff]
  %v130 = vld [vmem:[%s1 + $0x348] sm:$0xff]
  %v131 = vld [vmem:[%s1 + $0x350] sm:$0xff]
  %v132 = vld [vmem:[%s1 + $0x358] sm:$0xff]
  %v133 = vld [vmem:[%s1 + $0x360] sm:$0xff]
  %v134 = vld [vmem:[%s1 + $0x368] sm:$0xff]
  %v135 = vld [vmem:[%s1 + $0x370] sm:$0xff]
  %v136 = vld [vmem:[%s1 + $0x378] sm:$0xff]
  %v137 = vld [vmem:[%s1 + $0x380] sm:$0xff]
  %v138 = vld [vmem:[%s1 + $0x388] sm:$0xff]
  %v139 = vld [vmem:[%s1 + $0x390] sm:$0xff]
  %v140 = vld [vmem:[%s1 + $0x398] sm:$0xff]
  %v141 = vld [vmem:[%s1 + $0x3a0] sm:$0xff]
  %v142 = vld [vmem:[%s1 + $0x3a8] sm:$0xff]
  %v143 = vld [vmem:[%s1 + $0x3b0] sm:$0xff]
  %v144 = vld [vmem:[%s1 + $0x3b8] sm:$0xff]
  %v145 = vld [vmem:[%s1 + $0x3c0] sm:$0xff]
  %v146 = vld [vmem:[%s1 + $0x3c8] sm:$0xff]
  %v147 = vld [vmem:[%s1 + $0x3d0] sm:$0xff]
  %v148 = vld [vmem:[%s1 + $0x3d8] sm:$0xff]
  %v149 = vld [vmem:[%s1 + $0x3e0] sm:$0xff]
  %v150 = vld [vmem:[%s1 + $0x3e8] sm:$0xff]
  %v151 = vld [vmem:[%s1 + $0x3f0] sm:$0xff]
  %v152 = vld [vmem:[%s1 + $0x3f8] sm:$0xff]
  %153 = vmatprep.subr.mxu0 %v26
  %154 = vmatpush1.msra.mxu0 %v25
  %155 = vmatprep.subr.mxu0 %v30
  %156 = vmatpush1.msra.mxu0 %v29
  %157 = vmatprep.subr.mxu0 %v34
  %158 = vmatpush1.msra.mxu0 %v33
  %159 = vmatprep.subr.mxu0 %v38
  %160 = vmatpush1.msra.mxu0 %v37
  %161 = vmatprep.subr.mxu0 %v42
  %162 = vmatpush1.msra.mxu0 %v41
  %163 = vmatprep.subr.mxu0 %v46
  %164 = vmatpush1.msra.mxu0 %v45
  %165 = vmatprep.subr.mxu0 %v50
  %166 = vmatpush1.msra.mxu0 %v49
  %167 = vmatprep.subr.mxu0 %v54
  %168 = vmatpush1.msra.mxu0 %v53
  %169 = vmatprep.subr.mxu0 %v58
  %170 = vmatpush1.msra.mxu0 %v57
  %171 = vmatprep.subr.mxu0 %v62
  %172 = vmatpush1.msra.mxu0 %v61
  %173 = vmatprep.subr.mxu0 %v66
  %174 = vmatpush1.msra.mxu0 %v65
  %175 = vmatprep.subr.mxu0 %v70
  %176 = vmatpush1.msra.mxu0 %v69
  %177 = vmatprep.subr.mxu0 %v74
  %178 = vmatpush1.msra.mxu0 %v73
  %179 = vmatprep.subr.mxu0 %v78
  %180 = vmatpush1.msra.mxu0 %v77
  %181 = vmatprep.subr.mxu0 %v82
  %182 = vmatpush1.msra.mxu0 %v81
  %183 = vmatprep.subr.mxu0 %v86
  %184 = vmatpush1.msra.mxu0 %v85
  %185 = vmatprep.subr.mxu0 %v90
  %186 = vmatpush1.msra.mxu0 %v89
  %187 = vmatprep.subr.mxu0 %v94
  %188 = vmatpush1.msra.mxu0 %v93
  %189 = vmatprep.subr.mxu0 %v98
  %190 = vmatpush1.msra.mxu0 %v97
  %191 = vmatprep.subr.mxu0 %v102
  %192 = vmatpush1.msra.mxu0 %v101
  %193 = vmatprep.subr.mxu0 %v106
  %194 = vmatpush1.msra.mxu0 %v105
  %195 = vmatprep.subr.mxu0 %v110
  %196 = vmatpush1.msra.mxu0 %v109
  %197 = vmatprep.subr.mxu0 %v114
  %198 = vmatpush1.msra.mxu0 %v113
  %199 = vmatprep.subr.mxu0 %v118
  %200 = vmatpush1.msra.mxu0 %v117
  %201 = vmatprep.subr.mxu0 %v122
  %202 = vmatpush1.msra.mxu0 %v121
  %203 = vmatprep.subr.mxu0 %v126
  %204 = vmatpush1.msra.mxu0 %v125
  %205 = vmatprep.subr.mxu0 %v130
  %206 = vmatpush1.msra.mxu0 %v129
  %207 = vmatprep.subr.mxu0 %v134
  %208 = vmatpush1.msra.mxu0 %v133
  %209 = vmatprep.subr.mxu0 %v138
  %210 = vmatpush1.msra.mxu0 %v137
  %211 = vmatprep.subr.mxu0 %v142
  %212 = vmatpush1.msra.mxu0 %v141
  %213 = vmatprep.subr.mxu0 %v146
  %214 = vmatpush1.msra.mxu0 %v145
  %215 = vmatprep.subr.mxu0 %v150
  %216 = vmatpush1.msra.mxu0 %v149
  %217 = vmatprep.mubr.f32.mxu0 %v18
  %218 = vmatmul.mubr.f32.gmra.mrb[0].mxu0 %v17
  %v219 = vpop.f32.mrb[0].mxu0
  %v220 = vadd.f32 0.0, %v219
  %v221 = vpop.f32.mrb[0].mxu0
  %v222 = vadd.f32 0.0, %v221
  %223 = vmatprep.mubr.f32.mxu0 %v20
  %224 = vmatmul.mubr.f32.gmra.mrb[0].mxu0 %v19
  %v225 = vpop.f32.mrb[0].mxu0
  %v226 = vadd.f32 0.0, %v225
  %v227 = vpop.f32.mrb[0].mxu0
  %v228 = vadd.f32 0.0, %v227
  %229 = vmatprep.mubr.f32.mxu0 %v22
  %230 = vmatmul.mubr.f32.gmra.mrb[0].mxu0 %v21
  %v231 = vpop.f32.mrb[0].mxu0
  %v232 = vadd.f32 0.0, %v231
  %v233 = vpop.f32.mrb[0].mxu0
  %v234 = vadd.f32 0.0, %v233
  %235 = vmatprep.mubr.f32.mxu0 %v24
  %236 = vmatmul.mubr.f32.gmra.mrb[0].mxu0 %v23
  %v237 = vpop.f32.mrb[0].mxu0
  %v238 = vadd.f32 0.0, %v237
  %v239 = vpop.f32.mrb[0].mxu0
  %v240 = vadd.f32 0.0, %v239
  %241 = vdwg.mxu0
  %242 = vmatprep.subr.mxu0 %v28
  %243 = vmatpush1.msra.mxu0 %v27
  %244 = vmatprep.subr.mxu0 %v32
  %245 = vmatpush1.msra.mxu0 %v31
  %246 = vmatprep.subr.mxu0 %v36
  %247 = vmatpush1.msra.mxu0 %v35
  %248 = vmatprep.subr.mxu0 %v40
  %249 = vmatpush1.msra.mxu0 %v39
  %250 = vmatprep.subr.mxu0 %v44
  %251 = vmatpush1.msra.mxu0 %v43
  %252 = vmatprep.subr.mxu0 %v48
  %253 = vmatpush1.msra.mxu0 %v47
  %254 = vmatprep.subr.mxu0 %v52
  %255 = vmatpush1.msra.mxu0 %v51
  %256 = vmatprep.subr.mxu0 %v56
  %257 = vmatpush1.msra.mxu0 %v55
  %258 = vmatprep.subr.mxu0 %v60
  %259 = vmatpush1.msra.mxu0 %v59
  %260 = vmatprep.subr.mxu0 %v64
  %261 = vmatpush1.msra.mxu0 %v63
  %262 = vmatprep.subr.mxu0 %v68
  %263 = vmatpush1.msra.mxu0 %v67
  %264 = vmatprep.subr.mxu0 %v72
  %265 = vmatpush1.msra.mxu0 %v71
  %266 = vmatprep.subr.mxu0 %v76
  %267 = vmatpush1.msra.mxu0 %v75
  %268 = vmatprep.subr.mxu0 %v80
  %269 = vmatpush1.msra.mxu0 %v79
  %270 = vmatprep.subr.mxu0 %v84
  %271 = vmatpush1.msra.mxu0 %v83
  %272 = vmatprep.subr.mxu0 %v88
  %273 = vmatpush1.msra.mxu0 %v87
  %274 = vmatprep.subr.mxu0 %v92
  %275 = vmatpush1.msra.mxu0 %v91
  %276 = vmatprep.subr.mxu0 %v96
  %277 = vmatpush1.msra.mxu0 %v95
  %278 = vmatprep.subr.mxu0 %v100
  %279 = vmatpush1.msra.mxu0 %v99
  %280 = vmatprep.subr.mxu0 %v104
  %281 = vmatpush1.msra.mxu0 %v103
  %282 = vmatprep.subr.mxu0 %v108
  %283 = vmatpush1.msra.mxu0 %v107
  %284 = vmatprep.subr.mxu0 %v112
  %285 = vmatpush1.msra.mxu0 %v111
  %286 = vmatprep.subr.mxu0 %v116
  %287 = vmatpush1.msra.mxu0 %v115
  %288 = vmatprep.subr.mxu0 %v120
  %289 = vmatpush1.msra.mxu0 %v119
  %290 = vmatprep.subr.mxu0 %v124
  %291 = vmatpush1.msra.mxu0 %v123
  %292 = vmatprep.subr.mxu0 %v128
  %293 = vmatpush1.msra.mxu0 %v127
  %294 = vmatprep.subr.mxu0 %v132
  %295 = vmatpush1.msra.mxu0 %v131
  %296 = vmatprep.subr.mxu0 %v136
  %297 = vmatpush1.msra.mxu0 %v135
  %298 = vmatprep.subr.mxu0 %v140
  %299 = vmatpush1.msra.mxu0 %v139
  %300 = vmatprep.subr.mxu0 %v144
  %301 = vmatpush1.msra.mxu0 %v143
  %302 = vmatprep.subr.mxu0 %v148
  %303 = vmatpush1.msra.mxu0 %v147
  %304 = vmatprep.subr.mxu0 %v152
  %305 = vmatpush1.msra.mxu0 %v151
  %306 = vmatprep.mubr.f32.mxu0 %v18
  %307 = vmatmul.mubr.f32.gmra.mrb[0].mxu0 %v17
  %v308 = vpop.f32.mrb[0].mxu0
  %v309 = vadd.f32 0.0, %v308
  %v310 = vpop.f32.mrb[0].mxu0
  %v311 = vadd.f32 0.0, %v310
  %312 = vmatprep.mubr.f32.mxu0 %v20
  %313 = vmatmul.mubr.f32.gmra.mrb[0].mxu0 %v19
  %v314 = vpop.f32.mrb[0].mxu0
  %v315 = vadd.f32 0.0, %v314
  %v316 = vpop.f32.mrb[0].mxu0
  %v317 = vadd.f32 0.0, %v316
  %318 = vmatprep.mubr.f32.mxu0 %v22
  %319 = vmatmul.mubr.f32.gmra.mrb[0].mxu0 %v21
  %v320 = vpop.f32.mrb[0].mxu0
  %v321 = vadd.f32 0.0, %v320
  %v322 = vpop.f32.mrb[0].mxu0
  %v323 = vadd.f32 0.0, %v322
  %324 = vmatprep.mubr.f32.mxu0 %v24
  %325 = vmatmul.mubr.f32.gmra.mrb[0].mxu0 %v23
  %v326 = vpop.f32.mrb[0].mxu0
  %v327 = vadd.f32 0.0, %v326
  %v328 = vpop.f32.mrb[0].mxu0
  %v329 = vadd.f32 0.0, %v328
  %330 = vdwg.mxu0
  %v331 = vld [vmem:[%s2] sm:$0xff]
  %v332 = vld [vmem:[%s2 + $0x8] sm:$0xff]
  %v333 = vld [vmem:[%s2 + $0x10] sm:$0xff]
  %v334 = vld [vmem:[%s2 + $0x18] sm:$0xff]
  %v335 = vld [vmem:[%s3] sm:$0xff]
  %v336 = vld [vmem:[%s3 + $0x8] sm:$0xff]
  %v337 = vld [vmem:[%s3 + $0x10] sm:$0xff]
  %v338 = vld [vmem:[%s3 + $0x18] sm:$0xff]
  %v339 = vadd.f32 %v220, %v222
  %v340 = vadd.f32 %v339, %v309
  %v341 = vadd.f32 %v340, %v311
  %342 = vadd.xlane.f32.xlu0 %v341
  %v343 = vpop.xlane.xlu0 %342
  %v344 = vadd.f32 %v226, %v228
  %v345 = vadd.f32 %v344, %v315
  %v346 = vadd.f32 %v345, %v317
  %347 = vadd.xlane.f32.xlu0 %v346
  %v348 = vpop.xlane.xlu0 %347
  %v349 = vadd.f32 %v232, %v234
  %v350 = vadd.f32 %v349, %v321
  %v351 = vadd.f32 %v350, %v323
  %352 = vadd.xlane.f32.xlu0 %v351
  %v353 = vpop.xlane.xlu0 %352
  %v354 = vadd.f32 %v238, %v240
  %v355 = vadd.f32 %v354, %v327
  %v356 = vadd.f32 %v355, %v329
  %357 = vadd.xlane.f32.xlu0 %v356
  %v358 = vpop.xlane.xlu0 %357
  %v359 = vmul.f32 %v343, 0.001953125
  %v360 = vmul.f32 %v348, 0.001953125
  %v361 = vmul.f32 %v353, 0.001953125
  %v362 = vmul.f32 %v358, 0.001953125
  %v363 = vmul.f32 %v220, %v220
  %v364 = vmul.f32 %v222, %v222
  %v365 = vmul.f32 %v309, %v309
  %v366 = vmul.f32 %v311, %v311
  %v367 = vmul.f32 %v226, %v226
  %v368 = vmul.f32 %v228, %v228
  %v369 = vmul.f32 %v315, %v315
  %v370 = vmul.f32 %v317, %v317
  %v371 = vmul.f32 %v232, %v232
  %v372 = vmul.f32 %v234, %v234
  %v373 = vmul.f32 %v321, %v321
  %v374 = vmul.f32 %v323, %v323
  %v375 = vmul.f32 %v238, %v238
  %v376 = vmul.f32 %v240, %v240
  %v377 = vmul.f32 %v327, %v327
  %v378 = vmul.f32 %v329, %v329
  %v379 = vadd.f32 %v363, %v364
  %v380 = vadd.f32 %v379, %v365
  %v381 = vadd.f32 %v380, %v366
  %382 = vadd.xlane.f32.xlu0 %v381
  %v383 = vpop.xlane.xlu0 %382
  %v384 = vadd.f32 %v367, %v368
  %v385 = vadd.f32 %v384, %v369
  %v386 = vadd.f32 %v385, %v370
  %387 = vadd.xlane.f32.xlu0 %v386
  %v388 = vpop.xlane.xlu0 %387
  %v389 = vadd.f32 %v371, %v372
  %v390 = vadd.f32 %v389, %v373
  %v391 = vadd.f32 %v390, %v374
  %392 = vadd.xlane.f32.xlu0 %v391
  %v393 = vpop.xlane.xlu0 %392
  %v394 = vadd.f32 %v375, %v376
  %v395 = vadd.f32 %v394, %v377
  %v396 = vadd.f32 %v395, %v378
  %397 = vadd.xlane.f32.xlu0 %v396
  %v398 = vpop.xlane.xlu0 %397
  %v399 = vmul.f32 %v383, 0.001953125
  %v400 = vmul.f32 %v388, 0.001953125
  %v401 = vmul.f32 %v393, 0.001953125
  %v402 = vmul.f32 %v398, 0.001953125
  %v403 = vmul.f32 %v359, %v359
  %v404 = vmul.f32 %v360, %v360
  %v405 = vmul.f32 %v361, %v361
  %v406 = vmul.f32 %v362, %v362
  %v407 = vsub.f32 %v399, %v403
  %v408 = vsub.f32 %v400, %v404
  %v409 = vsub.f32 %v401, %v405
  %v410 = vsub.f32 %v402, %v406
  %v411 = vadd.f32 %v407, 1e-05
  %v412 = vadd.f32 %v408, 1e-05
  %v413 = vadd.f32 %v409, 1e-05
  %v414 = vadd.f32 %v410, 1e-05
  %v415 = vrsqrt.pop %v411
  %v416 = vrsqrt.pop %v412
  %v417 = vrsqrt.pop %v413
  %v418 = vrsqrt.pop %v414
  %v419 = vmul.f32 %v415, %v331
  %v420 = vmul.f32 %v416, %v332
  %v421 = vmul.f32 %v417, %v333
  %v422 = vmul.f32 %v418, %v334
  %v423 = vmul.f32 %v359, %v419
  %v424 = vmul.f32 %v360, %v420
  %v425 = vmul.f32 %v361, %v421
  %v426 = vmul.f32 %v362, %v422
  %v427 = vsub.f32 %v335, %v423
  %v428 = vsub.f32 %v336, %v424
  %v429 = vsub.f32 %v337, %v425
  %v430 = vsub.f32 %v338, %v426
  %432 = vset.pattern.permute.xlu0 0
  %433 = vperm.xlu0 %432, %v419
  %v434 = vpop.permute.xlu0 %433
  %437 = vset.pattern.permute.xlu0 0
  %438 = vperm.xlu0 %437, %v420
  %v439 = vpop.permute.xlu0 %438
  %442 = vset.pattern.permute.xlu0 0
  %443 = vperm.xlu0 %442, %v421
  %v444 = vpop.permute.xlu0 %443
  %447 = vset.pattern.permute.xlu0 0
  %448 = vperm.xlu0 %447, %v422
  %v449 = vpop.permute.xlu0 %448
  %v451 = vmul.f32 %v220, %v434
  %v452 = vmul.f32 %v222, %v434
  %v453 = vmul.f32 %v309, %v434
  %v454 = vmul.f32 %v311, %v434
  %v455 = vmul.f32 %v226, %v439
  %v456 = vmul.f32 %v228, %v439
  %v457 = vmul.f32 %v315, %v439
  %v458 = vmul.f32 %v317, %v439
  %v459 = vmul.f32 %v232, %v444
  %v460 = vmul.f32 %v234, %v444
  %v461 = vmul.f32 %v321, %v444
  %v462 = vmul.f32 %v323, %v444
  %v463 = vmul.f32 %v238, %v449
  %v464 = vmul.f32 %v240, %v449
  %v465 = vmul.f32 %v327, %v449
  %v466 = vmul.f32 %v329, %v449
  %468 = vset.pattern.permute.xlu0 0
  %469 = vperm.xlu0 %468, %v427
  %v470 = vpop.permute.xlu0 %469
  %473 = vset.pattern.permute.xlu0 0
  %474 = vperm.xlu0 %473, %v428
  %v475 = vpop.permute.xlu0 %474
  %478 = vset.pattern.permute.xlu0 0
  %479 = vperm.xlu0 %478, %v429
  %v480 = vpop.permute.xlu0 %479
  %483 = vset.pattern.permute.xlu0 0
  %484 = vperm.xlu0 %483, %v430
  %v485 = vpop.permute.xlu0 %484
  %v487 = vadd.f32 %v451, %v470
  %v488 = vadd.f32 %v452, %v470
  %v489 = vadd.f32 %v453, %v470
  %v490 = vadd.f32 %v454, %v470
  %v491 = vadd.f32 %v455, %v475
  %v492 = vadd.f32 %v456, %v475
  %v493 = vadd.f32 %v457, %v475
  %v494 = vadd.f32 %v458, %v475
  %v495 = vadd.f32 %v459, %v480
  %v496 = vadd.f32 %v460, %v480
  %v497 = vadd.f32 %v461, %v480
  %v498 = vadd.f32 %v462, %v480
  %v499 = vadd.f32 %v463, %v485
  %v500 = vadd.f32 %v464, %v485
  %v501 = vadd.f32 %v465, %v485
  %v502 = vadd.f32 %v466, %v485
  %vm503 = vcmp.ge.f32.partialorder %v487, 0.0
  %vm504 = vcmp.ge.f32.partialorder %v488, 0.0
  %vm505 = vcmp.ge.f32.partialorder %v489, 0.0
  %vm506 = vcmp.ge.f32.partialorder %v490, 0.0
  %vm507 = vcmp.ge.f32.partialorder %v491, 0.0
  %vm508 = vcmp.ge.f32.partialorder %v492, 0.0
  %vm509 = vcmp.ge.f32.partialorder %v493, 0.0
  %vm510 = vcmp.ge.f32.partialorder %v494, 0.0
  %vm511 = vcmp.ge.f32.partialorder %v495, 0.0
  %vm512 = vcmp.ge.f32.partialorder %v496, 0.0
  %vm513 = vcmp.ge.f32.partialorder %v497, 0.0
  %vm514 = vcmp.ge.f32.partialorder %v498, 0.0
  %vm515 = vcmp.ge.f32.partialorder %v499, 0.0
  %vm516 = vcmp.ge.f32.partialorder %v500, 0.0
  %vm517 = vcmp.ge.f32.partialorder %v501, 0.0
  %vm518 = vcmp.ge.f32.partialorder %v502, 0.0
  %v519 = vmul.f32 %v487, 0.2
  %v520 = vmul.f32 %v488, 0.2
  %v521 = vmul.f32 %v489, 0.2
  %v522 = vmul.f32 %v490, 0.2
  %v523 = vmul.f32 %v491, 0.2
  %v524 = vmul.f32 %v492, 0.2
  %v525 = vmul.f32 %v493, 0.2
  %v526 = vmul.f32 %v494, 0.2
  %v527 = vmul.f32 %v495, 0.2
  %v528 = vmul.f32 %v496, 0.2
  %v529 = vmul.f32 %v497, 0.2
  %v530 = vmul.f32 %v498, 0.2
  %v531 = vmul.f32 %v499, 0.2
  %v532 = vmul.f32 %v500, 0.2
  %v533 = vmul.f32 %v501, 0.2
  %v534 = vmul.f32 %v502, 0.2
  %v535 = vsel %vm503, %v487, %v519
  %v536 = vsel %vm504, %v488, %v520
  %v537 = vsel %vm505, %v489, %v521
  %v538 = vsel %vm506, %v490, %v522
  %v539 = vsel %vm507, %v491, %v523
  %v540 = vsel %vm508, %v492, %v524
  %v541 = vsel %vm509, %v493, %v525
  %v542 = vsel %vm510, %v494, %v526
  %v543 = vsel %vm511, %v495, %v527
  %v544 = vsel %vm512, %v496, %v528
  %v545 = vsel %vm513, %v497, %v529
  %v546 = vsel %vm514, %v498, %v530
  %v547 = vsel %vm515, %v499, %v531
  %v548 = vsel %vm516, %v500, %v532
  %v549 = vsel %vm517, %v501, %v533
  %v550 = vsel %vm518, %v502, %v534
  %551 = vst [vmem:[%s4] sm:$0xff] %v535
  %552 = vst [vmem:[%s4 + $0x8] sm:$0xff] %v536
  %553 = vst [vmem:[%s4 + $0x10] sm:$0xff] %v537
  %554 = vst [vmem:[%s4 + $0x18] sm:$0xff] %v538
  %555 = vst [vmem:[%s4 + $0x20] sm:$0xff] %v539
  %556 = vst [vmem:[%s4 + $0x28] sm:$0xff] %v540
  %557 = vst [vmem:[%s4 + $0x30] sm:$0xff] %v541
  %558 = vst [vmem:[%s4 + $0x38] sm:$0xff] %v542
  %559 = vst [vmem:[%s4 + $0x40] sm:$0xff] %v543
  %560 = vst [vmem:[%s4 + $0x48] sm:$0xff] %v544
  %561 = vst [vmem:[%s4 + $0x50] sm:$0xff] %v545
  %562 = vst [vmem:[%s4 + $0x58] sm:$0xff] %v546
  %563 = vst [vmem:[%s4 + $0x60] sm:$0xff] %v547
  %564 = vst [vmem:[%s4 + $0x68] sm:$0xff] %v548
  %565 = vst [vmem:[%s4 + $0x70] sm:$0xff] %v549
  %566 = vst [vmem:[%s4 + $0x78] sm:$0xff] %v550
  // Predicated region
  $region18: #{conv_discriminator_forward.4} parent=0 // pred_check
    _
  $region19: #{conv_discriminator_forward.4} parent=0 // pred_check_branch
    %568 = sbr.rel (0) target = $region21
  $region20: #{conv_discriminator_forward.4} parent=0 // pred_region
    _
  $region21: #{conv_discriminator_forward.4} parent=0 // pred_fallthru
    _
  // Predicated region
  $region22: #{conv_discriminator_forward.4} parent=0 // pred_check
    _
  $region23: #{conv_discriminator_forward.4} parent=0 // pred_check_branch
    %570 = sbr.rel (0) target = $region25
  $region24: #{conv_discriminator_forward.4} parent=0 // pred_region
    _
  $region25: #{conv_discriminator_forward.4} parent=0 // pred_fallthru
    _

// kernel: conv_discriminator_forward.5
$region0: #{conv_discriminator_forward.5}
  #allocation0 [shape = 'u32[]', space=smem, size = 0x4, offset = 0x4, fixed_abs, tag = 'smem constant byte address 0x4 - core index']
  #allocation1 [shape = 'u32[144,128]{1,0:T(1,128)}', space=vmem, size = 0x12000, scoped, tag = 'internal scratch']
  %s0 = inlined_call_operand.vmem [shape: f32[512,128], index: 0, kind: input, shape index: {}]
  %s1 = inlined_call_operand.vmem [shape: f32[64,512], index: 1, kind: input, shape index: {}]
  %s2 = inlined_call_operand.vmem [shape: f32[64,1], index: 2, kind: input, shape index: {}]
  %s3 = inlined_call_operand.vmem [shape: f32[64,1], index: 3, kind: input, shape index: {}]
  %s4 = inlined_call_operand.vmem [shape: f32[16,128,64], index: 4, kind: input, shape index: {}]
  %s5 = inlined_call_operand.vmem [shape: f32[16,128,32], index: 5, kind: input, shape index: {}]
  %s6 = inlined_call_operand.vmem [shape: f32[128,1], index: 6, kind: input, shape index: {}]
  %s7 = inlined_call_operand.vmem [shape: f32[128,1], index: 7, kind: input, shape index: {}]
  %s8 = inlined_call_operand.vmem [shape: f32[128,32], index: 8, kind: input, shape index: {}]
  %s9 = inlined_call_operand.vmem [shape: f32[32,2], index: 9, kind: input, shape index: {}]
  %s10 = inlined_call_operand.hbm [shape: f32[1,2], index: 10, kind: output, shape index: {}]
  %s11 = sld [smem:[#allocation0]]
  $region50: #{conv_discriminator_forward.5} parent=0
    _
  %s13 = ssub.s32 1, %s11
  %s14 = scalar_select 0, %s13, %s11
  $region1: #{conv_discriminator_forward.5} parent=0
    #allocation2 [shape = 'u8[512]{0}', space=vmem, size = 0x400, scoped, tag = 'output window, operand 0, single buffered']
    #allocation3 [shape = 's32[1]{0}', space=sflag, size = 0x4, scoped, tag = 'scoped memory for conv_discriminator_forward.5']
    %15 = vsyncpa [#allocation3], 0
    // Predicated region
    $region2: #{conv_discriminator_forward.5} parent=1 // pred_check
      _
    $region3: #{conv_discriminator_forward.5} parent=1 // pred_check_branch
      %17 = sbr.rel (0) target = $region5
    $region4: #{conv_discriminator_forward.5} parent=1 // pred_region
      _
    $region5: #{conv_discriminator_forward.5} parent=1 // pred_fallthru
      _
    // Predicated region
    $region6: #{conv_discriminator_forward.5} parent=1 // pred_check
      _
    $region7: #{conv_discriminator_forward.5} parent=1 // pred_check_branch
      %19 = sbr.rel (0) target = $region9
    $region8: #{conv_discriminator_forward.5} parent=1 // pred_region
      _
    $region9: #{conv_discriminator_forward.5} parent=1 // pred_fallthru
      _
    // Predicated region
    $region10: #{conv_discriminator_forward.5} parent=1 // pred_check
      _
    $region11: #{conv_discriminator_forward.5} parent=1 // pred_check_branch
      %21 = sbr.rel (0) target = $region13
    $region12: #{conv_discriminator_forward.5} parent=1 // pred_region
      _
    $region13: #{conv_discriminator_forward.5} parent=1 // pred_fallthru
      _
    // Predicated region
    $region14: #{conv_discriminator_forward.5} parent=1 // pred_check
      _
    $region15: #{conv_discriminator_forward.5} parent=1 // pred_check_branch
      %23 = sbr.rel (0) target = $region17
    $region16: #{conv_discriminator_forward.5} parent=1 // pred_region
      _
    $region17: #{conv_discriminator_forward.5} parent=1 // pred_fallthru
      _
    // Predicated region
    $region18: #{conv_discriminator_forward.5} parent=1 // pred_check
      _
    $region19: #{conv_discriminator_forward.5} parent=1 // pred_check_branch
      %25 = sbr.rel (0) target = $region21
    $region20: #{conv_discriminator_forward.5} parent=1 // pred_region
      _
    $region21: #{conv_discriminator_forward.5} parent=1 // pred_fallthru
      _
    // Predicated region
    $region22: #{conv_discriminator_forward.5} parent=1 // pred_check
      _
    $region23: #{conv_discriminator_forward.5} parent=1 // pred_check_branch
      %27 = sbr.rel (0) target = $region25
    $region24: #{conv_discriminator_forward.5} parent=1 // pred_region
      _
    $region25: #{conv_discriminator_forward.5} parent=1 // pred_fallthru
      _
    // Predicated region
    $region26: #{conv_discriminator_forward.5} parent=1 // pred_check
      _
    $region27: #{conv_discriminator_forward.5} parent=1 // pred_check_branch
      %29 = sbr.rel (0) target = $region29
    $region28: #{conv_discriminator_forward.5} parent=1 // pred_region
      _
    $region29: #{conv_discriminator_forward.5} parent=1 // pred_fallthru
      _
    // Predicated region
    $region30: #{conv_discriminator_forward.5} parent=1 // pred_check
      _
    $region31: #{conv_discriminator_forward.5} parent=1 // pred_check_branch
      %31 = sbr.rel (0) target = $region33
    $region32: #{conv_discriminator_forward.5} parent=1 // pred_region
      _
    $region33: #{conv_discriminator_forward.5} parent=1 // pred_fallthru
      _
    // Predicated region
    $region34: #{conv_discriminator_forward.5} parent=1 // pred_check
      _
    $region35: #{conv_discriminator_forward.5} parent=1 // pred_check_branch
      %33 = sbr.rel (0) target = $region37
    $region36: #{conv_discriminator_forward.5} parent=1 // pred_region
      _
    $region37: #{conv_discriminator_forward.5} parent=1 // pred_fallthru
      _
    // Predicated region
    $region38: #{conv_discriminator_forward.5} parent=1 // pred_check
      _
    $region39: #{conv_discriminator_forward.5} parent=1 // pred_check_branch
      %35 = sbr.rel (0) target = $region41
    $region40: #{conv_discriminator_forward.5} parent=1 // pred_region
      _
    $region41: #{conv_discriminator_forward.5} parent=1 // pred_fallthru
      _
    %v36 = vld [vmem:[%s1] sm:$0xff]
    %v37 = vld [vmem:[%s1 + $0x8] sm:$0xff]
    %v38 = vld [vmem:[%s1 + $0x10] sm:$0xff]
    %v39 = vld [vmem:[%s1 + $0x18] sm:$0xff]
    %v40 = vld [vmem:[%s1 + $0x20] sm:$0xff]
    %v41 = vld [vmem:[%s1 + $0x28] sm:$0xff]
    %v42 = vld [vmem:[%s1 + $0x30] sm:$0xff]
    %v43 = vld [vmem:[%s1 + $0x38] sm:$0xff]
    %v44 = vld [vmem:[%s1 + $0x40] sm:$0xff]
    %v45 = vld [vmem:[%s1 + $0x48] sm:$0xff]
    %v46 = vld [vmem:[%s1 + $0x50] sm:$0xff]
    %v47 = vld [vmem:[%s1 + $0x58] sm:$0xff]
    %v48 = vld [vmem:[%s1 + $0x60] sm:$0xff]
    %v49 = vld [vmem:[%s1 + $0x68] sm:$0xff]
    %v50 = vld [vmem:[%s1 + $0x70] sm:$0xff]
    %v51 = vld [vmem:[%s1 + $0x78] sm:$0xff]
    %v52 = vld [vmem:[%s1 + $0x80] sm:$0xff]
    %v53 = vld [vmem:[%s1 + $0x88] sm:$0xff]
    %v54 = vld [vmem:[%s1 + $0x90] sm:$0xff]
    %v55 = vld [vmem:[%s1 + $0x98] sm:$0xff]
    %v56 = vld [vmem:[%s1 + $0xa0] sm:$0xff]
    %v57 = vld [vmem:[%s1 + $0xa8] sm:$0xff]
    %v58 = vld [vmem:[%s1 + $0xb0] sm:$0xff]
    %v59 = vld [vmem:[%s1 + $0xb8] sm:$0xff]
    %v60 = vld [vmem:[%s1 + $0xc0] sm:$0xff]
    %v61 = vld [vmem:[%s1 + $0xc8] sm:$0xff]
    %v62 = vld [vmem:[%s1 + $0xd0] sm:$0xff]
    %v63 = vld [vmem:[%s1 + $0xd8] sm:$0xff]
    %v64 = vld [vmem:[%s1 + $0xe0] sm:$0xff]
    %v65 = vld [vmem:[%s1 + $0xe8] sm:$0xff]
    %v66 = vld [vmem:[%s1 + $0xf0] sm:$0xff]
    %v67 = vld [vmem:[%s1 + $0xf8] sm:$0xff]
    %v68 = vld [vmem:[%s0] sm:$0xff]
    %v69 = vld [vmem:[%s0 + $0x8] sm:$0xff]
    %v70 = vld [vmem:[%s0 + $0x10] sm:$0xff]
    %v71 = vld [vmem:[%s0 + $0x18] sm:$0xff]
    %v72 = vld [vmem:[%s0 + $0x20] sm:$0xff]
    %v73 = vld [vmem:[%s0 + $0x28] sm:$0xff]
    %v74 = vld [vmem:[%s0 + $0x30] sm:$0xff]
    %v75 = vld [vmem:[%s0 + $0x38] sm:$0xff]
    %v76 = vld [vmem:[%s0 + $0x40] sm:$0xff]
    %v77 = vld [vmem:[%s0 + $0x48] sm:$0xff]
    %v78 = vld [vmem:[%s0 + $0x50] sm:$0xff]
    %v79 = vld [vmem:[%s0 + $0x58] sm:$0xff]
    %v80 = vld [vmem:[%s0 + $0x60] sm:$0xff]
    %v81 = vld [vmem:[%s0 + $0x68] sm:$0xff]
    %v82 = vld [vmem:[%s0 + $0x70] sm:$0xff]
    %v83 = vld [vmem:[%s0 + $0x78] sm:$0xff]
    %v84 = vld [vmem:[%s0 + $0x80] sm:$0xff]
    %v85 = vld [vmem:[%s0 + $0x88] sm:$0xff]
    %v86 = vld [vmem:[%s0 + $0x90] sm:$0xff]
    %v87 = vld [vmem:[%s0 + $0x98] sm:$0xff]
    %v88 = vld [vmem:[%s0 + $0xa0] sm:$0xff]
    %v89 = vld [vmem:[%s0 + $0xa8] sm:$0xff]
    %v90 = vld [vmem:[%s0 + $0xb0] sm:$0xff]
    %v91 = vld [vmem:[%s0 + $0xb8] sm:$0xff]
    %v92 = vld [vmem:[%s0 + $0xc0] sm:$0xff]
    %v93 = vld [vmem:[%s0 + $0xc8] sm:$0xff]
    %v94 = vld [vmem:[%s0 + $0xd0] sm:$0xff]
    %v95 = vld [vmem:[%s0 + $0xd8] sm:$0xff]
    %v96 = vld [vmem:[%s0 + $0xe0] sm:$0xff]
    %v97 = vld [vmem:[%s0 + $0xe8] sm:$0xff]
    %v98 = vld [vmem:[%s0 + $0xf0] sm:$0xff]
    %v99 = vld [vmem:[%s0 + $0xf8] sm:$0xff]
    %v100 = vld [vmem:[%s0 + $0x100] sm:$0xff]
    %v101 = vld [vmem:[%s0 + $0x108] sm:$0xff]
    %v102 = vld [vmem:[%s0 + $0x110] sm:$0xff]
    %v103 = vld [vmem:[%s0 + $0x118] sm:$0xff]
    %v104 = vld [vmem:[%s0 + $0x120] sm:$0xff]
    %v105 = vld [vmem:[%s0 + $0x128] sm:$0xff]
    %v106 = vld [vmem:[%s0 + $0x130] sm:$0xff]
    %v107 = vld [vmem:[%s0 + $0x138] sm:$0xff]
    %v108 = vld [vmem:[%s0 + $0x140] sm:$0xff]
    %v109 = vld [vmem:[%s0 + $0x148] sm:$0xff]
    %v110 = vld [vmem:[%s0 + $0x150] sm:$0xff]
    %v111 = vld [vmem:[%s0 + $0x158] sm:$0xff]
    %v112 = vld [vmem:[%s0 + $0x160] sm:$0xff]
    %v113 = vld [vmem:[%s0 + $0x168] sm:$0xff]
    %v114 = vld [vmem:[%s0 + $0x170] sm:$0xff]
    %v115 = vld [vmem:[%s0 + $0x178] sm:$0xff]
    %v116 = vld [vmem:[%s0 + $0x180] sm:$0xff]
    %v117 = vld [vmem:[%s0 + $0x188] sm:$0xff]
    %v118 = vld [vmem:[%s0 + $0x190] sm:$0xff]
    %v119 = vld [vmem:[%s0 + $0x198] sm:$0xff]
    %v120 = vld [vmem:[%s0 + $0x1a0] sm:$0xff]
    %v121 = vld [vmem:[%s0 + $0x1a8] sm:$0xff]
    %v122 = vld [vmem:[%s0 + $0x1b0] sm:$0xff]
    %v123 = vld [vmem:[%s0 + $0x1b8] sm:$0xff]
    %v124 = vld [vmem:[%s0 + $0x1c0] sm:$0xff]
    %v125 = vld [vmem:[%s0 + $0x1c8] sm:$0xff]
    %v126 = vld [vmem:[%s0 + $0x1d0] sm:$0xff]
    %v127 = vld [vmem:[%s0 + $0x1d8] sm:$0xff]
    %v128 = vld [vmem:[%s0 + $0x1e0] sm:$0xff]
    %v129 = vld [vmem:[%s0 + $0x1e8] sm:$0xff]
    %v130 = vld [vmem:[%s0 + $0x1f0] sm:$0xff]
    %v131 = vld [vmem:[%s0 + $0x1f8] sm:$0xff]
    %132 = vmatprep.subr.mxu0 0.0
    %133 = vmatpush1.msra.mxu0 %v68
    %134 = vmatprep.subr.mxu0 0.0
    %135 = vmatpush1.msra.mxu0 %v69
    %136 = vmatprep.subr.mxu0 0.0
    %137 = vmatpush1.msra.mxu0 %v70
    %138 = vmatprep.subr.mxu0 0.0
    %139 = vmatpush1.msra.mxu0 %v71
    %140 = vmatprep.subr.mxu0 0.0
    %141 = vmatpush1.msra.mxu0 %v72
    %142 = vmatprep.subr.mxu0 0.0
    %143 = vmatpush1.msra.mxu0 %v73
    %144 = vmatprep.subr.mxu0 0.0
    %145 = vmatpush1.msra.mxu0 %v74
    %146 = vmatprep.subr.mxu0 0.0
    %147 = vmatpush1.msra.mxu0 %v75
    %148 = vmatprep.subr.mxu0 0.0
    %149 = vmatpush1.msra.mxu0 %v76
    %150 = vmatprep.subr.mxu0 0.0
    %151 = vmatpush1.msra.mxu0 %v77
    %152 = vmatprep.subr.mxu0 0.0
    %153 = vmatpush1.msra.mxu0 %v78
    %154 = vmatprep.subr.mxu0 0.0
    %155 = vmatpush1.msra.mxu0 %v79
    %156 = vmatprep.subr.mxu0 0.0
    %157 = vmatpush1.msra.mxu0 %v80
    %158 = vmatprep.subr.mxu0 0.0
    %159 = vmatpush1.msra.mxu0 %v81
    %160 = vmatprep.subr.mxu0 0.0
    %161 = vmatpush1.msra.mxu0 %v82
    %162 = vmatprep.subr.mxu0 0.0
    %163 = vmatpush1.msra.mxu0 %v83
    %164 = vmatprep.subr.mxu0 0.0
    %165 = vmatpush1.msra.mxu0 %v84
    %166 = vmatprep.subr.mxu0 0.0
    %167 = vmatpush1.msra.mxu0 %v85
    %168 = vmatprep.subr.mxu0 0.0
    %169 = vmatpush1.msra.mxu0 %v86
    %170 = vmatprep.subr.mxu0 0.0
    %171 = vmatpush1.msra.mxu0 %v87
    %172 = vmatprep.subr.mxu0 0.0
    %173 = vmatpush1.msra.mxu0 %v88
    %174 = vmatprep.subr.mxu0 0.0
    %175 = vmatpush1.msra.mxu0 %v89
    %176 = vmatprep.subr.mxu0 0.0
    %177 = vmatpush1.msra.mxu0 %v90
    %178 = vmatprep.subr.mxu0 0.0
    %179 = vmatpush1.msra.mxu0 %v91
    %180 = vmatprep.subr.mxu0 0.0
    %181 = vmatpush1.msra.mxu0 %v92
    %182 = vmatprep.subr.mxu0 0.0
    %183 = vmatpush1.msra.mxu0 %v93
    %184 = vmatprep.subr.mxu0 0.0
    %185 = vmatpush1.msra.mxu0 %v94
    %186 = vmatprep.subr.mxu0 0.0
    %187 = vmatpush1.msra.mxu0 %v95
    %188 = vmatprep.subr.mxu0 0.0
    %189 = vmatpush1.msra.mxu0 %v96
    %190 = vmatprep.subr.mxu0 0.0
    %191 = vmatpush1.msra.mxu0 %v97
    %192 = vmatprep.subr.mxu0 0.0
    %193 = vmatpush1.msra.mxu0 %v98
    %194 = vmatprep.subr.mxu0 0.0
    %195 = vmatpush1.msra.mxu0 %v99
    %196 = vmatprep.mubr.f32.mxu0 %v37
    %197 = vmatmul.mubr.f32.gmra.mrb[0].mxu0 %v36
    %v198 = vpop.f32.mrb[0].mxu0
    %v199 = vadd.f32 0.0, %v198
    %v200 = vpop.f32.mrb[0].mxu0
    %201 = vmatprep.mubr.f32.mxu0 %v41
    %202 = vmatmul.mubr.f32.gmra.mrb[0].mxu0 %v40
    %v203 = vpop.f32.mrb[0].mxu0
    %v204 = vadd.f32 0.0, %v203
    %v205 = vpop.f32.mrb[0].mxu0
    %206 = vmatprep.mubr.f32.mxu0 %v45
    %207 = vmatmul.mubr.f32.gmra.mrb[0].mxu0 %v44
    %v208 = vpop.f32.mrb[0].mxu0
    %v209 = vadd.f32 0.0, %v208
    %v210 = vpop.f32.mrb[0].mxu0
    %211 = vmatprep.mubr.f32.mxu0 %v49
    %212 = vmatmul.mubr.f32.gmra.mrb[0].mxu0 %v48
    %v213 = vpop.f32.mrb[0].mxu0
    %v214 = vadd.f32 0.0, %v213
    %v215 = vpop.f32.mrb[0].mxu0
    %216 = vmatprep.mubr.f32.mxu0 %v53
    %217 = vmatmul.mubr.f32.gmra.mrb[0].mxu0 %v52
    %v218 = vpop.f32.mrb[0].mxu0
    %v219 = vadd.f32 0.0, %v218
    %v220 = vpop.f32.mrb[0].mxu0
    %221 = vmatprep.mubr.f32.mxu0 %v57
    %222 = vmatmul.mubr.f32.gmra.mrb[0].mxu0 %v56
    %v223 = vpop.f32.mrb[0].mxu0
    %v224 = vadd.f32 0.0, %v223
    %v225 = vpop.f32.mrb[0].mxu0
    %226 = vmatprep.mubr.f32.mxu0 %v61
    %227 = vmatmul.mubr.f32.gmra.mrb[0].mxu0 %v60
    %v228 = vpop.f32.mrb[0].mxu0
    %v229 = vadd.f32 0.0, %v228
    %v230 = vpop.f32.mrb[0].mxu0
    %231 = vmatprep.mubr.f32.mxu0 %v65
    %232 = vmatmul.mubr.f32.gmra.mrb[0].mxu0 %v64
    %v233 = vpop.f32.mrb[0].mxu0
    %v234 = vadd.f32 0.0, %v233
    %v235 = vpop.f32.mrb[0].mxu0
    %236 = vdwg.mxu0
    %237 = vmatprep.subr.mxu0 0.0
    %238 = vmatpush1.msra.mxu0 %v100
    %239 = vmatprep.subr.mxu0 0.0
    %240 = vmatpush1.msra.mxu0 %v101
    %241 = vmatprep.subr.mxu0 0.0
    %242 = vmatpush1.msra.mxu0 %v102
    %243 = vmatprep.subr.mxu0 0.0
    %244 = vmatpush1.msra.mxu0 %v103
    %245 = vmatprep.subr.mxu0 0.0
    %246 = vmatpush1.msra.mxu0 %v104
    %247 = vmatprep.subr.mxu0 0.0
    %248 = vmatpush1.msra.mxu0 %v105
    %249 = vmatprep.subr.mxu0 0.0
    %250 = vmatpush1.msra.mxu0 %v106
    %251 = vmatprep.subr.mxu0 0.0
    %252 = vmatpush1.msra.mxu0 %v107
    %253 = vmatprep.subr.mxu0 0.0
    %254 = vmatpush1.msra.mxu0 %v108
    %255 = vmatprep.subr.mxu0 0.0
    %256 = vmatpush1.msra.mxu0 %v109
    %257 = vmatprep.subr.mxu0 0.0
    %258 = vmatpush1.msra.mxu0 %v110
    %259 = vmatprep.subr.mxu0 0.0
    %260 = vmatpush1.msra.mxu0 %v111
    %261 = vmatprep.subr.mxu0 0.0
    %262 = vmatpush1.msra.mxu0 %v112
    %263 = vmatprep.subr.mxu0 0.0
    %264 = vmatpush1.msra.mxu0 %v113
    %265 = vmatprep.subr.mxu0 0.0
    %266 = vmatpush1.msra.mxu0 %v114
    %267 = vmatprep.subr.mxu0 0.0
    %268 = vmatpush1.msra.mxu0 %v115
    %269 = vmatprep.subr.mxu0 0.0
    %270 = vmatpush1.msra.mxu0 %v116
    %271 = vmatprep.subr.mxu0 0.0
    %272 = vmatpush1.msra.mxu0 %v117
    %273 = vmatprep.subr.mxu0 0.0
    %274 = vmatpush1.msra.mxu0 %v118
    %275 = vmatprep.subr.mxu0 0.0
    %276 = vmatpush1.msra.mxu0 %v119
    %277 = vmatprep.subr.mxu0 0.0
    %278 = vmatpush1.msra.mxu0 %v120
    %279 = vmatprep.subr.mxu0 0.0
    %280 = vmatpush1.msra.mxu0 %v121
    %281 = vmatprep.subr.mxu0 0.0
    %282 = vmatpush1.msra.mxu0 %v122
    %283 = vmatprep.subr.mxu0 0.0
    %284 = vmatpush1.msra.mxu0 %v123
    %285 = vmatprep.subr.mxu0 0.0
    %286 = vmatpush1.msra.mxu0 %v124
    %287 = vmatprep.subr.mxu0 0.0
    %288 = vmatpush1.msra.mxu0 %v125
    %289 = vmatprep.subr.mxu0 0.0
    %290 = vmatpush1.msra.mxu0 %v126
    %291 = vmatprep.subr.mxu0 0.0
    %292 = vmatpush1.msra.mxu0 %v127
    %293 = vmatprep.subr.mxu0 0.0
    %294 = vmatpush1.msra.mxu0 %v128
    %295 = vmatprep.subr.mxu0 0.0
    %296 = vmatpush1.msra.mxu0 %v129
    %297 = vmatprep.subr.mxu0 0.0
    %298 = vmatpush1.msra.mxu0 %v130
    %299 = vmatprep.subr.mxu0 0.0
    %300 = vmatpush1.msra.mxu0 %v131
    %301 = vmatprep.mubr.f32.mxu0 %v39
    %302 = vmatmul.mubr.f32.gmra.mrb[0].mxu0 %v38
    %v303 = vpop.f32.mrb[0].mxu0
    %v304 = vadd.f32 %v199, %v303
    %v305 = vpop.f32.mrb[0].mxu0
    %306 = vmatprep.mubr.f32.mxu0 %v43
    %307 = vmatmul.mubr.f32.gmra.mrb[0].mxu0 %v42
    %v308 = vpop.f32.mrb[0].mxu0
    %v309 = vadd.f32 %v204, %v308
    %v310 = vpop.f32.mrb[0].mxu0
    %311 = vmatprep.mubr.f32.mxu0 %v47
    %312 = vmatmul.mubr.f32.gmra.mrb[0].mxu0 %v46
    %v313 = vpop.f32.mrb[0].mxu0
    %v314 = vadd.f32 %v209, %v313
    %v315 = vpop.f32.mrb[0].mxu0
    %316 = vmatprep.mubr.f32.mxu0 %v51
    %317 = vmatmul.mubr.f32.gmra.mrb[0].mxu0 %v50
    %v318 = vpop.f32.mrb[0].mxu0
    %v319 = vadd.f32 %v214, %v318
    %v320 = vpop.f32.mrb[0].mxu0
    %321 = vmatprep.mubr.f32.mxu0 %v55
    %322 = vmatmul.mubr.f32.gmra.mrb[0].mxu0 %v54
    %v323 = vpop.f32.mrb[0].mxu0
    %v324 = vadd.f32 %v219, %v323
    %v325 = vpop.f32.mrb[0].mxu0
    %326 = vmatprep.mubr.f32.mxu0 %v59
    %327 = vmatmul.mubr.f32.gmra.mrb[0].mxu0 %v58
    %v328 = vpop.f32.mrb[0].mxu0
    %v329 = vadd.f32 %v224, %v328
    %v330 = vpop.f32.mrb[0].mxu0
    %331 = vmatprep.mubr.f32.mxu0 %v63
    %332 = vmatmul.mubr.f32.gmra.mrb[0].mxu0 %v62
    %v333 = vpop.f32.mrb[0].mxu0
    %v334 = vadd.f32 %v229, %v333
    %v335 = vpop.f32.mrb[0].mxu0
    %336 = vmatprep.mubr.f32.mxu0 %v67
    %337 = vmatmul.mubr.f32.gmra.mrb[0].mxu0 %v66
    %v338 = vpop.f32.mrb[0].mxu0
    %v339 = vadd.f32 %v234, %v338
    %v340 = vpop.f32.mrb[0].mxu0
    %341 = vdwg.mxu0
    %v342 = vld [vmem:[%s2] sm:$0xff]
    %v343 = vld [vmem:[%s2 + $0x8] sm:$0xff]
    %v344 = vld [vmem:[%s2 + $0x10] sm:$0xff]
    %v345 = vld [vmem:[%s2 + $0x18] sm:$0xff]
    %v346 = vld [vmem:[%s2 + $0x20] sm:$0xff]
    %v347 = vld [vmem:[%s2 + $0x28] sm:$0xff]
    %v348 = vld [vmem:[%s2 + $0x30] sm:$0xff]
    %v349 = vld [vmem:[%s2 + $0x38] sm:$0xff]
    %v350 = vld [vmem:[%s3] sm:$0xff]
    %v351 = vld [vmem:[%s3 + $0x8] sm:$0xff]
    %v352 = vld [vmem:[%s3 + $0x10] sm:$0xff]
    %v353 = vld [vmem:[%s3 + $0x18] sm:$0xff]
    %v354 = vld [vmem:[%s3 + $0x20] sm:$0xff]
    %v355 = vld [vmem:[%s3 + $0x28] sm:$0xff]
    %v356 = vld [vmem:[%s3 + $0x30] sm:$0xff]
    %v357 = vld [vmem:[%s3 + $0x38] sm:$0xff]
    %358 = vadd.xlane.f32.xlu0 %v304
    %v359 = vpop.xlane.xlu0 %358
    %360 = vadd.xlane.f32.xlu0 %v309
    %v361 = vpop.xlane.xlu0 %360
    %362 = vadd.xlane.f32.xlu0 %v314
    %v363 = vpop.xlane.xlu0 %362
    %364 = vadd.xlane.f32.xlu0 %v319
    %v365 = vpop.xlane.xlu0 %364
    %366 = vadd.xlane.f32.xlu0 %v324
    %v367 = vpop.xlane.xlu0 %366
    %368 = vadd.xlane.f32.xlu0 %v329
    %v369 = vpop.xlane.xlu0 %368
    %370 = vadd.xlane.f32.xlu0 %v334
    %v371 = vpop.xlane.xlu0 %370
    %372 = vadd.xlane.f32.xlu0 %v339
    %v373 = vpop.xlane.xlu0 %372
    %v374 = vmul.f32 %v359, 0.0078125
    %v375 = vmul.f32 %v361, 0.0078125
    %v376 = vmul.f32 %v363, 0.0078125
    %v377 = vmul.f32 %v365, 0.0078125
    %v378 = vmul.f32 %v367, 0.0078125
    %v379 = vmul.f32 %v369, 0.0078125
    %v380 = vmul.f32 %v371, 0.0078125
    %v381 = vmul.f32 %v373, 0.0078125
    %v382 = vmul.f32 %v304, %v304
    %v383 = vmul.f32 %v309, %v309
    %v384 = vmul.f32 %v314, %v314
    %v385 = vmul.f32 %v319, %v319
    %v386 = vmul.f32 %v324, %v324
    %v387 = vmul.f32 %v329, %v329
    %v388 = vmul.f32 %v334, %v334
    %v389 = vmul.f32 %v339, %v339
    %390 = vadd.xlane.f32.xlu0 %v382
    %v391 = vpop.xlane.xlu0 %390
    %392 = vadd.xlane.f32.xlu0 %v383
    %v393 = vpop.xlane.xlu0 %392
    %394 = vadd.xlane.f32.xlu0 %v384
    %v395 = vpop.xlane.xlu0 %394
    %396 = vadd.xlane.f32.xlu0 %v385
    %v397 = vpop.xlane.xlu0 %396
    %398 = vadd.xlane.f32.xlu0 %v386
    %v399 = vpop.xlane.xlu0 %398
    %400 = vadd.xlane.f32.xlu0 %v387
    %v401 = vpop.xlane.xlu0 %400
    %402 = vadd.xlane.f32.xlu0 %v388
    %v403 = vpop.xlane.xlu0 %402
    %404 = vadd.xlane.f32.xlu0 %v389
    %v405 = vpop.xlane.xlu0 %404
    %v406 = vmul.f32 %v391, 0.0078125
    %v407 = vmul.f32 %v393, 0.0078125
    %v408 = vmul.f32 %v395, 0.0078125
    %v409 = vmul.f32 %v397, 0.0078125
    %v410 = vmul.f32 %v399, 0.0078125
    %v411 = vmul.f32 %v401, 0.0078125
    %v412 = vmul.f32 %v403, 0.0078125
    %v413 = vmul.f32 %v405, 0.0078125
    %v414 = vmul.f32 %v374, %v374
    %v415 = vmul.f32 %v375, %v375
    %v416 = vmul.f32 %v376, %v376
    %v417 = vmul.f32 %v377, %v377
    %v418 = vmul.f32 %v378, %v378
    %v419 = vmul.f32 %v379, %v379
    %v420 = vmul.f32 %v380, %v380
    %v421 = vmul.f32 %v381, %v381
    %v422 = vsub.f32 %v406, %v414
    %v423 = vsub.f32 %v407, %v415
    %v424 = vsub.f32 %v408, %v416
    %v425 = vsub.f32 %v409, %v417
    %v426 = vsub.f32 %v410, %v418
    %v427 = vsub.f32 %v411, %v419
    %v428 = vsub.f32 %v412, %v420
    %v429 = vsub.f32 %v413, %v421
    %v430 = vadd.f32 %v422, 1e-05
    %v431 = vadd.f32 %v423, 1e-05
    %v432 = vadd.f32 %v424, 1e-05
    %v433 = vadd.f32 %v425, 1e-05
    %v434 = vadd.f32 %v426, 1e-05
    %v435 = vadd.f32 %v427, 1e-05
    %v436 = vadd.f32 %v428, 1e-05
    %v437 = vadd.f32 %v429, 1e-05
    %v438 = vrsqrt.pop %v430
    %v439 = vrsqrt.pop %v431
    %v440 = vrsqrt.pop %v432
    %v441 = vrsqrt.pop %v433
    %v442 = vrsqrt.pop %v434
    %v443 = vrsqrt.pop %v435
    %v444 = vrsqrt.pop %v436
    %v445 = vrsqrt.pop %v437
    %v446 = vmul.f32 %v438, %v342
    %v447 = vmul.f32 %v439, %v343
    %v448 = vmul.f32 %v440, %v344
    %v449 = vmul.f32 %v441, %v345
    %v450 = vmul.f32 %v442, %v346
    %v451 = vmul.f32 %v443, %v347
    %v452 = vmul.f32 %v444, %v348
    %v453 = vmul.f32 %v445, %v349
    %v454 = vmul.f32 %v374, %v446
    %v455 = vmul.f32 %v375, %v447
    %v456 = vmul.f32 %v376, %v448
    %v457 = vmul.f32 %v377, %v449
    %v458 = vmul.f32 %v378, %v450
    %v459 = vmul.f32 %v379, %v451
    %v460 = vmul.f32 %v380, %v452
    %v461 = vmul.f32 %v381, %v453
    %v462 = vsub.f32 %v350, %v454
    %v463 = vsub.f32 %v351, %v455
    %v464 = vsub.f32 %v352, %v456
    %v465 = vsub.f32 %v353, %v457
    %v466 = vsub.f32 %v354, %v458
    %v467 = vsub.f32 %v355, %v459
    %v468 = vsub.f32 %v356, %v460
    %v469 = vsub.f32 %v357, %v461
    %471 = vset.pattern.permute.xlu0 0
    %472 = vperm.xlu0 %471, %v446
    %v473 = vpop.permute.xlu0 %472
    %476 = vset.pattern.permute.xlu0 0
    %477 = vperm.xlu0 %476, %v447
    %v478 = vpop.permute.xlu0 %477
    %481 = vset.pattern.permute.xlu0 0
    %482 = vperm.xlu0 %481, %v448
    %v483 = vpop.permute.xlu0 %482
    %486 = vset.pattern.permute.xlu0 0
    %487 = vperm.xlu0 %486, %v449
    %v488 = vpop.permute.xlu0 %487
    %491 = vset.pattern.permute.xlu0 0
    %492 = vperm.xlu0 %491, %v450
    %v493 = vpop.permute.xlu0 %492
    %496 = vset.pattern.permute.xlu0 0
    %497 = vperm.xlu0 %496, %v451
    %v498 = vpop.permute.xlu0 %497
    %501 = vset.pattern.permute.xlu0 0
    %502 = vperm.xlu0 %501, %v452
    %v503 = vpop.permute.xlu0 %502
    %506 = vset.pattern.permute.xlu0 0
    %507 = vperm.xlu0 %506, %v453
    %v508 = vpop.permute.xlu0 %507
    %v510 = vmul.f32 %v304, %v473
    %v511 = vmul.f32 %v309, %v478
    %v512 = vmul.f32 %v314, %v483
    %v513 = vmul.f32 %v319, %v488
    %v514 = vmul.f32 %v324, %v493
    %v515 = vmul.f32 %v329, %v498
    %v516 = vmul.f32 %v334, %v503
    %v517 = vmul.f32 %v339, %v508
    %519 = vset.pattern.permute.xlu0 0
    %520 = vperm.xlu0 %519, %v462
    %v521 = vpop.permute.xlu0 %520
    %524 = vset.pattern.permute.xlu0 0
    %525 = vperm.xlu0 %524, %v463
    %v526 = vpop.permute.xlu0 %525
    %529 = vset.pattern.permute.xlu0 0
    %530 = vperm.xlu0 %529, %v464
    %v531 = vpop.permute.xlu0 %530
    %534 = vset.pattern.permute.xlu0 0
    %535 = vperm.xlu0 %534, %v465
    %v536 = vpop.permute.xlu0 %535
    %539 = vset.pattern.permute.xlu0 0
    %540 = vperm.xlu0 %539, %v466
    %v541 = vpop.permute.xlu0 %540
    %544 = vset.pattern.permute.xlu0 0
    %545 = vperm.xlu0 %544, %v467
    %v546 = vpop.permute.xlu0 %545
    %549 = vset.pattern.permute.xlu0 0
    %550 = vperm.xlu0 %549, %v468
    %v551 = vpop.permute.xlu0 %550
    %554 = vset.pattern.permute.xlu0 0
    %555 = vperm.xlu0 %554, %v469
    %v556 = vpop.permute.xlu0 %555
    %v558 = vadd.f32 %v510, %v521
    %v559 = vadd.f32 %v511, %v526
    %v560 = vadd.f32 %v512, %v531
    %v561 = vadd.f32 %v513, %v536
    %v562 = vadd.f32 %v514, %v541
    %v563 = vadd.f32 %v515, %v546
    %v564 = vadd.f32 %v516, %v551
    %v565 = vadd.f32 %v517, %v556
    %vm566 = vcmp.ge.f32.partialorder %v558, 0.0
    %vm567 = vcmp.ge.f32.partialorder %v559, 0.0
    %vm568 = vcmp.ge.f32.partialorder %v560, 0.0
    %vm569 = vcmp.ge.f32.partialorder %v561, 0.0
    %vm570 = vcmp.ge.f32.partialorder %v562, 0.0
    %vm571 = vcmp.ge.f32.partialorder %v563, 0.0
    %vm572 = vcmp.ge.f32.partialorder %v564, 0.0
    %vm573 = vcmp.ge.f32.partialorder %v565, 0.0
    %v574 = vmul.f32 %v558, 0.2
    %v575 = vmul.f32 %v559, 0.2
    %v576 = vmul.f32 %v560, 0.2
    %v577 = vmul.f32 %v561, 0.2
    %v578 = vmul.f32 %v562, 0.2
    %v579 = vmul.f32 %v563, 0.2
    %v580 = vmul.f32 %v564, 0.2
    %v581 = vmul.f32 %v565, 0.2
    %v582 = vsel %vm566, %v558, %v574
    %v583 = vsel %vm567, %v559, %v575
    %v584 = vsel %vm568, %v560, %v576
    %v585 = vsel %vm569, %v561, %v577
    %v586 = vsel %vm570, %v562, %v578
    %v587 = vsel %vm571, %v563, %v579
    %v588 = vsel %vm572, %v564, %v580
    %v589 = vsel %vm573, %v565, %v581
    %v590 = vld [vmem:[%s5] sm:$0xff]
    %v591 = vld [vmem:[%s5 + $0x8] sm:$0xff]
    %v592 = vld [vmem:[%s5 + $0x10] sm:$0xff]
    %v593 = vld [vmem:[%s5 + $0x18] sm:$0xff]
    %v594 = vld [vmem:[%s5 + $0x20] sm:$0xff]
    %v595 = vld [vmem:[%s5 + $0x28] sm:$0xff]
    %v596 = vld [vmem:[%s5 + $0x30] sm:$0xff]
    %v597 = vld [vmem:[%s5 + $0x38] sm:$0xff]
    %v598 = vld [vmem:[%s5 + $0x40] sm:$0xff]
    %v599 = vld [vmem:[%s5 + $0x48] sm:$0xff]
    %v600 = vld [vmem:[%s5 + $0x50] sm:$0xff]
    %v601 = vld [vmem:[%s5 + $0x58] sm:$0xff]
    %v602 = vld [vmem:[%s5 + $0x60] sm:$0xff]
    %v603 = vld [vmem:[%s5 + $0x68] sm:$0xff]
    %v604 = vld [vmem:[%s5 + $0x70] sm:$0xff]
    %v605 = vld [vmem:[%s5 + $0x78] sm:$0xff]
    %606 = vmatprep.subr.mxu0 0.0
    %607 = vmatpush1.msra.mxu0 %v590
    %608 = vmatprep.subr.mxu0 0.0
    %609 = vmatpush1.msra.mxu0 %v591
    %610 = vmatprep.subr.mxu0 0.0
    %611 = vmatpush1.msra.mxu0 %v592
    %612 = vmatprep.subr.mxu0 0.0
    %613 = vmatpush1.msra.mxu0 %v593
    %614 = vmatprep.subr.mxu0 0.0
    %615 = vmatpush1.msra.mxu0 %v594
    %616 = vmatprep.subr.mxu0 0.0
    %617 = vmatpush1.msra.mxu0 %v595
    %618 = vmatprep.subr.mxu0 0.0
    %619 = vmatpush1.msra.mxu0 %v596
    %620 = vmatprep.subr.mxu0 0.0
    %621 = vmatpush1.msra.mxu0 %v597
    %622 = vmatprep.subr.mxu0 0.0
    %623 = vmatpush1.msra.mxu0 %v598
    %624 = vmatprep.subr.mxu0 0.0
    %625 = vmatpush1.msra.mxu0 %v599
    %626 = vmatprep.subr.mxu0 0.0
    %627 = vmatpush1.msra.mxu0 %v600
    %628 = vmatprep.subr.mxu0 0.0
    %629 = vmatpush1.msra.mxu0 %v601
    %630 = vmatprep.subr.mxu0 0.0
    %631 = vmatpush1.msra.mxu0 %v602
    %632 = vmatprep.subr.mxu0 0.0
    %633 = vmatpush1.msra.mxu0 %v603
    %634 = vmatprep.subr.mxu0 0.0
    %635 = vmatpush1.msra.mxu0 %v604
    %636 = vmatprep.subr.mxu0 0.0
    %637 = vmatpush1.msra.mxu0 %v605
    %638 = vmatprep.subr.mxu0 0.0
    %639 = vmatpush1.msra.mxu0 0.0
    %640 = vmatprep.subr.mxu0 0.0
    %641 = vmatpush1.msra.mxu0 0.0
    %642 = vmatprep.subr.mxu0 0.0
    %643 = vmatpush1.msra.mxu0 0.0
    %644 = vmatprep.subr.mxu0 0.0
    %645 = vmatpush1.msra.mxu0 0.0
    %646 = vmatprep.subr.mxu0 0.0
    %647 = vmatpush1.msra.mxu0 0.0
    %648 = vmatprep.subr.mxu0 0.0
    %649 = vmatpush1.msra.mxu0 0.0
    %650 = vmatprep.subr.mxu0 0.0
    %651 = vmatpush1.msra.mxu0 0.0
    %652 = vmatprep.subr.mxu0 0.0
    %653 = vmatpush1.msra.mxu0 0.0
    %654 = vmatprep.subr.mxu0 0.0
    %655 = vmatpush1.msra.mxu0 0.0
    %656 = vmatprep.subr.mxu0 0.0
    %657 = vmatpush1.msra.mxu0 0.0
    %658 = vmatprep.subr.mxu0 0.0
    %659 = vmatpush1.msra.mxu0 0.0
    %660 = vmatprep.subr.mxu0 0.0
    %661 = vmatpush1.msra.mxu0 0.0
    %662 = vmatprep.subr.mxu0 0.0
    %663 = vmatpush1.msra.mxu0 0.0
    %664 = vmatprep.subr.mxu0 0.0
    %665 = vmatpush1.msra.mxu0 0.0
    %666 = vmatprep.subr.mxu0 0.0
    %667 = vmatpush1.msra.mxu0 0.0
    %668 = vmatprep.subr.mxu0 0.0
    %669 = vmatpush1.msra.mxu0 0.0
    %670 = vmatprep.mubr.f32.mxu0 0.0
    %671 = vmatmul.mubr.f32.gmra.mrb[0].mxu0 %v582
    %v672 = vpop.f32.mrb[0].mxu0
    %v673 = vadd.f32 0.0, %v672
    %v674 = vpop.f32.mrb[0].mxu0
    %675 = vmatprep.mubr.f32.mxu0 0.0
    %676 = vmatmul.mubr.f32.gmra.mrb[0].mxu0 %v583
    %v677 = vpop.f32.mrb[0].mxu0
    %v678 = vadd.f32 0.0, %v677
    %v679 = vpop.f32.mrb[0].mxu0
    %680 = vmatprep.mubr.f32.mxu0 0.0
    %681 = vmatmul.mubr.f32.gmra.mrb[0].mxu0 %v584
    %v682 = vpop.f32.mrb[0].mxu0
    %v683 = vadd.f32 0.0, %v682
    %v684 = vpop.f32.mrb[0].mxu0
    %685 = vmatprep.mubr.f32.mxu0 0.0
    %686 = vmatmul.mubr.f32.gmra.mrb[0].mxu0 %v585
    %v687 = vpop.f32.mrb[0].mxu0
    %v688 = vadd.f32 0.0, %v687
    %v689 = vpop.f32.mrb[0].mxu0
    %690 = vmatprep.mubr.f32.mxu0 0.0
    %691 = vmatmul.mubr.f32.gmra.mrb[0].mxu0 %v586
    %v692 = vpop.f32.mrb[0].mxu0
    %v693 = vadd.f32 0.0, %v692
    %v694 = vpop.f32.mrb[0].mxu0
    %695 = vmatprep.mubr.f32.mxu0 0.0
    %696 = vmatmul.mubr.f32.gmra.mrb[0].mxu0 %v587
    %v697 = vpop.f32.mrb[0].mxu0
    %v698 = vadd.f32 0.0, %v697
    %v699 = vpop.f32.mrb[0].mxu0
    %700 = vmatprep.mubr.f32.mxu0 0.0
    %701 = vmatmul.mubr.f32.gmra.mrb[0].mxu0 %v588
    %v702 = vpop.f32.mrb[0].mxu0
    %v703 = vadd.f32 0.0, %v702
    %v704 = vpop.f32.mrb[0].mxu0
    %705 = vmatprep.mubr.f32.mxu0 0.0
    %706 = vmatmul.mubr.f32.gmra.mrb[0].mxu0 %v589
    %v707 = vpop.f32.mrb[0].mxu0
    %v708 = vadd.f32 0.0, %v707
    %v709 = vpop.f32.mrb[0].mxu0
    %710 = vdwg.mxu0
    %v711 = vld [vmem:[%s4] sm:$0xff]
    %v712 = vld [vmem:[%s4 + $0x8] sm:$0xff]
    %v713 = vld [vmem:[%s4 + $0x10] sm:$0xff]
    %v714 = vld [vmem:[%s4 + $0x18] sm:$0xff]
    %v715 = vld [vmem:[%s4 + $0x20] sm:$0xff]
    %v716 = vld [vmem:[%s4 + $0x28] sm:$0xff]
    %v717 = vld [vmem:[%s4 + $0x30] sm:$0xff]
    %v718 = vld [vmem:[%s4 + $0x38] sm:$0xff]
    %v719 = vld [vmem:[%s4 + $0x40] sm:$0xff]
    %v720 = vld [vmem:[%s4 + $0x48] sm:$0xff]
    %v721 = vld [vmem:[%s4 + $0x50] sm:$0xff]
    %v722 = vld [vmem:[%s4 + $0x58] sm:$0xff]
    %v723 = vld [vmem:[%s4 + $0x60] sm:$0xff]
    %v724 = vld [vmem:[%s4 + $0x68] sm:$0xff]
    %v725 = vld [vmem:[%s4 + $0x70] sm:$0xff]
    %v726 = vld [vmem:[%s4 + $0x78] sm:$0xff]
    %s727 = scalar_lea.vmem %s5, 128
    %v728 = vld [vmem:[%s727] sm:$0xff]
    %v729 = vld [vmem:[%s727 + $0x8] sm:$0xff]
    %v730 = vld [vmem:[%s727 + $0x10] sm:$0xff]
    %v731 = vld [vmem:[%s727 + $0x18] sm:$0xff]
    %v732 = vld [vmem:[%s727 + $0x20] sm:$0xff]
    %v733 = vld [vmem:[%s727 + $0x28] sm:$0xff]
    %v734 = vld [vmem:[%s727 + $0x30] sm:$0xff]
    %v735 = vld [vmem:[%s727 + $0x38] sm:$0xff]
    %v736 = vld [vmem:[%s727 + $0x40] sm:$0xff]
    %v737 = vld [vmem:[%s727 + $0x48] sm:$0xff]
    %v738 = vld [vmem:[%s727 + $0x50] sm:$0xff]
    %v739 = vld [vmem:[%s727 + $0x58] sm:$0xff]
    %v740 = vld [vmem:[%s727 + $0x60] sm:$0xff]
    %v741 = vld [vmem:[%s727 + $0x68] sm:$0xff]
    %v742 = vld [vmem:[%s727 + $0x70] sm:$0xff]
    %v743 = vld [vmem:[%s727 + $0x78] sm:$0xff]
    %744 = vmatprep.subr.mxu0 0.0
    %745 = vmatpush1.msra.mxu0 %v728
    %746 = vmatprep.subr.mxu0 0.0
    %747 = vmatpush1.msra.mxu0 %v729
    %748 = vmatprep.subr.mxu0 0.0
    %749 = vmatpush1.msra.mxu0 %v730
    %750 = vmatprep.subr.mxu0 0.0
    %751 = vmatpush1.msra.mxu0 %v731
    %752 = vmatprep.subr.mxu0 0.0
    %753 = vmatpush1.msra.mxu0 %v732
    %754 = vmatprep.subr.mxu0 0.0
    %755 = vmatpush1.msra.mxu0 %v733
    %756 = vmatprep.subr.mxu0 0.0
    %757 = vmatpush1.msra.mxu0 %v734
    %758 = vmatprep.subr.mxu0 0.0
    %759 = vmatpush1.msra.mxu0 %v735
    %760 = vmatprep.subr.mxu0 0.0
    %761 = vmatpush1.msra.mxu0 %v736
    %762 = vmatprep.subr.mxu0 0.0
    %763 = vmatpush1.msra.mxu0 %v737
    %764 = vmatprep.subr.mxu0 0.0
    %765 = vmatpush1.msra.mxu0 %v738
    %766 = vmatprep.subr.mxu0 0.0
    %767 = vmatpush1.msra.mxu0 %v739
    %768 = vmatprep.subr.mxu0 0.0
    %769 = vmatpush1.msra.mxu0 %v740
    %770 = vmatprep.subr.mxu0 0.0
    %771 = vmatpush1.msra.mxu0 %v741
    %772 = vmatprep.subr.mxu0 0.0
    %773 = vmatpush1.msra.mxu0 %v742
    %774 = vmatprep.subr.mxu0 0.0
    %775 = vmatpush1.msra.mxu0 %v743
    %776 = vmatprep.subr.mxu0 0.0
    %777 = vmatpush1.msra.mxu0 0.0
    %778 = vmatprep.subr.mxu0 0.0
    %779 = vmatpush1.msra.mxu0 0.0
    %780 = vmatprep.subr.mxu0 0.0
    %781 = vmatpush1.msra.mxu0 0.0
    %782 = vmatprep.subr.mxu0 0.0
    %783 = vmatpush1.msra.mxu0 0.0
    %784 = vmatprep.subr.mxu0 0.0
    %785 = vmatpush1.msra.mxu0 0.0
    %786 = vmatprep.subr.mxu0 0.0
    %787 = vmatpush1.msra.mxu0 0.0
    %788 = vmatprep.subr.mxu0 0.0
    %789 = vmatpush1.msra.mxu0 0.0
    %790 = vmatprep.subr.mxu0 0.0
    %791 = vmatpush1.msra.mxu0 0.0
    %792 = vmatprep.subr.mxu0 0.0
    %793 = vmatpush1.msra.mxu0 0.0
    %794 = vmatprep.subr.mxu0 0.0
    %795 = vmatpush1.msra.mxu0 0.0
    %796 = vmatprep.subr.mxu0 0.0
    %797 = vmatpush1.msra.mxu0 0.0
    %798 = vmatprep.subr.mxu0 0.0
    %799 = vmatpush1.msra.mxu0 0.0
    %800 = vmatprep.subr.mxu0 0.0
    %801 = vmatpush1.msra.mxu0 0.0
    %802 = vmatprep.subr.mxu0 0.0
    %803 = vmatpush1.msra.mxu0 0.0
    %804 = vmatprep.subr.mxu0 0.0
    %805 = vmatpush1.msra.mxu0 0.0
    %806 = vmatprep.subr.mxu0 0.0
    %807 = vmatpush1.msra.mxu0 0.0
    %808 = vmatprep.mubr.f32.mxu0 0.0
    %809 = vmatmul.mubr.f32.gmra.mrb[0].mxu0 %v582
    %v810 = vpop.f32.mrb[0].mxu0
    %v811 = vadd.f32 0.0, %v810
    %v812 = vpop.f32.mrb[0].mxu0
    %813 = vmatprep.mubr.f32.mxu0 0.0
    %814 = vmatmul.mubr.f32.gmra.mrb[0].mxu0 %v583
    %v815 = vpop.f32.mrb[0].mxu0
    %v816 = vadd.f32 0.0, %v815
    %v817 = vpop.f32.mrb[0].mxu0
    %818 = vmatprep.mubr.f32.mxu0 0.0
    %819 = vmatmul.mubr.f32.gmra.mrb[0].mxu0 %v584
    %v820 = vpop.f32.mrb[0].mxu0
    %v821 = vadd.f32 0.0, %v820
    %v822 = vpop.f32.mrb[0].mxu0
    %823 = vmatprep.mubr.f32.mxu0 0.0
    %824 = vmatmul.mubr.f32.gmra.mrb[0].mxu0 %v585
    %v825 = vpop.f32.mrb[0].mxu0
    %v826 = vadd.f32 0.0, %v825
    %v827 = vpop.f32.mrb[0].mxu0
    %828 = vmatprep.mubr.f32.mxu0 0.0
    %829 = vmatmul.mubr.f32.gmra.mrb[0].mxu0 %v586
    %v830 = vpop.f32.mrb[0].mxu0
    %v831 = vadd.f32 0.0, %v830
    %v832 = vpop.f32.mrb[0].mxu0
    %833 = vmatprep.mubr.f32.mxu0 0.0
    %834 = vmatmul.mubr.f32.gmra.mrb[0].mxu0 %v587
    %v835 = vpop.f32.mrb[0].mxu0
    %v836 = vadd.f32 0.0, %v835
    %v837 = vpop.f32.mrb[0].mxu0
    %838 = vmatprep.mubr.f32.mxu0 0.0
    %839 = vmatmul.mubr.f32.gmra.mrb[0].mxu0 %v588
    %v840 = vpop.f32.mrb[0].mxu0
    %v841 = vadd.f32 0.0, %v840
    %v842 = vpop.f32.mrb[0].mxu0
    %843 = vmatprep.mubr.f32.mxu0 0.0
    %844 = vmatmul.mubr.f32.gmra.mrb[0].mxu0 %v589
    %v845 = vpop.f32.mrb[0].mxu0
    %v846 = vadd.f32 0.0, %v845
    %v847 = vpop.f32.mrb[0].mxu0
    %848 = vdwg.mxu0
    %s849 = scalar_lea.vmem %s4, 128
    %v850 = vld [vmem:[%s849] sm:$0xff]
    %v851 = vld [vmem:[%s849 + $0x8] sm:$0xff]
    %v852 = vld [vmem:[%s849 + $0x10] sm:$0xff]
    %v853 = vld [vmem:[%s849 + $0x18] sm:$0xff]
    %v854 = vld [vmem:[%s849 + $0x20] sm:$0xff]
    %v855 = vld [vmem:[%s849 + $0x28] sm:$0xff]
    %v856 = vld [vmem:[%s849 + $0x30] sm:$0xff]
    %v857 = vld [vmem:[%s849 + $0x38] sm:$0xff]
    %v858 = vld [vmem:[%s849 + $0x40] sm:$0xff]
    %v859 = vld [vmem:[%s849 + $0x48] sm:$0xff]
    %v860 = vld [vmem:[%s849 + $0x50] sm:$0xff]
    %v861 = vld [vmem:[%s849 + $0x58] sm:$0xff]
    %v862 = vld [vmem:[%s849 + $0x60] sm:$0xff]
    %v863 = vld [vmem:[%s849 + $0x68] sm:$0xff]
    %v864 = vld [vmem:[%s849 + $0x70] sm:$0xff]
    %v865 = vld [vmem:[%s849 + $0x78] sm:$0xff]
    %vm866 = vcmask 523264
    %v868 = vsel %vm866, %v850, 0
    %v871 = vsel %vm866, %v851, 0
    %v874 = vsel %vm866, %v852, 0
    %v877 = vsel %vm866, %v853, 0
    %v880 = vsel %vm866, %v854, 0
    %v883 = vsel %vm866, %v855, 0
    %v886 = vsel %vm866, %v856, 0
    %v889 = vsel %vm866, %v857, 0
    %v892 = vsel %vm866, %v858, 0
    %v895 = vsel %vm866, %v859, 0
    %v898 = vsel %vm866, %v860, 0
    %v901 = vsel %vm866, %v861, 0
    %v904 = vsel %vm866, %v862, 0
    %v907 = vsel %vm866, %v863, 0
    %v910 = vsel %vm866, %v864, 0
    %v913 = vsel %vm866, %v865, 0
    %915 = vmatprep.subr.mxu0 0.0
    %916 = vmatpush1.msra.mxu0 %v811
    %917 = vmatprep.subr.mxu0 0.0
    %918 = vmatpush1.msra.mxu0 %v816
    %919 = vmatprep.subr.mxu0 0.0
    %920 = vmatpush1.msra.mxu0 %v821
    %921 = vmatprep.subr.mxu0 0.0
    %922 = vmatpush1.msra.mxu0 %v826
    %923 = vmatprep.subr.mxu0 0.0
    %924 = vmatpush1.msra.mxu0 %v831
    %925 = vmatprep.subr.mxu0 0.0
    %926 = vmatpush1.msra.mxu0 %v836
    %927 = vmatprep.subr.mxu0 0.0
    %928 = vmatpush1.msra.mxu0 %v841
    %929 = vmatprep.subr.mxu0 0.0
    %930 = vmatpush1.msra.mxu0 %v846
    %931 = vmatprep.subr.mxu0 0.0
    %932 = vmatpush1.msra.mxu0 0.0
    %933 = vmatprep.subr.mxu0 0.0
    %934 = vmatpush1.msra.mxu0 0.0
    %935 = vmatprep.subr.mxu0 0.0
    %936 = vmatpush1.msra.mxu0 0.0
    %937 = vmatprep.subr.mxu0 0.0
    %938 = vmatpush1.msra.mxu0 0.0
    %939 = vmatprep.subr.mxu0 0.0
    %940 = vmatpush1.msra.mxu0 0.0
    %941 = vmatprep.subr.mxu0 0.0
    %942 = vmatpush1.msra.mxu0 0.0
    %943 = vmatprep.subr.mxu0 0.0
    %944 = vmatpush1.msra.mxu0 0.0
    %945 = vmatprep.subr.mxu0 0.0
    %946 = vmatpush1.msra.mxu0 0.0
    %947 = vmatprep.subr.mxu0 0.0
    %948 = vmatpush1.msra.mxu0 0.0
    %949 = vmatprep.subr.mxu0 0.0
    %950 = vmatpush1.msra.mxu0 0.0
    %951 = vmatprep.subr.mxu0 0.0
    %952 = vmatpush1.msra.mxu0 0.0
    %953 = vmatprep.subr.mxu0 0.0
    %954 = vmatpush1.msra.mxu0 0.0
    %955 = vmatprep.subr.mxu0 0.0
    %956 = vmatpush1.msra.mxu0 0.0
    %957 = vmatprep.subr.mxu0 0.0
    %958 = vmatpush1.msra.mxu0 0.0
    %959 = vmatprep.subr.mxu0 0.0
    %960 = vmatpush1.msra.mxu0 0.0
    %961 = vmatprep.subr.mxu0 0.0
    %962 = vmatpush1.msra.mxu0 0.0
    %963 = vmatprep.subr.mxu0 0.0
    %964 = vmatpush1.msra.mxu0 0.0
    %965 = vmatprep.subr.mxu0 0.0
    %966 = vmatpush1.msra.mxu0 0.0
    %967 = vmatprep.subr.mxu0 0.0
    %968 = vmatpush1.msra.mxu0 0.0
    %969 = vmatprep.subr.mxu0 0.0
    %970 = vmatpush1.msra.mxu0 0.0
    %971 = vmatprep.subr.mxu0 0.0
    %972 = vmatpush1.msra.mxu0 0.0
    %973 = vmatprep.subr.mxu0 0.0
    %974 = vmatpush1.msra.mxu0 0.0
    %975 = vmatprep.subr.mxu0 0.0
    %976 = vmatpush1.msra.mxu0 0.0
    %977 = vmatprep.subr.mxu0 0.0
    %978 = vmatpush1.msra.mxu0 0.0
    %979 = vmatprep.mubr.f32.mxu0 0.0
    %980 = vmatmul.mubr.f32.gmra.mrb[0].mxu0 %v868
    %v981 = vpop.f32.mrb[0].mxu0
    %v982 = vadd.f32 0.0, %v981
    %v983 = vpop.f32.mrb[0].mxu0
    %984 = vmatprep.mubr.f32.mxu0 0.0
    %985 = vmatmul.mubr.f32.gmra.mrb[0].mxu0 %v871
    %v986 = vpop.f32.mrb[0].mxu0
    %v987 = vadd.f32 0.0, %v986
    %v988 = vpop.f32.mrb[0].mxu0
    %989 = vmatprep.mubr.f32.mxu0 0.0
    %990 = vmatmul.mubr.f32.gmra.mrb[0].mxu0 %v874
    %v991 = vpop.f32.mrb[0].mxu0
    %v992 = vadd.f32 0.0, %v991
    %v993 = vpop.f32.mrb[0].mxu0
    %994 = vmatprep.mubr.f32.mxu0 0.0
    %995 = vmatmul.mubr.f32.gmra.mrb[0].mxu0 %v877
    %v996 = vpop.f32.mrb[0].mxu0
    %v997 = vadd.f32 0.0, %v996
    %v998 = vpop.f32.mrb[0].mxu0
    %999 = vmatprep.mubr.f32.mxu0 0.0
    %1000 = vmatmul.mubr.f32.gmra.mrb[0].mxu0 %v880
    %v1001 = vpop.f32.mrb[0].mxu0
    %v1002 = vadd.f32 0.0, %v1001
    %v1003 = vpop.f32.mrb[0].mxu0
    %1004 = vmatprep.mubr.f32.mxu0 0.0
    %1005 = vmatmul.mubr.f32.gmra.mrb[0].mxu0 %v883
    %v1006 = vpop.f32.mrb[0].mxu0
    %v1007 = vadd.f32 0.0, %v1006
    %v1008 = vpop.f32.mrb[0].mxu0
    %1009 = vmatprep.mubr.f32.mxu0 0.0
    %1010 = vmatmul.mubr.f32.gmra.mrb[0].mxu0 %v886
    %v1011 = vpop.f32.mrb[0].mxu0
    %v1012 = vadd.f32 0.0, %v1011
    %v1013 = vpop.f32.mrb[0].mxu0
    %1014 = vmatprep.mubr.f32.mxu0 0.0
    %1015 = vmatmul.mubr.f32.gmra.mrb[0].mxu0 %v889
    %v1016 = vpop.f32.mrb[0].mxu0
    %v1017 = vadd.f32 0.0, %v1016
    %v1018 = vpop.f32.mrb[0].mxu0
    %1019 = vmatprep.mubr.f32.mxu0 0.0
    %1020 = vmatmul.mubr.f32.gmra.mrb[0].mxu0 %v892
    %v1021 = vpop.f32.mrb[0].mxu0
    %v1022 = vadd.f32 0.0, %v1021
    %v1023 = vpop.f32.mrb[0].mxu0
    %1024 = vmatprep.mubr.f32.mxu0 0.0
    %1025 = vmatmul.mubr.f32.gmra.mrb[0].mxu0 %v895
    %v1026 = vpop.f32.mrb[0].mxu0
    %v1027 = vadd.f32 0.0, %v1026
    %v1028 = vpop.f32.mrb[0].mxu0
    %1029 = vmatprep.mubr.f32.mxu0 0.0
    %1030 = vmatmul.mubr.f32.gmra.mrb[0].mxu0 %v898
    %v1031 = vpop.f32.mrb[0].mxu0
    %v1032 = vadd.f32 0.0, %v1031
    %v1033 = vpop.f32.mrb[0].mxu0
    %1034 = vmatprep.mubr.f32.mxu0 0.0
    %1035 = vmatmul.mubr.f32.gmra.mrb[0].mxu0 %v901
    %v1036 = vpop.f32.mrb[0].mxu0
    %v1037 = vadd.f32 0.0, %v1036
    %v1038 = vpop.f32.mrb[0].mxu0
    %1039 = vmatprep.mubr.f32.mxu0 0.0
    %1040 = vmatmul.mubr.f32.gmra.mrb[0].mxu0 %v904
    %v1041 = vpop.f32.mrb[0].mxu0
    %v1042 = vadd.f32 0.0, %v1041
    %v1043 = vpop.f32.mrb[0].mxu0
    %1044 = vmatprep.mubr.f32.mxu0 0.0
    %1045 = vmatmul.mubr.f32.gmra.mrb[0].mxu0 %v907
    %v1046 = vpop.f32.mrb[0].mxu0
    %v1047 = vadd.f32 0.0, %v1046
    %v1048 = vpop.f32.mrb[0].mxu0
    %1049 = vmatprep.mubr.f32.mxu0 0.0
    %1050 = vmatmul.mubr.f32.gmra.mrb[0].mxu0 %v910
    %v1051 = vpop.f32.mrb[0].mxu0
    %v1052 = vadd.f32 0.0, %v1051
    %v1053 = vpop.f32.mrb[0].mxu0
    %1054 = vmatprep.mubr.f32.mxu0 0.0
    %1055 = vmatmul.mubr.f32.gmra.mrb[0].mxu0 %v913
    %v1056 = vpop.f32.mrb[0].mxu0
    %v1057 = vadd.f32 0.0, %v1056
    %v1058 = vpop.f32.mrb[0].mxu0
    %1059 = vdwg.mxu0
    %v1061 = vsel %vm866, %v711, 0
    %v1064 = vsel %vm866, %v712, 0
    %v1067 = vsel %vm866, %v713, 0
    %v1070 = vsel %vm866, %v714, 0
    %v1073 = vsel %vm866, %v715, 0
    %v1076 = vsel %vm866, %v716, 0
    %v1079 = vsel %vm866, %v717, 0
    %v1082 = vsel %vm866, %v718, 0
    %v1085 = vsel %vm866, %v719, 0
    %v1088 = vsel %vm866, %v720, 0
    %v1091 = vsel %vm866, %v721, 0
    %v1094 = vsel %vm866, %v722, 0
    %v1097 = vsel %vm866, %v723, 0
    %v1100 = vsel %vm866, %v724, 0
    %v1103 = vsel %vm866, %v725, 0
    %v1106 = vsel %vm866, %v726, 0
    %1108 = vmatprep.subr.mxu0 0.0
    %1109 = vmatpush1.msra.mxu0 %v673
    %1110 = vmatprep.subr.mxu0 0.0
    %1111 = vmatpush1.msra.mxu0 %v678
    %1112 = vmatprep.subr.mxu0 0.0
    %1113 = vmatpush1.msra.mxu0 %v683
    %1114 = vmatprep.subr.mxu0 0.0
    %1115 = vmatpush1.msra.mxu0 %v688
    %1116 = vmatprep.subr.mxu0 0.0
    %1117 = vmatpush1.msra.mxu0 %v693
    %1118 = vmatprep.subr.mxu0 0.0
    %1119 = vmatpush1.msra.mxu0 %v698
    %1120 = vmatprep.subr.mxu0 0.0
    %1121 = vmatpush1.msra.mxu0 %v703
    %1122 = vmatprep.subr.mxu0 0.0
    %1123 = vmatpush1.msra.mxu0 %v708
    %1124 = vmatprep.subr.mxu0 0.0
    %1125 = vmatpush1.msra.mxu0 0.0
    %1126 = vmatprep.subr.mxu0 0.0
    %1127 = vmatpush1.msra.mxu0 0.0
    %1128 = vmatprep.subr.mxu0 0.0
    %1129 = vmatpush1.msra.mxu0 0.0
    %1130 = vmatprep.subr.mxu0 0.0
    %1131 = vmatpush1.msra.mxu0 0.0
    %1132 = vmatprep.subr.mxu0 0.0
    %1133 = vmatpush1.msra.mxu0 0.0
    %1134 = vmatprep.subr.mxu0 0.0
    %1135 = vmatpush1.msra.mxu0 0.0
    %1136 = vmatprep.subr.mxu0 0.0
    %1137 = vmatpush1.msra.mxu0 0.0
    %1138 = vmatprep.subr.mxu0 0.0
    %1139 = vmatpush1.msra.mxu0 0.0
    %1140 = vmatprep.subr.mxu0 0.0
    %1141 = vmatpush1.msra.mxu0 0.0
    %1142 = vmatprep.subr.mxu0 0.0
    %1143 = vmatpush1.msra.mxu0 0.0
    %1144 = vmatprep.subr.mxu0 0.0
    %1145 = vmatpush1.msra.mxu0 0.0
    %1146 = vmatprep.subr.mxu0 0.0
    %1147 = vmatpush1.msra.mxu0 0.0
    %1148 = vmatprep.subr.mxu0 0.0
    %1149 = vmatpush1.msra.mxu0 0.0
    %1150 = vmatprep.subr.mxu0 0.0
    %1151 = vmatpush1.msra.mxu0 0.0
    %1152 = vmatprep.subr.mxu0 0.0
    %1153 = vmatpush1.msra.mxu0 0.0
    %1154 = vmatprep.subr.mxu0 0.0
    %1155 = vmatpush1.msra.mxu0 0.0
    %1156 = vmatprep.subr.mxu0 0.0
    %1157 = vmatpush1.msra.mxu0 0.0
    %1158 = vmatprep.subr.mxu0 0.0
    %1159 = vmatpush1.msra.mxu0 0.0
    %1160 = vmatprep.subr.mxu0 0.0
    %1161 = vmatpush1.msra.mxu0 0.0
    %1162 = vmatprep.subr.mxu0 0.0
    %1163 = vmatpush1.msra.mxu0 0.0
    %1164 = vmatprep.subr.mxu0 0.0
    %1165 = vmatpush1.msra.mxu0 0.0
    %1166 = vmatprep.subr.mxu0 0.0
    %1167 = vmatpush1.msra.mxu0 0.0
    %1168 = vmatprep.subr.mxu0 0.0
    %1169 = vmatpush1.msra.mxu0 0.0
    %1170 = vmatprep.subr.mxu0 0.0
    %1171 = vmatpush1.msra.mxu0 0.0
    %1172 = vmatprep.mubr.f32.mxu0 0.0
    %1173 = vmatmul.mubr.f32.gmra.mrb[0].mxu0 %v1061
    %v1174 = vpop.f32.mrb[0].mxu0
    %v1175 = vadd.f32 %v982, %v1174
    %v1176 = vpop.f32.mrb[0].mxu0
    %1177 = vmatprep.mubr.f32.mxu0 0.0
    %1178 = vmatmul.mubr.f32.gmra.mrb[0].mxu0 %v1064
    %v1179 = vpop.f32.mrb[0].mxu0
    %v1180 = vadd.f32 %v987, %v1179
    %v1181 = vpop.f32.mrb[0].mxu0
    %1182 = vmatprep.mubr.f32.mxu0 0.0
    %1183 = vmatmul.mubr.f32.gmra.mrb[0].mxu0 %v1067
    %v1184 = vpop.f32.mrb[0].mxu0
    %v1185 = vadd.f32 %v992, %v1184
    %v1186 = vpop.f32.mrb[0].mxu0
    %1187 = vmatprep.mubr.f32.mxu0 0.0
    %1188 = vmatmul.mubr.f32.gmra.mrb[0].mxu0 %v1070
    %v1189 = vpop.f32.mrb[0].mxu0
    %v1190 = vadd.f32 %v997, %v1189
    %v1191 = vpop.f32.mrb[0].mxu0
    %1192 = vmatprep.mubr.f32.mxu0 0.0
    %1193 = vmatmul.mubr.f32.gmra.mrb[0].mxu0 %v1073
    %v1194 = vpop.f32.mrb[0].mxu0
    %v1195 = vadd.f32 %v1002, %v1194
    %v1196 = vpop.f32.mrb[0].mxu0
    %1197 = vmatprep.mubr.f32.mxu0 0.0
    %1198 = vmatmul.mubr.f32.gmra.mrb[0].mxu0 %v1076
    %v1199 = vpop.f32.mrb[0].mxu0
    %v1200 = vadd.f32 %v1007, %v1199
    %v1201 = vpop.f32.mrb[0].mxu0
    %1202 = vmatprep.mubr.f32.mxu0 0.0
    %1203 = vmatmul.mubr.f32.gmra.mrb[0].mxu0 %v1079
    %v1204 = vpop.f32.mrb[0].mxu0
    %v1205 = vadd.f32 %v1012, %v1204
    %v1206 = vpop.f32.mrb[0].mxu0
    %1207 = vmatprep.mubr.f32.mxu0 0.0
    %1208 = vmatmul.mubr.f32.gmra.mrb[0].mxu0 %v1082
    %v1209 = vpop.f32.mrb[0].mxu0
    %v1210 = vadd.f32 %v1017, %v1209
    %v1211 = vpop.f32.mrb[0].mxu0
    %1212 = vmatprep.mubr.f32.mxu0 0.0
    %1213 = vmatmul.mubr.f32.gmra.mrb[0].mxu0 %v1085
    %v1214 = vpop.f32.mrb[0].mxu0
    %v1215 = vadd.f32 %v1022, %v1214
    %v1216 = vpop.f32.mrb[0].mxu0
    %1217 = vmatprep.mubr.f32.mxu0 0.0
    %1218 = vmatmul.mubr.f32.gmra.mrb[0].mxu0 %v1088
    %v1219 = vpop.f32.mrb[0].mxu0
    %v1220 = vadd.f32 %v1027, %v1219
    %v1221 = vpop.f32.mrb[0].mxu0
    %1222 = vmatprep.mubr.f32.mxu0 0.0
    %1223 = vmatmul.mubr.f32.gmra.mrb[0].mxu0 %v1091
    %v1224 = vpop.f32.mrb[0].mxu0
    %v1225 = vadd.f32 %v1032, %v1224
    %v1226 = vpop.f32.mrb[0].mxu0
    %1227 = vmatprep.mubr.f32.mxu0 0.0
    %1228 = vmatmul.mubr.f32.gmra.mrb[0].mxu0 %v1094
    %v1229 = vpop.f32.mrb[0].mxu0
    %v1230 = vadd.f32 %v1037, %v1229
    %v1231 = vpop.f32.mrb[0].mxu0
    %1232 = vmatprep.mubr.f32.mxu0 0.0
    %1233 = vmatmul.mubr.f32.gmra.mrb[0].mxu0 %v1097
    %v1234 = vpop.f32.mrb[0].mxu0
    %v1235 = vadd.f32 %v1042, %v1234
    %v1236 = vpop.f32.mrb[0].mxu0
    %1237 = vmatprep.mubr.f32.mxu0 0.0
    %1238 = vmatmul.mubr.f32.gmra.mrb[0].mxu0 %v1100
    %v1239 = vpop.f32.mrb[0].mxu0
    %v1240 = vadd.f32 %v1047, %v1239
    %v1241 = vpop.f32.mrb[0].mxu0
    %1242 = vmatprep.mubr.f32.mxu0 0.0
    %1243 = vmatmul.mubr.f32.gmra.mrb[0].mxu0 %v1103
    %v1244 = vpop.f32.mrb[0].mxu0
    %v1245 = vadd.f32 %v1052, %v1244
    %v1246 = vpop.f32.mrb[0].mxu0
    %1247 = vmatprep.mubr.f32.mxu0 0.0
    %1248 = vmatmul.mubr.f32.gmra.mrb[0].mxu0 %v1106
    %v1249 = vpop.f32.mrb[0].mxu0
    %v1250 = vadd.f32 %v1057, %v1249
    %v1251 = vpop.f32.mrb[0].mxu0
    %1252 = vdwg.mxu0
    %s1253 = scalar_lea.vmem %s5, 256
    %v1254 = vld [vmem:[%s1253] sm:$0xff]
    %v1255 = vld [vmem:[%s1253 + $0x8] sm:$0xff]
    %v1256 = vld [vmem:[%s1253 + $0x10] sm:$0xff]
    %v1257 = vld [vmem:[%s1253 + $0x18] sm:$0xff]
    %v1258 = vld [vmem:[%s1253 + $0x20] sm:$0xff]
    %v1259 = vld [vmem:[%s1253 + $0x28] sm:$0xff]
    %v1260 = vld [vmem:[%s1253 + $0x30] sm:$0xff]
    %v1261 = vld [vmem:[%s1253 + $0x38] sm:$0xff]
    %v1262 = vld [vmem:[%s1253 + $0x40] sm:$0xff]
    %v1263 = vld [vmem:[%s1253 + $0x48] sm:$0xff]
    %v1264 = vld [vmem:[%s1253 + $0x50] sm:$0xff]
    %v1265 = vld [vmem:[%s1253 + $0x58] sm:$0xff]
    %v1266 = vld [vmem:[%s1253 + $0x60] sm:$0xff]
    %v1267 = vld [vmem:[%s1253 + $0x68] sm:$0xff]
    %v1268 = vld [vmem:[%s1253 + $0x70] sm:$0xff]
    %v1269 = vld [vmem:[%s1253 + $0x78] sm:$0xff]
    %1270 = vmatprep.subr.mxu0 0.0
    %1271 = vmatpush1.msra.mxu0 %v1254
    %1272 = vmatprep.subr.mxu0 0.0
    %1273 = vmatpush1.msra.mxu0 %v1255
    %1274 = vmatprep.subr.mxu0 0.0
    %1275 = vmatpush1.msra.mxu0 %v1256
    %1276 = vmatprep.subr.mxu0 0.0
    %1277 = vmatpush1.msra.mxu0 %v1257
    %1278 = vmatprep.subr.mxu0 0.0
    %1279 = vmatpush1.msra.mxu0 %v1258
    %1280 = vmatprep.subr.mxu0 0.0
    %1281 = vmatpush1.msra.mxu0 %v1259
    %1282 = vmatprep.subr.mxu0 0.0
    %1283 = vmatpush1.msra.mxu0 %v1260
    %1284 = vmatprep.subr.mxu0 0.0
    %1285 = vmatpush1.msra.mxu0 %v1261
    %1286 = vmatprep.subr.mxu0 0.0
    %1287 = vmatpush1.msra.mxu0 %v1262
    %1288 = vmatprep.subr.mxu0 0.0
    %1289 = vmatpush1.msra.mxu0 %v1263
    %1290 = vmatprep.subr.mxu0 0.0
    %1291 = vmatpush1.msra.mxu0 %v1264
    %1292 = vmatprep.subr.mxu0 0.0
    %1293 = vmatpush1.msra.mxu0 %v1265
    %1294 = vmatprep.subr.mxu0 0.0
    %1295 = vmatpush1.msra.mxu0 %v1266
    %1296 = vmatprep.subr.mxu0 0.0
    %1297 = vmatpush1.msra.mxu0 %v1267
    %1298 = vmatprep.subr.mxu0 0.0
    %1299 = vmatpush1.msra.mxu0 %v1268
    %1300 = vmatprep.subr.mxu0 0.0
    %1301 = vmatpush1.msra.mxu0 %v1269
    %1302 = vmatprep.subr.mxu0 0.0
    %1303 = vmatpush1.msra.mxu0 0.0
    %1304 = vmatprep.subr.mxu0 0.0
    %1305 = vmatpush1.msra.mxu0 0.0
    %1306 = vmatprep.subr.mxu0 0.0
    %1307 = vmatpush1.msra.mxu0 0.0
    %1308 = vmatprep.subr.mxu0 0.0
    %1309 = vmatpush1.msra.mxu0 0.0
    %1310 = vmatprep.subr.mxu0 0.0
    %1311 = vmatpush1.msra.mxu0 0.0
    %1312 = vmatprep.subr.mxu0 0.0
    %1313 = vmatpush1.msra.mxu0 0.0
    %1314 = vmatprep.subr.mxu0 0.0
    %1315 = vmatpush1.msra.mxu0 0.0
    %1316 = vmatprep.subr.mxu0 0.0
    %1317 = vmatpush1.msra.mxu0 0.0
    %1318 = vmatprep.subr.mxu0 0.0
    %1319 = vmatpush1.msra.mxu0 0.0
    %1320 = vmatprep.subr.mxu0 0.0
    %1321 = vmatpush1.msra.mxu0 0.0
    %1322 = vmatprep.subr.mxu0 0.0
    %1323 = vmatpush1.msra.mxu0 0.0
    %1324 = vmatprep.subr.mxu0 0.0
    %1325 = vmatpush1.msra.mxu0 0.0
    %1326 = vmatprep.subr.mxu0 0.0
    %1327 = vmatpush1.msra.mxu0 0.0
    %1328 = vmatprep.subr.mxu0 0.0
    %1329 = vmatpush1.msra.mxu0 0.0
    %1330 = vmatprep.subr.mxu0 0.0
    %1331 = vmatpush1.msra.mxu0 0.0
    %1332 = vmatprep.subr.mxu0 0.0
    %1333 = vmatpush1.msra.mxu0 0.0
    %1334 = vmatprep.mubr.f32.mxu0 0.0
    %1335 = vmatmul.mubr.f32.gmra.mrb[0].mxu0 %v582
    %v1336 = vpop.f32.mrb[0].mxu0
    %v1337 = vadd.f32 0.0, %v1336
    %v1338 = vpop.f32.mrb[0].mxu0
    %1339 = vmatprep.mubr.f32.mxu0 0.0
    %1340 = vmatmul.mubr.f32.gmra.mrb[0].mxu0 %v583
    %v1341 = vpop.f32.mrb[0].mxu0
    %v1342 = vadd.f32 0.0, %v1341
    %v1343 = vpop.f32.mrb[0].mxu0
    %1344 = vmatprep.mubr.f32.mxu0 0.0
    %1345 = vmatmul.mubr.f32.gmra.mrb[0].mxu0 %v584
    %v1346 = vpop.f32.mrb[0].mxu0
    %v1347 = vadd.f32 0.0, %v1346
    %v1348 = vpop.f32.mrb[0].mxu0
    %1349 = vmatprep.mubr.f32.mxu0 0.0
    %1350 = vmatmul.mubr.f32.gmra.mrb[0].mxu0 %v585
    %v1351 = vpop.f32.mrb[0].mxu0
    %v1352 = vadd.f32 0.0, %v1351
    %v1353 = vpop.f32.mrb[0].mxu0
    %1354 = vmatprep.mubr.f32.mxu0 0.0
    %1355 = vmatmul.mubr.f32.gmra.mrb[0].mxu0 %v586
    %v1356 = vpop.f32.mrb[0].mxu0
    %v1357 = vadd.f32 0.0, %v1356
    %v1358 = vpop.f32.mrb[0].mxu0
    %1359 = vmatprep.mubr.f32.mxu0 0.0
    %1360 = vmatmul.mubr.f32.gmra.mrb[0].mxu0 %v587
    %v1361 = vpop.f32.mrb[0].mxu0
    %v1362 = vadd.f32 0.0, %v1361
    %v1363 = vpop.f32.mrb[0].mxu0
    %1364 = vmatprep.mubr.f32.mxu0 0.0
    %1365 = vmatmul.mubr.f32.gmra.mrb[0].mxu0 %v588
    %v1366 = vpop.f32.mrb[0].mxu0
    %v1367 = vadd.f32 0.0, %v1366
    %v1368 = vpop.f32.mrb[0].mxu0
    %1369 = vmatprep.mubr.f32.mxu0 0.0
    %1370 = vmatmul.mubr.f32.gmra.mrb[0].mxu0 %v589
    %v1371 = vpop.f32.mrb[0].mxu0
    %v1372 = vadd.f32 0.0, %v1371
    %v1373 = vpop.f32.mrb[0].mxu0
    %1374 = vdwg.mxu0
    %s1375 = scalar_lea.vmem %s4, 256
    %v1376 = vld [vmem:[%s1375] sm:$0xff]
    %v1377 = vld [vmem:[%s1375 + $0x8] sm:$0xff]
    %v1378 = vld [vmem:[%s1375 + $0x10] sm:$0xff]
    %v1379 = vld [vmem:[%s1375 + $0x18] sm:$0xff]
    %v1380 = vld [vmem:[%s1375 + $0x20] sm:$0xff]
    %v1381 = vld [vmem:[%s1375 + $0x28] sm:$0xff]
    %v1382 = vld [vmem:[%s1375 + $0x30] sm:$0xff]
    %v1383 = vld [vmem:[%s1375 + $0x38] sm:$0xff]
    %v1384 = vld [vmem:[%s1375 + $0x40] sm:$0xff]
    %v1385 = vld [vmem:[%s1375 + $0x48] sm:$0xff]
    %v1386 = vld [vmem:[%s1375 + $0x50] sm:$0xff]
    %v1387 = vld [vmem:[%s1375 + $0x58] sm:$0xff]
    %v1388 = vld [vmem:[%s1375 + $0x60] sm:$0xff]
    %v1389 = vld [vmem:[%s1375 + $0x68] sm:$0xff]
    %v1390 = vld [vmem:[%s1375 + $0x70] sm:$0xff]
    %v1391 = vld [vmem:[%s1375 + $0x78] sm:$0xff]
    %v1393 = vsel %vm866, %v1376, 0
    %v1396 = vsel %vm866, %v1377, 0
    %v1399 = vsel %vm866, %v1378, 0
    %v1402 = vsel %vm866, %v1379, 0
    %v1405 = vsel %vm866, %v1380, 0
    %v1408 = vsel %vm866, %v1381, 0
    %v1411 = vsel %vm866, %v1382, 0
    %v1414 = vsel %vm866, %v1383, 0
    %v1417 = vsel %vm866, %v1384, 0
    %v1420 = vsel %vm866, %v1385, 0
    %v1423 = vsel %vm866, %v1386, 0
    %v1426 = vsel %vm866, %v1387, 0
    %v1429 = vsel %vm866, %v1388, 0
    %v1432 = vsel %vm866, %v1389, 0
    %v1435 = vsel %vm866, %v1390, 0
    %v1438 = vsel %vm866, %v1391, 0
    %1440 = vmatprep.subr.mxu0 0.0
    %1441 = vmatpush1.msra.mxu0 %v1337
    %1442 = vmatprep.subr.mxu0 0.0
    %1443 = vmatpush1.msra.mxu0 %v1342
    %1444 = vmatprep.subr.mxu0 0.0
    %1445 = vmatpush1.msra.mxu0 %v1347
    %1446 = vmatprep.subr.mxu0 0.0
    %1447 = vmatpush1.msra.mxu0 %v1352
    %1448 = vmatprep.subr.mxu0 0.0
    %1449 = vmatpush1.msra.mxu0 %v1357
    %1450 = vmatprep.subr.mxu0 0.0
    %1451 = vmatpush1.msra.mxu0 %v1362
    %1452 = vmatprep.subr.mxu0 0.0
    %1453 = vmatpush1.msra.mxu0 %v1367
    %1454 = vmatprep.subr.mxu0 0.0
    %1455 = vmatpush1.msra.mxu0 %v1372
    %1456 = vmatprep.subr.mxu0 0.0
    %1457 = vmatpush1.msra.mxu0 0.0
    %1458 = vmatprep.subr.mxu0 0.0
    %1459 = vmatpush1.msra.mxu0 0.0
    %1460 = vmatprep.subr.mxu0 0.0
    %1461 = vmatpush1.msra.mxu0 0.0
    %1462 = vmatprep.subr.mxu0 0.0
    %1463 = vmatpush1.msra.mxu0 0.0
    %1464 = vmatprep.subr.mxu0 0.0
    %1465 = vmatpush1.msra.mxu0 0.0
    %1466 = vmatprep.subr.mxu0 0.0
    %1467 = vmatpush1.msra.mxu0 0.0
    %1468 = vmatprep.subr.mxu0 0.0
    %1469 = vmatpush1.msra.mxu0 0.0
    %1470 = vmatprep.subr.mxu0 0.0
    %1471 = vmatpush1.msra.mxu0 0.0
    %1472 = vmatprep.subr.mxu0 0.0
    %1473 = vmatpush1.msra.mxu0 0.0
    %1474 = vmatprep.subr.mxu0 0.0
    %1475 = vmatpush1.msra.mxu0 0.0
    %1476 = vmatprep.subr.mxu0 0.0
    %1477 = vmatpush1.msra.mxu0 0.0
    %1478 = vmatprep.subr.mxu0 0.0
    %1479 = vmatpush1.msra.mxu0 0.0
    %1480 = vmatprep.subr.mxu0 0.0
    %1481 = vmatpush1.msra.mxu0 0.0
    %1482 = vmatprep.subr.mxu0 0.0
    %1483 = vmatpush1.msra.mxu0 0.0
    %1484 = vmatprep.subr.mxu0 0.0
    %1485 = vmatpush1.msra.mxu0 0.0
    %1486 = vmatprep.subr.mxu0 0.0
    %1487 = vmatpush1.msra.mxu0 0.0
    %1488 = vmatprep.subr.mxu0 0.0
    %1489 = vmatpush1.msra.mxu0 0.0
    %1490 = vmatprep.subr.mxu0 0.0
    %1491 = vmatpush1.msra.mxu0 0.0
    %1492 = vmatprep.subr.mxu0 0.0
    %1493 = vmatpush1.msra.mxu0 0.0
    %1494 = vmatprep.subr.mxu0 0.0
    %1495 = vmatpush1.msra.mxu0 0.0
    %1496 = vmatprep.subr.mxu0 0.0
    %1497 = vmatpush1.msra.mxu0 0.0
    %1498 = vmatprep.subr.mxu0 0.0
    %1499 = vmatpush1.msra.mxu0 0.0
    %1500 = vmatprep.subr.mxu0 0.0
    %1501 = vmatpush1.msra.mxu0 0.0
    %1502 = vmatprep.subr.mxu0 0.0
    %1503 = vmatpush1.msra.mxu0 0.0
    %1504 = vmatprep.mubr.f32.mxu0 0.0
    %1505 = vmatmul.mubr.f32.gmra.mrb[0].mxu0 %v1393
    %v1506 = vpop.f32.mrb[0].mxu0
    %v1507 = vadd.f32 0.0, %v1506
    %v1508 = vpop.f32.mrb[0].mxu0
    %1509 = vmatprep.mubr.f32.mxu0 0.0
    %1510 = vmatmul.mubr.f32.gmra.mrb[0].mxu0 %v1396
    %v1511 = vpop.f32.mrb[0].mxu0
    %v1512 = vadd.f32 0.0, %v1511
    %v1513 = vpop.f32.mrb[0].mxu0
    %1514 = vmatprep.mubr.f32.mxu0 0.0
    %1515 = vmatmul.mubr.f32.gmra.mrb[0].mxu0 %v1399
    %v1516 = vpop.f32.mrb[0].mxu0
    %v1517 = vadd.f32 0.0, %v1516
    %v1518 = vpop.f32.mrb[0].mxu0
    %1519 = vmatprep.mubr.f32.mxu0 0.0
    %1520 = vmatmul.mubr.f32.gmra.mrb[0].mxu0 %v1402
    %v1521 = vpop.f32.mrb[0].mxu0
    %v1522 = vadd.f32 0.0, %v1521
    %v1523 = vpop.f32.mrb[0].mxu0
    %1524 = vmatprep.mubr.f32.mxu0 0.0
    %1525 = vmatmul.mubr.f32.gmra.mrb[0].mxu0 %v1405
    %v1526 = vpop.f32.mrb[0].mxu0
    %v1527 = vadd.f32 0.0, %v1526
    %v1528 = vpop.f32.mrb[0].mxu0
    %1529 = vmatprep.mubr.f32.mxu0 0.0
    %1530 = vmatmul.mubr.f32.gmra.mrb[0].mxu0 %v1408
    %v1531 = vpop.f32.mrb[0].mxu0
    %v1532 = vadd.f32 0.0, %v1531
    %v1533 = vpop.f32.mrb[0].mxu0
    %1534 = vmatprep.mubr.f32.mxu0 0.0
    %1535 = vmatmul.mubr.f32.gmra.mrb[0].mxu0 %v1411
    %v1536 = vpop.f32.mrb[0].mxu0
    %v1537 = vadd.f32 0.0, %v1536
    %v1538 = vpop.f32.mrb[0].mxu0
    %1539 = vmatprep.mubr.f32.mxu0 0.0
    %1540 = vmatmul.mubr.f32.gmra.mrb[0].mxu0 %v1414
    %v1541 = vpop.f32.mrb[0].mxu0
    %v1542 = vadd.f32 0.0, %v1541
    %v1543 = vpop.f32.mrb[0].mxu0
    %1544 = vmatprep.mubr.f32.mxu0 0.0
    %1545 = vmatmul.mubr.f32.gmra.mrb[0].mxu0 %v1417
    %v1546 = vpop.f32.mrb[0].mxu0
    %v1547 = vadd.f32 0.0, %v1546
    %v1548 = vpop.f32.mrb[0].mxu0
    %1549 = vmatprep.mubr.f32.mxu0 0.0
    %1550 = vmatmul.mubr.f32.gmra.mrb[0].mxu0 %v1420
    %v1551 = vpop.f32.mrb[0].mxu0
    %v1552 = vadd.f32 0.0, %v1551
    %v1553 = vpop.f32.mrb[0].mxu0
    %1554 = vmatprep.mubr.f32.mxu0 0.0
    %1555 = vmatmul.mubr.f32.gmra.mrb[0].mxu0 %v1423
    %v1556 = vpop.f32.mrb[0].mxu0
    %v1557 = vadd.f32 0.0, %v1556
    %v1558 = vpop.f32.mrb[0].mxu0
    %1559 = vmatprep.mubr.f32.mxu0 0.0
    %1560 = vmatmul.mubr.f32.gmra.mrb[0].mxu0 %v1426
    %v1561 = vpop.f32.mrb[0].mxu0
    %v1562 = vadd.f32 0.0, %v1561
    %v1563 = vpop.f32.mrb[0].mxu0
    %1564 = vmatprep.mubr.f32.mxu0 0.0
    %1565 = vmatmul.mubr.f32.gmra.mrb[0].mxu0 %v1429
    %v1566 = vpop.f32.mrb[0].mxu0
    %v1567 = vadd.f32 0.0, %v1566
    %v1568 = vpop.f32.mrb[0].mxu0
    %1569 = vmatprep.mubr.f32.mxu0 0.0
    %1570 = vmatmul.mubr.f32.gmra.mrb[0].mxu0 %v1432
    %v1571 = vpop.f32.mrb[0].mxu0
    %v1572 = vadd.f32 0.0, %v1571
    %v1573 = vpop.f32.mrb[0].mxu0
    %1574 = vmatprep.mubr.f32.mxu0 0.0
    %1575 = vmatmul.mubr.f32.gmra.mrb[0].mxu0 %v1435
    %v1576 = vpop.f32.mrb[0].mxu0
    %v1577 = vadd.f32 0.0, %v1576
    %v1578 = vpop.f32.mrb[0].mxu0
    %1579 = vmatprep.mubr.f32.mxu0 0.0
    %1580 = vmatmul.mubr.f32.gmra.mrb[0].mxu0 %v1438
    %v1581 = vpop.f32.mrb[0].mxu0
    %v1582 = vadd.f32 0.0, %v1581
    %v1583 = vpop.f32.mrb[0].mxu0
    %1584 = vdwg.mxu0
    %v1585 = vadd.f32 %v1175, %v1507
    %v1586 = vadd.f32 %v1180, %v1512
    %v1587 = vadd.f32 %v1185, %v1517
    %v1588 = vadd.f32 %v1190, %v1522
    %v1589 = vadd.f32 %v1195, %v1527
    %v1590 = vadd.f32 %v1200, %v1532
    %v1591 = vadd.f32 %v1205, %v1537
    %v1592 = vadd.f32 %v1210, %v1542
    %v1593 = vadd.f32 %v1215, %v1547
    %v1594 = vadd.f32 %v1220, %v1552
    %v1595 = vadd.f32 %v1225, %v1557
    %v1596 = vadd.f32 %v1230, %v1562
    %v1597 = vadd.f32 %v1235, %v1567
    %v1598 = vadd.f32 %v1240, %v1572
    %v1599 = vadd.f32 %v1245, %v1577
    %v1600 = vadd.f32 %v1250, %v1582
    %s1601 = scalar_lea.vmem %s5, 384
    %v1602 = vld [vmem:[%s1601] sm:$0xff]
    %v1603 = vld [vmem:[%s1601 + $0x8] sm:$0xff]
    %v1604 = vld [vmem:[%s1601 + $0x10] sm:$0xff]
    %v1605 = vld [vmem:[%s1601 + $0x18] sm:$0xff]
    %v1606 = vld [vmem:[%s1601 + $0x20] sm:$0xff]
    %v1607 = vld [vmem:[%s1601 + $0x28] sm:$0xff]
    %v1608 = vld [vmem:[%s1601 + $0x30] sm:$0xff]
    %v1609 = vld [vmem:[%s1601 + $0x38] sm:$0xff]
    %v1610 = vld [vmem:[%s1601 + $0x40] sm:$0xff]
    %v1611 = vld [vmem:[%s1601 + $0x48] sm:$0xff]
    %v1612 = vld [vmem:[%s1601 + $0x50] sm:$0xff]
    %v1613 = vld [vmem:[%s1601 + $0x58] sm:$0xff]
    %v1614 = vld [vmem:[%s1601 + $0x60] sm:$0xff]
    %v1615 = vld [vmem:[%s1601 + $0x68] sm:$0xff]
    %v1616 = vld [vmem:[%s1601 + $0x70] sm:$0xff]
    %v1617 = vld [vmem:[%s1601 + $0x78] sm:$0xff]
    %1618 = vmatprep.subr.mxu0 0.0
    %1619 = vmatpush1.msra.mxu0 %v1602
    %1620 = vmatprep.subr.mxu0 0.0
    %1621 = vmatpush1.msra.mxu0 %v1603
    %1622 = vmatprep.subr.mxu0 0.0
    %1623 = vmatpush1.msra.mxu0 %v1604
    %1624 = vmatprep.subr.mxu0 0.0
    %1625 = vmatpush1.msra.mxu0 %v1605
    %1626 = vmatprep.subr.mxu0 0.0
    %1627 = vmatpush1.msra.mxu0 %v1606
    %1628 = vmatprep.subr.mxu0 0.0
    %1629 = vmatpush1.msra.mxu0 %v1607
    %1630 = vmatprep.subr.mxu0 0.0
    %1631 = vmatpush1.msra.mxu0 %v1608
    %1632 = vmatprep.subr.mxu0 0.0
    %1633 = vmatpush1.msra.mxu0 %v1609
    %1634 = vmatprep.subr.mxu0 0.0
    %1635 = vmatpush1.msra.mxu0 %v1610
    %1636 = vmatprep.subr.mxu0 0.0
    %1637 = vmatpush1.msra.mxu0 %v1611
    %1638 = vmatprep.subr.mxu0 0.0
    %1639 = vmatpush1.msra.mxu0 %v1612
    %1640 = vmatprep.subr.mxu0 0.0
    %1641 = vmatpush1.msra.mxu0 %v1613
    %1642 = vmatprep.subr.mxu0 0.0
    %1643 = vmatpush1.msra.mxu0 %v1614
    %1644 = vmatprep.subr.mxu0 0.0
    %1645 = vmatpush1.msra.mxu0 %v1615
    %1646 = vmatprep.subr.mxu0 0.0
    %1647 = vmatpush1.msra.mxu0 %v1616
    %1648 = vmatprep.subr.mxu0 0.0
    %1649 = vmatpush1.msra.mxu0 %v1617
    %1650 = vmatprep.subr.mxu0 0.0
    %1651 = vmatpush1.msra.mxu0 0.0
    %1652 = vmatprep.subr.mxu0 0.0
    %1653 = vmatpush1.msra.mxu0 0.0
    %1654 = vmatprep.subr.mxu0 0.0
    %1655 = vmatpush1.msra.mxu0 0.0
    %1656 = vmatprep.subr.mxu0 0.0
    %1657 = vmatpush1.msra.mxu0 0.0
    %1658 = vmatprep.subr.mxu0 0.0
    %1659 = vmatpush1.msra.mxu0 0.0
    %1660 = vmatprep.subr.mxu0 0.0
    %1661 = vmatpush1.msra.mxu0 0.0
    %1662 = vmatprep.subr.mxu0 0.0
    %1663 = vmatpush1.msra.mxu0 0.0
    %1664 = vmatprep.subr.mxu0 0.0
    %1665 = vmatpush1.msra.mxu0 0.0
    %1666 = vmatprep.subr.mxu0 0.0
    %1667 = vmatpush1.msra.mxu0 0.0
    %1668 = vmatprep.subr.mxu0 0.0
    %1669 = vmatpush1.msra.mxu0 0.0
    %1670 = vmatprep.subr.mxu0 0.0
    %1671 = vmatpush1.msra.mxu0 0.0
    %1672 = vmatprep.subr.mxu0 0.0
    %1673 = vmatpush1.msra.mxu0 0.0
    %1674 = vmatprep.subr.mxu0 0.0
    %1675 = vmatpush1.msra.mxu0 0.0
    %1676 = vmatprep.subr.mxu0 0.0
    %1677 = vmatpush1.msra.mxu0 0.0
    %1678 = vmatprep.subr.mxu0 0.0
    %1679 = vmatpush1.msra.mxu0 0.0
    %1680 = vmatprep.subr.mxu0 0.0
    %1681 = vmatpush1.msra.mxu0 0.0
    %1682 = vmatprep.mubr.f32.mxu0 0.0
    %1683 = vmatmul.mubr.f32.gmra.mrb[0].mxu0 %v582
    %v1684 = vpop.f32.mrb[0].mxu0
    %v1685 = vadd.f32 0.0, %v1684
    %v1686 = vpop.f32.mrb[0].mxu0
    %1687 = vmatprep.mubr.f32.mxu0 0.0
    %1688 = vmatmul.mubr.f32.gmra.mrb[0].mxu0 %v583
    %v1689 = vpop.f32.mrb[0].mxu0
    %v1690 = vadd.f32 0.0, %v1689
    %v1691 = vpop.f32.mrb[0].mxu0
    %1692 = vmatprep.mubr.f32.mxu0 0.0
    %1693 = vmatmul.mubr.f32.gmra.mrb[0].mxu0 %v584
    %v1694 = vpop.f32.mrb[0].mxu0
    %v1695 = vadd.f32 0.0, %v1694
    %v1696 = vpop.f32.mrb[0].mxu0
    %1697 = vmatprep.mubr.f32.mxu0 0.0
    %1698 = vmatmul.mubr.f32.gmra.mrb[0].mxu0 %v585
    %v1699 = vpop.f32.mrb[0].mxu0
    %v1700 = vadd.f32 0.0, %v1699
    %v1701 = vpop.f32.mrb[0].mxu0
    %1702 = vmatprep.mubr.f32.mxu0 0.0
    %1703 = vmatmul.mubr.f32.gmra.mrb[0].mxu0 %v586
    %v1704 = vpop.f32.mrb[0].mxu0
    %v1705 = vadd.f32 0.0, %v1704
    %v1706 = vpop.f32.mrb[0].mxu0
    %1707 = vmatprep.mubr.f32.mxu0 0.0
    %1708 = vmatmul.mubr.f32.gmra.mrb[0].mxu0 %v587
    %v1709 = vpop.f32.mrb[0].mxu0
    %v1710 = vadd.f32 0.0, %v1709
    %v1711 = vpop.f32.mrb[0].mxu0
    %1712 = vmatprep.mubr.f32.mxu0 0.0
    %1713 = vmatmul.mubr.f32.gmra.mrb[0].mxu0 %v588
    %v1714 = vpop.f32.mrb[0].mxu0
    %v1715 = vadd.f32 0.0, %v1714
    %v1716 = vpop.f32.mrb[0].mxu0
    %1717 = vmatprep.mubr.f32.mxu0 0.0
    %1718 = vmatmul.mubr.f32.gmra.mrb[0].mxu0 %v589
    %v1719 = vpop.f32.mrb[0].mxu0
    %v1720 = vadd.f32 0.0, %v1719
    %v1721 = vpop.f32.mrb[0].mxu0
    %1722 = vdwg.mxu0
    %s1723 = scalar_lea.vmem %s4, 384
    %v1724 = vld [vmem:[%s1723] sm:$0xff]
    %v1725 = vld [vmem:[%s1723 + $0x8] sm:$0xff]
    %v1726 = vld [vmem:[%s1723 + $0x10] sm:$0xff]
    %v1727 = vld [vmem:[%s1723 + $0x18] sm:$0xff]
    %v1728 = vld [vmem:[%s1723 + $0x20] sm:$0xff]
    %v1729 = vld [vmem:[%s1723 + $0x28] sm:$0xff]
    %v1730 = vld [vmem:[%s1723 + $0x30] sm:$0xff]
    %v1731 = vld [vmem:[%s1723 + $0x38] sm:$0xff]
    %v1732 = vld [vmem:[%s1723 + $0x40] sm:$0xff]
    %v1733 = vld [vmem:[%s1723 + $0x48] sm:$0xff]
    %v1734 = vld [vmem:[%s1723 + $0x50] sm:$0xff]
    %v1735 = vld [vmem:[%s1723 + $0x58] sm:$0xff]
    %v1736 = vld [vmem:[%s1723 + $0x60] sm:$0xff]
    %v1737 = vld [vmem:[%s1723 + $0x68] sm:$0xff]
    %v1738 = vld [vmem:[%s1723 + $0x70] sm:$0xff]
    %v1739 = vld [vmem:[%s1723 + $0x78] sm:$0xff]
    %v1741 = vsel %vm866, %v1724, 0
    %v1744 = vsel %vm866, %v1725, 0
    %v1747 = vsel %vm866, %v1726, 0
    %v1750 = vsel %vm866, %v1727, 0
    %v1753 = vsel %vm866, %v1728, 0
    %v1756 = vsel %vm866, %v1729, 0
    %v1759 = vsel %vm866, %v1730, 0
    %v1762 = vsel %vm866, %v1731, 0
    %v1765 = vsel %vm866, %v1732, 0
    %v1768 = vsel %vm866, %v1733, 0
    %v1771 = vsel %vm866, %v1734, 0
    %v1774 = vsel %vm866, %v1735, 0
    %v1777 = vsel %vm866, %v1736, 0
    %v1780 = vsel %vm866, %v1737, 0
    %v1783 = vsel %vm866, %v1738, 0
    %v1786 = vsel %vm866, %v1739, 0
    %1788 = vmatprep.subr.mxu0 0.0
    %1789 = vmatpush1.msra.mxu0 %v1685
    %1790 = vmatprep.subr.mxu0 0.0
    %1791 = vmatpush1.msra.mxu0 %v1690
    %1792 = vmatprep.subr.mxu0 0.0
    %1793 = vmatpush1.msra.mxu0 %v1695
    %1794 = vmatprep.subr.mxu0 0.0
    %1795 = vmatpush1.msra.mxu0 %v1700
    %1796 = vmatprep.subr.mxu0 0.0
    %1797 = vmatpush1.msra.mxu0 %v1705
    %1798 = vmatprep.subr.mxu0 0.0
    %1799 = vmatpush1.msra.mxu0 %v1710
    %1800 = vmatprep.subr.mxu0 0.0
    %1801 = vmatpush1.msra.mxu0 %v1715
    %1802 = vmatprep.subr.mxu0 0.0
    %1803 = vmatpush1.msra.mxu0 %v1720
    %1804 = vmatprep.subr.mxu0 0.0
    %1805 = vmatpush1.msra.mxu0 0.0
    %1806 = vmatprep.subr.mxu0 0.0
    %1807 = vmatpush1.msra.mxu0 0.0
    %1808 = vmatprep.subr.mxu0 0.0
    %1809 = vmatpush1.msra.mxu0 0.0
    %1810 = vmatprep.subr.mxu0 0.0
    %1811 = vmatpush1.msra.mxu0 0.0
    %1812 = vmatprep.subr.mxu0 0.0
    %1813 = vmatpush1.msra.mxu0 0.0
    %1814 = vmatprep.subr.mxu0 0.0
    %1815 = vmatpush1.msra.mxu0 0.0
    %1816 = vmatprep.subr.mxu0 0.0
    %1817 = vmatpush1.msra.mxu0 0.0
    %1818 = vmatprep.subr.mxu0 0.0
    %1819 = vmatpush1.msra.mxu0 0.0
    %1820 = vmatprep.subr.mxu0 0.0
    %1821 = vmatpush1.msra.mxu0 0.0
    %1822 = vmatprep.subr.mxu0 0.0
    %1823 = vmatpush1.msra.mxu0 0.0
    %1824 = vmatprep.subr.mxu0 0.0
    %1825 = vmatpush1.msra.mxu0 0.0
    %1826 = vmatprep.subr.mxu0 0.0
    %1827 = vmatpush1.msra.mxu0 0.0
    %1828 = vmatprep.subr.mxu0 0.0
    %1829 = vmatpush1.msra.mxu0 0.0
    %1830 = vmatprep.subr.mxu0 0.0
    %1831 = vmatpush1.msra.mxu0 0.0
    %1832 = vmatprep.subr.mxu0 0.0
    %1833 = vmatpush1.msra.mxu0 0.0
    %1834 = vmatprep.subr.mxu0 0.0
    %1835 = vmatpush1.msra.mxu0 0.0
    %1836 = vmatprep.subr.mxu0 0.0
    %1837 = vmatpush1.msra.mxu0 0.0
    %1838 = vmatprep.subr.mxu0 0.0
    %1839 = vmatpush1.msra.mxu0 0.0
    %1840 = vmatprep.subr.mxu0 0.0
    %1841 = vmatpush1.msra.mxu0 0.0
    %1842 = vmatprep.subr.mxu0 0.0
    %1843 = vmatpush1.msra.mxu0 0.0
    %1844 = vmatprep.subr.mxu0 0.0
    %1845 = vmatpush1.msra.mxu0 0.0
    %1846 = vmatprep.subr.mxu0 0.0
    %1847 = vmatpush1.msra.mxu0 0.0
    %1848 = vmatprep.subr.mxu0 0.0
    %1849 = vmatpush1.msra.mxu0 0.0
    %1850 = vmatprep.subr.mxu0 0.0
    %1851 = vmatpush1.msra.mxu0 0.0
    %1852 = vmatprep.mubr.f32.mxu0 0.0
    %1853 = vmatmul.mubr.f32.gmra.mrb[0].mxu0 %v1741
    %v1854 = vpop.f32.mrb[0].mxu0
    %v1855 = vadd.f32 0.0, %v1854
    %v1856 = vpop.f32.mrb[0].mxu0
    %1857 = vmatprep.mubr.f32.mxu0 0.0
    %1858 = vmatmul.mubr.f32.gmra.mrb[0].mxu0 %v1744
    %v1859 = vpop.f32.mrb[0].mxu0
    %v1860 = vadd.f32 0.0, %v1859
    %v1861 = vpop.f32.mrb[0].mxu0
    %1862 = vmatprep.mubr.f32.mxu0 0.0
    %1863 = vmatmul.mubr.f32.gmra.mrb[0].mxu0 %v1747
    %v1864 = vpop.f32.mrb[0].mxu0
    %v1865 = vadd.f32 0.0, %v1864
    %v1866 = vpop.f32.mrb[0].mxu0
    %1867 = vmatprep.mubr.f32.mxu0 0.0
    %1868 = vmatmul.mubr.f32.gmra.mrb[0].mxu0 %v1750
    %v1869 = vpop.f32.mrb[0].mxu0
    %v1870 = vadd.f32 0.0, %v1869
    %v1871 = vpop.f32.mrb[0].mxu0
    %1872 = vmatprep.mubr.f32.mxu0 0.0
    %1873 = vmatmul.mubr.f32.gmra.mrb[0].mxu0 %v1753
    %v1874 = vpop.f32.mrb[0].mxu0
    %v1875 = vadd.f32 0.0, %v1874
    %v1876 = vpop.f32.mrb[0].mxu0
    %1877 = vmatprep.mubr.f32.mxu0 0.0
    %1878 = vmatmul.mubr.f32.gmra.mrb[0].mxu0 %v1756
    %v1879 = vpop.f32.mrb[0].mxu0
    %v1880 = vadd.f32 0.0, %v1879
    %v1881 = vpop.f32.mrb[0].mxu0
    %1882 = vmatprep.mubr.f32.mxu0 0.0
    %1883 = vmatmul.mubr.f32.gmra.mrb[0].mxu0 %v1759
    %v1884 = vpop.f32.mrb[0].mxu0
    %v1885 = vadd.f32 0.0, %v1884
    %v1886 = vpop.f32.mrb[0].mxu0
    %1887 = vmatprep.mubr.f32.mxu0 0.0
    %1888 = vmatmul.mubr.f32.gmra.mrb[0].mxu0 %v1762
    %v1889 = vpop.f32.mrb[0].mxu0
    %v1890 = vadd.f32 0.0, %v1889
    %v1891 = vpop.f32.mrb[0].mxu0
    %1892 = vmatprep.mubr.f32.mxu0 0.0
    %1893 = vmatmul.mubr.f32.gmra.mrb[0].mxu0 %v1765
    %v1894 = vpop.f32.mrb[0].mxu0
    %v1895 = vadd.f32 0.0, %v1894
    %v1896 = vpop.f32.mrb[0].mxu0
    %1897 = vmatprep.mubr.f32.mxu0 0.0
    %1898 = vmatmul.mubr.f32.gmra.mrb[0].mxu0 %v1768
    %v1899 = vpop.f32.mrb[0].mxu0
    %v1900 = vadd.f32 0.0, %v1899
    %v1901 = vpop.f32.mrb[0].mxu0
    %1902 = vmatprep.mubr.f32.mxu0 0.0
    %1903 = vmatmul.mubr.f32.gmra.mrb[0].mxu0 %v1771
    %v1904 = vpop.f32.mrb[0].mxu0
    %v1905 = vadd.f32 0.0, %v1904
    %v1906 = vpop.f32.mrb[0].mxu0
    %1907 = vmatprep.mubr.f32.mxu0 0.0
    %1908 = vmatmul.mubr.f32.gmra.mrb[0].mxu0 %v1774
    %v1909 = vpop.f32.mrb[0].mxu0
    %v1910 = vadd.f32 0.0, %v1909
    %v1911 = vpop.f32.mrb[0].mxu0
    %1912 = vmatprep.mubr.f32.mxu0 0.0
    %1913 = vmatmul.mubr.f32.gmra.mrb[0].mxu0 %v1777
    %v1914 = vpop.f32.mrb[0].mxu0
    %v1915 = vadd.f32 0.0, %v1914
    %v1916 = vpop.f32.mrb[0].mxu0
    %1917 = vmatprep.mubr.f32.mxu0 0.0
    %1918 = vmatmul.mubr.f32.gmra.mrb[0].mxu0 %v1780
    %v1919 = vpop.f32.mrb[0].mxu0
    %v1920 = vadd.f32 0.0, %v1919
    %v1921 = vpop.f32.mrb[0].mxu0
    %1922 = vmatprep.mubr.f32.mxu0 0.0
    %1923 = vmatmul.mubr.f32.gmra.mrb[0].mxu0 %v1783
    %v1924 = vpop.f32.mrb[0].mxu0
    %v1925 = vadd.f32 0.0, %v1924
    %v1926 = vpop.f32.mrb[0].mxu0
    %1927 = vmatprep.mubr.f32.mxu0 0.0
    %1928 = vmatmul.mubr.f32.gmra.mrb[0].mxu0 %v1786
    %v1929 = vpop.f32.mrb[0].mxu0
    %v1930 = vadd.f32 0.0, %v1929
    %v1931 = vpop.f32.mrb[0].mxu0
    %1932 = vdwg.mxu0
    %v1933 = vadd.f32 %v1585, %v1855
    %v1934 = vadd.f32 %v1586, %v1860
    %v1935 = vadd.f32 %v1587, %v1865
    %v1936 = vadd.f32 %v1588, %v1870
    %v1937 = vadd.f32 %v1589, %v1875
    %v1938 = vadd.f32 %v1590, %v1880
    %v1939 = vadd.f32 %v1591, %v1885
    %v1940 = vadd.f32 %v1592, %v1890
    %v1941 = vadd.f32 %v1593, %v1895
    %v1942 = vadd.f32 %v1594, %v1900
    %v1943 = vadd.f32 %v1595, %v1905
    %v1944 = vadd.f32 %v1596, %v1910
    %v1945 = vadd.f32 %v1597, %v1915
    %v1946 = vadd.f32 %v1598, %v1920
    %v1947 = vadd.f32 %v1599, %v1925
    %v1948 = vadd.f32 %v1600, %v1930
    %s1949 = scalar_lea.vmem %s5, 512
    %v1950 = vld [vmem:[%s1949] sm:$0xff]
    %v1951 = vld [vmem:[%s1949 + $0x8] sm:$0xff]
    %v1952 = vld [vmem:[%s1949 + $0x10] sm:$0xff]
    %v1953 = vld [vmem:[%s1949 + $0x18] sm:$0xff]
    %v1954 = vld [vmem:[%s1949 + $0x20] sm:$0xff]
    %v1955 = vld [vmem:[%s1949 + $0x28] sm:$0xff]
    %v1956 = vld [vmem:[%s1949 + $0x30] sm:$0xff]
    %v1957 = vld [vmem:[%s1949 + $0x38] sm:$0xff]
    %v1958 = vld [vmem:[%s1949 + $0x40] sm:$0xff]
    %v1959 = vld [vmem:[%s1949 + $0x48] sm:$0xff]
    %v1960 = vld [vmem:[%s1949 + $0x50] sm:$0xff]
    %v1961 = vld [vmem:[%s1949 + $0x58] sm:$0xff]
    %v1962 = vld [vmem:[%s1949 + $0x60] sm:$0xff]
    %v1963 = vld [vmem:[%s1949 + $0x68] sm:$0xff]
    %v1964 = vld [vmem:[%s1949 + $0x70] sm:$0xff]
    %v1965 = vld [vmem:[%s1949 + $0x78] sm:$0xff]
    %1966 = vmatprep.subr.mxu0 0.0
    %1967 = vmatpush1.msra.mxu0 %v1950
    %1968 = vmatprep.subr.mxu0 0.0
    %1969 = vmatpush1.msra.mxu0 %v1951
    %1970 = vmatprep.subr.mxu0 0.0
    %1971 = vmatpush1.msra.mxu0 %v1952
    %1972 = vmatprep.subr.mxu0 0.0
    %1973 = vmatpush1.msra.mxu0 %v1953
    %1974 = vmatprep.subr.mxu0 0.0
    %1975 = vmatpush1.msra.mxu0 %v1954
    %1976 = vmatprep.subr.mxu0 0.0
    %1977 = vmatpush1.msra.mxu0 %v1955
    %1978 = vmatprep.subr.mxu0 0.0
    %1979 = vmatpush1.msra.mxu0 %v1956
    %1980 = vmatprep.subr.mxu0 0.0
    %1981 = vmatpush1.msra.mxu0 %v1957
    %1982 = vmatprep.subr.mxu0 0.0
    %1983 = vmatpush1.msra.mxu0 %v1958
    %1984 = vmatprep.subr.mxu0 0.0
    %1985 = vmatpush1.msra.mxu0 %v1959
    %1986 = vmatprep.subr.mxu0 0.0
    %1987 = vmatpush1.msra.mxu0 %v1960
    %1988 = vmatprep.subr.mxu0 0.0
    %1989 = vmatpush1.msra.mxu0 %v1961
    %1990 = vmatprep.subr.mxu0 0.0
    %1991 = vmatpush1.msra.mxu0 %v1962
    %1992 = vmatprep.subr.mxu0 0.0
    %1993 = vmatpush1.msra.mxu0 %v1963
    %1994 = vmatprep.subr.mxu0 0.0
    %1995 = vmatpush1.msra.mxu0 %v1964
    %1996 = vmatprep.subr.mxu0 0.0
    %1997 = vmatpush1.msra.mxu0 %v1965
    %1998 = vmatprep.subr.mxu0 0.0
    %1999 = vmatpush1.msra.mxu0 0.0
    %2000 = vmatprep.subr.mxu0 0.0
    %2001 = vmatpush1.msra.mxu0 0.0
    %2002 = vmatprep.subr.mxu0 0.0
    %2003 = vmatpush1.msra.mxu0 0.0
    %2004 = vmatprep.subr.mxu0 0.0
    %2005 = vmatpush1.msra.mxu0 0.0
    %2006 = vmatprep.subr.mxu0 0.0
    %2007 = vmatpush1.msra.mxu0 0.0
    %2008 = vmatprep.subr.mxu0 0.0
    %2009 = vmatpush1.msra.mxu0 0.0
    %2010 = vmatprep.subr.mxu0 0.0
    %2011 = vmatpush1.msra.mxu0 0.0
    %2012 = vmatprep.subr.mxu0 0.0
    %2013 = vmatpush1.msra.mxu0 0.0
    %2014 = vmatprep.subr.mxu0 0.0
    %2015 = vmatpush1.msra.mxu0 0.0
    %2016 = vmatprep.subr.mxu0 0.0
    %2017 = vmatpush1.msra.mxu0 0.0
    %2018 = vmatprep.subr.mxu0 0.0
    %2019 = vmatpush1.msra.mxu0 0.0
    %2020 = vmatprep.subr.mxu0 0.0
    %2021 = vmatpush1.msra.mxu0 0.0
    %2022 = vmatprep.subr.mxu0 0.0
    %2023 = vmatpush1.msra.mxu0 0.0
    %2024 = vmatprep.subr.mxu0 0.0
    %2025 = vmatpush1.msra.mxu0 0.0
    %2026 = vmatprep.subr.mxu0 0.0
    %2027 = vmatpush1.msra.mxu0 0.0
    %2028 = vmatprep.subr.mxu0 0.0
    %2029 = vmatpush1.msra.mxu0 0.0
    %2030 = vmatprep.mubr.f32.mxu0 0.0
    %2031 = vmatmul.mubr.f32.gmra.mrb[0].mxu0 %v582
    %v2032 = vpop.f32.mrb[0].mxu0
    %v2033 = vadd.f32 0.0, %v2032
    %v2034 = vpop.f32.mrb[0].mxu0
    %2035 = vmatprep.mubr.f32.mxu0 0.0
    %2036 = vmatmul.mubr.f32.gmra.mrb[0].mxu0 %v583
    %v2037 = vpop.f32.mrb[0].mxu0
    %v2038 = vadd.f32 0.0, %v2037
    %v2039 = vpop.f32.mrb[0].mxu0
    %2040 = vmatprep.mubr.f32.mxu0 0.0
    %2041 = vmatmul.mubr.f32.gmra.mrb[0].mxu0 %v584
    %v2042 = vpop.f32.mrb[0].mxu0
    %v2043 = vadd.f32 0.0, %v2042
    %v2044 = vpop.f32.mrb[0].mxu0
    %2045 = vmatprep.mubr.f32.mxu0 0.0
    %2046 = vmatmul.mubr.f32.gmra.mrb[0].mxu0 %v585
    %v2047 = vpop.f32.mrb[0].mxu0
    %v2048 = vadd.f32 0.0, %v2047
    %v2049 = vpop.f32.mrb[0].mxu0
    %2050 = vmatprep.mubr.f32.mxu0 0.0
    %2051 = vmatmul.mubr.f32.gmra.mrb[0].mxu0 %v586
    %v2052 = vpop.f32.mrb[0].mxu0
    %v2053 = vadd.f32 0.0, %v2052
    %v2054 = vpop.f32.mrb[0].mxu0
    %2055 = vmatprep.mubr.f32.mxu0 0.0
    %2056 = vmatmul.mubr.f32.gmra.mrb[0].mxu0 %v587
    %v2057 = vpop.f32.mrb[0].mxu0
    %v2058 = vadd.f32 0.0, %v2057
    %v2059 = vpop.f32.mrb[0].mxu0
    %2060 = vmatprep.mubr.f32.mxu0 0.0
    %2061 = vmatmul.mubr.f32.gmra.mrb[0].mxu0 %v588
    %v2062 = vpop.f32.mrb[0].mxu0
    %v2063 = vadd.f32 0.0, %v2062
    %v2064 = vpop.f32.mrb[0].mxu0
    %2065 = vmatprep.mubr.f32.mxu0 0.0
    %2066 = vmatmul.mubr.f32.gmra.mrb[0].mxu0 %v589
    %v2067 = vpop.f32.mrb[0].mxu0
    %v2068 = vadd.f32 0.0, %v2067
    %v2069 = vpop.f32.mrb[0].mxu0
    %2070 = vdwg.mxu0
    %s2071 = scalar_lea.vmem %s4, 512
    %v2072 = vld [vmem:[%s2071] sm:$0xff]
    %v2073 = vld [vmem:[%s2071 + $0x8] sm:$0xff]
    %v2074 = vld [vmem:[%s2071 + $0x10] sm:$0xff]
    %v2075 = vld [vmem:[%s2071 + $0x18] sm:$0xff]
    %v2076 = vld [vmem:[%s2071 + $0x20] sm:$0xff]
    %v2077 = vld [vmem:[%s2071 + $0x28] sm:$0xff]
    %v2078 = vld [vmem:[%s2071 + $0x30] sm:$0xff]
    %v2079 = vld [vmem:[%s2071 + $0x38] sm:$0xff]
    %v2080 = vld [vmem:[%s2071 + $0x40] sm:$0xff]
    %v2081 = vld [vmem:[%s2071 + $0x48] sm:$0xff]
    %v2082 = vld [vmem:[%s2071 + $0x50] sm:$0xff]
    %v2083 = vld [vmem:[%s2071 + $0x58] sm:$0xff]
    %v2084 = vld [vmem:[%s2071 + $0x60] sm:$0xff]
    %v2085 = vld [vmem:[%s2071 + $0x68] sm:$0xff]
    %v2086 = vld [vmem:[%s2071 + $0x70] sm:$0xff]
    %v2087 = vld [vmem:[%s2071 + $0x78] sm:$0xff]
    %v2089 = vsel %vm866, %v2072, 0
    %v2092 = vsel %vm866, %v2073, 0
    %v2095 = vsel %vm866, %v2074, 0
    %v2098 = vsel %vm866, %v2075, 0
    %v2101 = vsel %vm866, %v2076, 0
    %v2104 = vsel %vm866, %v2077, 0
    %v2107 = vsel %vm866, %v2078, 0
    %v2110 = vsel %vm866, %v2079, 0
    %v2113 = vsel %vm866, %v2080, 0
    %v2116 = vsel %vm866, %v2081, 0
    %v2119 = vsel %vm866, %v2082, 0
    %v2122 = vsel %vm866, %v2083, 0
    %v2125 = vsel %vm866, %v2084, 0
    %v2128 = vsel %vm866, %v2085, 0
    %v2131 = vsel %vm866, %v2086, 0
    %v2134 = vsel %vm866, %v2087, 0
    %2136 = vmatprep.subr.mxu0 0.0
    %2137 = vmatpush1.msra.mxu0 %v2033
    %2138 = vmatprep.subr.mxu0 0.0
    %2139 = vmatpush1.msra.mxu0 %v2038
    %2140 = vmatprep.subr.mxu0 0.0
    %2141 = vmatpush1.msra.mxu0 %v2043
    %2142 = vmatprep.subr.mxu0 0.0
    %2143 = vmatpush1.msra.mxu0 %v2048
    %2144 = vmatprep.subr.mxu0 0.0
    %2145 = vmatpush1.msra.mxu0 %v2053
    %2146 = vmatprep.subr.mxu0 0.0
    %2147 = vmatpush1.msra.mxu0 %v2058
    %2148 = vmatprep.subr.mxu0 0.0
    %2149 = vmatpush1.msra.mxu0 %v2063
    %2150 = vmatprep.subr.mxu0 0.0
    %2151 = vmatpush1.msra.mxu0 %v2068
    %2152 = vmatprep.subr.mxu0 0.0
    %2153 = vmatpush1.msra.mxu0 0.0
    %2154 = vmatprep.subr.mxu0 0.0
    %2155 = vmatpush1.msra.mxu0 0.0
    %2156 = vmatprep.subr.mxu0 0.0
    %2157 = vmatpush1.msra.mxu0 0.0
    %2158 = vmatprep.subr.mxu0 0.0
    %2159 = vmatpush1.msra.mxu0 0.0
    %2160 = vmatprep.subr.mxu0 0.0
    %2161 = vmatpush1.msra.mxu0 0.0
    %2162 = vmatprep.subr.mxu0 0.0
    %2163 = vmatpush1.msra.mxu0 0.0
    %2164 = vmatprep.subr.mxu0 0.0
    %2165 = vmatpush1.msra.mxu0 0.0
    %2166 = vmatprep.subr.mxu0 0.0
    %2167 = vmatpush1.msra.mxu0 0.0
    %2168 = vmatprep.subr.mxu0 0.0
    %2169 = vmatpush1.msra.mxu0 0.0
    %2170 = vmatprep.subr.mxu0 0.0
    %2171 = vmatpush1.msra.mxu0 0.0
    %2172 = vmatprep.subr.mxu0 0.0
    %2173 = vmatpush1.msra.mxu0 0.0
    %2174 = vmatprep.subr.mxu0 0.0
    %2175 = vmatpush1.msra.mxu0 0.0
    %2176 = vmatprep.subr.mxu0 0.0
    %2177 = vmatpush1.msra.mxu0 0.0
    %2178 = vmatprep.subr.mxu0 0.0
    %2179 = vmatpush1.msra.mxu0 0.0
    %2180 = vmatprep.subr.mxu0 0.0
    %2181 = vmatpush1.msra.mxu0 0.0
    %2182 = vmatprep.subr.mxu0 0.0
    %2183 = vmatpush1.msra.mxu0 0.0
    %2184 = vmatprep.subr.mxu0 0.0
    %2185 = vmatpush1.msra.mxu0 0.0
    %2186 = vmatprep.subr.mxu0 0.0
    %2187 = vmatpush1.msra.mxu0 0.0
    %2188 = vmatprep.subr.mxu0 0.0
    %2189 = vmatpush1.msra.mxu0 0.0
    %2190 = vmatprep.subr.mxu0 0.0
    %2191 = vmatpush1.msra.mxu0 0.0
    %2192 = vmatprep.subr.mxu0 0.0
    %2193 = vmatpush1.msra.mxu0 0.0
    %2194 = vmatprep.subr.mxu0 0.0
    %2195 = vmatpush1.msra.mxu0 0.0
    %2196 = vmatprep.subr.mxu0 0.0
    %2197 = vmatpush1.msra.mxu0 0.0
    %2198 = vmatprep.subr.mxu0 0.0
    %2199 = vmatpush1.msra.mxu0 0.0
    %2200 = vmatprep.mubr.f32.mxu0 0.0
    %2201 = vmatmul.mubr.f32.gmra.mrb[0].mxu0 %v2089
    %v2202 = vpop.f32.mrb[0].mxu0
    %v2203 = vadd.f32 0.0, %v2202
    %v2204 = vpop.f32.mrb[0].mxu0
    %2205 = vmatprep.mubr.f32.mxu0 0.0
    %2206 = vmatmul.mubr.f32.gmra.mrb[0].mxu0 %v2092
    %v2207 = vpop.f32.mrb[0].mxu0
    %v2208 = vadd.f32 0.0, %v2207
    %v2209 = vpop.f32.mrb[0].mxu0
    %2210 = vmatprep.mubr.f32.mxu0 0.0
    %2211 = vmatmul.mubr.f32.gmra.mrb[0].mxu0 %v2095
    %v2212 = vpop.f32.mrb[0].mxu0
    %v2213 = vadd.f32 0.0, %v2212
    %v2214 = vpop.f32.mrb[0].mxu0
    %2215 = vmatprep.mubr.f32.mxu0 0.0
    %2216 = vmatmul.mubr.f32.gmra.mrb[0].mxu0 %v2098
    %v2217 = vpop.f32.mrb[0].mxu0
    %v2218 = vadd.f32 0.0, %v2217
    %v2219 = vpop.f32.mrb[0].mxu0
    %2220 = vmatprep.mubr.f32.mxu0 0.0
    %2221 = vmatmul.mubr.f32.gmra.mrb[0].mxu0 %v2101
    %v2222 = vpop.f32.mrb[0].mxu0
    %v2223 = vadd.f32 0.0, %v2222
    %v2224 = vpop.f32.mrb[0].mxu0
    %2225 = vmatprep.mubr.f32.mxu0 0.0
    %2226 = vmatmul.mubr.f32.gmra.mrb[0].mxu0 %v2104
    %v2227 = vpop.f32.mrb[0].mxu0
    %v2228 = vadd.f32 0.0, %v2227
    %v2229 = vpop.f32.mrb[0].mxu0
    %2230 = vmatprep.mubr.f32.mxu0 0.0
    %2231 = vmatmul.mubr.f32.gmra.mrb[0].mxu0 %v2107
    %v2232 = vpop.f32.mrb[0].mxu0
    %v2233 = vadd.f32 0.0, %v2232
    %v2234 = vpop.f32.mrb[0].mxu0
    %2235 = vmatprep.mubr.f32.mxu0 0.0
    %2236 = vmatmul.mubr.f32.gmra.mrb[0].mxu0 %v2110
    %v2237 = vpop.f32.mrb[0].mxu0
    %v2238 = vadd.f32 0.0, %v2237
    %v2239 = vpop.f32.mrb[0].mxu0
    %2240 = vmatprep.mubr.f32.mxu0 0.0
    %2241 = vmatmul.mubr.f32.gmra.mrb[0].mxu0 %v2113
    %v2242 = vpop.f32.mrb[0].mxu0
    %v2243 = vadd.f32 0.0, %v2242
    %v2244 = vpop.f32.mrb[0].mxu0
    %2245 = vmatprep.mubr.f32.mxu0 0.0
    %2246 = vmatmul.mubr.f32.gmra.mrb[0].mxu0 %v2116
    %v2247 = vpop.f32.mrb[0].mxu0
    %v2248 = vadd.f32 0.0, %v2247
    %v2249 = vpop.f32.mrb[0].mxu0
    %2250 = vmatprep.mubr.f32.mxu0 0.0
    %2251 = vmatmul.mubr.f32.gmra.mrb[0].mxu0 %v2119
    %v2252 = vpop.f32.mrb[0].mxu0
    %v2253 = vadd.f32 0.0, %v2252
    %v2254 = vpop.f32.mrb[0].mxu0
    %2255 = vmatprep.mubr.f32.mxu0 0.0
    %2256 = vmatmul.mubr.f32.gmra.mrb[0].mxu0 %v2122
    %v2257 = vpop.f32.mrb[0].mxu0
    %v2258 = vadd.f32 0.0, %v2257
    %v2259 = vpop.f32.mrb[0].mxu0
    %2260 = vmatprep.mubr.f32.mxu0 0.0
    %2261 = vmatmul.mubr.f32.gmra.mrb[0].mxu0 %v2125
    %v2262 = vpop.f32.mrb[0].mxu0
    %v2263 = vadd.f32 0.0, %v2262
    %v2264 = vpop.f32.mrb[0].mxu0
    %2265 = vmatprep.mubr.f32.mxu0 0.0
    %2266 = vmatmul.mubr.f32.gmra.mrb[0].mxu0 %v2128
    %v2267 = vpop.f32.mrb[0].mxu0
    %v2268 = vadd.f32 0.0, %v2267
    %v2269 = vpop.f32.mrb[0].mxu0
    %2270 = vmatprep.mubr.f32.mxu0 0.0
    %2271 = vmatmul.mubr.f32.gmra.mrb[0].mxu0 %v2131
    %v2272 = vpop.f32.mrb[0].mxu0
    %v2273 = vadd.f32 0.0, %v2272
    %v2274 = vpop.f32.mrb[0].mxu0
    %2275 = vmatprep.mubr.f32.mxu0 0.0
    %2276 = vmatmul.mubr.f32.gmra.mrb[0].mxu0 %v2134
    %v2277 = vpop.f32.mrb[0].mxu0
    %v2278 = vadd.f32 0.0, %v2277
    %v2279 = vpop.f32.mrb[0].mxu0
    %2280 = vdwg.mxu0
    %v2281 = vadd.f32 %v1933, %v2203
    %v2282 = vadd.f32 %v1934, %v2208
    %v2283 = vadd.f32 %v1935, %v2213
    %v2284 = vadd.f32 %v1936, %v2218
    %v2285 = vadd.f32 %v1937, %v2223
    %v2286 = vadd.f32 %v1938, %v2228
    %v2287 = vadd.f32 %v1939, %v2233
    %v2288 = vadd.f32 %v1940, %v2238
    %v2289 = vadd.f32 %v1941, %v2243
    %v2290 = vadd.f32 %v1942, %v2248
    %v2291 = vadd.f32 %v1943, %v2253
    %v2292 = vadd.f32 %v1944, %v2258
    %v2293 = vadd.f32 %v1945, %v2263
    %v2294 = vadd.f32 %v1946, %v2268
    %v2295 = vadd.f32 %v1947, %v2273
    %v2296 = vadd.f32 %v1948, %v2278
    %s2297 = scalar_lea.vmem %s5, 640
    %v2298 = vld [vmem:[%s2297] sm:$0xff]
    %v2299 = vld [vmem:[%s2297 + $0x8] sm:$0xff]
    %v2300 = vld [vmem:[%s2297 + $0x10] sm:$0xff]
    %v2301 = vld [vmem:[%s2297 + $0x18] sm:$0xff]
    %v2302 = vld [vmem:[%s2297 + $0x20] sm:$0xff]
    %v2303 = vld [vmem:[%s2297 + $0x28] sm:$0xff]
    %v2304 = vld [vmem:[%s2297 + $0x30] sm:$0xff]
    %v2305 = vld [vmem:[%s2297 + $0x38] sm:$0xff]
    %v2306 = vld [vmem:[%s2297 + $0x40] sm:$0xff]
    %v2307 = vld [vmem:[%s2297 + $0x48] sm:$0xff]
    %v2308 = vld [vmem:[%s2297 + $0x50] sm:$0xff]
    %v2309 = vld [vmem:[%s2297 + $0x58] sm:$0xff]
    %v2310 = vld [vmem:[%s2297 + $0x60] sm:$0xff]
    %v2311 = vld [vmem:[%s2297 + $0x68] sm:$0xff]
    %v2312 = vld [vmem:[%s2297 + $0x70] sm:$0xff]
    %v2313 = vld [vmem:[%s2297 + $0x78] sm:$0xff]
    %2314 = vmatprep.subr.mxu0 0.0
    %2315 = vmatpush1.msra.mxu0 %v2298
    %2316 = vmatprep.subr.mxu0 0.0
    %2317 = vmatpush1.msra.mxu0 %v2299
    %2318 = vmatprep.subr.mxu0 0.0
    %2319 = vmatpush1.msra.mxu0 %v2300
    %2320 = vmatprep.subr.mxu0 0.0
    %2321 = vmatpush1.msra.mxu0 %v2301
    %2322 = vmatprep.subr.mxu0 0.0
    %2323 = vmatpush1.msra.mxu0 %v2302
    %2324 = vmatprep.subr.mxu0 0.0
    %2325 = vmatpush1.msra.mxu0 %v2303
    %2326 = vmatprep.subr.mxu0 0.0
    %2327 = vmatpush1.msra.mxu0 %v2304
    %2328 = vmatprep.subr.mxu0 0.0
    %2329 = vmatpush1.msra.mxu0 %v2305
    %2330 = vmatprep.subr.mxu0 0.0
    %2331 = vmatpush1.msra.mxu0 %v2306
    %2332 = vmatprep.subr.mxu0 0.0
    %2333 = vmatpush1.msra.mxu0 %v2307
    %2334 = vmatprep.subr.mxu0 0.0
    %2335 = vmatpush1.msra.mxu0 %v2308
    %2336 = vmatprep.subr.mxu0 0.0
    %2337 = vmatpush1.msra.mxu0 %v2309
    %2338 = vmatprep.subr.mxu0 0.0
    %2339 = vmatpush1.msra.mxu0 %v2310
    %2340 = vmatprep.subr.mxu0 0.0
    %2341 = vmatpush1.msra.mxu0 %v2311
    %2342 = vmatprep.subr.mxu0 0.0
    %2343 = vmatpush1.msra.mxu0 %v2312
    %2344 = vmatprep.subr.mxu0 0.0
    %2345 = vmatpush1.msra.mxu0 %v2313
    %2346 = vmatprep.subr.mxu0 0.0
    %2347 = vmatpush1.msra.mxu0 0.0
    %2348 = vmatprep.subr.mxu0 0.0
    %2349 = vmatpush1.msra.mxu0 0.0
    %2350 = vmatprep.subr.mxu0 0.0
    %2351 = vmatpush1.msra.mxu0 0.0
    %2352 = vmatprep.subr.mxu0 0.0
    %2353 = vmatpush1.msra.mxu0 0.0
    %2354 = vmatprep.subr.mxu0 0.0
    %2355 = vmatpush1.msra.mxu0 0.0
    %2356 = vmatprep.subr.mxu0 0.0
    %2357 = vmatpush1.msra.mxu0 0.0
    %2358 = vmatprep.subr.mxu0 0.0
    %2359 = vmatpush1.msra.mxu0 0.0
    %2360 = vmatprep.subr.mxu0 0.0
    %2361 = vmatpush1.msra.mxu0 0.0
    %2362 = vmatprep.subr.mxu0 0.0
    %2363 = vmatpush1.msra.mxu0 0.0
    %2364 = vmatprep.subr.mxu0 0.0
    %2365 = vmatpush1.msra.mxu0 0.0
    %2366 = vmatprep.subr.mxu0 0.0
    %2367 = vmatpush1.msra.mxu0 0.0
    %2368 = vmatprep.subr.mxu0 0.0
    %2369 = vmatpush1.msra.mxu0 0.0
    %2370 = vmatprep.subr.mxu0 0.0
    %2371 = vmatpush1.msra.mxu0 0.0
    %2372 = vmatprep.subr.mxu0 0.0
    %2373 = vmatpush1.msra.mxu0 0.0
    %2374 = vmatprep.subr.mxu0 0.0
    %2375 = vmatpush1.msra.mxu0 0.0
    %2376 = vmatprep.subr.mxu0 0.0
    %2377 = vmatpush1.msra.mxu0 0.0
    %2378 = vmatprep.mubr.f32.mxu0 0.0
    %2379 = vmatmul.mubr.f32.gmra.mrb[0].mxu0 %v582
    %v2380 = vpop.f32.mrb[0].mxu0
    %v2381 = vadd.f32 0.0, %v2380
    %v2382 = vpop.f32.mrb[0].mxu0
    %2383 = vmatprep.mubr.f32.mxu0 0.0
    %2384 = vmatmul.mubr.f32.gmra.mrb[0].mxu0 %v583
    %v2385 = vpop.f32.mrb[0].mxu0
    %v2386 = vadd.f32 0.0, %v2385
    %v2387 = vpop.f32.mrb[0].mxu0
    %2388 = vmatprep.mubr.f32.mxu0 0.0
    %2389 = vmatmul.mubr.f32.gmra.mrb[0].mxu0 %v584
    %v2390 = vpop.f32.mrb[0].mxu0
    %v2391 = vadd.f32 0.0, %v2390
    %v2392 = vpop.f32.mrb[0].mxu0
    %2393 = vmatprep.mubr.f32.mxu0 0.0
    %2394 = vmatmul.mubr.f32.gmra.mrb[0].mxu0 %v585
    %v2395 = vpop.f32.mrb[0].mxu0
    %v2396 = vadd.f32 0.0, %v2395
    %v2397 = vpop.f32.mrb[0].mxu0
    %2398 = vmatprep.mubr.f32.mxu0 0.0
    %2399 = vmatmul.mubr.f32.gmra.mrb[0].mxu0 %v586
    %v2400 = vpop.f32.mrb[0].mxu0
    %v2401 = vadd.f32 0.0, %v2400
    %v2402 = vpop.f32.mrb[0].mxu0
    %2403 = vmatprep.mubr.f32.mxu0 0.0
    %2404 = vmatmul.mubr.f32.gmra.mrb[0].mxu0 %v587
    %v2405 = vpop.f32.mrb[0].mxu0
    %v2406 = vadd.f32 0.0, %v2405
    %v2407 = vpop.f32.mrb[0].mxu0
    %2408 = vmatprep.mubr.f32.mxu0 0.0
    %2409 = vmatmul.mubr.f32.gmra.mrb[0].mxu0 %v588
    %v2410 = vpop.f32.mrb[0].mxu0
    %v2411 = vadd.f32 0.0, %v2410
    %v2412 = vpop.f32.mrb[0].mxu0
    %2413 = vmatprep.mubr.f32.mxu0 0.0
    %2414 = vmatmul.mubr.f32.gmra.mrb[0].mxu0 %v589
    %v2415 = vpop.f32.mrb[0].mxu0
    %v2416 = vadd.f32 0.0, %v2415
    %v2417 = vpop.f32.mrb[0].mxu0
    %2418 = vdwg.mxu0
    %s2419 = scalar_lea.vmem %s4, 640
    %v2420 = vld [vmem:[%s2419] sm:$0xff]
    %v2421 = vld [vmem:[%s2419 + $0x8] sm:$0xff]
    %v2422 = vld [vmem:[%s2419 + $0x10] sm:$0xff]
    %v2423 = vld [vmem:[%s2419 + $0x18] sm:$0xff]
    %v2424 = vld [vmem:[%s2419 + $0x20] sm:$0xff]
    %v2425 = vld [vmem:[%s2419 + $0x28] sm:$0xff]
    %v2426 = vld [vmem:[%s2419 + $0x30] sm:$0xff]
    %v2427 = vld [vmem:[%s2419 + $0x38] sm:$0xff]
    %v2428 = vld [vmem:[%s2419 + $0x40] sm:$0xff]
    %v2429 = vld [vmem:[%s2419 + $0x48] sm:$0xff]
    %v2430 = vld [vmem:[%s2419 + $0x50] sm:$0xff]
    %v2431 = vld [vmem:[%s2419 + $0x58] sm:$0xff]
    %v2432 = vld [vmem:[%s2419 + $0x60] sm:$0xff]
    %v2433 = vld [vmem:[%s2419 + $0x68] sm:$0xff]
    %v2434 = vld [vmem:[%s2419 + $0x70] sm:$0xff]
    %v2435 = vld [vmem:[%s2419 + $0x78] sm:$0xff]
    %v2437 = vsel %vm866, %v2420, 0
    %v2440 = vsel %vm866, %v2421, 0
    %v2443 = vsel %vm866, %v2422, 0
    %v2446 = vsel %vm866, %v2423, 0
    %v2449 = vsel %vm866, %v2424, 0
    %v2452 = vsel %vm866, %v2425, 0
    %v2455 = vsel %vm866, %v2426, 0
    %v2458 = vsel %vm866, %v2427, 0
    %v2461 = vsel %vm866, %v2428, 0
    %v2464 = vsel %vm866, %v2429, 0
    %v2467 = vsel %vm866, %v2430, 0
    %v2470 = vsel %vm866, %v2431, 0
    %v2473 = vsel %vm866, %v2432, 0
    %v2476 = vsel %vm866, %v2433, 0
    %v2479 = vsel %vm866, %v2434, 0
    %v2482 = vsel %vm866, %v2435, 0
    %2484 = vmatprep.subr.mxu0 0.0
    %2485 = vmatpush1.msra.mxu0 %v2381
    %2486 = vmatprep.subr.mxu0 0.0
    %2487 = vmatpush1.msra.mxu0 %v2386
    %2488 = vmatprep.subr.mxu0 0.0
    %2489 = vmatpush1.msra.mxu0 %v2391
    %2490 = vmatprep.subr.mxu0 0.0
    %2491 = vmatpush1.msra.mxu0 %v2396
    %2492 = vmatprep.subr.mxu0 0.0
    %2493 = vmatpush1.msra.mxu0 %v2401
    %2494 = vmatprep.subr.mxu0 0.0
    %2495 = vmatpush1.msra.mxu0 %v2406
    %2496 = vmatprep.subr.mxu0 0.0
    %2497 = vmatpush1.msra.mxu0 %v2411
    %2498 = vmatprep.subr.mxu0 0.0
    %2499 = vmatpush1.msra.mxu0 %v2416
    %2500 = vmatprep.subr.mxu0 0.0
    %2501 = vmatpush1.msra.mxu0 0.0
    %2502 = vmatprep.subr.mxu0 0.0
    %2503 = vmatpush1.msra.mxu0 0.0
    %2504 = vmatprep.subr.mxu0 0.0
    %2505 = vmatpush1.msra.mxu0 0.0
    %2506 = vmatprep.subr.mxu0 0.0
    %2507 = vmatpush1.msra.mxu0 0.0
    %2508 = vmatprep.subr.mxu0 0.0
    %2509 = vmatpush1.msra.mxu0 0.0
    %2510 = vmatprep.subr.mxu0 0.0
    %2511 = vmatpush1.msra.mxu0 0.0
    %2512 = vmatprep.subr.mxu0 0.0
    %2513 = vmatpush1.msra.mxu0 0.0
    %2514 = vmatprep.subr.mxu0 0.0
    %2515 = vmatpush1.msra.mxu0 0.0
    %2516 = vmatprep.subr.mxu0 0.0
    %2517 = vmatpush1.msra.mxu0 0.0
    %2518 = vmatprep.subr.mxu0 0.0
    %2519 = vmatpush1.msra.mxu0 0.0
    %2520 = vmatprep.subr.mxu0 0.0
    %2521 = vmatpush1.msra.mxu0 0.0
    %2522 = vmatprep.subr.mxu0 0.0
    %2523 = vmatpush1.msra.mxu0 0.0
    %2524 = vmatprep.subr.mxu0 0.0
    %2525 = vmatpush1.msra.mxu0 0.0
    %2526 = vmatprep.subr.mxu0 0.0
    %2527 = vmatpush1.msra.mxu0 0.0
    %2528 = vmatprep.subr.mxu0 0.0
    %2529 = vmatpush1.msra.mxu0 0.0
    %2530 = vmatprep.subr.mxu0 0.0
    %2531 = vmatpush1.msra.mxu0 0.0
    %2532 = vmatprep.subr.mxu0 0.0
    %2533 = vmatpush1.msra.mxu0 0.0
    %2534 = vmatprep.subr.mxu0 0.0
    %2535 = vmatpush1.msra.mxu0 0.0
    %2536 = vmatprep.subr.mxu0 0.0
    %2537 = vmatpush1.msra.mxu0 0.0
    %2538 = vmatprep.subr.mxu0 0.0
    %2539 = vmatpush1.msra.mxu0 0.0
    %2540 = vmatprep.subr.mxu0 0.0
    %2541 = vmatpush1.msra.mxu0 0.0
    %2542 = vmatprep.subr.mxu0 0.0
    %2543 = vmatpush1.msra.mxu0 0.0
    %2544 = vmatprep.subr.mxu0 0.0
    %2545 = vmatpush1.msra.mxu0 0.0
    %2546 = vmatprep.subr.mxu0 0.0
    %2547 = vmatpush1.msra.mxu0 0.0
    %2548 = vmatprep.mubr.f32.mxu0 0.0
    %2549 = vmatmul.mubr.f32.gmra.mrb[0].mxu0 %v2437
    %v2550 = vpop.f32.mrb[0].mxu0
    %v2551 = vadd.f32 0.0, %v2550
    %v2552 = vpop.f32.mrb[0].mxu0
    %2553 = vmatprep.mubr.f32.mxu0 0.0
    %2554 = vmatmul.mubr.f32.gmra.mrb[0].mxu0 %v2440
    %v2555 = vpop.f32.mrb[0].mxu0
    %v2556 = vadd.f32 0.0, %v2555
    %v2557 = vpop.f32.mrb[0].mxu0
    %2558 = vmatprep.mubr.f32.mxu0 0.0
    %2559 = vmatmul.mubr.f32.gmra.mrb[0].mxu0 %v2443
    %v2560 = vpop.f32.mrb[0].mxu0
    %v2561 = vadd.f32 0.0, %v2560
    %v2562 = vpop.f32.mrb[0].mxu0
    %2563 = vmatprep.mubr.f32.mxu0 0.0
    %2564 = vmatmul.mubr.f32.gmra.mrb[0].mxu0 %v2446
    %v2565 = vpop.f32.mrb[0].mxu0
    %v2566 = vadd.f32 0.0, %v2565
    %v2567 = vpop.f32.mrb[0].mxu0
    %2568 = vmatprep.mubr.f32.mxu0 0.0
    %2569 = vmatmul.mubr.f32.gmra.mrb[0].mxu0 %v2449
    %v2570 = vpop.f32.mrb[0].mxu0
    %v2571 = vadd.f32 0.0, %v2570
    %v2572 = vpop.f32.mrb[0].mxu0
    %2573 = vmatprep.mubr.f32.mxu0 0.0
    %2574 = vmatmul.mubr.f32.gmra.mrb[0].mxu0 %v2452
    %v2575 = vpop.f32.mrb[0].mxu0
    %v2576 = vadd.f32 0.0, %v2575
    %v2577 = vpop.f32.mrb[0].mxu0
    %2578 = vmatprep.mubr.f32.mxu0 0.0
    %2579 = vmatmul.mubr.f32.gmra.mrb[0].mxu0 %v2455
    %v2580 = vpop.f32.mrb[0].mxu0
    %v2581 = vadd.f32 0.0, %v2580
    %v2582 = vpop.f32.mrb[0].mxu0
    %2583 = vmatprep.mubr.f32.mxu0 0.0
    %2584 = vmatmul.mubr.f32.gmra.mrb[0].mxu0 %v2458
    %v2585 = vpop.f32.mrb[0].mxu0
    %v2586 = vadd.f32 0.0, %v2585
    %v2587 = vpop.f32.mrb[0].mxu0
    %2588 = vmatprep.mubr.f32.mxu0 0.0
    %2589 = vmatmul.mubr.f32.gmra.mrb[0].mxu0 %v2461
    %v2590 = vpop.f32.mrb[0].mxu0
    %v2591 = vadd.f32 0.0, %v2590
    %v2592 = vpop.f32.mrb[0].mxu0
    %2593 = vmatprep.mubr.f32.mxu0 0.0
    %2594 = vmatmul.mubr.f32.gmra.mrb[0].mxu0 %v2464
    %v2595 = vpop.f32.mrb[0].mxu0
    %v2596 = vadd.f32 0.0, %v2595
    %v2597 = vpop.f32.mrb[0].mxu0
    %2598 = vmatprep.mubr.f32.mxu0 0.0
    %2599 = vmatmul.mubr.f32.gmra.mrb[0].mxu0 %v2467
    %v2600 = vpop.f32.mrb[0].mxu0
    %v2601 = vadd.f32 0.0, %v2600
    %v2602 = vpop.f32.mrb[0].mxu0
    %2603 = vmatprep.mubr.f32.mxu0 0.0
    %2604 = vmatmul.mubr.f32.gmra.mrb[0].mxu0 %v2470
    %v2605 = vpop.f32.mrb[0].mxu0
    %v2606 = vadd.f32 0.0, %v2605
    %v2607 = vpop.f32.mrb[0].mxu0
    %2608 = vmatprep.mubr.f32.mxu0 0.0
    %2609 = vmatmul.mubr.f32.gmra.mrb[0].mxu0 %v2473
    %v2610 = vpop.f32.mrb[0].mxu0
    %v2611 = vadd.f32 0.0, %v2610
    %v2612 = vpop.f32.mrb[0].mxu0
    %2613 = vmatprep.mubr.f32.mxu0 0.0
    %2614 = vmatmul.mubr.f32.gmra.mrb[0].mxu0 %v2476
    %v2615 = vpop.f32.mrb[0].mxu0
    %v2616 = vadd.f32 0.0, %v2615
    %v2617 = vpop.f32.mrb[0].mxu0
    %2618 = vmatprep.mubr.f32.mxu0 0.0
    %2619 = vmatmul.mubr.f32.gmra.mrb[0].mxu0 %v2479
    %v2620 = vpop.f32.mrb[0].mxu0
    %v2621 = vadd.f32 0.0, %v2620
    %v2622 = vpop.f32.mrb[0].mxu0
    %2623 = vmatprep.mubr.f32.mxu0 0.0
    %2624 = vmatmul.mubr.f32.gmra.mrb[0].mxu0 %v2482
    %v2625 = vpop.f32.mrb[0].mxu0
    %v2626 = vadd.f32 0.0, %v2625
    %v2627 = vpop.f32.mrb[0].mxu0
    %2628 = vdwg.mxu0
    %v2629 = vadd.f32 %v2281, %v2551
    %v2630 = vadd.f32 %v2282, %v2556
    %v2631 = vadd.f32 %v2283, %v2561
    %v2632 = vadd.f32 %v2284, %v2566
    %v2633 = vadd.f32 %v2285, %v2571
    %v2634 = vadd.f32 %v2286, %v2576
    %v2635 = vadd.f32 %v2287, %v2581
    %v2636 = vadd.f32 %v2288, %v2586
    %v2637 = vadd.f32 %v2289, %v2591
    %v2638 = vadd.f32 %v2290, %v2596
    %v2639 = vadd.f32 %v2291, %v2601
    %v2640 = vadd.f32 %v2292, %v2606
    %v2641 = vadd.f32 %v2293, %v2611
    %v2642 = vadd.f32 %v2294, %v2616
    %v2643 = vadd.f32 %v2295, %v2621
    %v2644 = vadd.f32 %v2296, %v2626
    %s2645 = scalar_lea.vmem %s5, 768
    %v2646 = vld [vmem:[%s2645] sm:$0xff]
    %v2647 = vld [vmem:[%s2645 + $0x8] sm:$0xff]
    %v2648 = vld [vmem:[%s2645 + $0x10] sm:$0xff]
    %v2649 = vld [vmem:[%s2645 + $0x18] sm:$0xff]
    %v2650 = vld [vmem:[%s2645 + $0x20] sm:$0xff]
    %v2651 = vld [vmem:[%s2645 + $0x28] sm:$0xff]
    %v2652 = vld [vmem:[%s2645 + $0x30] sm:$0xff]
    %v2653 = vld [vmem:[%s2645 + $0x38] sm:$0xff]
    %v2654 = vld [vmem:[%s2645 + $0x40] sm:$0xff]
    %v2655 = vld [vmem:[%s2645 + $0x48] sm:$0xff]
    %v2656 = vld [vmem:[%s2645 + $0x50] sm:$0xff]
    %v2657 = vld [vmem:[%s2645 + $0x58] sm:$0xff]
    %v2658 = vld [vmem:[%s2645 + $0x60] sm:$0xff]
    %v2659 = vld [vmem:[%s2645 + $0x68] sm:$0xff]
    %v2660 = vld [vmem:[%s2645 + $0x70] sm:$0xff]
    %v2661 = vld [vmem:[%s2645 + $0x78] sm:$0xff]
    %2662 = vmatprep.subr.mxu0 0.0
    %2663 = vmatpush1.msra.mxu0 %v2646
    %2664 = vmatprep.subr.mxu0 0.0
    %2665 = vmatpush1.msra.mxu0 %v2647
    %2666 = vmatprep.subr.mxu0 0.0
    %2667 = vmatpush1.msra.mxu0 %v2648
    %2668 = vmatprep.subr.mxu0 0.0
    %2669 = vmatpush1.msra.mxu0 %v2649
    %2670 = vmatprep.subr.mxu0 0.0
    %2671 = vmatpush1.msra.mxu0 %v2650
    %2672 = vmatprep.subr.mxu0 0.0
    %2673 = vmatpush1.msra.mxu0 %v2651
    %2674 = vmatprep.subr.mxu0 0.0
    %2675 = vmatpush1.msra.mxu0 %v2652
    %2676 = vmatprep.subr.mxu0 0.0
    %2677 = vmatpush1.msra.mxu0 %v2653
    %2678 = vmatprep.subr.mxu0 0.0
    %2679 = vmatpush1.msra.mxu0 %v2654
    %2680 = vmatprep.subr.mxu0 0.0
    %2681 = vmatpush1.msra.mxu0 %v2655
    %2682 = vmatprep.subr.mxu0 0.0
    %2683 = vmatpush1.msra.mxu0 %v2656
    %2684 = vmatprep.subr.mxu0 0.0
    %2685 = vmatpush1.msra.mxu0 %v2657
    %2686 = vmatprep.subr.mxu0 0.0
    %2687 = vmatpush1.msra.mxu0 %v2658
    %2688 = vmatprep.subr.mxu0 0.0
    %2689 = vmatpush1.msra.mxu0 %v2659
    %2690 = vmatprep.subr.mxu0 0.0
    %2691 = vmatpush1.msra.mxu0 %v2660
    %2692 = vmatprep.subr.mxu0 0.0
    %2693 = vmatpush1.msra.mxu0 %v2661
    %2694 = vmatprep.subr.mxu0 0.0
    %2695 = vmatpush1.msra.mxu0 0.0
    %2696 = vmatprep.subr.mxu0 0.0
    %2697 = vmatpush1.msra.mxu0 0.0
    %2698 = vmatprep.subr.mxu0 0.0
    %2699 = vmatpush1.msra.mxu0 0.0
    %2700 = vmatprep.subr.mxu0 0.0
    %2701 = vmatpush1.msra.mxu0 0.0
    %2702 = vmatprep.subr.mxu0 0.0
    %2703 = vmatpush1.msra.mxu0 0.0
    %2704 = vmatprep.subr.mxu0 0.0
    %2705 = vmatpush1.msra.mxu0 0.0
    %2706 = vmatprep.subr.mxu0 0.0
    %2707 = vmatpush1.msra.mxu0 0.0
    %2708 = vmatprep.subr.mxu0 0.0
    %2709 = vmatpush1.msra.mxu0 0.0
    %2710 = vmatprep.subr.mxu0 0.0
    %2711 = vmatpush1.msra.mxu0 0.0
    %2712 = vmatprep.subr.mxu0 0.0
    %2713 = vmatpush1.msra.mxu0 0.0
    %2714 = vmatprep.subr.mxu0 0.0
    %2715 = vmatpush1.msra.mxu0 0.0
    %2716 = vmatprep.subr.mxu0 0.0
    %2717 = vmatpush1.msra.mxu0 0.0
    %2718 = vmatprep.subr.mxu0 0.0
    %2719 = vmatpush1.msra.mxu0 0.0
    %2720 = vmatprep.subr.mxu0 0.0
    %2721 = vmatpush1.msra.mxu0 0.0
    %2722 = vmatprep.subr.mxu0 0.0
    %2723 = vmatpush1.msra.mxu0 0.0
    %2724 = vmatprep.subr.mxu0 0.0
    %2725 = vmatpush1.msra.mxu0 0.0
    %2726 = vmatprep.mubr.f32.mxu0 0.0
    %2727 = vmatmul.mubr.f32.gmra.mrb[0].mxu0 %v582
    %v2728 = vpop.f32.mrb[0].mxu0
    %v2729 = vadd.f32 0.0, %v2728
    %v2730 = vpop.f32.mrb[0].mxu0
    %2731 = vmatprep.mubr.f32.mxu0 0.0
    %2732 = vmatmul.mubr.f32.gmra.mrb[0].mxu0 %v583
    %v2733 = vpop.f32.mrb[0].mxu0
    %v2734 = vadd.f32 0.0, %v2733
    %v2735 = vpop.f32.mrb[0].mxu0
    %2736 = vmatprep.mubr.f32.mxu0 0.0
    %2737 = vmatmul.mubr.f32.gmra.mrb[0].mxu0 %v584
    %v2738 = vpop.f32.mrb[0].mxu0
    %v2739 = vadd.f32 0.0, %v2738
    %v2740 = vpop.f32.mrb[0].mxu0
    %2741 = vmatprep.mubr.f32.mxu0 0.0
    %2742 = vmatmul.mubr.f32.gmra.mrb[0].mxu0 %v585
    %v2743 = vpop.f32.mrb[0].mxu0
    %v2744 = vadd.f32 0.0, %v2743
    %v2745 = vpop.f32.mrb[0].mxu0
    %2746 = vmatprep.mubr.f32.mxu0 0.0
    %2747 = vmatmul.mubr.f32.gmra.mrb[0].mxu0 %v586
    %v2748 = vpop.f32.mrb[0].mxu0
    %v2749 = vadd.f32 0.0, %v2748
    %v2750 = vpop.f32.mrb[0].mxu0
    %2751 = vmatprep.mubr.f32.mxu0 0.0
    %2752 = vmatmul.mubr.f32.gmra.mrb[0].mxu0 %v587
    %v2753 = vpop.f32.mrb[0].mxu0
    %v2754 = vadd.f32 0.0, %v2753
    %v2755 = vpop.f32.mrb[0].mxu0
    %2756 = vmatprep.mubr.f32.mxu0 0.0
    %2757 = vmatmul.mubr.f32.gmra.mrb[0].mxu0 %v588
    %v2758 = vpop.f32.mrb[0].mxu0
    %v2759 = vadd.f32 0.0, %v2758
    %v2760 = vpop.f32.mrb[0].mxu0
    %2761 = vmatprep.mubr.f32.mxu0 0.0
    %2762 = vmatmul.mubr.f32.gmra.mrb[0].mxu0 %v589
    %v2763 = vpop.f32.mrb[0].mxu0
    %v2764 = vadd.f32 0.0, %v2763
    %v2765 = vpop.f32.mrb[0].mxu0
    %2766 = vdwg.mxu0
    %s2767 = scalar_lea.vmem %s4, 768
    %v2768 = vld [vmem:[%s2767] sm:$0xff]
    %v2769 = vld [vmem:[%s2767 + $0x8] sm:$0xff]
    %v2770 = vld [vmem:[%s2767 + $0x10] sm:$0xff]
    %v2771 = vld [vmem:[%s2767 + $0x18] sm:$0xff]
    %v2772 = vld [vmem:[%s2767 + $0x20] sm:$0xff]
    %v2773 = vld [vmem:[%s2767 + $0x28] sm:$0xff]
    %v2774 = vld [vmem:[%s2767 + $0x30] sm:$0xff]
    %v2775 = vld [vmem:[%s2767 + $0x38] sm:$0xff]
    %v2776 = vld [vmem:[%s2767 + $0x40] sm:$0xff]
    %v2777 = vld [vmem:[%s2767 + $0x48] sm:$0xff]
    %v2778 = vld [vmem:[%s2767 + $0x50] sm:$0xff]
    %v2779 = vld [vmem:[%s2767 + $0x58] sm:$0xff]
    %v2780 = vld [vmem:[%s2767 + $0x60] sm:$0xff]
    %v2781 = vld [vmem:[%s2767 + $0x68] sm:$0xff]
    %v2782 = vld [vmem:[%s2767 + $0x70] sm:$0xff]
    %v2783 = vld [vmem:[%s2767 + $0x78] sm:$0xff]
    %v2785 = vsel %vm866, %v2768, 0
    %v2788 = vsel %vm866, %v2769, 0
    %v2791 = vsel %vm866, %v2770, 0
    %v2794 = vsel %vm866, %v2771, 0
    %v2797 = vsel %vm866, %v2772, 0
    %v2800 = vsel %vm866, %v2773, 0
    %v2803 = vsel %vm866, %v2774, 0
    %v2806 = vsel %vm866, %v2775, 0
    %v2809 = vsel %vm866, %v2776, 0
    %v2812 = vsel %vm866, %v2777, 0
    %v2815 = vsel %vm866, %v2778, 0
    %v2818 = vsel %vm866, %v2779, 0
    %v2821 = vsel %vm866, %v2780, 0
    %v2824 = vsel %vm866, %v2781, 0
    %v2827 = vsel %vm866, %v2782, 0
    %v2830 = vsel %vm866, %v2783, 0
    %2832 = vmatprep.subr.mxu0 0.0
    %2833 = vmatpush1.msra.mxu0 %v2729
    %2834 = vmatprep.subr.mxu0 0.0
    %2835 = vmatpush1.msra.mxu0 %v2734
    %2836 = vmatprep.subr.mxu0 0.0
    %2837 = vmatpush1.msra.mxu0 %v2739
    %2838 = vmatprep.subr.mxu0 0.0
    %2839 = vmatpush1.msra.mxu0 %v2744
    %2840 = vmatprep.subr.mxu0 0.0
    %2841 = vmatpush1.msra.mxu0 %v2749
    %2842 = vmatprep.subr.mxu0 0.0
    %2843 = vmatpush1.msra.mxu0 %v2754
    %2844 = vmatprep.subr.mxu0 0.0
    %2845 = vmatpush1.msra.mxu0 %v2759
    %2846 = vmatprep.subr.mxu0 0.0
    %2847 = vmatpush1.msra.mxu0 %v2764
    %2848 = vmatprep.subr.mxu0 0.0
    %2849 = vmatpush1.msra.mxu0 0.0
    %2850 = vmatprep.subr.mxu0 0.0
    %2851 = vmatpush1.msra.mxu0 0.0
    %2852 = vmatprep.subr.mxu0 0.0
    %2853 = vmatpush1.msra.mxu0 0.0
    %2854 = vmatprep.subr.mxu0 0.0
    %2855 = vmatpush1.msra.mxu0 0.0
    %2856 = vmatprep.subr.mxu0 0.0
    %2857 = vmatpush1.msra.mxu0 0.0
    %2858 = vmatprep.subr.mxu0 0.0
    %2859 = vmatpush1.msra.mxu0 0.0
    %2860 = vmatprep.subr.mxu0 0.0
    %2861 = vmatpush1.msra.mxu0 0.0
    %2862 = vmatprep.subr.mxu0 0.0
    %2863 = vmatpush1.msra.mxu0 0.0
    %2864 = vmatprep.subr.mxu0 0.0
    %2865 = vmatpush1.msra.mxu0 0.0
    %2866 = vmatprep.subr.mxu0 0.0
    %2867 = vmatpush1.msra.mxu0 0.0
    %2868 = vmatprep.subr.mxu0 0.0
    %2869 = vmatpush1.msra.mxu0 0.0
    %2870 = vmatprep.subr.mxu0 0.0
    %2871 = vmatpush1.msra.mxu0 0.0
    %2872 = vmatprep.subr.mxu0 0.0
    %2873 = vmatpush1.msra.mxu0 0.0
    %2874 = vmatprep.subr.mxu0 0.0
    %2875 = vmatpush1.msra.mxu0 0.0
    %2876 = vmatprep.subr.mxu0 0.0
    %2877 = vmatpush1.msra.mxu0 0.0
    %2878 = vmatprep.subr.mxu0 0.0
    %2879 = vmatpush1.msra.mxu0 0.0
    %2880 = vmatprep.subr.mxu0 0.0
    %2881 = vmatpush1.msra.mxu0 0.0
    %2882 = vmatprep.subr.mxu0 0.0
    %2883 = vmatpush1.msra.mxu0 0.0
    %2884 = vmatprep.subr.mxu0 0.0
    %2885 = vmatpush1.msra.mxu0 0.0
    %2886 = vmatprep.subr.mxu0 0.0
    %2887 = vmatpush1.msra.mxu0 0.0
    %2888 = vmatprep.subr.mxu0 0.0
    %2889 = vmatpush1.msra.mxu0 0.0
    %2890 = vmatprep.subr.mxu0 0.0
    %2891 = vmatpush1.msra.mxu0 0.0
    %2892 = vmatprep.subr.mxu0 0.0
    %2893 = vmatpush1.msra.mxu0 0.0
    %2894 = vmatprep.subr.mxu0 0.0
    %2895 = vmatpush1.msra.mxu0 0.0
    %2896 = vmatprep.mubr.f32.mxu0 0.0
    %2897 = vmatmul.mubr.f32.gmra.mrb[0].mxu0 %v2785
    %v2898 = vpop.f32.mrb[0].mxu0
    %v2899 = vadd.f32 0.0, %v2898
    %v2900 = vpop.f32.mrb[0].mxu0
    %2901 = vmatprep.mubr.f32.mxu0 0.0
    %2902 = vmatmul.mubr.f32.gmra.mrb[0].mxu0 %v2788
    %v2903 = vpop.f32.mrb[0].mxu0
    %v2904 = vadd.f32 0.0, %v2903
    %v2905 = vpop.f32.mrb[0].mxu0
    %2906 = vmatprep.mubr.f32.mxu0 0.0
    %2907 = vmatmul.mubr.f32.gmra.mrb[0].mxu0 %v2791
    %v2908 = vpop.f32.mrb[0].mxu0
    %v2909 = vadd.f32 0.0, %v2908
    %v2910 = vpop.f32.mrb[0].mxu0
    %2911 = vmatprep.mubr.f32.mxu0 0.0
    %2912 = vmatmul.mubr.f32.gmra.mrb[0].mxu0 %v2794
    %v2913 = vpop.f32.mrb[0].mxu0
    %v2914 = vadd.f32 0.0, %v2913
    %v2915 = vpop.f32.mrb[0].mxu0
    %2916 = vmatprep.mubr.f32.mxu0 0.0
    %2917 = vmatmul.mubr.f32.gmra.mrb[0].mxu0 %v2797
    %v2918 = vpop.f32.mrb[0].mxu0
    %v2919 = vadd.f32 0.0, %v2918
    %v2920 = vpop.f32.mrb[0].mxu0
    %2921 = vmatprep.mubr.f32.mxu0 0.0
    %2922 = vmatmul.mubr.f32.gmra.mrb[0].mxu0 %v2800
    %v2923 = vpop.f32.mrb[0].mxu0
    %v2924 = vadd.f32 0.0, %v2923
    %v2925 = vpop.f32.mrb[0].mxu0
    %2926 = vmatprep.mubr.f32.mxu0 0.0
    %2927 = vmatmul.mubr.f32.gmra.mrb[0].mxu0 %v2803
    %v2928 = vpop.f32.mrb[0].mxu0
    %v2929 = vadd.f32 0.0, %v2928
    %v2930 = vpop.f32.mrb[0].mxu0
    %2931 = vmatprep.mubr.f32.mxu0 0.0
    %2932 = vmatmul.mubr.f32.gmra.mrb[0].mxu0 %v2806
    %v2933 = vpop.f32.mrb[0].mxu0
    %v2934 = vadd.f32 0.0, %v2933
    %v2935 = vpop.f32.mrb[0].mxu0
    %2936 = vmatprep.mubr.f32.mxu0 0.0
    %2937 = vmatmul.mubr.f32.gmra.mrb[0].mxu0 %v2809
    %v2938 = vpop.f32.mrb[0].mxu0
    %v2939 = vadd.f32 0.0, %v2938
    %v2940 = vpop.f32.mrb[0].mxu0
    %2941 = vmatprep.mubr.f32.mxu0 0.0
    %2942 = vmatmul.mubr.f32.gmra.mrb[0].mxu0 %v2812
    %v2943 = vpop.f32.mrb[0].mxu0
    %v2944 = vadd.f32 0.0, %v2943
    %v2945 = vpop.f32.mrb[0].mxu0
    %2946 = vmatprep.mubr.f32.mxu0 0.0
    %2947 = vmatmul.mubr.f32.gmra.mrb[0].mxu0 %v2815
    %v2948 = vpop.f32.mrb[0].mxu0
    %v2949 = vadd.f32 0.0, %v2948
    %v2950 = vpop.f32.mrb[0].mxu0
    %2951 = vmatprep.mubr.f32.mxu0 0.0
    %2952 = vmatmul.mubr.f32.gmra.mrb[0].mxu0 %v2818
    %v2953 = vpop.f32.mrb[0].mxu0
    %v2954 = vadd.f32 0.0, %v2953
    %v2955 = vpop.f32.mrb[0].mxu0
    %2956 = vmatprep.mubr.f32.mxu0 0.0
    %2957 = vmatmul.mubr.f32.gmra.mrb[0].mxu0 %v2821
    %v2958 = vpop.f32.mrb[0].mxu0
    %v2959 = vadd.f32 0.0, %v2958
    %v2960 = vpop.f32.mrb[0].mxu0
    %2961 = vmatprep.mubr.f32.mxu0 0.0
    %2962 = vmatmul.mubr.f32.gmra.mrb[0].mxu0 %v2824
    %v2963 = vpop.f32.mrb[0].mxu0
    %v2964 = vadd.f32 0.0, %v2963
    %v2965 = vpop.f32.mrb[0].mxu0
    %2966 = vmatprep.mubr.f32.mxu0 0.0
    %2967 = vmatmul.mubr.f32.gmra.mrb[0].mxu0 %v2827
    %v2968 = vpop.f32.mrb[0].mxu0
    %v2969 = vadd.f32 0.0, %v2968
    %v2970 = vpop.f32.mrb[0].mxu0
    %2971 = vmatprep.mubr.f32.mxu0 0.0
    %2972 = vmatmul.mubr.f32.gmra.mrb[0].mxu0 %v2830
    %v2973 = vpop.f32.mrb[0].mxu0
    %v2974 = vadd.f32 0.0, %v2973
    %v2975 = vpop.f32.mrb[0].mxu0
    %2976 = vdwg.mxu0
    %v2977 = vadd.f32 %v2629, %v2899
    %v2978 = vadd.f32 %v2630, %v2904
    %v2979 = vadd.f32 %v2631, %v2909
    %v2980 = vadd.f32 %v2632, %v2914
    %v2981 = vadd.f32 %v2633, %v2919
    %v2982 = vadd.f32 %v2634, %v2924
    %v2983 = vadd.f32 %v2635, %v2929
    %v2984 = vadd.f32 %v2636, %v2934
    %v2985 = vadd.f32 %v2637, %v2939
    %v2986 = vadd.f32 %v2638, %v2944
    %v2987 = vadd.f32 %v2639, %v2949
    %v2988 = vadd.f32 %v2640, %v2954
    %v2989 = vadd.f32 %v2641, %v2959
    %v2990 = vadd.f32 %v2642, %v2964
    %v2991 = vadd.f32 %v2643, %v2969
    %v2992 = vadd.f32 %v2644, %v2974
    %s2993 = scalar_lea.vmem %s5, 896
    %v2994 = vld [vmem:[%s2993] sm:$0xff]
    %v2995 = vld [vmem:[%s2993 + $0x8] sm:$0xff]
    %v2996 = vld [vmem:[%s2993 + $0x10] sm:$0xff]
    %v2997 = vld [vmem:[%s2993 + $0x18] sm:$0xff]
    %v2998 = vld [vmem:[%s2993 + $0x20] sm:$0xff]
    %v2999 = vld [vmem:[%s2993 + $0x28] sm:$0xff]
    %v3000 = vld [vmem:[%s2993 + $0x30] sm:$0xff]
    %v3001 = vld [vmem:[%s2993 + $0x38] sm:$0xff]
    %v3002 = vld [vmem:[%s2993 + $0x40] sm:$0xff]
    %v3003 = vld [vmem:[%s2993 + $0x48] sm:$0xff]
    %v3004 = vld [vmem:[%s2993 + $0x50] sm:$0xff]
    %v3005 = vld [vmem:[%s2993 + $0x58] sm:$0xff]
    %v3006 = vld [vmem:[%s2993 + $0x60] sm:$0xff]
    %v3007 = vld [vmem:[%s2993 + $0x68] sm:$0xff]
    %v3008 = vld [vmem:[%s2993 + $0x70] sm:$0xff]
    %v3009 = vld [vmem:[%s2993 + $0x78] sm:$0xff]
    %3010 = vmatprep.subr.mxu0 0.0
    %3011 = vmatpush1.msra.mxu0 %v2994
    %3012 = vmatprep.subr.mxu0 0.0
    %3013 = vmatpush1.msra.mxu0 %v2995
    %3014 = vmatprep.subr.mxu0 0.0
    %3015 = vmatpush1.msra.mxu0 %v2996
    %3016 = vmatprep.subr.mxu0 0.0
    %3017 = vmatpush1.msra.mxu0 %v2997
    %3018 = vmatprep.subr.mxu0 0.0
    %3019 = vmatpush1.msra.mxu0 %v2998
    %3020 = vmatprep.subr.mxu0 0.0
    %3021 = vmatpush1.msra.mxu0 %v2999
    %3022 = vmatprep.subr.mxu0 0.0
    %3023 = vmatpush1.msra.mxu0 %v3000
    %3024 = vmatprep.subr.mxu0 0.0
    %3025 = vmatpush1.msra.mxu0 %v3001
    %3026 = vmatprep.subr.mxu0 0.0
    %3027 = vmatpush1.msra.mxu0 %v3002
    %3028 = vmatprep.subr.mxu0 0.0
    %3029 = vmatpush1.msra.mxu0 %v3003
    %3030 = vmatprep.subr.mxu0 0.0
    %3031 = vmatpush1.msra.mxu0 %v3004
    %3032 = vmatprep.subr.mxu0 0.0
    %3033 = vmatpush1.msra.mxu0 %v3005
    %3034 = vmatprep.subr.mxu0 0.0
    %3035 = vmatpush1.msra.mxu0 %v3006
    %3036 = vmatprep.subr.mxu0 0.0
    %3037 = vmatpush1.msra.mxu0 %v3007
    %3038 = vmatprep.subr.mxu0 0.0
    %3039 = vmatpush1.msra.mxu0 %v3008
    %3040 = vmatprep.subr.mxu0 0.0
    %3041 = vmatpush1.msra.mxu0 %v3009
    %3042 = vmatprep.subr.mxu0 0.0
    %3043 = vmatpush1.msra.mxu0 0.0
    %3044 = vmatprep.subr.mxu0 0.0
    %3045 = vmatpush1.msra.mxu0 0.0
    %3046 = vmatprep.subr.mxu0 0.0
    %3047 = vmatpush1.msra.mxu0 0.0
    %3048 = vmatprep.subr.mxu0 0.0
    %3049 = vmatpush1.msra.mxu0 0.0
    %3050 = vmatprep.subr.mxu0 0.0
    %3051 = vmatpush1.msra.mxu0 0.0
    %3052 = vmatprep.subr.mxu0 0.0
    %3053 = vmatpush1.msra.mxu0 0.0
    %3054 = vmatprep.subr.mxu0 0.0
    %3055 = vmatpush1.msra.mxu0 0.0
    %3056 = vmatprep.subr.mxu0 0.0
    %3057 = vmatpush1.msra.mxu0 0.0
    %3058 = vmatprep.subr.mxu0 0.0
    %3059 = vmatpush1.msra.mxu0 0.0
    %3060 = vmatprep.subr.mxu0 0.0
    %3061 = vmatpush1.msra.mxu0 0.0
    %3062 = vmatprep.subr.mxu0 0.0
    %3063 = vmatpush1.msra.mxu0 0.0
    %3064 = vmatprep.subr.mxu0 0.0
    %3065 = vmatpush1.msra.mxu0 0.0
    %3066 = vmatprep.subr.mxu0 0.0
    %3067 = vmatpush1.msra.mxu0 0.0
    %3068 = vmatprep.subr.mxu0 0.0
    %3069 = vmatpush1.msra.mxu0 0.0
    %3070 = vmatprep.subr.mxu0 0.0
    %3071 = vmatpush1.msra.mxu0 0.0
    %3072 = vmatprep.subr.mxu0 0.0
    %3073 = vmatpush1.msra.mxu0 0.0
    %3074 = vmatprep.mubr.f32.mxu0 0.0
    %3075 = vmatmul.mubr.f32.gmra.mrb[0].mxu0 %v582
    %v3076 = vpop.f32.mrb[0].mxu0
    %v3077 = vadd.f32 0.0, %v3076
    %v3078 = vpop.f32.mrb[0].mxu0
    %3079 = vmatprep.mubr.f32.mxu0 0.0
    %3080 = vmatmul.mubr.f32.gmra.mrb[0].mxu0 %v583
    %v3081 = vpop.f32.mrb[0].mxu0
    %v3082 = vadd.f32 0.0, %v3081
    %v3083 = vpop.f32.mrb[0].mxu0
    %3084 = vmatprep.mubr.f32.mxu0 0.0
    %3085 = vmatmul.mubr.f32.gmra.mrb[0].mxu0 %v584
    %v3086 = vpop.f32.mrb[0].mxu0
    %v3087 = vadd.f32 0.0, %v3086
    %v3088 = vpop.f32.mrb[0].mxu0
    %3089 = vmatprep.mubr.f32.mxu0 0.0
    %3090 = vmatmul.mubr.f32.gmra.mrb[0].mxu0 %v585
    %v3091 = vpop.f32.mrb[0].mxu0
    %v3092 = vadd.f32 0.0, %v3091
    %v3093 = vpop.f32.mrb[0].mxu0
    %3094 = vmatprep.mubr.f32.mxu0 0.0
    %3095 = vmatmul.mubr.f32.gmra.mrb[0].mxu0 %v586
    %v3096 = vpop.f32.mrb[0].mxu0
    %v3097 = vadd.f32 0.0, %v3096
    %v3098 = vpop.f32.mrb[0].mxu0
    %3099 = vmatprep.mubr.f32.mxu0 0.0
    %3100 = vmatmul.mubr.f32.gmra.mrb[0].mxu0 %v587
    %v3101 = vpop.f32.mrb[0].mxu0
    %v3102 = vadd.f32 0.0, %v3101
    %v3103 = vpop.f32.mrb[0].mxu0
    %3104 = vmatprep.mubr.f32.mxu0 0.0
    %3105 = vmatmul.mubr.f32.gmra.mrb[0].mxu0 %v588
    %v3106 = vpop.f32.mrb[0].mxu0
    %v3107 = vadd.f32 0.0, %v3106
    %v3108 = vpop.f32.mrb[0].mxu0
    %3109 = vmatprep.mubr.f32.mxu0 0.0
    %3110 = vmatmul.mubr.f32.gmra.mrb[0].mxu0 %v589
    %v3111 = vpop.f32.mrb[0].mxu0
    %v3112 = vadd.f32 0.0, %v3111
    %v3113 = vpop.f32.mrb[0].mxu0
    %3114 = vdwg.mxu0
    %s3115 = scalar_lea.vmem %s4, 896
    %v3116 = vld [vmem:[%s3115] sm:$0xff]
    %v3117 = vld [vmem:[%s3115 + $0x8] sm:$0xff]
    %v3118 = vld [vmem:[%s3115 + $0x10] sm:$0xff]
    %v3119 = vld [vmem:[%s3115 + $0x18] sm:$0xff]
    %v3120 = vld [vmem:[%s3115 + $0x20] sm:$0xff]
    %v3121 = vld [vmem:[%s3115 + $0x28] sm:$0xff]
    %v3122 = vld [vmem:[%s3115 + $0x30] sm:$0xff]
    %v3123 = vld [vmem:[%s3115 + $0x38] sm:$0xff]
    %v3124 = vld [vmem:[%s3115 + $0x40] sm:$0xff]
    %v3125 = vld [vmem:[%s3115 + $0x48] sm:$0xff]
    %v3126 = vld [vmem:[%s3115 + $0x50] sm:$0xff]
    %v3127 = vld [vmem:[%s3115 + $0x58] sm:$0xff]
    %v3128 = vld [vmem:[%s3115 + $0x60] sm:$0xff]
    %v3129 = vld [vmem:[%s3115 + $0x68] sm:$0xff]
    %v3130 = vld [vmem:[%s3115 + $0x70] sm:$0xff]
    %v3131 = vld [vmem:[%s3115 + $0x78] sm:$0xff]
    %v3133 = vsel %vm866, %v3116, 0
    %v3136 = vsel %vm866, %v3117, 0
    %v3139 = vsel %vm866, %v3118, 0
    %v3142 = vsel %vm866, %v3119, 0
    %v3145 = vsel %vm866, %v3120, 0
    %v3148 = vsel %vm866, %v3121, 0
    %v3151 = vsel %vm866, %v3122, 0
    %v3154 = vsel %vm866, %v3123, 0
    %v3157 = vsel %vm866, %v3124, 0
    %v3160 = vsel %vm866, %v3125, 0
    %v3163 = vsel %vm866, %v3126, 0
    %v3166 = vsel %vm866, %v3127, 0
    %v3169 = vsel %vm866, %v3128, 0
    %v3172 = vsel %vm866, %v3129, 0
    %v3175 = vsel %vm866, %v3130, 0
    %v3178 = vsel %vm866, %v3131, 0
    %3180 = vmatprep.subr.mxu0 0.0
    %3181 = vmatpush1.msra.mxu0 %v3077
    %3182 = vmatprep.subr.mxu0 0.0
    %3183 = vmatpush1.msra.mxu0 %v3082
    %3184 = vmatprep.subr.mxu0 0.0
    %3185 = vmatpush1.msra.mxu0 %v3087
    %3186 = vmatprep.subr.mxu0 0.0
    %3187 = vmatpush1.msra.mxu0 %v3092
    %3188 = vmatprep.subr.mxu0 0.0
    %3189 = vmatpush1.msra.mxu0 %v3097
    %3190 = vmatprep.subr.mxu0 0.0
    %3191 = vmatpush1.msra.mxu0 %v3102
    %3192 = vmatprep.subr.mxu0 0.0
    %3193 = vmatpush1.msra.mxu0 %v3107
    %3194 = vmatprep.subr.mxu0 0.0
    %3195 = vmatpush1.msra.mxu0 %v3112
    %3196 = vmatprep.subr.mxu0 0.0
    %3197 = vmatpush1.msra.mxu0 0.0
    %3198 = vmatprep.subr.mxu0 0.0
    %3199 = vmatpush1.msra.mxu0 0.0
    %3200 = vmatprep.subr.mxu0 0.0
    %3201 = vmatpush1.msra.mxu0 0.0
    %3202 = vmatprep.subr.mxu0 0.0
    %3203 = vmatpush1.msra.mxu0 0.0
    %3204 = vmatprep.subr.mxu0 0.0
    %3205 = vmatpush1.msra.mxu0 0.0
    %3206 = vmatprep.subr.mxu0 0.0
    %3207 = vmatpush1.msra.mxu0 0.0
    %3208 = vmatprep.subr.mxu0 0.0
    %3209 = vmatpush1.msra.mxu0 0.0
    %3210 = vmatprep.subr.mxu0 0.0
    %3211 = vmatpush1.msra.mxu0 0.0
    %3212 = vmatprep.subr.mxu0 0.0
    %3213 = vmatpush1.msra.mxu0 0.0
    %3214 = vmatprep.subr.mxu0 0.0
    %3215 = vmatpush1.msra.mxu0 0.0
    %3216 = vmatprep.subr.mxu0 0.0
    %3217 = vmatpush1.msra.mxu0 0.0
    %3218 = vmatprep.subr.mxu0 0.0
    %3219 = vmatpush1.msra.mxu0 0.0
    %3220 = vmatprep.subr.mxu0 0.0
    %3221 = vmatpush1.msra.mxu0 0.0
    %3222 = vmatprep.subr.mxu0 0.0
    %3223 = vmatpush1.msra.mxu0 0.0
    %3224 = vmatprep.subr.mxu0 0.0
    %3225 = vmatpush1.msra.mxu0 0.0
    %3226 = vmatprep.subr.mxu0 0.0
    %3227 = vmatpush1.msra.mxu0 0.0
    %3228 = vmatprep.subr.mxu0 0.0
    %3229 = vmatpush1.msra.mxu0 0.0
    %3230 = vmatprep.subr.mxu0 0.0
    %3231 = vmatpush1.msra.mxu0 0.0
    %3232 = vmatprep.subr.mxu0 0.0
    %3233 = vmatpush1.msra.mxu0 0.0
    %3234 = vmatprep.subr.mxu0 0.0
    %3235 = vmatpush1.msra.mxu0 0.0
    %3236 = vmatprep.subr.mxu0 0.0
    %3237 = vmatpush1.msra.mxu0 0.0
    %3238 = vmatprep.subr.mxu0 0.0
    %3239 = vmatpush1.msra.mxu0 0.0
    %3240 = vmatprep.subr.mxu0 0.0
    %3241 = vmatpush1.msra.mxu0 0.0
    %3242 = vmatprep.subr.mxu0 0.0
    %3243 = vmatpush1.msra.mxu0 0.0
    %3244 = vmatprep.mubr.f32.mxu0 0.0
    %3245 = vmatmul.mubr.f32.gmra.mrb[0].mxu0 %v3133
    %v3246 = vpop.f32.mrb[0].mxu0
    %v3247 = vadd.f32 0.0, %v3246
    %v3248 = vpop.f32.mrb[0].mxu0
    %3249 = vmatprep.mubr.f32.mxu0 0.0
    %3250 = vmatmul.mubr.f32.gmra.mrb[0].mxu0 %v3136
    %v3251 = vpop.f32.mrb[0].mxu0
    %v3252 = vadd.f32 0.0, %v3251
    %v3253 = vpop.f32.mrb[0].mxu0
    %3254 = vmatprep.mubr.f32.mxu0 0.0
    %3255 = vmatmul.mubr.f32.gmra.mrb[0].mxu0 %v3139
    %v3256 = vpop.f32.mrb[0].mxu0
    %v3257 = vadd.f32 0.0, %v3256
    %v3258 = vpop.f32.mrb[0].mxu0
    %3259 = vmatprep.mubr.f32.mxu0 0.0
    %3260 = vmatmul.mubr.f32.gmra.mrb[0].mxu0 %v3142
    %v3261 = vpop.f32.mrb[0].mxu0
    %v3262 = vadd.f32 0.0, %v3261
    %v3263 = vpop.f32.mrb[0].mxu0
    %3264 = vmatprep.mubr.f32.mxu0 0.0
    %3265 = vmatmul.mubr.f32.gmra.mrb[0].mxu0 %v3145
    %v3266 = vpop.f32.mrb[0].mxu0
    %v3267 = vadd.f32 0.0, %v3266
    %v3268 = vpop.f32.mrb[0].mxu0
    %3269 = vmatprep.mubr.f32.mxu0 0.0
    %3270 = vmatmul.mubr.f32.gmra.mrb[0].mxu0 %v3148
    %v3271 = vpop.f32.mrb[0].mxu0
    %v3272 = vadd.f32 0.0, %v3271
    %v3273 = vpop.f32.mrb[0].mxu0
    %3274 = vmatprep.mubr.f32.mxu0 0.0
    %3275 = vmatmul.mubr.f32.gmra.mrb[0].mxu0 %v3151
    %v3276 = vpop.f32.mrb[0].mxu0
    %v3277 = vadd.f32 0.0, %v3276
    %v3278 = vpop.f32.mrb[0].mxu0
    %3279 = vmatprep.mubr.f32.mxu0 0.0
    %3280 = vmatmul.mubr.f32.gmra.mrb[0].mxu0 %v3154
    %v3281 = vpop.f32.mrb[0].mxu0
    %v3282 = vadd.f32 0.0, %v3281
    %v3283 = vpop.f32.mrb[0].mxu0
    %3284 = vmatprep.mubr.f32.mxu0 0.0
    %3285 = vmatmul.mubr.f32.gmra.mrb[0].mxu0 %v3157
    %v3286 = vpop.f32.mrb[0].mxu0
    %v3287 = vadd.f32 0.0, %v3286
    %v3288 = vpop.f32.mrb[0].mxu0
    %3289 = vmatprep.mubr.f32.mxu0 0.0
    %3290 = vmatmul.mubr.f32.gmra.mrb[0].mxu0 %v3160
    %v3291 = vpop.f32.mrb[0].mxu0
    %v3292 = vadd.f32 0.0, %v3291
    %v3293 = vpop.f32.mrb[0].mxu0
    %3294 = vmatprep.mubr.f32.mxu0 0.0
    %3295 = vmatmul.mubr.f32.gmra.mrb[0].mxu0 %v3163
    %v3296 = vpop.f32.mrb[0].mxu0
    %v3297 = vadd.f32 0.0, %v3296
    %v3298 = vpop.f32.mrb[0].mxu0
    %3299 = vmatprep.mubr.f32.mxu0 0.0
    %3300 = vmatmul.mubr.f32.gmra.mrb[0].mxu0 %v3166
    %v3301 = vpop.f32.mrb[0].mxu0
    %v3302 = vadd.f32 0.0, %v3301
    %v3303 = vpop.f32.mrb[0].mxu0
    %3304 = vmatprep.mubr.f32.mxu0 0.0
    %3305 = vmatmul.mubr.f32.gmra.mrb[0].mxu0 %v3169
    %v3306 = vpop.f32.mrb[0].mxu0
    %v3307 = vadd.f32 0.0, %v3306
    %v3308 = vpop.f32.mrb[0].mxu0
    %3309 = vmatprep.mubr.f32.mxu0 0.0
    %3310 = vmatmul.mubr.f32.gmra.mrb[0].mxu0 %v3172
    %v3311 = vpop.f32.mrb[0].mxu0
    %v3312 = vadd.f32 0.0, %v3311
    %v3313 = vpop.f32.mrb[0].mxu0
    %3314 = vmatprep.mubr.f32.mxu0 0.0
    %3315 = vmatmul.mubr.f32.gmra.mrb[0].mxu0 %v3175
    %v3316 = vpop.f32.mrb[0].mxu0
    %v3317 = vadd.f32 0.0, %v3316
    %v3318 = vpop.f32.mrb[0].mxu0
    %3319 = vmatprep.mubr.f32.mxu0 0.0
    %3320 = vmatmul.mubr.f32.gmra.mrb[0].mxu0 %v3178
    %v3321 = vpop.f32.mrb[0].mxu0
    %v3322 = vadd.f32 0.0, %v3321
    %v3323 = vpop.f32.mrb[0].mxu0
    %3324 = vdwg.mxu0
    %v3325 = vadd.f32 %v2977, %v3247
    %v3326 = vadd.f32 %v2978, %v3252
    %v3327 = vadd.f32 %v2979, %v3257
    %v3328 = vadd.f32 %v2980, %v3262
    %v3329 = vadd.f32 %v2981, %v3267
    %v3330 = vadd.f32 %v2982, %v3272
    %v3331 = vadd.f32 %v2983, %v3277
    %v3332 = vadd.f32 %v2984, %v3282
    %v3333 = vadd.f32 %v2985, %v3287
    %v3334 = vadd.f32 %v2986, %v3292
    %v3335 = vadd.f32 %v2987, %v3297
    %v3336 = vadd.f32 %v2988, %v3302
    %v3337 = vadd.f32 %v2989, %v3307
    %v3338 = vadd.f32 %v2990, %v3312
    %v3339 = vadd.f32 %v2991, %v3317
    %v3340 = vadd.f32 %v2992, %v3322
    %s3341 = scalar_lea.vmem %s5, 1024
    %v3342 = vld [vmem:[%s3341] sm:$0xff]
    %v3343 = vld [vmem:[%s3341 + $0x8] sm:$0xff]
    %v3344 = vld [vmem:[%s3341 + $0x10] sm:$0xff]
    %v3345 = vld [vmem:[%s3341 + $0x18] sm:$0xff]
    %v3346 = vld [vmem:[%s3341 + $0x20] sm:$0xff]
    %v3347 = vld [vmem:[%s3341 + $0x28] sm:$0xff]
    %v3348 = vld [vmem:[%s3341 + $0x30] sm:$0xff]
    %v3349 = vld [vmem:[%s3341 + $0x38] sm:$0xff]
    %v3350 = vld [vmem:[%s3341 + $0x40] sm:$0xff]
    %v3351 = vld [vmem:[%s3341 + $0x48] sm:$0xff]
    %v3352 = vld [vmem:[%s3341 + $0x50] sm:$0xff]
    %v3353 = vld [vmem:[%s3341 + $0x58] sm:$0xff]
    %v3354 = vld [vmem:[%s3341 + $0x60] sm:$0xff]
    %v3355 = vld [vmem:[%s3341 + $0x68] sm:$0xff]
    %v3356 = vld [vmem:[%s3341 + $0x70] sm:$0xff]
    %v3357 = vld [vmem:[%s3341 + $0x78] sm:$0xff]
    %3358 = vmatprep.subr.mxu0 0.0
    %3359 = vmatpush1.msra.mxu0 %v3342
    %3360 = vmatprep.subr.mxu0 0.0
    %3361 = vmatpush1.msra.mxu0 %v3343
    %3362 = vmatprep.subr.mxu0 0.0
    %3363 = vmatpush1.msra.mxu0 %v3344
    %3364 = vmatprep.subr.mxu0 0.0
    %3365 = vmatpush1.msra.mxu0 %v3345
    %3366 = vmatprep.subr.mxu0 0.0
    %3367 = vmatpush1.msra.mxu0 %v3346
    %3368 = vmatprep.subr.mxu0 0.0
    %3369 = vmatpush1.msra.mxu0 %v3347
    %3370 = vmatprep.subr.mxu0 0.0
    %3371 = vmatpush1.msra.mxu0 %v3348
    %3372 = vmatprep.subr.mxu0 0.0
    %3373 = vmatpush1.msra.mxu0 %v3349
    %3374 = vmatprep.subr.mxu0 0.0
    %3375 = vmatpush1.msra.mxu0 %v3350
    %3376 = vmatprep.subr.mxu0 0.0
    %3377 = vmatpush1.msra.mxu0 %v3351
    %3378 = vmatprep.subr.mxu0 0.0
    %3379 = vmatpush1.msra.mxu0 %v3352
    %3380 = vmatprep.subr.mxu0 0.0
    %3381 = vmatpush1.msra.mxu0 %v3353
    %3382 = vmatprep.subr.mxu0 0.0
    %3383 = vmatpush1.msra.mxu0 %v3354
    %3384 = vmatprep.subr.mxu0 0.0
    %3385 = vmatpush1.msra.mxu0 %v3355
    %3386 = vmatprep.subr.mxu0 0.0
    %3387 = vmatpush1.msra.mxu0 %v3356
    %3388 = vmatprep.subr.mxu0 0.0
    %3389 = vmatpush1.msra.mxu0 %v3357
    %3390 = vmatprep.subr.mxu0 0.0
    %3391 = vmatpush1.msra.mxu0 0.0
    %3392 = vmatprep.subr.mxu0 0.0
    %3393 = vmatpush1.msra.mxu0 0.0
    %3394 = vmatprep.subr.mxu0 0.0
    %3395 = vmatpush1.msra.mxu0 0.0
    %3396 = vmatprep.subr.mxu0 0.0
    %3397 = vmatpush1.msra.mxu0 0.0
    %3398 = vmatprep.subr.mxu0 0.0
    %3399 = vmatpush1.msra.mxu0 0.0
    %3400 = vmatprep.subr.mxu0 0.0
    %3401 = vmatpush1.msra.mxu0 0.0
    %3402 = vmatprep.subr.mxu0 0.0
    %3403 = vmatpush1.msra.mxu0 0.0
    %3404 = vmatprep.subr.mxu0 0.0
    %3405 = vmatpush1.msra.mxu0 0.0
    %3406 = vmatprep.subr.mxu0 0.0
    %3407 = vmatpush1.msra.mxu0 0.0
    %3408 = vmatprep.subr.mxu0 0.0
    %3409 = vmatpush1.msra.mxu0 0.0
    %3410 = vmatprep.subr.mxu0 0.0
    %3411 = vmatpush1.msra.mxu0 0.0
    %3412 = vmatprep.subr.mxu0 0.0
    %3413 = vmatpush1.msra.mxu0 0.0
    %3414 = vmatprep.subr.mxu0 0.0
    %3415 = vmatpush1.msra.mxu0 0.0
    %3416 = vmatprep.subr.mxu0 0.0
    %3417 = vmatpush1.msra.mxu0 0.0
    %3418 = vmatprep.subr.mxu0 0.0
    %3419 = vmatpush1.msra.mxu0 0.0
    %3420 = vmatprep.subr.mxu0 0.0
    %3421 = vmatpush1.msra.mxu0 0.0
    %3422 = vmatprep.mubr.f32.mxu0 0.0
    %3423 = vmatmul.mubr.f32.gmra.mrb[0].mxu0 %v582
    %v3424 = vpop.f32.mrb[0].mxu0
    %v3425 = vadd.f32 0.0, %v3424
    %v3426 = vpop.f32.mrb[0].mxu0
    %3427 = vmatprep.mubr.f32.mxu0 0.0
    %3428 = vmatmul.mubr.f32.gmra.mrb[0].mxu0 %v583
    %v3429 = vpop.f32.mrb[0].mxu0
    %v3430 = vadd.f32 0.0, %v3429
    %v3431 = vpop.f32.mrb[0].mxu0
    %3432 = vmatprep.mubr.f32.mxu0 0.0
    %3433 = vmatmul.mubr.f32.gmra.mrb[0].mxu0 %v584
    %v3434 = vpop.f32.mrb[0].mxu0
    %v3435 = vadd.f32 0.0, %v3434
    %v3436 = vpop.f32.mrb[0].mxu0
    %3437 = vmatprep.mubr.f32.mxu0 0.0
    %3438 = vmatmul.mubr.f32.gmra.mrb[0].mxu0 %v585
    %v3439 = vpop.f32.mrb[0].mxu0
    %v3440 = vadd.f32 0.0, %v3439
    %v3441 = vpop.f32.mrb[0].mxu0
    %3442 = vmatprep.mubr.f32.mxu0 0.0
    %3443 = vmatmul.mubr.f32.gmra.mrb[0].mxu0 %v586
    %v3444 = vpop.f32.mrb[0].mxu0
    %v3445 = vadd.f32 0.0, %v3444
    %v3446 = vpop.f32.mrb[0].mxu0
    %3447 = vmatprep.mubr.f32.mxu0 0.0
    %3448 = vmatmul.mubr.f32.gmra.mrb[0].mxu0 %v587
    %v3449 = vpop.f32.mrb[0].mxu0
    %v3450 = vadd.f32 0.0, %v3449
    %v3451 = vpop.f32.mrb[0].mxu0
    %3452 = vmatprep.mubr.f32.mxu0 0.0
    %3453 = vmatmul.mubr.f32.gmra.mrb[0].mxu0 %v588
    %v3454 = vpop.f32.mrb[0].mxu0
    %v3455 = vadd.f32 0.0, %v3454
    %v3456 = vpop.f32.mrb[0].mxu0
    %3457 = vmatprep.mubr.f32.mxu0 0.0
    %3458 = vmatmul.mubr.f32.gmra.mrb[0].mxu0 %v589
    %v3459 = vpop.f32.mrb[0].mxu0
    %v3460 = vadd.f32 0.0, %v3459
    %v3461 = vpop.f32.mrb[0].mxu0
    %3462 = vdwg.mxu0
    %s3463 = scalar_lea.vmem %s4, 1024
    %v3464 = vld [vmem:[%s3463] sm:$0xff]
    %v3465 = vld [vmem:[%s3463 + $0x8] sm:$0xff]
    %v3466 = vld [vmem:[%s3463 + $0x10] sm:$0xff]
    %v3467 = vld [vmem:[%s3463 + $0x18] sm:$0xff]
    %v3468 = vld [vmem:[%s3463 + $0x20] sm:$0xff]
    %v3469 = vld [vmem:[%s3463 + $0x28] sm:$0xff]
    %v3470 = vld [vmem:[%s3463 + $0x30] sm:$0xff]
    %v3471 = vld [vmem:[%s3463 + $0x38] sm:$0xff]
    %v3472 = vld [vmem:[%s3463 + $0x40] sm:$0xff]
    %v3473 = vld [vmem:[%s3463 + $0x48] sm:$0xff]
    %v3474 = vld [vmem:[%s3463 + $0x50] sm:$0xff]
    %v3475 = vld [vmem:[%s3463 + $0x58] sm:$0xff]
    %v3476 = vld [vmem:[%s3463 + $0x60] sm:$0xff]
    %v3477 = vld [vmem:[%s3463 + $0x68] sm:$0xff]
    %v3478 = vld [vmem:[%s3463 + $0x70] sm:$0xff]
    %v3479 = vld [vmem:[%s3463 + $0x78] sm:$0xff]
    %v3481 = vsel %vm866, %v3464, 0
    %v3484 = vsel %vm866, %v3465, 0
    %v3487 = vsel %vm866, %v3466, 0
    %v3490 = vsel %vm866, %v3467, 0
    %v3493 = vsel %vm866, %v3468, 0
    %v3496 = vsel %vm866, %v3469, 0
    %v3499 = vsel %vm866, %v3470, 0
    %v3502 = vsel %vm866, %v3471, 0
    %v3505 = vsel %vm866, %v3472, 0
    %v3508 = vsel %vm866, %v3473, 0
    %v3511 = vsel %vm866, %v3474, 0
    %v3514 = vsel %vm866, %v3475, 0
    %v3517 = vsel %vm866, %v3476, 0
    %v3520 = vsel %vm866, %v3477, 0
    %v3523 = vsel %vm866, %v3478, 0
    %v3526 = vsel %vm866, %v3479, 0
    %3528 = vmatprep.subr.mxu0 0.0
    %3529 = vmatpush1.msra.mxu0 %v3425
    %3530 = vmatprep.subr.mxu0 0.0
    %3531 = vmatpush1.msra.mxu0 %v3430
    %3532 = vmatprep.subr.mxu0 0.0
    %3533 = vmatpush1.msra.mxu0 %v3435
    %3534 = vmatprep.subr.mxu0 0.0
    %3535 = vmatpush1.msra.mxu0 %v3440
    %3536 = vmatprep.subr.mxu0 0.0
    %3537 = vmatpush1.msra.mxu0 %v3445
    %3538 = vmatprep.subr.mxu0 0.0
    %3539 = vmatpush1.msra.mxu0 %v3450
    %3540 = vmatprep.subr.mxu0 0.0
    %3541 = vmatpush1.msra.mxu0 %v3455
    %3542 = vmatprep.subr.mxu0 0.0
    %3543 = vmatpush1.msra.mxu0 %v3460
    %3544 = vmatprep.subr.mxu0 0.0
    %3545 = vmatpush1.msra.mxu0 0.0
    %3546 = vmatprep.subr.mxu0 0.0
    %3547 = vmatpush1.msra.mxu0 0.0
    %3548 = vmatprep.subr.mxu0 0.0
    %3549 = vmatpush1.msra.mxu0 0.0
    %3550 = vmatprep.subr.mxu0 0.0
    %3551 = vmatpush1.msra.mxu0 0.0
    %3552 = vmatprep.subr.mxu0 0.0
    %3553 = vmatpush1.msra.mxu0 0.0
    %3554 = vmatprep.subr.mxu0 0.0
    %3555 = vmatpush1.msra.mxu0 0.0
    %3556 = vmatprep.subr.mxu0 0.0
    %3557 = vmatpush1.msra.mxu0 0.0
    %3558 = vmatprep.subr.mxu0 0.0
    %3559 = vmatpush1.msra.mxu0 0.0
    %3560 = vmatprep.subr.mxu0 0.0
    %3561 = vmatpush1.msra.mxu0 0.0
    %3562 = vmatprep.subr.mxu0 0.0
    %3563 = vmatpush1.msra.mxu0 0.0
    %3564 = vmatprep.subr.mxu0 0.0
    %3565 = vmatpush1.msra.mxu0 0.0
    %3566 = vmatprep.subr.mxu0 0.0
    %3567 = vmatpush1.msra.mxu0 0.0
    %3568 = vmatprep.subr.mxu0 0.0
    %3569 = vmatpush1.msra.mxu0 0.0
    %3570 = vmatprep.subr.mxu0 0.0
    %3571 = vmatpush1.msra.mxu0 0.0
    %3572 = vmatprep.subr.mxu0 0.0
    %3573 = vmatpush1.msra.mxu0 0.0
    %3574 = vmatprep.subr.mxu0 0.0
    %3575 = vmatpush1.msra.mxu0 0.0
    %3576 = vmatprep.subr.mxu0 0.0
    %3577 = vmatpush1.msra.mxu0 0.0
    %3578 = vmatprep.subr.mxu0 0.0
    %3579 = vmatpush1.msra.mxu0 0.0
    %3580 = vmatprep.subr.mxu0 0.0
    %3581 = vmatpush1.msra.mxu0 0.0
    %3582 = vmatprep.subr.mxu0 0.0
    %3583 = vmatpush1.msra.mxu0 0.0
    %3584 = vmatprep.subr.mxu0 0.0
    %3585 = vmatpush1.msra.mxu0 0.0
    %3586 = vmatprep.subr.mxu0 0.0
    %3587 = vmatpush1.msra.mxu0 0.0
    %3588 = vmatprep.subr.mxu0 0.0
    %3589 = vmatpush1.msra.mxu0 0.0
    %3590 = vmatprep.subr.mxu0 0.0
    %3591 = vmatpush1.msra.mxu0 0.0
    %3592 = vmatprep.mubr.f32.mxu0 0.0
    %3593 = vmatmul.mubr.f32.gmra.mrb[0].mxu0 %v3481
    %v3594 = vpop.f32.mrb[0].mxu0
    %v3595 = vadd.f32 0.0, %v3594
    %v3596 = vpop.f32.mrb[0].mxu0
    %3597 = vmatprep.mubr.f32.mxu0 0.0
    %3598 = vmatmul.mubr.f32.gmra.mrb[0].mxu0 %v3484
    %v3599 = vpop.f32.mrb[0].mxu0
    %v3600 = vadd.f32 0.0, %v3599
    %v3601 = vpop.f32.mrb[0].mxu0
    %3602 = vmatprep.mubr.f32.mxu0 0.0
    %3603 = vmatmul.mubr.f32.gmra.mrb[0].mxu0 %v3487
    %v3604 = vpop.f32.mrb[0].mxu0
    %v3605 = vadd.f32 0.0, %v3604
    %v3606 = vpop.f32.mrb[0].mxu0
    %3607 = vmatprep.mubr.f32.mxu0 0.0
    %3608 = vmatmul.mubr.f32.gmra.mrb[0].mxu0 %v3490
    %v3609 = vpop.f32.mrb[0].mxu0
    %v3610 = vadd.f32 0.0, %v3609
    %v3611 = vpop.f32.mrb[0].mxu0
    %3612 = vmatprep.mubr.f32.mxu0 0.0
    %3613 = vmatmul.mubr.f32.gmra.mrb[0].mxu0 %v3493
    %v3614 = vpop.f32.mrb[0].mxu0
    %v3615 = vadd.f32 0.0, %v3614
    %v3616 = vpop.f32.mrb[0].mxu0
    %3617 = vmatprep.mubr.f32.mxu0 0.0
    %3618 = vmatmul.mubr.f32.gmra.mrb[0].mxu0 %v3496
    %v3619 = vpop.f32.mrb[0].mxu0
    %v3620 = vadd.f32 0.0, %v3619
    %v3621 = vpop.f32.mrb[0].mxu0
    %3622 = vmatprep.mubr.f32.mxu0 0.0
    %3623 = vmatmul.mubr.f32.gmra.mrb[0].mxu0 %v3499
    %v3624 = vpop.f32.mrb[0].mxu0
    %v3625 = vadd.f32 0.0, %v3624
    %v3626 = vpop.f32.mrb[0].mxu0
    %3627 = vmatprep.mubr.f32.mxu0 0.0
    %3628 = vmatmul.mubr.f32.gmra.mrb[0].mxu0 %v3502
    %v3629 = vpop.f32.mrb[0].mxu0
    %v3630 = vadd.f32 0.0, %v3629
    %v3631 = vpop.f32.mrb[0].mxu0
    %3632 = vmatprep.mubr.f32.mxu0 0.0
    %3633 = vmatmul.mubr.f32.gmra.mrb[0].mxu0 %v3505
    %v3634 = vpop.f32.mrb[0].mxu0
    %v3635 = vadd.f32 0.0, %v3634
    %v3636 = vpop.f32.mrb[0].mxu0
    %3637 = vmatprep.mubr.f32.mxu0 0.0
    %3638 = vmatmul.mubr.f32.gmra.mrb[0].mxu0 %v3508
    %v3639 = vpop.f32.mrb[0].mxu0
    %v3640 = vadd.f32 0.0, %v3639
    %v3641 = vpop.f32.mrb[0].mxu0
    %3642 = vmatprep.mubr.f32.mxu0 0.0
    %3643 = vmatmul.mubr.f32.gmra.mrb[0].mxu0 %v3511
    %v3644 = vpop.f32.mrb[0].mxu0
    %v3645 = vadd.f32 0.0, %v3644
    %v3646 = vpop.f32.mrb[0].mxu0
    %3647 = vmatprep.mubr.f32.mxu0 0.0
    %3648 = vmatmul.mubr.f32.gmra.mrb[0].mxu0 %v3514
    %v3649 = vpop.f32.mrb[0].mxu0
    %v3650 = vadd.f32 0.0, %v3649
    %v3651 = vpop.f32.mrb[0].mxu0
    %3652 = vmatprep.mubr.f32.mxu0 0.0
    %3653 = vmatmul.mubr.f32.gmra.mrb[0].mxu0 %v3517
    %v3654 = vpop.f32.mrb[0].mxu0
    %v3655 = vadd.f32 0.0, %v3654
    %v3656 = vpop.f32.mrb[0].mxu0
    %3657 = vmatprep.mubr.f32.mxu0 0.0
    %3658 = vmatmul.mubr.f32.gmra.mrb[0].mxu0 %v3520
    %v3659 = vpop.f32.mrb[0].mxu0
    %v3660 = vadd.f32 0.0, %v3659
    %v3661 = vpop.f32.mrb[0].mxu0
    %3662 = vmatprep.mubr.f32.mxu0 0.0
    %3663 = vmatmul.mubr.f32.gmra.mrb[0].mxu0 %v3523
    %v3664 = vpop.f32.mrb[0].mxu0
    %v3665 = vadd.f32 0.0, %v3664
    %v3666 = vpop.f32.mrb[0].mxu0
    %3667 = vmatprep.mubr.f32.mxu0 0.0
    %3668 = vmatmul.mubr.f32.gmra.mrb[0].mxu0 %v3526
    %v3669 = vpop.f32.mrb[0].mxu0
    %v3670 = vadd.f32 0.0, %v3669
    %v3671 = vpop.f32.mrb[0].mxu0
    %3672 = vdwg.mxu0
    %v3673 = vadd.f32 %v3325, %v3595
    %v3674 = vadd.f32 %v3326, %v3600
    %v3675 = vadd.f32 %v3327, %v3605
    %v3676 = vadd.f32 %v3328, %v3610
    %v3677 = vadd.f32 %v3329, %v3615
    %v3678 = vadd.f32 %v3330, %v3620
    %v3679 = vadd.f32 %v3331, %v3625
    %v3680 = vadd.f32 %v3332, %v3630
    %v3681 = vadd.f32 %v3333, %v3635
    %v3682 = vadd.f32 %v3334, %v3640
    %v3683 = vadd.f32 %v3335, %v3645
    %v3684 = vadd.f32 %v3336, %v3650
    %v3685 = vadd.f32 %v3337, %v3655
    %v3686 = vadd.f32 %v3338, %v3660
    %v3687 = vadd.f32 %v3339, %v3665
    %v3688 = vadd.f32 %v3340, %v3670
    %s3689 = scalar_lea.vmem %s5, 1152
    %v3690 = vld [vmem:[%s3689] sm:$0xff]
    %v3691 = vld [vmem:[%s3689 + $0x8] sm:$0xff]
    %v3692 = vld [vmem:[%s3689 + $0x10] sm:$0xff]
    %v3693 = vld [vmem:[%s3689 + $0x18] sm:$0xff]
    %v3694 = vld [vmem:[%s3689 + $0x20] sm:$0xff]
    %v3695 = vld [vmem:[%s3689 + $0x28] sm:$0xff]
    %v3696 = vld [vmem:[%s3689 + $0x30] sm:$0xff]
    %v3697 = vld [vmem:[%s3689 + $0x38] sm:$0xff]
    %v3698 = vld [vmem:[%s3689 + $0x40] sm:$0xff]
    %v3699 = vld [vmem:[%s3689 + $0x48] sm:$0xff]
    %v3700 = vld [vmem:[%s3689 + $0x50] sm:$0xff]
    %v3701 = vld [vmem:[%s3689 + $0x58] sm:$0xff]
    %v3702 = vld [vmem:[%s3689 + $0x60] sm:$0xff]
    %v3703 = vld [vmem:[%s3689 + $0x68] sm:$0xff]
    %v3704 = vld [vmem:[%s3689 + $0x70] sm:$0xff]
    %v3705 = vld [vmem:[%s3689 + $0x78] sm:$0xff]
    %3706 = vmatprep.subr.mxu0 0.0
    %3707 = vmatpush1.msra.mxu0 %v3690
    %3708 = vmatprep.subr.mxu0 0.0
    %3709 = vmatpush1.msra.mxu0 %v3691
    %3710 = vmatprep.subr.mxu0 0.0
    %3711 = vmatpush1.msra.mxu0 %v3692
    %3712 = vmatprep.subr.mxu0 0.0
    %3713 = vmatpush1.msra.mxu0 %v3693
    %3714 = vmatprep.subr.mxu0 0.0
    %3715 = vmatpush1.msra.mxu0 %v3694
    %3716 = vmatprep.subr.mxu0 0.0
    %3717 = vmatpush1.msra.mxu0 %v3695
    %3718 = vmatprep.subr.mxu0 0.0
    %3719 = vmatpush1.msra.mxu0 %v3696
    %3720 = vmatprep.subr.mxu0 0.0
    %3721 = vmatpush1.msra.mxu0 %v3697
    %3722 = vmatprep.subr.mxu0 0.0
    %3723 = vmatpush1.msra.mxu0 %v3698
    %3724 = vmatprep.subr.mxu0 0.0
    %3725 = vmatpush1.msra.mxu0 %v3699
    %3726 = vmatprep.subr.mxu0 0.0
    %3727 = vmatpush1.msra.mxu0 %v3700
    %3728 = vmatprep.subr.mxu0 0.0
    %3729 = vmatpush1.msra.mxu0 %v3701
    %3730 = vmatprep.subr.mxu0 0.0
    %3731 = vmatpush1.msra.mxu0 %v3702
    %3732 = vmatprep.subr.mxu0 0.0
    %3733 = vmatpush1.msra.mxu0 %v3703
    %3734 = vmatprep.subr.mxu0 0.0
    %3735 = vmatpush1.msra.mxu0 %v3704
    %3736 = vmatprep.subr.mxu0 0.0
    %3737 = vmatpush1.msra.mxu0 %v3705
    %3738 = vmatprep.subr.mxu0 0.0
    %3739 = vmatpush1.msra.mxu0 0.0
    %3740 = vmatprep.subr.mxu0 0.0
    %3741 = vmatpush1.msra.mxu0 0.0
    %3742 = vmatprep.subr.mxu0 0.0
    %3743 = vmatpush1.msra.mxu0 0.0
    %3744 = vmatprep.subr.mxu0 0.0
    %3745 = vmatpush1.msra.mxu0 0.0
    %3746 = vmatprep.subr.mxu0 0.0
    %3747 = vmatpush1.msra.mxu0 0.0
    %3748 = vmatprep.subr.mxu0 0.0
    %3749 = vmatpush1.msra.mxu0 0.0
    %3750 = vmatprep.subr.mxu0 0.0
    %3751 = vmatpush1.msra.mxu0 0.0
    %3752 = vmatprep.subr.mxu0 0.0
    %3753 = vmatpush1.msra.mxu0 0.0
    %3754 = vmatprep.subr.mxu0 0.0
    %3755 = vmatpush1.msra.mxu0 0.0
    %3756 = vmatprep.subr.mxu0 0.0
    %3757 = vmatpush1.msra.mxu0 0.0
    %3758 = vmatprep.subr.mxu0 0.0
    %3759 = vmatpush1.msra.mxu0 0.0
    %3760 = vmatprep.subr.mxu0 0.0
    %3761 = vmatpush1.msra.mxu0 0.0
    %3762 = vmatprep.subr.mxu0 0.0
    %3763 = vmatpush1.msra.mxu0 0.0
    %3764 = vmatprep.subr.mxu0 0.0
    %3765 = vmatpush1.msra.mxu0 0.0
    %3766 = vmatprep.subr.mxu0 0.0
    %3767 = vmatpush1.msra.mxu0 0.0
    %3768 = vmatprep.subr.mxu0 0.0
    %3769 = vmatpush1.msra.mxu0 0.0
    %3770 = vmatprep.mubr.f32.mxu0 0.0
    %3771 = vmatmul.mubr.f32.gmra.mrb[0].mxu0 %v582
    %v3772 = vpop.f32.mrb[0].mxu0
    %v3773 = vadd.f32 0.0, %v3772
    %v3774 = vpop.f32.mrb[0].mxu0
    %3775 = vmatprep.mubr.f32.mxu0 0.0
    %3776 = vmatmul.mubr.f32.gmra.mrb[0].mxu0 %v583
    %v3777 = vpop.f32.mrb[0].mxu0
    %v3778 = vadd.f32 0.0, %v3777
    %v3779 = vpop.f32.mrb[0].mxu0
    %3780 = vmatprep.mubr.f32.mxu0 0.0
    %3781 = vmatmul.mubr.f32.gmra.mrb[0].mxu0 %v584
    %v3782 = vpop.f32.mrb[0].mxu0
    %v3783 = vadd.f32 0.0, %v3782
    %v3784 = vpop.f32.mrb[0].mxu0
    %3785 = vmatprep.mubr.f32.mxu0 0.0
    %3786 = vmatmul.mubr.f32.gmra.mrb[0].mxu0 %v585
    %v3787 = vpop.f32.mrb[0].mxu0
    %v3788 = vadd.f32 0.0, %v3787
    %v3789 = vpop.f32.mrb[0].mxu0
    %3790 = vmatprep.mubr.f32.mxu0 0.0
    %3791 = vmatmul.mubr.f32.gmra.mrb[0].mxu0 %v586
    %v3792 = vpop.f32.mrb[0].mxu0
    %v3793 = vadd.f32 0.0, %v3792
    %v3794 = vpop.f32.mrb[0].mxu0
    %3795 = vmatprep.mubr.f32.mxu0 0.0
    %3796 = vmatmul.mubr.f32.gmra.mrb[0].mxu0 %v587
    %v3797 = vpop.f32.mrb[0].mxu0
    %v3798 = vadd.f32 0.0, %v3797
    %v3799 = vpop.f32.mrb[0].mxu0
    %3800 = vmatprep.mubr.f32.mxu0 0.0
    %3801 = vmatmul.mubr.f32.gmra.mrb[0].mxu0 %v588
    %v3802 = vpop.f32.mrb[0].mxu0
    %v3803 = vadd.f32 0.0, %v3802
    %v3804 = vpop.f32.mrb[0].mxu0
    %3805 = vmatprep.mubr.f32.mxu0 0.0
    %3806 = vmatmul.mubr.f32.gmra.mrb[0].mxu0 %v589
    %v3807 = vpop.f32.mrb[0].mxu0
    %v3808 = vadd.f32 0.0, %v3807
    %v3809 = vpop.f32.mrb[0].mxu0
    %3810 = vdwg.mxu0
    %s3811 = scalar_lea.vmem %s4, 1152
    %v3812 = vld [vmem:[%s3811] sm:$0xff]
    %v3813 = vld [vmem:[%s3811 + $0x8] sm:$0xff]
    %v3814 = vld [vmem:[%s3811 + $0x10] sm:$0xff]
    %v3815 = vld [vmem:[%s3811 + $0x18] sm:$0xff]
    %v3816 = vld [vmem:[%s3811 + $0x20] sm:$0xff]
    %v3817 = vld [vmem:[%s3811 + $0x28] sm:$0xff]
    %v3818 = vld [vmem:[%s3811 + $0x30] sm:$0xff]
    %v3819 = vld [vmem:[%s3811 + $0x38] sm:$0xff]
    %v3820 = vld [vmem:[%s3811 + $0x40] sm:$0xff]
    %v3821 = vld [vmem:[%s3811 + $0x48] sm:$0xff]
    %v3822 = vld [vmem:[%s3811 + $0x50] sm:$0xff]
    %v3823 = vld [vmem:[%s3811 + $0x58] sm:$0xff]
    %v3824 = vld [vmem:[%s3811 + $0x60] sm:$0xff]
    %v3825 = vld [vmem:[%s3811 + $0x68] sm:$0xff]
    %v3826 = vld [vmem:[%s3811 + $0x70] sm:$0xff]
    %v3827 = vld [vmem:[%s3811 + $0x78] sm:$0xff]
    %v3829 = vsel %vm866, %v3812, 0
    %v3832 = vsel %vm866, %v3813, 0
    %v3835 = vsel %vm866, %v3814, 0
    %v3838 = vsel %vm866, %v3815, 0
    %v3841 = vsel %vm866, %v3816, 0
    %v3844 = vsel %vm866, %v3817, 0
    %v3847 = vsel %vm866, %v3818, 0
    %v3850 = vsel %vm866, %v3819, 0
    %v3853 = vsel %vm866, %v3820, 0
    %v3856 = vsel %vm866, %v3821, 0
    %v3859 = vsel %vm866, %v3822, 0
    %v3862 = vsel %vm866, %v3823, 0
    %v3865 = vsel %vm866, %v3824, 0
    %v3868 = vsel %vm866, %v3825, 0
    %v3871 = vsel %vm866, %v3826, 0
    %v3874 = vsel %vm866, %v3827, 0
    %3876 = vmatprep.subr.mxu0 0.0
    %3877 = vmatpush1.msra.mxu0 %v3773
    %3878 = vmatprep.subr.mxu0 0.0
    %3879 = vmatpush1.msra.mxu0 %v3778
    %3880 = vmatprep.subr.mxu0 0.0
    %3881 = vmatpush1.msra.mxu0 %v3783
    %3882 = vmatprep.subr.mxu0 0.0
    %3883 = vmatpush1.msra.mxu0 %v3788
    %3884 = vmatprep.subr.mxu0 0.0
    %3885 = vmatpush1.msra.mxu0 %v3793
    %3886 = vmatprep.subr.mxu0 0.0
    %3887 = vmatpush1.msra.mxu0 %v3798
    %3888 = vmatprep.subr.mxu0 0.0
    %3889 = vmatpush1.msra.mxu0 %v3803
    %3890 = vmatprep.subr.mxu0 0.0
    %3891 = vmatpush1.msra.mxu0 %v3808
    %3892 = vmatprep.subr.mxu0 0.0
    %3893 = vmatpush1.msra.mxu0 0.0
    %3894 = vmatprep.subr.mxu0 0.0
    %3895 = vmatpush1.msra.mxu0 0.0
    %3896 = vmatprep.subr.mxu0 0.0
    %3897 = vmatpush1.msra.mxu0 0.0
    %3898 = vmatprep.subr.mxu0 0.0
    %3899 = vmatpush1.msra.mxu0 0.0
    %3900 = vmatprep.subr.mxu0 0.0
    %3901 = vmatpush1.msra.mxu0 0.0
    %3902 = vmatprep.subr.mxu0 0.0
    %3903 = vmatpush1.msra.mxu0 0.0
    %3904 = vmatprep.subr.mxu0 0.0
    %3905 = vmatpush1.msra.mxu0 0.0
    %3906 = vmatprep.subr.mxu0 0.0
    %3907 = vmatpush1.msra.mxu0 0.0
    %3908 = vmatprep.subr.mxu0 0.0
    %3909 = vmatpush1.msra.mxu0 0.0
    %3910 = vmatprep.subr.mxu0 0.0
    %3911 = vmatpush1.msra.mxu0 0.0
    %3912 = vmatprep.subr.mxu0 0.0
    %3913 = vmatpush1.msra.mxu0 0.0
    %3914 = vmatprep.subr.mxu0 0.0
    %3915 = vmatpush1.msra.mxu0 0.0
    %3916 = vmatprep.subr.mxu0 0.0
    %3917 = vmatpush1.msra.mxu0 0.0
    %3918 = vmatprep.subr.mxu0 0.0
    %3919 = vmatpush1.msra.mxu0 0.0
    %3920 = vmatprep.subr.mxu0 0.0
    %3921 = vmatpush1.msra.mxu0 0.0
    %3922 = vmatprep.subr.mxu0 0.0
    %3923 = vmatpush1.msra.mxu0 0.0
    %3924 = vmatprep.subr.mxu0 0.0
    %3925 = vmatpush1.msra.mxu0 0.0
    %3926 = vmatprep.subr.mxu0 0.0
    %3927 = vmatpush1.msra.mxu0 0.0
    %3928 = vmatprep.subr.mxu0 0.0
    %3929 = vmatpush1.msra.mxu0 0.0
    %3930 = vmatprep.subr.mxu0 0.0
    %3931 = vmatpush1.msra.mxu0 0.0
    %3932 = vmatprep.subr.mxu0 0.0
    %3933 = vmatpush1.msra.mxu0 0.0
    %3934 = vmatprep.subr.mxu0 0.0
    %3935 = vmatpush1.msra.mxu0 0.0
    %3936 = vmatprep.subr.mxu0 0.0
    %3937 = vmatpush1.msra.mxu0 0.0
    %3938 = vmatprep.subr.mxu0 0.0
    %3939 = vmatpush1.msra.mxu0 0.0
    %3940 = vmatprep.mubr.f32.mxu0 0.0
    %3941 = vmatmul.mubr.f32.gmra.mrb[0].mxu0 %v3829
    %v3942 = vpop.f32.mrb[0].mxu0
    %v3943 = vadd.f32 0.0, %v3942
    %v3944 = vpop.f32.mrb[0].mxu0
    %3945 = vmatprep.mubr.f32.mxu0 0.0
    %3946 = vmatmul.mubr.f32.gmra.mrb[0].mxu0 %v3832
    %v3947 = vpop.f32.mrb[0].mxu0
    %v3948 = vadd.f32 0.0, %v3947
    %v3949 = vpop.f32.mrb[0].mxu0
    %3950 = vmatprep.mubr.f32.mxu0 0.0
    %3951 = vmatmul.mubr.f32.gmra.mrb[0].mxu0 %v3835
    %v3952 = vpop.f32.mrb[0].mxu0
    %v3953 = vadd.f32 0.0, %v3952
    %v3954 = vpop.f32.mrb[0].mxu0
    %3955 = vmatprep.mubr.f32.mxu0 0.0
    %3956 = vmatmul.mubr.f32.gmra.mrb[0].mxu0 %v3838
    %v3957 = vpop.f32.mrb[0].mxu0
    %v3958 = vadd.f32 0.0, %v3957
    %v3959 = vpop.f32.mrb[0].mxu0
    %3960 = vmatprep.mubr.f32.mxu0 0.0
    %3961 = vmatmul.mubr.f32.gmra.mrb[0].mxu0 %v3841
    %v3962 = vpop.f32.mrb[0].mxu0
    %v3963 = vadd.f32 0.0, %v3962
    %v3964 = vpop.f32.mrb[0].mxu0
    %3965 = vmatprep.mubr.f32.mxu0 0.0
    %3966 = vmatmul.mubr.f32.gmra.mrb[0].mxu0 %v3844
    %v3967 = vpop.f32.mrb[0].mxu0
    %v3968 = vadd.f32 0.0, %v3967
    %v3969 = vpop.f32.mrb[0].mxu0
    %3970 = vmatprep.mubr.f32.mxu0 0.0
    %3971 = vmatmul.mubr.f32.gmra.mrb[0].mxu0 %v3847
    %v3972 = vpop.f32.mrb[0].mxu0
    %v3973 = vadd.f32 0.0, %v3972
    %v3974 = vpop.f32.mrb[0].mxu0
    %3975 = vmatprep.mubr.f32.mxu0 0.0
    %3976 = vmatmul.mubr.f32.gmra.mrb[0].mxu0 %v3850
    %v3977 = vpop.f32.mrb[0].mxu0
    %v3978 = vadd.f32 0.0, %v3977
    %v3979 = vpop.f32.mrb[0].mxu0
    %3980 = vmatprep.mubr.f32.mxu0 0.0
    %3981 = vmatmul.mubr.f32.gmra.mrb[0].mxu0 %v3853
    %v3982 = vpop.f32.mrb[0].mxu0
    %v3983 = vadd.f32 0.0, %v3982
    %v3984 = vpop.f32.mrb[0].mxu0
    %3985 = vmatprep.mubr.f32.mxu0 0.0
    %3986 = vmatmul.mubr.f32.gmra.mrb[0].mxu0 %v3856
    %v3987 = vpop.f32.mrb[0].mxu0
    %v3988 = vadd.f32 0.0, %v3987
    %v3989 = vpop.f32.mrb[0].mxu0
    %3990 = vmatprep.mubr.f32.mxu0 0.0
    %3991 = vmatmul.mubr.f32.gmra.mrb[0].mxu0 %v3859
    %v3992 = vpop.f32.mrb[0].mxu0
    %v3993 = vadd.f32 0.0, %v3992
    %v3994 = vpop.f32.mrb[0].mxu0
    %3995 = vmatprep.mubr.f32.mxu0 0.0
    %3996 = vmatmul.mubr.f32.gmra.mrb[0].mxu0 %v3862
    %v3997 = vpop.f32.mrb[0].mxu0
    %v3998 = vadd.f32 0.0, %v3997
    %v3999 = vpop.f32.mrb[0].mxu0
    %4000 = vmatprep.mubr.f32.mxu0 0.0
    %4001 = vmatmul.mubr.f32.gmra.mrb[0].mxu0 %v3865
    %v4002 = vpop.f32.mrb[0].mxu0
    %v4003 = vadd.f32 0.0, %v4002
    %v4004 = vpop.f32.mrb[0].mxu0
    %4005 = vmatprep.mubr.f32.mxu0 0.0
    %4006 = vmatmul.mubr.f32.gmra.mrb[0].mxu0 %v3868
    %v4007 = vpop.f32.mrb[0].mxu0
    %v4008 = vadd.f32 0.0, %v4007
    %v4009 = vpop.f32.mrb[0].mxu0
    %4010 = vmatprep.mubr.f32.mxu0 0.0
    %4011 = vmatmul.mubr.f32.gmra.mrb[0].mxu0 %v3871
    %v4012 = vpop.f32.mrb[0].mxu0
    %v4013 = vadd.f32 0.0, %v4012
    %v4014 = vpop.f32.mrb[0].mxu0
    %4015 = vmatprep.mubr.f32.mxu0 0.0
    %4016 = vmatmul.mubr.f32.gmra.mrb[0].mxu0 %v3874
    %v4017 = vpop.f32.mrb[0].mxu0
    %v4018 = vadd.f32 0.0, %v4017
    %v4019 = vpop.f32.mrb[0].mxu0
    %4020 = vdwg.mxu0
    %v4021 = vadd.f32 %v3673, %v3943
    %v4022 = vadd.f32 %v3674, %v3948
    %v4023 = vadd.f32 %v3675, %v3953
    %v4024 = vadd.f32 %v3676, %v3958
    %v4025 = vadd.f32 %v3677, %v3963
    %v4026 = vadd.f32 %v3678, %v3968
    %v4027 = vadd.f32 %v3679, %v3973
    %v4028 = vadd.f32 %v3680, %v3978
    %v4029 = vadd.f32 %v3681, %v3983
    %v4030 = vadd.f32 %v3682, %v3988
    %v4031 = vadd.f32 %v3683, %v3993
    %v4032 = vadd.f32 %v3684, %v3998
    %v4033 = vadd.f32 %v3685, %v4003
    %v4034 = vadd.f32 %v3686, %v4008
    %v4035 = vadd.f32 %v3687, %v4013
    %v4036 = vadd.f32 %v3688, %v4018
    %s4037 = scalar_lea.vmem %s5, 1280
    %v4038 = vld [vmem:[%s4037] sm:$0xff]
    %v4039 = vld [vmem:[%s4037 + $0x8] sm:$0xff]
    %v4040 = vld [vmem:[%s4037 + $0x10] sm:$0xff]
    %v4041 = vld [vmem:[%s4037 + $0x18] sm:$0xff]
    %v4042 = vld [vmem:[%s4037 + $0x20] sm:$0xff]
    %v4043 = vld [vmem:[%s4037 + $0x28] sm:$0xff]
    %v4044 = vld [vmem:[%s4037 + $0x30] sm:$0xff]
    %v4045 = vld [vmem:[%s4037 + $0x38] sm:$0xff]
    %v4046 = vld [vmem:[%s4037 + $0x40] sm:$0xff]
    %v4047 = vld [vmem:[%s4037 + $0x48] sm:$0xff]
    %v4048 = vld [vmem:[%s4037 + $0x50] sm:$0xff]
    %v4049 = vld [vmem:[%s4037 + $0x58] sm:$0xff]
    %v4050 = vld [vmem:[%s4037 + $0x60] sm:$0xff]
    %v4051 = vld [vmem:[%s4037 + $0x68] sm:$0xff]
    %v4052 = vld [vmem:[%s4037 + $0x70] sm:$0xff]
    %v4053 = vld [vmem:[%s4037 + $0x78] sm:$0xff]
    %4054 = vmatprep.subr.mxu0 0.0
    %4055 = vmatpush1.msra.mxu0 %v4038
    %4056 = vmatprep.subr.mxu0 0.0
    %4057 = vmatpush1.msra.mxu0 %v4039
    %4058 = vmatprep.subr.mxu0 0.0
    %4059 = vmatpush1.msra.mxu0 %v4040
    %4060 = vmatprep.subr.mxu0 0.0
    %4061 = vmatpush1.msra.mxu0 %v4041
    %4062 = vmatprep.subr.mxu0 0.0
    %4063 = vmatpush1.msra.mxu0 %v4042
    %4064 = vmatprep.subr.mxu0 0.0
    %4065 = vmatpush1.msra.mxu0 %v4043
    %4066 = vmatprep.subr.mxu0 0.0
    %4067 = vmatpush1.msra.mxu0 %v4044
    %4068 = vmatprep.subr.mxu0 0.0
    %4069 = vmatpush1.msra.mxu0 %v4045
    %4070 = vmatprep.subr.mxu0 0.0
    %4071 = vmatpush1.msra.mxu0 %v4046
    %4072 = vmatprep.subr.mxu0 0.0
    %4073 = vmatpush1.msra.mxu0 %v4047
    %4074 = vmatprep.subr.mxu0 0.0
    %4075 = vmatpush1.msra.mxu0 %v4048
    %4076 = vmatprep.subr.mxu0 0.0
    %4077 = vmatpush1.msra.mxu0 %v4049
    %4078 = vmatprep.subr.mxu0 0.0
    %4079 = vmatpush1.msra.mxu0 %v4050
    %4080 = vmatprep.subr.mxu0 0.0
    %4081 = vmatpush1.msra.mxu0 %v4051
    %4082 = vmatprep.subr.mxu0 0.0
    %4083 = vmatpush1.msra.mxu0 %v4052
    %4084 = vmatprep.subr.mxu0 0.0
    %4085 = vmatpush1.msra.mxu0 %v4053
    %4086 = vmatprep.subr.mxu0 0.0
    %4087 = vmatpush1.msra.mxu0 0.0
    %4088 = vmatprep.subr.mxu0 0.0
    %4089 = vmatpush1.msra.mxu0 0.0
    %4090 = vmatprep.subr.mxu0 0.0
    %4091 = vmatpush1.msra.mxu0 0.0
    %4092 = vmatprep.subr.mxu0 0.0
    %4093 = vmatpush1.msra.mxu0 0.0
    %4094 = vmatprep.subr.mxu0 0.0
    %4095 = vmatpush1.msra.mxu0 0.0
    %4096 = vmatprep.subr.mxu0 0.0
    %4097 = vmatpush1.msra.mxu0 0.0
    %4098 = vmatprep.subr.mxu0 0.0
    %4099 = vmatpush1.msra.mxu0 0.0
    %4100 = vmatprep.subr.mxu0 0.0
    %4101 = vmatpush1.msra.mxu0 0.0
    %4102 = vmatprep.subr.mxu0 0.0
    %4103 = vmatpush1.msra.mxu0 0.0
    %4104 = vmatprep.subr.mxu0 0.0
    %4105 = vmatpush1.msra.mxu0 0.0
    %4106 = vmatprep.subr.mxu0 0.0
    %4107 = vmatpush1.msra.mxu0 0.0
    %4108 = vmatprep.subr.mxu0 0.0
    %4109 = vmatpush1.msra.mxu0 0.0
    %4110 = vmatprep.subr.mxu0 0.0
    %4111 = vmatpush1.msra.mxu0 0.0
    %4112 = vmatprep.subr.mxu0 0.0
    %4113 = vmatpush1.msra.mxu0 0.0
    %4114 = vmatprep.subr.mxu0 0.0
    %4115 = vmatpush1.msra.mxu0 0.0
    %4116 = vmatprep.subr.mxu0 0.0
    %4117 = vmatpush1.msra.mxu0 0.0
    %4118 = vmatprep.mubr.f32.mxu0 0.0
    %4119 = vmatmul.mubr.f32.gmra.mrb[0].mxu0 %v582
    %v4120 = vpop.f32.mrb[0].mxu0
    %v4121 = vadd.f32 0.0, %v4120
    %v4122 = vpop.f32.mrb[0].mxu0
    %4123 = vmatprep.mubr.f32.mxu0 0.0
    %4124 = vmatmul.mubr.f32.gmra.mrb[0].mxu0 %v583
    %v4125 = vpop.f32.mrb[0].mxu0
    %v4126 = vadd.f32 0.0, %v4125
    %v4127 = vpop.f32.mrb[0].mxu0
    %4128 = vmatprep.mubr.f32.mxu0 0.0
    %4129 = vmatmul.mubr.f32.gmra.mrb[0].mxu0 %v584
    %v4130 = vpop.f32.mrb[0].mxu0
    %v4131 = vadd.f32 0.0, %v4130
    %v4132 = vpop.f32.mrb[0].mxu0
    %4133 = vmatprep.mubr.f32.mxu0 0.0
    %4134 = vmatmul.mubr.f32.gmra.mrb[0].mxu0 %v585
    %v4135 = vpop.f32.mrb[0].mxu0
    %v4136 = vadd.f32 0.0, %v4135
    %v4137 = vpop.f32.mrb[0].mxu0
    %4138 = vmatprep.mubr.f32.mxu0 0.0
    %4139 = vmatmul.mubr.f32.gmra.mrb[0].mxu0 %v586
    %v4140 = vpop.f32.mrb[0].mxu0
    %v4141 = vadd.f32 0.0, %v4140
    %v4142 = vpop.f32.mrb[0].mxu0
    %4143 = vmatprep.mubr.f32.mxu0 0.0
    %4144 = vmatmul.mubr.f32.gmra.mrb[0].mxu0 %v587
    %v4145 = vpop.f32.mrb[0].mxu0
    %v4146 = vadd.f32 0.0, %v4145
    %v4147 = vpop.f32.mrb[0].mxu0
    %4148 = vmatprep.mubr.f32.mxu0 0.0
    %4149 = vmatmul.mubr.f32.gmra.mrb[0].mxu0 %v588
    %v4150 = vpop.f32.mrb[0].mxu0
    %v4151 = vadd.f32 0.0, %v4150
    %v4152 = vpop.f32.mrb[0].mxu0
    %4153 = vmatprep.mubr.f32.mxu0 0.0
    %4154 = vmatmul.mubr.f32.gmra.mrb[0].mxu0 %v589
    %v4155 = vpop.f32.mrb[0].mxu0
    %v4156 = vadd.f32 0.0, %v4155
    %v4157 = vpop.f32.mrb[0].mxu0
    %4158 = vdwg.mxu0
    %s4159 = scalar_lea.vmem %s4, 1280
    %v4160 = vld [vmem:[%s4159] sm:$0xff]
    %v4161 = vld [vmem:[%s4159 + $0x8] sm:$0xff]
    %v4162 = vld [vmem:[%s4159 + $0x10] sm:$0xff]
    %v4163 = vld [vmem:[%s4159 + $0x18] sm:$0xff]
    %v4164 = vld [vmem:[%s4159 + $0x20] sm:$0xff]
    %v4165 = vld [vmem:[%s4159 + $0x28] sm:$0xff]
    %v4166 = vld [vmem:[%s4159 + $0x30] sm:$0xff]
    %v4167 = vld [vmem:[%s4159 + $0x38] sm:$0xff]
    %v4168 = vld [vmem:[%s4159 + $0x40] sm:$0xff]
    %v4169 = vld [vmem:[%s4159 + $0x48] sm:$0xff]
    %v4170 = vld [vmem:[%s4159 + $0x50] sm:$0xff]
    %v4171 = vld [vmem:[%s4159 + $0x58] sm:$0xff]
    %v4172 = vld [vmem:[%s4159 + $0x60] sm:$0xff]
    %v4173 = vld [vmem:[%s4159 + $0x68] sm:$0xff]
    %v4174 = vld [vmem:[%s4159 + $0x70] sm:$0xff]
    %v4175 = vld [vmem:[%s4159 + $0x78] sm:$0xff]
    %v4177 = vsel %vm866, %v4160, 0
    %v4180 = vsel %vm866, %v4161, 0
    %v4183 = vsel %vm866, %v4162, 0
    %v4186 = vsel %vm866, %v4163, 0
    %v4189 = vsel %vm866, %v4164, 0
    %v4192 = vsel %vm866, %v4165, 0
    %v4195 = vsel %vm866, %v4166, 0
    %v4198 = vsel %vm866, %v4167, 0
    %v4201 = vsel %vm866, %v4168, 0
    %v4204 = vsel %vm866, %v4169, 0
    %v4207 = vsel %vm866, %v4170, 0
    %v4210 = vsel %vm866, %v4171, 0
    %v4213 = vsel %vm866, %v4172, 0
    %v4216 = vsel %vm866, %v4173, 0
    %v4219 = vsel %vm866, %v4174, 0
    %v4222 = vsel %vm866, %v4175, 0
    %4224 = vmatprep.subr.mxu0 0.0
    %4225 = vmatpush1.msra.mxu0 %v4121
    %4226 = vmatprep.subr.mxu0 0.0
    %4227 = vmatpush1.msra.mxu0 %v4126
    %4228 = vmatprep.subr.mxu0 0.0
    %4229 = vmatpush1.msra.mxu0 %v4131
    %4230 = vmatprep.subr.mxu0 0.0
    %4231 = vmatpush1.msra.mxu0 %v4136
    %4232 = vmatprep.subr.mxu0 0.0
    %4233 = vmatpush1.msra.mxu0 %v4141
    %4234 = vmatprep.subr.mxu0 0.0
    %4235 = vmatpush1.msra.mxu0 %v4146
    %4236 = vmatprep.subr.mxu0 0.0
    %4237 = vmatpush1.msra.mxu0 %v4151
    %4238 = vmatprep.subr.mxu0 0.0
    %4239 = vmatpush1.msra.mxu0 %v4156
    %4240 = vmatprep.subr.mxu0 0.0
    %4241 = vmatpush1.msra.mxu0 0.0
    %4242 = vmatprep.subr.mxu0 0.0
    %4243 = vmatpush1.msra.mxu0 0.0
    %4244 = vmatprep.subr.mxu0 0.0
    %4245 = vmatpush1.msra.mxu0 0.0
    %4246 = vmatprep.subr.mxu0 0.0
    %4247 = vmatpush1.msra.mxu0 0.0
    %4248 = vmatprep.subr.mxu0 0.0
    %4249 = vmatpush1.msra.mxu0 0.0
    %4250 = vmatprep.subr.mxu0 0.0
    %4251 = vmatpush1.msra.mxu0 0.0
    %4252 = vmatprep.subr.mxu0 0.0
    %4253 = vmatpush1.msra.mxu0 0.0
    %4254 = vmatprep.subr.mxu0 0.0
    %4255 = vmatpush1.msra.mxu0 0.0
    %4256 = vmatprep.subr.mxu0 0.0
    %4257 = vmatpush1.msra.mxu0 0.0
    %4258 = vmatprep.subr.mxu0 0.0
    %4259 = vmatpush1.msra.mxu0 0.0
    %4260 = vmatprep.subr.mxu0 0.0
    %4261 = vmatpush1.msra.mxu0 0.0
    %4262 = vmatprep.subr.mxu0 0.0
    %4263 = vmatpush1.msra.mxu0 0.0
    %4264 = vmatprep.subr.mxu0 0.0
    %4265 = vmatpush1.msra.mxu0 0.0
    %4266 = vmatprep.subr.mxu0 0.0
    %4267 = vmatpush1.msra.mxu0 0.0
    %4268 = vmatprep.subr.mxu0 0.0
    %4269 = vmatpush1.msra.mxu0 0.0
    %4270 = vmatprep.subr.mxu0 0.0
    %4271 = vmatpush1.msra.mxu0 0.0
    %4272 = vmatprep.subr.mxu0 0.0
    %4273 = vmatpush1.msra.mxu0 0.0
    %4274 = vmatprep.subr.mxu0 0.0
    %4275 = vmatpush1.msra.mxu0 0.0
    %4276 = vmatprep.subr.mxu0 0.0
    %4277 = vmatpush1.msra.mxu0 0.0
    %4278 = vmatprep.subr.mxu0 0.0
    %4279 = vmatpush1.msra.mxu0 0.0
    %4280 = vmatprep.subr.mxu0 0.0
    %4281 = vmatpush1.msra.mxu0 0.0
    %4282 = vmatprep.subr.mxu0 0.0
    %4283 = vmatpush1.msra.mxu0 0.0
    %4284 = vmatprep.subr.mxu0 0.0
    %4285 = vmatpush1.msra.mxu0 0.0
    %4286 = vmatprep.subr.mxu0 0.0
    %4287 = vmatpush1.msra.mxu0 0.0
    %4288 = vmatprep.mubr.f32.mxu0 0.0
    %4289 = vmatmul.mubr.f32.gmra.mrb[0].mxu0 %v4177
    %v4290 = vpop.f32.mrb[0].mxu0
    %v4291 = vadd.f32 0.0, %v4290
    %v4292 = vpop.f32.mrb[0].mxu0
    %4293 = vmatprep.mubr.f32.mxu0 0.0
    %4294 = vmatmul.mubr.f32.gmra.mrb[0].mxu0 %v4180
    %v4295 = vpop.f32.mrb[0].mxu0
    %v4296 = vadd.f32 0.0, %v4295
    %v4297 = vpop.f32.mrb[0].mxu0
    %4298 = vmatprep.mubr.f32.mxu0 0.0
    %4299 = vmatmul.mubr.f32.gmra.mrb[0].mxu0 %v4183
    %v4300 = vpop.f32.mrb[0].mxu0
    %v4301 = vadd.f32 0.0, %v4300
    %v4302 = vpop.f32.mrb[0].mxu0
    %4303 = vmatprep.mubr.f32.mxu0 0.0
    %4304 = vmatmul.mubr.f32.gmra.mrb[0].mxu0 %v4186
    %v4305 = vpop.f32.mrb[0].mxu0
    %v4306 = vadd.f32 0.0, %v4305
    %v4307 = vpop.f32.mrb[0].mxu0
    %4308 = vmatprep.mubr.f32.mxu0 0.0
    %4309 = vmatmul.mubr.f32.gmra.mrb[0].mxu0 %v4189
    %v4310 = vpop.f32.mrb[0].mxu0
    %v4311 = vadd.f32 0.0, %v4310
    %v4312 = vpop.f32.mrb[0].mxu0
    %4313 = vmatprep.mubr.f32.mxu0 0.0
    %4314 = vmatmul.mubr.f32.gmra.mrb[0].mxu0 %v4192
    %v4315 = vpop.f32.mrb[0].mxu0
    %v4316 = vadd.f32 0.0, %v4315
    %v4317 = vpop.f32.mrb[0].mxu0
    %4318 = vmatprep.mubr.f32.mxu0 0.0
    %4319 = vmatmul.mubr.f32.gmra.mrb[0].mxu0 %v4195
    %v4320 = vpop.f32.mrb[0].mxu0
    %v4321 = vadd.f32 0.0, %v4320
    %v4322 = vpop.f32.mrb[0].mxu0
    %4323 = vmatprep.mubr.f32.mxu0 0.0
    %4324 = vmatmul.mubr.f32.gmra.mrb[0].mxu0 %v4198
    %v4325 = vpop.f32.mrb[0].mxu0
    %v4326 = vadd.f32 0.0, %v4325
    %v4327 = vpop.f32.mrb[0].mxu0
    %4328 = vmatprep.mubr.f32.mxu0 0.0
    %4329 = vmatmul.mubr.f32.gmra.mrb[0].mxu0 %v4201
    %v4330 = vpop.f32.mrb[0].mxu0
    %v4331 = vadd.f32 0.0, %v4330
    %v4332 = vpop.f32.mrb[0].mxu0
    %4333 = vmatprep.mubr.f32.mxu0 0.0
    %4334 = vmatmul.mubr.f32.gmra.mrb[0].mxu0 %v4204
    %v4335 = vpop.f32.mrb[0].mxu0
    %v4336 = vadd.f32 0.0, %v4335
    %v4337 = vpop.f32.mrb[0].mxu0
    %4338 = vmatprep.mubr.f32.mxu0 0.0
    %4339 = vmatmul.mubr.f32.gmra.mrb[0].mxu0 %v4207
    %v4340 = vpop.f32.mrb[0].mxu0
    %v4341 = vadd.f32 0.0, %v4340
    %v4342 = vpop.f32.mrb[0].mxu0
    %4343 = vmatprep.mubr.f32.mxu0 0.0
    %4344 = vmatmul.mubr.f32.gmra.mrb[0].mxu0 %v4210
    %v4345 = vpop.f32.mrb[0].mxu0
    %v4346 = vadd.f32 0.0, %v4345
    %v4347 = vpop.f32.mrb[0].mxu0
    %4348 = vmatprep.mubr.f32.mxu0 0.0
    %4349 = vmatmul.mubr.f32.gmra.mrb[0].mxu0 %v4213
    %v4350 = vpop.f32.mrb[0].mxu0
    %v4351 = vadd.f32 0.0, %v4350
    %v4352 = vpop.f32.mrb[0].mxu0
    %4353 = vmatprep.mubr.f32.mxu0 0.0
    %4354 = vmatmul.mubr.f32.gmra.mrb[0].mxu0 %v4216
    %v4355 = vpop.f32.mrb[0].mxu0
    %v4356 = vadd.f32 0.0, %v4355
    %v4357 = vpop.f32.mrb[0].mxu0
    %4358 = vmatprep.mubr.f32.mxu0 0.0
    %4359 = vmatmul.mubr.f32.gmra.mrb[0].mxu0 %v4219
    %v4360 = vpop.f32.mrb[0].mxu0
    %v4361 = vadd.f32 0.0, %v4360
    %v4362 = vpop.f32.mrb[0].mxu0
    %4363 = vmatprep.mubr.f32.mxu0 0.0
    %4364 = vmatmul.mubr.f32.gmra.mrb[0].mxu0 %v4222
    %v4365 = vpop.f32.mrb[0].mxu0
    %v4366 = vadd.f32 0.0, %v4365
    %v4367 = vpop.f32.mrb[0].mxu0
    %4368 = vdwg.mxu0
    %v4369 = vadd.f32 %v4021, %v4291
    %v4370 = vadd.f32 %v4022, %v4296
    %v4371 = vadd.f32 %v4023, %v4301
    %v4372 = vadd.f32 %v4024, %v4306
    %v4373 = vadd.f32 %v4025, %v4311
    %v4374 = vadd.f32 %v4026, %v4316
    %v4375 = vadd.f32 %v4027, %v4321
    %v4376 = vadd.f32 %v4028, %v4326
    %v4377 = vadd.f32 %v4029, %v4331
    %v4378 = vadd.f32 %v4030, %v4336
    %v4379 = vadd.f32 %v4031, %v4341
    %v4380 = vadd.f32 %v4032, %v4346
    %v4381 = vadd.f32 %v4033, %v4351
    %v4382 = vadd.f32 %v4034, %v4356
    %v4383 = vadd.f32 %v4035, %v4361
    %v4384 = vadd.f32 %v4036, %v4366
    %s4385 = scalar_lea.vmem %s5, 1408
    %v4386 = vld [vmem:[%s4385] sm:$0xff]
    %v4387 = vld [vmem:[%s4385 + $0x8] sm:$0xff]
    %v4388 = vld [vmem:[%s4385 + $0x10] sm:$0xff]
    %v4389 = vld [vmem:[%s4385 + $0x18] sm:$0xff]
    %v4390 = vld [vmem:[%s4385 + $0x20] sm:$0xff]
    %v4391 = vld [vmem:[%s4385 + $0x28] sm:$0xff]
    %v4392 = vld [vmem:[%s4385 + $0x30] sm:$0xff]
    %v4393 = vld [vmem:[%s4385 + $0x38] sm:$0xff]
    %v4394 = vld [vmem:[%s4385 + $0x40] sm:$0xff]
    %v4395 = vld [vmem:[%s4385 + $0x48] sm:$0xff]
    %v4396 = vld [vmem:[%s4385 + $0x50] sm:$0xff]
    %v4397 = vld [vmem:[%s4385 + $0x58] sm:$0xff]
    %v4398 = vld [vmem:[%s4385 + $0x60] sm:$0xff]
    %v4399 = vld [vmem:[%s4385 + $0x68] sm:$0xff]
    %v4400 = vld [vmem:[%s4385 + $0x70] sm:$0xff]
    %v4401 = vld [vmem:[%s4385 + $0x78] sm:$0xff]
    %4402 = vmatprep.subr.mxu0 0.0
    %4403 = vmatpush1.msra.mxu0 %v4386
    %4404 = vmatprep.subr.mxu0 0.0
    %4405 = vmatpush1.msra.mxu0 %v4387
    %4406 = vmatprep.subr.mxu0 0.0
    %4407 = vmatpush1.msra.mxu0 %v4388
    %4408 = vmatprep.subr.mxu0 0.0
    %4409 = vmatpush1.msra.mxu0 %v4389
    %4410 = vmatprep.subr.mxu0 0.0
    %4411 = vmatpush1.msra.mxu0 %v4390
    %4412 = vmatprep.subr.mxu0 0.0
    %4413 = vmatpush1.msra.mxu0 %v4391
    %4414 = vmatprep.subr.mxu0 0.0
    %4415 = vmatpush1.msra.mxu0 %v4392
    %4416 = vmatprep.subr.mxu0 0.0
    %4417 = vmatpush1.msra.mxu0 %v4393
    %4418 = vmatprep.subr.mxu0 0.0
    %4419 = vmatpush1.msra.mxu0 %v4394
    %4420 = vmatprep.subr.mxu0 0.0
    %4421 = vmatpush1.msra.mxu0 %v4395
    %4422 = vmatprep.subr.mxu0 0.0
    %4423 = vmatpush1.msra.mxu0 %v4396
    %4424 = vmatprep.subr.mxu0 0.0
    %4425 = vmatpush1.msra.mxu0 %v4397
    %4426 = vmatprep.subr.mxu0 0.0
    %4427 = vmatpush1.msra.mxu0 %v4398
    %4428 = vmatprep.subr.mxu0 0.0
    %4429 = vmatpush1.msra.mxu0 %v4399
    %4430 = vmatprep.subr.mxu0 0.0
    %4431 = vmatpush1.msra.mxu0 %v4400
    %4432 = vmatprep.subr.mxu0 0.0
    %4433 = vmatpush1.msra.mxu0 %v4401
    %4434 = vmatprep.subr.mxu0 0.0
    %4435 = vmatpush1.msra.mxu0 0.0
    %4436 = vmatprep.subr.mxu0 0.0
    %4437 = vmatpush1.msra.mxu0 0.0
    %4438 = vmatprep.subr.mxu0 0.0
    %4439 = vmatpush1.msra.mxu0 0.0
    %4440 = vmatprep.subr.mxu0 0.0
    %4441 = vmatpush1.msra.mxu0 0.0
    %4442 = vmatprep.subr.mxu0 0.0
    %4443 = vmatpush1.msra.mxu0 0.0
    %4444 = vmatprep.subr.mxu0 0.0
    %4445 = vmatpush1.msra.mxu0 0.0
    %4446 = vmatprep.subr.mxu0 0.0
    %4447 = vmatpush1.msra.mxu0 0.0
    %4448 = vmatprep.subr.mxu0 0.0
    %4449 = vmatpush1.msra.mxu0 0.0
    %4450 = vmatprep.subr.mxu0 0.0
    %4451 = vmatpush1.msra.mxu0 0.0
    %4452 = vmatprep.subr.mxu0 0.0
    %4453 = vmatpush1.msra.mxu0 0.0
    %4454 = vmatprep.subr.mxu0 0.0
    %4455 = vmatpush1.msra.mxu0 0.0
    %4456 = vmatprep.subr.mxu0 0.0
    %4457 = vmatpush1.msra.mxu0 0.0
    %4458 = vmatprep.subr.mxu0 0.0
    %4459 = vmatpush1.msra.mxu0 0.0
    %4460 = vmatprep.subr.mxu0 0.0
    %4461 = vmatpush1.msra.mxu0 0.0
    %4462 = vmatprep.subr.mxu0 0.0
    %4463 = vmatpush1.msra.mxu0 0.0
    %4464 = vmatprep.subr.mxu0 0.0
    %4465 = vmatpush1.msra.mxu0 0.0
    %4466 = vmatprep.mubr.f32.mxu0 0.0
    %4467 = vmatmul.mubr.f32.gmra.mrb[0].mxu0 %v582
    %v4468 = vpop.f32.mrb[0].mxu0
    %v4469 = vadd.f32 0.0, %v4468
    %v4470 = vpop.f32.mrb[0].mxu0
    %4471 = vmatprep.mubr.f32.mxu0 0.0
    %4472 = vmatmul.mubr.f32.gmra.mrb[0].mxu0 %v583
    %v4473 = vpop.f32.mrb[0].mxu0
    %v4474 = vadd.f32 0.0, %v4473
    %v4475 = vpop.f32.mrb[0].mxu0
    %4476 = vmatprep.mubr.f32.mxu0 0.0
    %4477 = vmatmul.mubr.f32.gmra.mrb[0].mxu0 %v584
    %v4478 = vpop.f32.mrb[0].mxu0
    %v4479 = vadd.f32 0.0, %v4478
    %v4480 = vpop.f32.mrb[0].mxu0
    %4481 = vmatprep.mubr.f32.mxu0 0.0
    %4482 = vmatmul.mubr.f32.gmra.mrb[0].mxu0 %v585
    %v4483 = vpop.f32.mrb[0].mxu0
    %v4484 = vadd.f32 0.0, %v4483
    %v4485 = vpop.f32.mrb[0].mxu0
    %4486 = vmatprep.mubr.f32.mxu0 0.0
    %4487 = vmatmul.mubr.f32.gmra.mrb[0].mxu0 %v586
    %v4488 = vpop.f32.mrb[0].mxu0
    %v4489 = vadd.f32 0.0, %v4488
    %v4490 = vpop.f32.mrb[0].mxu0
    %4491 = vmatprep.mubr.f32.mxu0 0.0
    %4492 = vmatmul.mubr.f32.gmra.mrb[0].mxu0 %v587
    %v4493 = vpop.f32.mrb[0].mxu0
    %v4494 = vadd.f32 0.0, %v4493
    %v4495 = vpop.f32.mrb[0].mxu0
    %4496 = vmatprep.mubr.f32.mxu0 0.0
    %4497 = vmatmul.mubr.f32.gmra.mrb[0].mxu0 %v588
    %v4498 = vpop.f32.mrb[0].mxu0
    %v4499 = vadd.f32 0.0, %v4498
    %v4500 = vpop.f32.mrb[0].mxu0
    %4501 = vmatprep.mubr.f32.mxu0 0.0
    %4502 = vmatmul.mubr.f32.gmra.mrb[0].mxu0 %v589
    %v4503 = vpop.f32.mrb[0].mxu0
    %v4504 = vadd.f32 0.0, %v4503
    %v4505 = vpop.f32.mrb[0].mxu0
    %4506 = vdwg.mxu0
    %s4507 = scalar_lea.vmem %s4, 1408
    %v4508 = vld [vmem:[%s4507] sm:$0xff]
    %v4509 = vld [vmem:[%s4507 + $0x8] sm:$0xff]
    %v4510 = vld [vmem:[%s4507 + $0x10] sm:$0xff]
    %v4511 = vld [vmem:[%s4507 + $0x18] sm:$0xff]
    %v4512 = vld [vmem:[%s4507 + $0x20] sm:$0xff]
    %v4513 = vld [vmem:[%s4507 + $0x28] sm:$0xff]
    %v4514 = vld [vmem:[%s4507 + $0x30] sm:$0xff]
    %v4515 = vld [vmem:[%s4507 + $0x38] sm:$0xff]
    %v4516 = vld [vmem:[%s4507 + $0x40] sm:$0xff]
    %v4517 = vld [vmem:[%s4507 + $0x48] sm:$0xff]
    %v4518 = vld [vmem:[%s4507 + $0x50] sm:$0xff]
    %v4519 = vld [vmem:[%s4507 + $0x58] sm:$0xff]
    %v4520 = vld [vmem:[%s4507 + $0x60] sm:$0xff]
    %v4521 = vld [vmem:[%s4507 + $0x68] sm:$0xff]
    %v4522 = vld [vmem:[%s4507 + $0x70] sm:$0xff]
    %v4523 = vld [vmem:[%s4507 + $0x78] sm:$0xff]
    %v4525 = vsel %vm866, %v4508, 0
    %v4528 = vsel %vm866, %v4509, 0
    %v4531 = vsel %vm866, %v4510, 0
    %v4534 = vsel %vm866, %v4511, 0
    %v4537 = vsel %vm866, %v4512, 0
    %v4540 = vsel %vm866, %v4513, 0
    %v4543 = vsel %vm866, %v4514, 0
    %v4546 = vsel %vm866, %v4515, 0
    %v4549 = vsel %vm866, %v4516, 0
    %v4552 = vsel %vm866, %v4517, 0
    %v4555 = vsel %vm866, %v4518, 0
    %v4558 = vsel %vm866, %v4519, 0
    %v4561 = vsel %vm866, %v4520, 0
    %v4564 = vsel %vm866, %v4521, 0
    %v4567 = vsel %vm866, %v4522, 0
    %v4570 = vsel %vm866, %v4523, 0
    %4572 = vmatprep.subr.mxu0 0.0
    %4573 = vmatpush1.msra.mxu0 %v4469
    %4574 = vmatprep.subr.mxu0 0.0
    %4575 = vmatpush1.msra.mxu0 %v4474
    %4576 = vmatprep.subr.mxu0 0.0
    %4577 = vmatpush1.msra.mxu0 %v4479
    %4578 = vmatprep.subr.mxu0 0.0
    %4579 = vmatpush1.msra.mxu0 %v4484
    %4580 = vmatprep.subr.mxu0 0.0
    %4581 = vmatpush1.msra.mxu0 %v4489
    %4582 = vmatprep.subr.mxu0 0.0
    %4583 = vmatpush1.msra.mxu0 %v4494
    %4584 = vmatprep.subr.mxu0 0.0
    %4585 = vmatpush1.msra.mxu0 %v4499
    %4586 = vmatprep.subr.mxu0 0.0
    %4587 = vmatpush1.msra.mxu0 %v4504
    %4588 = vmatprep.subr.mxu0 0.0
    %4589 = vmatpush1.msra.mxu0 0.0
    %4590 = vmatprep.subr.mxu0 0.0
    %4591 = vmatpush1.msra.mxu0 0.0
    %4592 = vmatprep.subr.mxu0 0.0
    %4593 = vmatpush1.msra.mxu0 0.0
    %4594 = vmatprep.subr.mxu0 0.0
    %4595 = vmatpush1.msra.mxu0 0.0
    %4596 = vmatprep.subr.mxu0 0.0
    %4597 = vmatpush1.msra.mxu0 0.0
    %4598 = vmatprep.subr.mxu0 0.0
    %4599 = vmatpush1.msra.mxu0 0.0
    %4600 = vmatprep.subr.mxu0 0.0
    %4601 = vmatpush1.msra.mxu0 0.0
    %4602 = vmatprep.subr.mxu0 0.0
    %4603 = vmatpush1.msra.mxu0 0.0
    %4604 = vmatprep.subr.mxu0 0.0
    %4605 = vmatpush1.msra.mxu0 0.0
    %4606 = vmatprep.subr.mxu0 0.0
    %4607 = vmatpush1.msra.mxu0 0.0
    %4608 = vmatprep.subr.mxu0 0.0
    %4609 = vmatpush1.msra.mxu0 0.0
    %4610 = vmatprep.subr.mxu0 0.0
    %4611 = vmatpush1.msra.mxu0 0.0
    %4612 = vmatprep.subr.mxu0 0.0
    %4613 = vmatpush1.msra.mxu0 0.0
    %4614 = vmatprep.subr.mxu0 0.0
    %4615 = vmatpush1.msra.mxu0 0.0
    %4616 = vmatprep.subr.mxu0 0.0
    %4617 = vmatpush1.msra.mxu0 0.0
    %4618 = vmatprep.subr.mxu0 0.0
    %4619 = vmatpush1.msra.mxu0 0.0
    %4620 = vmatprep.subr.mxu0 0.0
    %4621 = vmatpush1.msra.mxu0 0.0
    %4622 = vmatprep.subr.mxu0 0.0
    %4623 = vmatpush1.msra.mxu0 0.0
    %4624 = vmatprep.subr.mxu0 0.0
    %4625 = vmatpush1.msra.mxu0 0.0
    %4626 = vmatprep.subr.mxu0 0.0
    %4627 = vmatpush1.msra.mxu0 0.0
    %4628 = vmatprep.subr.mxu0 0.0
    %4629 = vmatpush1.msra.mxu0 0.0
    %4630 = vmatprep.subr.mxu0 0.0
    %4631 = vmatpush1.msra.mxu0 0.0
    %4632 = vmatprep.subr.mxu0 0.0
    %4633 = vmatpush1.msra.mxu0 0.0
    %4634 = vmatprep.subr.mxu0 0.0
    %4635 = vmatpush1.msra.mxu0 0.0
    %4636 = vmatprep.mubr.f32.mxu0 0.0
    %4637 = vmatmul.mubr.f32.gmra.mrb[0].mxu0 %v4525
    %v4638 = vpop.f32.mrb[0].mxu0
    %v4639 = vadd.f32 0.0, %v4638
    %v4640 = vpop.f32.mrb[0].mxu0
    %4641 = vmatprep.mubr.f32.mxu0 0.0
    %4642 = vmatmul.mubr.f32.gmra.mrb[0].mxu0 %v4528
    %v4643 = vpop.f32.mrb[0].mxu0
    %v4644 = vadd.f32 0.0, %v4643
    %v4645 = vpop.f32.mrb[0].mxu0
    %4646 = vmatprep.mubr.f32.mxu0 0.0
    %4647 = vmatmul.mubr.f32.gmra.mrb[0].mxu0 %v4531
    %v4648 = vpop.f32.mrb[0].mxu0
    %v4649 = vadd.f32 0.0, %v4648
    %v4650 = vpop.f32.mrb[0].mxu0
    %4651 = vmatprep.mubr.f32.mxu0 0.0
    %4652 = vmatmul.mubr.f32.gmra.mrb[0].mxu0 %v4534
    %v4653 = vpop.f32.mrb[0].mxu0
    %v4654 = vadd.f32 0.0, %v4653
    %v4655 = vpop.f32.mrb[0].mxu0
    %4656 = vmatprep.mubr.f32.mxu0 0.0
    %4657 = vmatmul.mubr.f32.gmra.mrb[0].mxu0 %v4537
    %v4658 = vpop.f32.mrb[0].mxu0
    %v4659 = vadd.f32 0.0, %v4658
    %v4660 = vpop.f32.mrb[0].mxu0
    %4661 = vmatprep.mubr.f32.mxu0 0.0
    %4662 = vmatmul.mubr.f32.gmra.mrb[0].mxu0 %v4540
    %v4663 = vpop.f32.mrb[0].mxu0
    %v4664 = vadd.f32 0.0, %v4663
    %v4665 = vpop.f32.mrb[0].mxu0
    %4666 = vmatprep.mubr.f32.mxu0 0.0
    %4667 = vmatmul.mubr.f32.gmra.mrb[0].mxu0 %v4543
    %v4668 = vpop.f32.mrb[0].mxu0
    %v4669 = vadd.f32 0.0, %v4668
    %v4670 = vpop.f32.mrb[0].mxu0
    %4671 = vmatprep.mubr.f32.mxu0 0.0
    %4672 = vmatmul.mubr.f32.gmra.mrb[0].mxu0 %v4546
    %v4673 = vpop.f32.mrb[0].mxu0
    %v4674 = vadd.f32 0.0, %v4673
    %v4675 = vpop.f32.mrb[0].mxu0
    %4676 = vmatprep.mubr.f32.mxu0 0.0
    %4677 = vmatmul.mubr.f32.gmra.mrb[0].mxu0 %v4549
    %v4678 = vpop.f32.mrb[0].mxu0
    %v4679 = vadd.f32 0.0, %v4678
    %v4680 = vpop.f32.mrb[0].mxu0
    %4681 = vmatprep.mubr.f32.mxu0 0.0
    %4682 = vmatmul.mubr.f32.gmra.mrb[0].mxu0 %v4552
    %v4683 = vpop.f32.mrb[0].mxu0
    %v4684 = vadd.f32 0.0, %v4683
    %v4685 = vpop.f32.mrb[0].mxu0
    %4686 = vmatprep.mubr.f32.mxu0 0.0
    %4687 = vmatmul.mubr.f32.gmra.mrb[0].mxu0 %v4555
    %v4688 = vpop.f32.mrb[0].mxu0
    %v4689 = vadd.f32 0.0, %v4688
    %v4690 = vpop.f32.mrb[0].mxu0
    %4691 = vmatprep.mubr.f32.mxu0 0.0
    %4692 = vmatmul.mubr.f32.gmra.mrb[0].mxu0 %v4558
    %v4693 = vpop.f32.mrb[0].mxu0
    %v4694 = vadd.f32 0.0, %v4693
    %v4695 = vpop.f32.mrb[0].mxu0
    %4696 = vmatprep.mubr.f32.mxu0 0.0
    %4697 = vmatmul.mubr.f32.gmra.mrb[0].mxu0 %v4561
    %v4698 = vpop.f32.mrb[0].mxu0
    %v4699 = vadd.f32 0.0, %v4698
    %v4700 = vpop.f32.mrb[0].mxu0
    %4701 = vmatprep.mubr.f32.mxu0 0.0
    %4702 = vmatmul.mubr.f32.gmra.mrb[0].mxu0 %v4564
    %v4703 = vpop.f32.mrb[0].mxu0
    %v4704 = vadd.f32 0.0, %v4703
    %v4705 = vpop.f32.mrb[0].mxu0
    %4706 = vmatprep.mubr.f32.mxu0 0.0
    %4707 = vmatmul.mubr.f32.gmra.mrb[0].mxu0 %v4567
    %v4708 = vpop.f32.mrb[0].mxu0
    %v4709 = vadd.f32 0.0, %v4708
    %v4710 = vpop.f32.mrb[0].mxu0
    %4711 = vmatprep.mubr.f32.mxu0 0.0
    %4712 = vmatmul.mubr.f32.gmra.mrb[0].mxu0 %v4570
    %v4713 = vpop.f32.mrb[0].mxu0
    %v4714 = vadd.f32 0.0, %v4713
    %v4715 = vpop.f32.mrb[0].mxu0
    %4716 = vdwg.mxu0
    %v4717 = vadd.f32 %v4369, %v4639
    %v4718 = vadd.f32 %v4370, %v4644
    %v4719 = vadd.f32 %v4371, %v4649
    %v4720 = vadd.f32 %v4372, %v4654
    %v4721 = vadd.f32 %v4373, %v4659
    %v4722 = vadd.f32 %v4374, %v4664
    %v4723 = vadd.f32 %v4375, %v4669
    %v4724 = vadd.f32 %v4376, %v4674
    %v4725 = vadd.f32 %v4377, %v4679
    %v4726 = vadd.f32 %v4378, %v4684
    %v4727 = vadd.f32 %v4379, %v4689
    %v4728 = vadd.f32 %v4380, %v4694
    %v4729 = vadd.f32 %v4381, %v4699
    %v4730 = vadd.f32 %v4382, %v4704
    %v4731 = vadd.f32 %v4383, %v4709
    %v4732 = vadd.f32 %v4384, %v4714
    %s4733 = scalar_lea.vmem %s5, 1536
    %v4734 = vld [vmem:[%s4733] sm:$0xff]
    %v4735 = vld [vmem:[%s4733 + $0x8] sm:$0xff]
    %v4736 = vld [vmem:[%s4733 + $0x10] sm:$0xff]
    %v4737 = vld [vmem:[%s4733 + $0x18] sm:$0xff]
    %v4738 = vld [vmem:[%s4733 + $0x20] sm:$0xff]
    %v4739 = vld [vmem:[%s4733 + $0x28] sm:$0xff]
    %v4740 = vld [vmem:[%s4733 + $0x30] sm:$0xff]
    %v4741 = vld [vmem:[%s4733 + $0x38] sm:$0xff]
    %v4742 = vld [vmem:[%s4733 + $0x40] sm:$0xff]
    %v4743 = vld [vmem:[%s4733 + $0x48] sm:$0xff]
    %v4744 = vld [vmem:[%s4733 + $0x50] sm:$0xff]
    %v4745 = vld [vmem:[%s4733 + $0x58] sm:$0xff]
    %v4746 = vld [vmem:[%s4733 + $0x60] sm:$0xff]
    %v4747 = vld [vmem:[%s4733 + $0x68] sm:$0xff]
    %v4748 = vld [vmem:[%s4733 + $0x70] sm:$0xff]
    %v4749 = vld [vmem:[%s4733 + $0x78] sm:$0xff]
    %4750 = vmatprep.subr.mxu0 0.0
    %4751 = vmatpush1.msra.mxu0 %v4734
    %4752 = vmatprep.subr.mxu0 0.0
    %4753 = vmatpush1.msra.mxu0 %v4735
    %4754 = vmatprep.subr.mxu0 0.0
    %4755 = vmatpush1.msra.mxu0 %v4736
    %4756 = vmatprep.subr.mxu0 0.0
    %4757 = vmatpush1.msra.mxu0 %v4737
    %4758 = vmatprep.subr.mxu0 0.0
    %4759 = vmatpush1.msra.mxu0 %v4738
    %4760 = vmatprep.subr.mxu0 0.0
    %4761 = vmatpush1.msra.mxu0 %v4739
    %4762 = vmatprep.subr.mxu0 0.0
    %4763 = vmatpush1.msra.mxu0 %v4740
    %4764 = vmatprep.subr.mxu0 0.0
    %4765 = vmatpush1.msra.mxu0 %v4741
    %4766 = vmatprep.subr.mxu0 0.0
    %4767 = vmatpush1.msra.mxu0 %v4742
    %4768 = vmatprep.subr.mxu0 0.0
    %4769 = vmatpush1.msra.mxu0 %v4743
    %4770 = vmatprep.subr.mxu0 0.0
    %4771 = vmatpush1.msra.mxu0 %v4744
    %4772 = vmatprep.subr.mxu0 0.0
    %4773 = vmatpush1.msra.mxu0 %v4745
    %4774 = vmatprep.subr.mxu0 0.0
    %4775 = vmatpush1.msra.mxu0 %v4746
    %4776 = vmatprep.subr.mxu0 0.0
    %4777 = vmatpush1.msra.mxu0 %v4747
    %4778 = vmatprep.subr.mxu0 0.0
    %4779 = vmatpush1.msra.mxu0 %v4748
    %4780 = vmatprep.subr.mxu0 0.0
    %4781 = vmatpush1.msra.mxu0 %v4749
    %4782 = vmatprep.subr.mxu0 0.0
    %4783 = vmatpush1.msra.mxu0 0.0
    %4784 = vmatprep.subr.mxu0 0.0
    %4785 = vmatpush1.msra.mxu0 0.0
    %4786 = vmatprep.subr.mxu0 0.0
    %4787 = vmatpush1.msra.mxu0 0.0
    %4788 = vmatprep.subr.mxu0 0.0
    %4789 = vmatpush1.msra.mxu0 0.0
    %4790 = vmatprep.subr.mxu0 0.0
    %4791 = vmatpush1.msra.mxu0 0.0
    %4792 = vmatprep.subr.mxu0 0.0
    %4793 = vmatpush1.msra.mxu0 0.0
    %4794 = vmatprep.subr.mxu0 0.0
    %4795 = vmatpush1.msra.mxu0 0.0
    %4796 = vmatprep.subr.mxu0 0.0
    %4797 = vmatpush1.msra.mxu0 0.0
    %4798 = vmatprep.subr.mxu0 0.0
    %4799 = vmatpush1.msra.mxu0 0.0
    %4800 = vmatprep.subr.mxu0 0.0
    %4801 = vmatpush1.msra.mxu0 0.0
    %4802 = vmatprep.subr.mxu0 0.0
    %4803 = vmatpush1.msra.mxu0 0.0
    %4804 = vmatprep.subr.mxu0 0.0
    %4805 = vmatpush1.msra.mxu0 0.0
    %4806 = vmatprep.subr.mxu0 0.0
    %4807 = vmatpush1.msra.mxu0 0.0
    %4808 = vmatprep.subr.mxu0 0.0
    %4809 = vmatpush1.msra.mxu0 0.0
    %4810 = vmatprep.subr.mxu0 0.0
    %4811 = vmatpush1.msra.mxu0 0.0
    %4812 = vmatprep.subr.mxu0 0.0
    %4813 = vmatpush1.msra.mxu0 0.0
    %4814 = vmatprep.mubr.f32.mxu0 0.0
    %4815 = vmatmul.mubr.f32.gmra.mrb[0].mxu0 %v582
    %v4816 = vpop.f32.mrb[0].mxu0
    %v4817 = vadd.f32 0.0, %v4816
    %v4818 = vpop.f32.mrb[0].mxu0
    %4819 = vmatprep.mubr.f32.mxu0 0.0
    %4820 = vmatmul.mubr.f32.gmra.mrb[0].mxu0 %v583
    %v4821 = vpop.f32.mrb[0].mxu0
    %v4822 = vadd.f32 0.0, %v4821
    %v4823 = vpop.f32.mrb[0].mxu0
    %4824 = vmatprep.mubr.f32.mxu0 0.0
    %4825 = vmatmul.mubr.f32.gmra.mrb[0].mxu0 %v584
    %v4826 = vpop.f32.mrb[0].mxu0
    %v4827 = vadd.f32 0.0, %v4826
    %v4828 = vpop.f32.mrb[0].mxu0
    %4829 = vmatprep.mubr.f32.mxu0 0.0
    %4830 = vmatmul.mubr.f32.gmra.mrb[0].mxu0 %v585
    %v4831 = vpop.f32.mrb[0].mxu0
    %v4832 = vadd.f32 0.0, %v4831
    %v4833 = vpop.f32.mrb[0].mxu0
    %4834 = vmatprep.mubr.f32.mxu0 0.0
    %4835 = vmatmul.mubr.f32.gmra.mrb[0].mxu0 %v586
    %v4836 = vpop.f32.mrb[0].mxu0
    %v4837 = vadd.f32 0.0, %v4836
    %v4838 = vpop.f32.mrb[0].mxu0
    %4839 = vmatprep.mubr.f32.mxu0 0.0
    %4840 = vmatmul.mubr.f32.gmra.mrb[0].mxu0 %v587
    %v4841 = vpop.f32.mrb[0].mxu0
    %v4842 = vadd.f32 0.0, %v4841
    %v4843 = vpop.f32.mrb[0].mxu0
    %4844 = vmatprep.mubr.f32.mxu0 0.0
    %4845 = vmatmul.mubr.f32.gmra.mrb[0].mxu0 %v588
    %v4846 = vpop.f32.mrb[0].mxu0
    %v4847 = vadd.f32 0.0, %v4846
    %v4848 = vpop.f32.mrb[0].mxu0
    %4849 = vmatprep.mubr.f32.mxu0 0.0
    %4850 = vmatmul.mubr.f32.gmra.mrb[0].mxu0 %v589
    %v4851 = vpop.f32.mrb[0].mxu0
    %v4852 = vadd.f32 0.0, %v4851
    %v4853 = vpop.f32.mrb[0].mxu0
    %4854 = vdwg.mxu0
    %s4855 = scalar_lea.vmem %s4, 1536
    %v4856 = vld [vmem:[%s4855] sm:$0xff]
    %v4857 = vld [vmem:[%s4855 + $0x8] sm:$0xff]
    %v4858 = vld [vmem:[%s4855 + $0x10] sm:$0xff]
    %v4859 = vld [vmem:[%s4855 + $0x18] sm:$0xff]
    %v4860 = vld [vmem:[%s4855 + $0x20] sm:$0xff]
    %v4861 = vld [vmem:[%s4855 + $0x28] sm:$0xff]
    %v4862 = vld [vmem:[%s4855 + $0x30] sm:$0xff]
    %v4863 = vld [vmem:[%s4855 + $0x38] sm:$0xff]
    %v4864 = vld [vmem:[%s4855 + $0x40] sm:$0xff]
    %v4865 = vld [vmem:[%s4855 + $0x48] sm:$0xff]
    %v4866 = vld [vmem:[%s4855 + $0x50] sm:$0xff]
    %v4867 = vld [vmem:[%s4855 + $0x58] sm:$0xff]
    %v4868 = vld [vmem:[%s4855 + $0x60] sm:$0xff]
    %v4869 = vld [vmem:[%s4855 + $0x68] sm:$0xff]
    %v4870 = vld [vmem:[%s4855 + $0x70] sm:$0xff]
    %v4871 = vld [vmem:[%s4855 + $0x78] sm:$0xff]
    %v4873 = vsel %vm866, %v4856, 0
    %v4876 = vsel %vm866, %v4857, 0
    %v4879 = vsel %vm866, %v4858, 0
    %v4882 = vsel %vm866, %v4859, 0
    %v4885 = vsel %vm866, %v4860, 0
    %v4888 = vsel %vm866, %v4861, 0
    %v4891 = vsel %vm866, %v4862, 0
    %v4894 = vsel %vm866, %v4863, 0
    %v4897 = vsel %vm866, %v4864, 0
    %v4900 = vsel %vm866, %v4865, 0
    %v4903 = vsel %vm866, %v4866, 0
    %v4906 = vsel %vm866, %v4867, 0
    %v4909 = vsel %vm866, %v4868, 0
    %v4912 = vsel %vm866, %v4869, 0
    %v4915 = vsel %vm866, %v4870, 0
    %v4918 = vsel %vm866, %v4871, 0
    %4920 = vmatprep.subr.mxu0 0.0
    %4921 = vmatpush1.msra.mxu0 %v4817
    %4922 = vmatprep.subr.mxu0 0.0
    %4923 = vmatpush1.msra.mxu0 %v4822
    %4924 = vmatprep.subr.mxu0 0.0
    %4925 = vmatpush1.msra.mxu0 %v4827
    %4926 = vmatprep.subr.mxu0 0.0
    %4927 = vmatpush1.msra.mxu0 %v4832
    %4928 = vmatprep.subr.mxu0 0.0
    %4929 = vmatpush1.msra.mxu0 %v4837
    %4930 = vmatprep.subr.mxu0 0.0
    %4931 = vmatpush1.msra.mxu0 %v4842
    %4932 = vmatprep.subr.mxu0 0.0
    %4933 = vmatpush1.msra.mxu0 %v4847
    %4934 = vmatprep.subr.mxu0 0.0
    %4935 = vmatpush1.msra.mxu0 %v4852
    %4936 = vmatprep.subr.mxu0 0.0
    %4937 = vmatpush1.msra.mxu0 0.0
    %4938 = vmatprep.subr.mxu0 0.0
    %4939 = vmatpush1.msra.mxu0 0.0
    %4940 = vmatprep.subr.mxu0 0.0
    %4941 = vmatpush1.msra.mxu0 0.0
    %4942 = vmatprep.subr.mxu0 0.0
    %4943 = vmatpush1.msra.mxu0 0.0
    %4944 = vmatprep.subr.mxu0 0.0
    %4945 = vmatpush1.msra.mxu0 0.0
    %4946 = vmatprep.subr.mxu0 0.0
    %4947 = vmatpush1.msra.mxu0 0.0
    %4948 = vmatprep.subr.mxu0 0.0
    %4949 = vmatpush1.msra.mxu0 0.0
    %4950 = vmatprep.subr.mxu0 0.0
    %4951 = vmatpush1.msra.mxu0 0.0
    %4952 = vmatprep.subr.mxu0 0.0
    %4953 = vmatpush1.msra.mxu0 0.0
    %4954 = vmatprep.subr.mxu0 0.0
    %4955 = vmatpush1.msra.mxu0 0.0
    %4956 = vmatprep.subr.mxu0 0.0
    %4957 = vmatpush1.msra.mxu0 0.0
    %4958 = vmatprep.subr.mxu0 0.0
    %4959 = vmatpush1.msra.mxu0 0.0
    %4960 = vmatprep.subr.mxu0 0.0
    %4961 = vmatpush1.msra.mxu0 0.0
    %4962 = vmatprep.subr.mxu0 0.0
    %4963 = vmatpush1.msra.mxu0 0.0
    %4964 = vmatprep.subr.mxu0 0.0
    %4965 = vmatpush1.msra.mxu0 0.0
    %4966 = vmatprep.subr.mxu0 0.0
    %4967 = vmatpush1.msra.mxu0 0.0
    %4968 = vmatprep.subr.mxu0 0.0
    %4969 = vmatpush1.msra.mxu0 0.0
    %4970 = vmatprep.subr.mxu0 0.0
    %4971 = vmatpush1.msra.mxu0 0.0
    %4972 = vmatprep.subr.mxu0 0.0
    %4973 = vmatpush1.msra.mxu0 0.0
    %4974 = vmatprep.subr.mxu0 0.0
    %4975 = vmatpush1.msra.mxu0 0.0
    %4976 = vmatprep.subr.mxu0 0.0
    %4977 = vmatpush1.msra.mxu0 0.0
    %4978 = vmatprep.subr.mxu0 0.0
    %4979 = vmatpush1.msra.mxu0 0.0
    %4980 = vmatprep.subr.mxu0 0.0
    %4981 = vmatpush1.msra.mxu0 0.0
    %4982 = vmatprep.subr.mxu0 0.0
    %4983 = vmatpush1.msra.mxu0 0.0
    %4984 = vmatprep.mubr.f32.mxu0 0.0
    %4985 = vmatmul.mubr.f32.gmra.mrb[0].mxu0 %v4873
    %v4986 = vpop.f32.mrb[0].mxu0
    %v4987 = vadd.f32 0.0, %v4986
    %v4988 = vpop.f32.mrb[0].mxu0
    %4989 = vmatprep.mubr.f32.mxu0 0.0
    %4990 = vmatmul.mubr.f32.gmra.mrb[0].mxu0 %v4876
    %v4991 = vpop.f32.mrb[0].mxu0
    %v4992 = vadd.f32 0.0, %v4991
    %v4993 = vpop.f32.mrb[0].mxu0
    %4994 = vmatprep.mubr.f32.mxu0 0.0
    %4995 = vmatmul.mubr.f32.gmra.mrb[0].mxu0 %v4879
    %v4996 = vpop.f32.mrb[0].mxu0
    %v4997 = vadd.f32 0.0, %v4996
    %v4998 = vpop.f32.mrb[0].mxu0
    %4999 = vmatprep.mubr.f32.mxu0 0.0
    %5000 = vmatmul.mubr.f32.gmra.mrb[0].mxu0 %v4882
    %v5001 = vpop.f32.mrb[0].mxu0
    %v5002 = vadd.f32 0.0, %v5001
    %v5003 = vpop.f32.mrb[0].mxu0
    %5004 = vmatprep.mubr.f32.mxu0 0.0
    %5005 = vmatmul.mubr.f32.gmra.mrb[0].mxu0 %v4885
    %v5006 = vpop.f32.mrb[0].mxu0
    %v5007 = vadd.f32 0.0, %v5006
    %v5008 = vpop.f32.mrb[0].mxu0
    %5009 = vmatprep.mubr.f32.mxu0 0.0
    %5010 = vmatmul.mubr.f32.gmra.mrb[0].mxu0 %v4888
    %v5011 = vpop.f32.mrb[0].mxu0
    %v5012 = vadd.f32 0.0, %v5011
    %v5013 = vpop.f32.mrb[0].mxu0
    %5014 = vmatprep.mubr.f32.mxu0 0.0
    %5015 = vmatmul.mubr.f32.gmra.mrb[0].mxu0 %v4891
    %v5016 = vpop.f32.mrb[0].mxu0
    %v5017 = vadd.f32 0.0, %v5016
    %v5018 = vpop.f32.mrb[0].mxu0
    %5019 = vmatprep.mubr.f32.mxu0 0.0
    %5020 = vmatmul.mubr.f32.gmra.mrb[0].mxu0 %v4894
    %v5021 = vpop.f32.mrb[0].mxu0
    %v5022 = vadd.f32 0.0, %v5021
    %v5023 = vpop.f32.mrb[0].mxu0
    %5024 = vmatprep.mubr.f32.mxu0 0.0
    %5025 = vmatmul.mubr.f32.gmra.mrb[0].mxu0 %v4897
    %v5026 = vpop.f32.mrb[0].mxu0
    %v5027 = vadd.f32 0.0, %v5026
    %v5028 = vpop.f32.mrb[0].mxu0
    %5029 = vmatprep.mubr.f32.mxu0 0.0
    %5030 = vmatmul.mubr.f32.gmra.mrb[0].mxu0 %v4900
    %v5031 = vpop.f32.mrb[0].mxu0
    %v5032 = vadd.f32 0.0, %v5031
    %v5033 = vpop.f32.mrb[0].mxu0
    %5034 = vmatprep.mubr.f32.mxu0 0.0
    %5035 = vmatmul.mubr.f32.gmra.mrb[0].mxu0 %v4903
    %v5036 = vpop.f32.mrb[0].mxu0
    %v5037 = vadd.f32 0.0, %v5036
    %v5038 = vpop.f32.mrb[0].mxu0
    %5039 = vmatprep.mubr.f32.mxu0 0.0
    %5040 = vmatmul.mubr.f32.gmra.mrb[0].mxu0 %v4906
    %v5041 = vpop.f32.mrb[0].mxu0
    %v5042 = vadd.f32 0.0, %v5041
    %v5043 = vpop.f32.mrb[0].mxu0
    %5044 = vmatprep.mubr.f32.mxu0 0.0
    %5045 = vmatmul.mubr.f32.gmra.mrb[0].mxu0 %v4909
    %v5046 = vpop.f32.mrb[0].mxu0
    %v5047 = vadd.f32 0.0, %v5046
    %v5048 = vpop.f32.mrb[0].mxu0
    %5049 = vmatprep.mubr.f32.mxu0 0.0
    %5050 = vmatmul.mubr.f32.gmra.mrb[0].mxu0 %v4912
    %v5051 = vpop.f32.mrb[0].mxu0
    %v5052 = vadd.f32 0.0, %v5051
    %v5053 = vpop.f32.mrb[0].mxu0
    %5054 = vmatprep.mubr.f32.mxu0 0.0
    %5055 = vmatmul.mubr.f32.gmra.mrb[0].mxu0 %v4915
    %v5056 = vpop.f32.mrb[0].mxu0
    %v5057 = vadd.f32 0.0, %v5056
    %v5058 = vpop.f32.mrb[0].mxu0
    %5059 = vmatprep.mubr.f32.mxu0 0.0
    %5060 = vmatmul.mubr.f32.gmra.mrb[0].mxu0 %v4918
    %v5061 = vpop.f32.mrb[0].mxu0
    %v5062 = vadd.f32 0.0, %v5061
    %v5063 = vpop.f32.mrb[0].mxu0
    %5064 = vdwg.mxu0
    %v5065 = vadd.f32 %v4717, %v4987
    %v5066 = vadd.f32 %v4718, %v4992
    %v5067 = vadd.f32 %v4719, %v4997
    %v5068 = vadd.f32 %v4720, %v5002
    %v5069 = vadd.f32 %v4721, %v5007
    %v5070 = vadd.f32 %v4722, %v5012
    %v5071 = vadd.f32 %v4723, %v5017
    %v5072 = vadd.f32 %v4724, %v5022
    %v5073 = vadd.f32 %v4725, %v5027
    %v5074 = vadd.f32 %v4726, %v5032
    %v5075 = vadd.f32 %v4727, %v5037
    %v5076 = vadd.f32 %v4728, %v5042
    %v5077 = vadd.f32 %v4729, %v5047
    %v5078 = vadd.f32 %v4730, %v5052
    %v5079 = vadd.f32 %v4731, %v5057
    %v5080 = vadd.f32 %v4732, %v5062
    %s5081 = scalar_lea.vmem %s5, 1664
    %v5082 = vld [vmem:[%s5081] sm:$0xff]
    %v5083 = vld [vmem:[%s5081 + $0x8] sm:$0xff]
    %v5084 = vld [vmem:[%s5081 + $0x10] sm:$0xff]
    %v5085 = vld [vmem:[%s5081 + $0x18] sm:$0xff]
    %v5086 = vld [vmem:[%s5081 + $0x20] sm:$0xff]
    %v5087 = vld [vmem:[%s5081 + $0x28] sm:$0xff]
    %v5088 = vld [vmem:[%s5081 + $0x30] sm:$0xff]
    %v5089 = vld [vmem:[%s5081 + $0x38] sm:$0xff]
    %v5090 = vld [vmem:[%s5081 + $0x40] sm:$0xff]
    %v5091 = vld [vmem:[%s5081 + $0x48] sm:$0xff]
    %v5092 = vld [vmem:[%s5081 + $0x50] sm:$0xff]
    %v5093 = vld [vmem:[%s5081 + $0x58] sm:$0xff]
    %v5094 = vld [vmem:[%s5081 + $0x60] sm:$0xff]
    %v5095 = vld [vmem:[%s5081 + $0x68] sm:$0xff]
    %v5096 = vld [vmem:[%s5081 + $0x70] sm:$0xff]
    %v5097 = vld [vmem:[%s5081 + $0x78] sm:$0xff]
    %5098 = vmatprep.subr.mxu0 0.0
    %5099 = vmatpush1.msra.mxu0 %v5082
    %5100 = vmatprep.subr.mxu0 0.0
    %5101 = vmatpush1.msra.mxu0 %v5083
    %5102 = vmatprep.subr.mxu0 0.0
    %5103 = vmatpush1.msra.mxu0 %v5084
    %5104 = vmatprep.subr.mxu0 0.0
    %5105 = vmatpush1.msra.mxu0 %v5085
    %5106 = vmatprep.subr.mxu0 0.0
    %5107 = vmatpush1.msra.mxu0 %v5086
    %5108 = vmatprep.subr.mxu0 0.0
    %5109 = vmatpush1.msra.mxu0 %v5087
    %5110 = vmatprep.subr.mxu0 0.0
    %5111 = vmatpush1.msra.mxu0 %v5088
    %5112 = vmatprep.subr.mxu0 0.0
    %5113 = vmatpush1.msra.mxu0 %v5089
    %5114 = vmatprep.subr.mxu0 0.0
    %5115 = vmatpush1.msra.mxu0 %v5090
    %5116 = vmatprep.subr.mxu0 0.0
    %5117 = vmatpush1.msra.mxu0 %v5091
    %5118 = vmatprep.subr.mxu0 0.0
    %5119 = vmatpush1.msra.mxu0 %v5092
    %5120 = vmatprep.subr.mxu0 0.0
    %5121 = vmatpush1.msra.mxu0 %v5093
    %5122 = vmatprep.subr.mxu0 0.0
    %5123 = vmatpush1.msra.mxu0 %v5094
    %5124 = vmatprep.subr.mxu0 0.0
    %5125 = vmatpush1.msra.mxu0 %v5095
    %5126 = vmatprep.subr.mxu0 0.0
    %5127 = vmatpush1.msra.mxu0 %v5096
    %5128 = vmatprep.subr.mxu0 0.0
    %5129 = vmatpush1.msra.mxu0 %v5097
    %5130 = vmatprep.subr.mxu0 0.0
    %5131 = vmatpush1.msra.mxu0 0.0
    %5132 = vmatprep.subr.mxu0 0.0
    %5133 = vmatpush1.msra.mxu0 0.0
    %5134 = vmatprep.subr.mxu0 0.0
    %5135 = vmatpush1.msra.mxu0 0.0
    %5136 = vmatprep.subr.mxu0 0.0
    %5137 = vmatpush1.msra.mxu0 0.0
    %5138 = vmatprep.subr.mxu0 0.0
    %5139 = vmatpush1.msra.mxu0 0.0
    %5140 = vmatprep.subr.mxu0 0.0
    %5141 = vmatpush1.msra.mxu0 0.0
    %5142 = vmatprep.subr.mxu0 0.0
    %5143 = vmatpush1.msra.mxu0 0.0
    %5144 = vmatprep.subr.mxu0 0.0
    %5145 = vmatpush1.msra.mxu0 0.0
    %5146 = vmatprep.subr.mxu0 0.0
    %5147 = vmatpush1.msra.mxu0 0.0
    %5148 = vmatprep.subr.mxu0 0.0
    %5149 = vmatpush1.msra.mxu0 0.0
    %5150 = vmatprep.subr.mxu0 0.0
    %5151 = vmatpush1.msra.mxu0 0.0
    %5152 = vmatprep.subr.mxu0 0.0
    %5153 = vmatpush1.msra.mxu0 0.0
    %5154 = vmatprep.subr.mxu0 0.0
    %5155 = vmatpush1.msra.mxu0 0.0
    %5156 = vmatprep.subr.mxu0 0.0
    %5157 = vmatpush1.msra.mxu0 0.0
    %5158 = vmatprep.subr.mxu0 0.0
    %5159 = vmatpush1.msra.mxu0 0.0
    %5160 = vmatprep.subr.mxu0 0.0
    %5161 = vmatpush1.msra.mxu0 0.0
    %5162 = vmatprep.mubr.f32.mxu0 0.0
    %5163 = vmatmul.mubr.f32.gmra.mrb[0].mxu0 %v582
    %v5164 = vpop.f32.mrb[0].mxu0
    %v5165 = vadd.f32 0.0, %v5164
    %v5166 = vpop.f32.mrb[0].mxu0
    %5167 = vmatprep.mubr.f32.mxu0 0.0
    %5168 = vmatmul.mubr.f32.gmra.mrb[0].mxu0 %v583
    %v5169 = vpop.f32.mrb[0].mxu0
    %v5170 = vadd.f32 0.0, %v5169
    %v5171 = vpop.f32.mrb[0].mxu0
    %5172 = vmatprep.mubr.f32.mxu0 0.0
    %5173 = vmatmul.mubr.f32.gmra.mrb[0].mxu0 %v584
    %v5174 = vpop.f32.mrb[0].mxu0
    %v5175 = vadd.f32 0.0, %v5174
    %v5176 = vpop.f32.mrb[0].mxu0
    %5177 = vmatprep.mubr.f32.mxu0 0.0
    %5178 = vmatmul.mubr.f32.gmra.mrb[0].mxu0 %v585
    %v5179 = vpop.f32.mrb[0].mxu0
    %v5180 = vadd.f32 0.0, %v5179
    %v5181 = vpop.f32.mrb[0].mxu0
    %5182 = vmatprep.mubr.f32.mxu0 0.0
    %5183 = vmatmul.mubr.f32.gmra.mrb[0].mxu0 %v586
    %v5184 = vpop.f32.mrb[0].mxu0
    %v5185 = vadd.f32 0.0, %v5184
    %v5186 = vpop.f32.mrb[0].mxu0
    %5187 = vmatprep.mubr.f32.mxu0 0.0
    %5188 = vmatmul.mubr.f32.gmra.mrb[0].mxu0 %v587
    %v5189 = vpop.f32.mrb[0].mxu0
    %v5190 = vadd.f32 0.0, %v5189
    %v5191 = vpop.f32.mrb[0].mxu0
    %5192 = vmatprep.mubr.f32.mxu0 0.0
    %5193 = vmatmul.mubr.f32.gmra.mrb[0].mxu0 %v588
    %v5194 = vpop.f32.mrb[0].mxu0
    %v5195 = vadd.f32 0.0, %v5194
    %v5196 = vpop.f32.mrb[0].mxu0
    %5197 = vmatprep.mubr.f32.mxu0 0.0
    %5198 = vmatmul.mubr.f32.gmra.mrb[0].mxu0 %v589
    %v5199 = vpop.f32.mrb[0].mxu0
    %v5200 = vadd.f32 0.0, %v5199
    %v5201 = vpop.f32.mrb[0].mxu0
    %5202 = vdwg.mxu0
    %s5203 = scalar_lea.vmem %s4, 1664
    %v5204 = vld [vmem:[%s5203] sm:$0xff]
    %v5205 = vld [vmem:[%s5203 + $0x8] sm:$0xff]
    %v5206 = vld [vmem:[%s5203 + $0x10] sm:$0xff]
    %v5207 = vld [vmem:[%s5203 + $0x18] sm:$0xff]
    %v5208 = vld [vmem:[%s5203 + $0x20] sm:$0xff]
    %v5209 = vld [vmem:[%s5203 + $0x28] sm:$0xff]
    %v5210 = vld [vmem:[%s5203 + $0x30] sm:$0xff]
    %v5211 = vld [vmem:[%s5203 + $0x38] sm:$0xff]
    %v5212 = vld [vmem:[%s5203 + $0x40] sm:$0xff]
    %v5213 = vld [vmem:[%s5203 + $0x48] sm:$0xff]
    %v5214 = vld [vmem:[%s5203 + $0x50] sm:$0xff]
    %v5215 = vld [vmem:[%s5203 + $0x58] sm:$0xff]
    %v5216 = vld [vmem:[%s5203 + $0x60] sm:$0xff]
    %v5217 = vld [vmem:[%s5203 + $0x68] sm:$0xff]
    %v5218 = vld [vmem:[%s5203 + $0x70] sm:$0xff]
    %v5219 = vld [vmem:[%s5203 + $0x78] sm:$0xff]
    %v5221 = vsel %vm866, %v5204, 0
    %v5224 = vsel %vm866, %v5205, 0
    %v5227 = vsel %vm866, %v5206, 0
    %v5230 = vsel %vm866, %v5207, 0
    %v5233 = vsel %vm866, %v5208, 0
    %v5236 = vsel %vm866, %v5209, 0
    %v5239 = vsel %vm866, %v5210, 0
    %v5242 = vsel %vm866, %v5211, 0
    %v5245 = vsel %vm866, %v5212, 0
    %v5248 = vsel %vm866, %v5213, 0
    %v5251 = vsel %vm866, %v5214, 0
    %v5254 = vsel %vm866, %v5215, 0
    %v5257 = vsel %vm866, %v5216, 0
    %v5260 = vsel %vm866, %v5217, 0
    %v5263 = vsel %vm866, %v5218, 0
    %v5266 = vsel %vm866, %v5219, 0
    %5268 = vmatprep.subr.mxu0 0.0
    %5269 = vmatpush1.msra.mxu0 %v5165
    %5270 = vmatprep.subr.mxu0 0.0
    %5271 = vmatpush1.msra.mxu0 %v5170
    %5272 = vmatprep.subr.mxu0 0.0
    %5273 = vmatpush1.msra.mxu0 %v5175
    %5274 = vmatprep.subr.mxu0 0.0
    %5275 = vmatpush1.msra.mxu0 %v5180
    %5276 = vmatprep.subr.mxu0 0.0
    %5277 = vmatpush1.msra.mxu0 %v5185
    %5278 = vmatprep.subr.mxu0 0.0
    %5279 = vmatpush1.msra.mxu0 %v5190
    %5280 = vmatprep.subr.mxu0 0.0
    %5281 = vmatpush1.msra.mxu0 %v5195
    %5282 = vmatprep.subr.mxu0 0.0
    %5283 = vmatpush1.msra.mxu0 %v5200
    %5284 = vmatprep.subr.mxu0 0.0
    %5285 = vmatpush1.msra.mxu0 0.0
    %5286 = vmatprep.subr.mxu0 0.0
    %5287 = vmatpush1.msra.mxu0 0.0
    %5288 = vmatprep.subr.mxu0 0.0
    %5289 = vmatpush1.msra.mxu0 0.0
    %5290 = vmatprep.subr.mxu0 0.0
    %5291 = vmatpush1.msra.mxu0 0.0
    %5292 = vmatprep.subr.mxu0 0.0
    %5293 = vmatpush1.msra.mxu0 0.0
    %5294 = vmatprep.subr.mxu0 0.0
    %5295 = vmatpush1.msra.mxu0 0.0
    %5296 = vmatprep.subr.mxu0 0.0
    %5297 = vmatpush1.msra.mxu0 0.0
    %5298 = vmatprep.subr.mxu0 0.0
    %5299 = vmatpush1.msra.mxu0 0.0
    %5300 = vmatprep.subr.mxu0 0.0
    %5301 = vmatpush1.msra.mxu0 0.0
    %5302 = vmatprep.subr.mxu0 0.0
    %5303 = vmatpush1.msra.mxu0 0.0
    %5304 = vmatprep.subr.mxu0 0.0
    %5305 = vmatpush1.msra.mxu0 0.0
    %5306 = vmatprep.subr.mxu0 0.0
    %5307 = vmatpush1.msra.mxu0 0.0
    %5308 = vmatprep.subr.mxu0 0.0
    %5309 = vmatpush1.msra.mxu0 0.0
    %5310 = vmatprep.subr.mxu0 0.0
    %5311 = vmatpush1.msra.mxu0 0.0
    %5312 = vmatprep.subr.mxu0 0.0
    %5313 = vmatpush1.msra.mxu0 0.0
    %5314 = vmatprep.subr.mxu0 0.0
    %5315 = vmatpush1.msra.mxu0 0.0
    %5316 = vmatprep.subr.mxu0 0.0
    %5317 = vmatpush1.msra.mxu0 0.0
    %5318 = vmatprep.subr.mxu0 0.0
    %5319 = vmatpush1.msra.mxu0 0.0
    %5320 = vmatprep.subr.mxu0 0.0
    %5321 = vmatpush1.msra.mxu0 0.0
    %5322 = vmatprep.subr.mxu0 0.0
    %5323 = vmatpush1.msra.mxu0 0.0
    %5324 = vmatprep.subr.mxu0 0.0
    %5325 = vmatpush1.msra.mxu0 0.0
    %5326 = vmatprep.subr.mxu0 0.0
    %5327 = vmatpush1.msra.mxu0 0.0
    %5328 = vmatprep.subr.mxu0 0.0
    %5329 = vmatpush1.msra.mxu0 0.0
    %5330 = vmatprep.subr.mxu0 0.0
    %5331 = vmatpush1.msra.mxu0 0.0
    %5332 = vmatprep.mubr.f32.mxu0 0.0
    %5333 = vmatmul.mubr.f32.gmra.mrb[0].mxu0 %v5221
    %v5334 = vpop.f32.mrb[0].mxu0
    %v5335 = vadd.f32 0.0, %v5334
    %v5336 = vpop.f32.mrb[0].mxu0
    %5337 = vmatprep.mubr.f32.mxu0 0.0
    %5338 = vmatmul.mubr.f32.gmra.mrb[0].mxu0 %v5224
    %v5339 = vpop.f32.mrb[0].mxu0
    %v5340 = vadd.f32 0.0, %v5339
    %v5341 = vpop.f32.mrb[0].mxu0
    %5342 = vmatprep.mubr.f32.mxu0 0.0
    %5343 = vmatmul.mubr.f32.gmra.mrb[0].mxu0 %v5227
    %v5344 = vpop.f32.mrb[0].mxu0
    %v5345 = vadd.f32 0.0, %v5344
    %v5346 = vpop.f32.mrb[0].mxu0
    %5347 = vmatprep.mubr.f32.mxu0 0.0
    %5348 = vmatmul.mubr.f32.gmra.mrb[0].mxu0 %v5230
    %v5349 = vpop.f32.mrb[0].mxu0
    %v5350 = vadd.f32 0.0, %v5349
    %v5351 = vpop.f32.mrb[0].mxu0
    %5352 = vmatprep.mubr.f32.mxu0 0.0
    %5353 = vmatmul.mubr.f32.gmra.mrb[0].mxu0 %v5233
    %v5354 = vpop.f32.mrb[0].mxu0
    %v5355 = vadd.f32 0.0, %v5354
    %v5356 = vpop.f32.mrb[0].mxu0
    %5357 = vmatprep.mubr.f32.mxu0 0.0
    %5358 = vmatmul.mubr.f32.gmra.mrb[0].mxu0 %v5236
    %v5359 = vpop.f32.mrb[0].mxu0
    %v5360 = vadd.f32 0.0, %v5359
    %v5361 = vpop.f32.mrb[0].mxu0
    %5362 = vmatprep.mubr.f32.mxu0 0.0
    %5363 = vmatmul.mubr.f32.gmra.mrb[0].mxu0 %v5239
    %v5364 = vpop.f32.mrb[0].mxu0
    %v5365 = vadd.f32 0.0, %v5364
    %v5366 = vpop.f32.mrb[0].mxu0
    %5367 = vmatprep.mubr.f32.mxu0 0.0
    %5368 = vmatmul.mubr.f32.gmra.mrb[0].mxu0 %v5242
    %v5369 = vpop.f32.mrb[0].mxu0
    %v5370 = vadd.f32 0.0, %v5369
    %v5371 = vpop.f32.mrb[0].mxu0
    %5372 = vmatprep.mubr.f32.mxu0 0.0
    %5373 = vmatmul.mubr.f32.gmra.mrb[0].mxu0 %v5245
    %v5374 = vpop.f32.mrb[0].mxu0
    %v5375 = vadd.f32 0.0, %v5374
    %v5376 = vpop.f32.mrb[0].mxu0
    %5377 = vmatprep.mubr.f32.mxu0 0.0
    %5378 = vmatmul.mubr.f32.gmra.mrb[0].mxu0 %v5248
    %v5379 = vpop.f32.mrb[0].mxu0
    %v5380 = vadd.f32 0.0, %v5379
    %v5381 = vpop.f32.mrb[0].mxu0
    %5382 = vmatprep.mubr.f32.mxu0 0.0
    %5383 = vmatmul.mubr.f32.gmra.mrb[0].mxu0 %v5251
    %v5384 = vpop.f32.mrb[0].mxu0
    %v5385 = vadd.f32 0.0, %v5384
    %v5386 = vpop.f32.mrb[0].mxu0
    %5387 = vmatprep.mubr.f32.mxu0 0.0
    %5388 = vmatmul.mubr.f32.gmra.mrb[0].mxu0 %v5254
    %v5389 = vpop.f32.mrb[0].mxu0
    %v5390 = vadd.f32 0.0, %v5389
    %v5391 = vpop.f32.mrb[0].mxu0
    %5392 = vmatprep.mubr.f32.mxu0 0.0
    %5393 = vmatmul.mubr.f32.gmra.mrb[0].mxu0 %v5257
    %v5394 = vpop.f32.mrb[0].mxu0
    %v5395 = vadd.f32 0.0, %v5394
    %v5396 = vpop.f32.mrb[0].mxu0
    %5397 = vmatprep.mubr.f32.mxu0 0.0
    %5398 = vmatmul.mubr.f32.gmra.mrb[0].mxu0 %v5260
    %v5399 = vpop.f32.mrb[0].mxu0
    %v5400 = vadd.f32 0.0, %v5399
    %v5401 = vpop.f32.mrb[0].mxu0
    %5402 = vmatprep.mubr.f32.mxu0 0.0
    %5403 = vmatmul.mubr.f32.gmra.mrb[0].mxu0 %v5263
    %v5404 = vpop.f32.mrb[0].mxu0
    %v5405 = vadd.f32 0.0, %v5404
    %v5406 = vpop.f32.mrb[0].mxu0
    %5407 = vmatprep.mubr.f32.mxu0 0.0
    %5408 = vmatmul.mubr.f32.gmra.mrb[0].mxu0 %v5266
    %v5409 = vpop.f32.mrb[0].mxu0
    %v5410 = vadd.f32 0.0, %v5409
    %v5411 = vpop.f32.mrb[0].mxu0
    %5412 = vdwg.mxu0
    %v5413 = vadd.f32 %v5065, %v5335
    %v5414 = vadd.f32 %v5066, %v5340
    %v5415 = vadd.f32 %v5067, %v5345
    %v5416 = vadd.f32 %v5068, %v5350
    %v5417 = vadd.f32 %v5069, %v5355
    %v5418 = vadd.f32 %v5070, %v5360
    %v5419 = vadd.f32 %v5071, %v5365
    %v5420 = vadd.f32 %v5072, %v5370
    %v5421 = vadd.f32 %v5073, %v5375
    %v5422 = vadd.f32 %v5074, %v5380
    %v5423 = vadd.f32 %v5075, %v5385
    %v5424 = vadd.f32 %v5076, %v5390
    %v5425 = vadd.f32 %v5077, %v5395
    %v5426 = vadd.f32 %v5078, %v5400
    %v5427 = vadd.f32 %v5079, %v5405
    %v5428 = vadd.f32 %v5080, %v5410
    %s5429 = scalar_lea.vmem %s5, 1792
    %v5430 = vld [vmem:[%s5429] sm:$0xff]
    %v5431 = vld [vmem:[%s5429 + $0x8] sm:$0xff]
    %v5432 = vld [vmem:[%s5429 + $0x10] sm:$0xff]
    %v5433 = vld [vmem:[%s5429 + $0x18] sm:$0xff]
    %v5434 = vld [vmem:[%s5429 + $0x20] sm:$0xff]
    %v5435 = vld [vmem:[%s5429 + $0x28] sm:$0xff]
    %v5436 = vld [vmem:[%s5429 + $0x30] sm:$0xff]
    %v5437 = vld [vmem:[%s5429 + $0x38] sm:$0xff]
    %v5438 = vld [vmem:[%s5429 + $0x40] sm:$0xff]
    %v5439 = vld [vmem:[%s5429 + $0x48] sm:$0xff]
    %v5440 = vld [vmem:[%s5429 + $0x50] sm:$0xff]
    %v5441 = vld [vmem:[%s5429 + $0x58] sm:$0xff]
    %v5442 = vld [vmem:[%s5429 + $0x60] sm:$0xff]
    %v5443 = vld [vmem:[%s5429 + $0x68] sm:$0xff]
    %v5444 = vld [vmem:[%s5429 + $0x70] sm:$0xff]
    %v5445 = vld [vmem:[%s5429 + $0x78] sm:$0xff]
    %5446 = vmatprep.subr.mxu0 0.0
    %5447 = vmatpush1.msra.mxu0 %v5430
    %5448 = vmatprep.subr.mxu0 0.0
    %5449 = vmatpush1.msra.mxu0 %v5431
    %5450 = vmatprep.subr.mxu0 0.0
    %5451 = vmatpush1.msra.mxu0 %v5432
    %5452 = vmatprep.subr.mxu0 0.0
    %5453 = vmatpush1.msra.mxu0 %v5433
    %5454 = vmatprep.subr.mxu0 0.0
    %5455 = vmatpush1.msra.mxu0 %v5434
    %5456 = vmatprep.subr.mxu0 0.0
    %5457 = vmatpush1.msra.mxu0 %v5435
    %5458 = vmatprep.subr.mxu0 0.0
    %5459 = vmatpush1.msra.mxu0 %v5436
    %5460 = vmatprep.subr.mxu0 0.0
    %5461 = vmatpush1.msra.mxu0 %v5437
    %5462 = vmatprep.subr.mxu0 0.0
    %5463 = vmatpush1.msra.mxu0 %v5438
    %5464 = vmatprep.subr.mxu0 0.0
    %5465 = vmatpush1.msra.mxu0 %v5439
    %5466 = vmatprep.subr.mxu0 0.0
    %5467 = vmatpush1.msra.mxu0 %v5440
    %5468 = vmatprep.subr.mxu0 0.0
    %5469 = vmatpush1.msra.mxu0 %v5441
    %5470 = vmatprep.subr.mxu0 0.0
    %5471 = vmatpush1.msra.mxu0 %v5442
    %5472 = vmatprep.subr.mxu0 0.0
    %5473 = vmatpush1.msra.mxu0 %v5443
    %5474 = vmatprep.subr.mxu0 0.0
    %5475 = vmatpush1.msra.mxu0 %v5444
    %5476 = vmatprep.subr.mxu0 0.0
    %5477 = vmatpush1.msra.mxu0 %v5445
    %5478 = vmatprep.subr.mxu0 0.0
    %5479 = vmatpush1.msra.mxu0 0.0
    %5480 = vmatprep.subr.mxu0 0.0
    %5481 = vmatpush1.msra.mxu0 0.0
    %5482 = vmatprep.subr.mxu0 0.0
    %5483 = vmatpush1.msra.mxu0 0.0
    %5484 = vmatprep.subr.mxu0 0.0
    %5485 = vmatpush1.msra.mxu0 0.0
    %5486 = vmatprep.subr.mxu0 0.0
    %5487 = vmatpush1.msra.mxu0 0.0
    %5488 = vmatprep.subr.mxu0 0.0
    %5489 = vmatpush1.msra.mxu0 0.0
    %5490 = vmatprep.subr.mxu0 0.0
    %5491 = vmatpush1.msra.mxu0 0.0
    %5492 = vmatprep.subr.mxu0 0.0
    %5493 = vmatpush1.msra.mxu0 0.0
    %5494 = vmatprep.subr.mxu0 0.0
    %5495 = vmatpush1.msra.mxu0 0.0
    %5496 = vmatprep.subr.mxu0 0.0
    %5497 = vmatpush1.msra.mxu0 0.0
    %5498 = vmatprep.subr.mxu0 0.0
    %5499 = vmatpush1.msra.mxu0 0.0
    %5500 = vmatprep.subr.mxu0 0.0
    %5501 = vmatpush1.msra.mxu0 0.0
    %5502 = vmatprep.subr.mxu0 0.0
    %5503 = vmatpush1.msra.mxu0 0.0
    %5504 = vmatprep.subr.mxu0 0.0
    %5505 = vmatpush1.msra.mxu0 0.0
    %5506 = vmatprep.subr.mxu0 0.0
    %5507 = vmatpush1.msra.mxu0 0.0
    %5508 = vmatprep.subr.mxu0 0.0
    %5509 = vmatpush1.msra.mxu0 0.0
    %5510 = vmatprep.mubr.f32.mxu0 0.0
    %5511 = vmatmul.mubr.f32.gmra.mrb[0].mxu0 %v582
    %v5512 = vpop.f32.mrb[0].mxu0
    %v5513 = vadd.f32 0.0, %v5512
    %v5514 = vpop.f32.mrb[0].mxu0
    %5515 = vmatprep.mubr.f32.mxu0 0.0
    %5516 = vmatmul.mubr.f32.gmra.mrb[0].mxu0 %v583
    %v5517 = vpop.f32.mrb[0].mxu0
    %v5518 = vadd.f32 0.0, %v5517
    %v5519 = vpop.f32.mrb[0].mxu0
    %5520 = vmatprep.mubr.f32.mxu0 0.0
    %5521 = vmatmul.mubr.f32.gmra.mrb[0].mxu0 %v584
    %v5522 = vpop.f32.mrb[0].mxu0
    %v5523 = vadd.f32 0.0, %v5522
    %v5524 = vpop.f32.mrb[0].mxu0
    %5525 = vmatprep.mubr.f32.mxu0 0.0
    %5526 = vmatmul.mubr.f32.gmra.mrb[0].mxu0 %v585
    %v5527 = vpop.f32.mrb[0].mxu0
    %v5528 = vadd.f32 0.0, %v5527
    %v5529 = vpop.f32.mrb[0].mxu0
    %5530 = vmatprep.mubr.f32.mxu0 0.0
    %5531 = vmatmul.mubr.f32.gmra.mrb[0].mxu0 %v586
    %v5532 = vpop.f32.mrb[0].mxu0
    %v5533 = vadd.f32 0.0, %v5532
    %v5534 = vpop.f32.mrb[0].mxu0
    %5535 = vmatprep.mubr.f32.mxu0 0.0
    %5536 = vmatmul.mubr.f32.gmra.mrb[0].mxu0 %v587
    %v5537 = vpop.f32.mrb[0].mxu0
    %v5538 = vadd.f32 0.0, %v5537
    %v5539 = vpop.f32.mrb[0].mxu0
    %5540 = vmatprep.mubr.f32.mxu0 0.0
    %5541 = vmatmul.mubr.f32.gmra.mrb[0].mxu0 %v588
    %v5542 = vpop.f32.mrb[0].mxu0
    %v5543 = vadd.f32 0.0, %v5542
    %v5544 = vpop.f32.mrb[0].mxu0
    %5545 = vmatprep.mubr.f32.mxu0 0.0
    %5546 = vmatmul.mubr.f32.gmra.mrb[0].mxu0 %v589
    %v5547 = vpop.f32.mrb[0].mxu0
    %v5548 = vadd.f32 0.0, %v5547
    %v5549 = vpop.f32.mrb[0].mxu0
    %5550 = vdwg.mxu0
    %s5551 = scalar_lea.vmem %s4, 1792
    %v5552 = vld [vmem:[%s5551] sm:$0xff]
    %v5553 = vld [vmem:[%s5551 + $0x8] sm:$0xff]
    %v5554 = vld [vmem:[%s5551 + $0x10] sm:$0xff]
    %v5555 = vld [vmem:[%s5551 + $0x18] sm:$0xff]
    %v5556 = vld [vmem:[%s5551 + $0x20] sm:$0xff]
    %v5557 = vld [vmem:[%s5551 + $0x28] sm:$0xff]
    %v5558 = vld [vmem:[%s5551 + $0x30] sm:$0xff]
    %v5559 = vld [vmem:[%s5551 + $0x38] sm:$0xff]
    %v5560 = vld [vmem:[%s5551 + $0x40] sm:$0xff]
    %v5561 = vld [vmem:[%s5551 + $0x48] sm:$0xff]
    %v5562 = vld [vmem:[%s5551 + $0x50] sm:$0xff]
    %v5563 = vld [vmem:[%s5551 + $0x58] sm:$0xff]
    %v5564 = vld [vmem:[%s5551 + $0x60] sm:$0xff]
    %v5565 = vld [vmem:[%s5551 + $0x68] sm:$0xff]
    %v5566 = vld [vmem:[%s5551 + $0x70] sm:$0xff]
    %v5567 = vld [vmem:[%s5551 + $0x78] sm:$0xff]
    %v5569 = vsel %vm866, %v5552, 0
    %v5572 = vsel %vm866, %v5553, 0
    %v5575 = vsel %vm866, %v5554, 0
    %v5578 = vsel %vm866, %v5555, 0
    %v5581 = vsel %vm866, %v5556, 0
    %v5584 = vsel %vm866, %v5557, 0
    %v5587 = vsel %vm866, %v5558, 0
    %v5590 = vsel %vm866, %v5559, 0
    %v5593 = vsel %vm866, %v5560, 0
    %v5596 = vsel %vm866, %v5561, 0
    %v5599 = vsel %vm866, %v5562, 0
    %v5602 = vsel %vm866, %v5563, 0
    %v5605 = vsel %vm866, %v5564, 0
    %v5608 = vsel %vm866, %v5565, 0
    %v5611 = vsel %vm866, %v5566, 0
    %v5614 = vsel %vm866, %v5567, 0
    %5616 = vmatprep.subr.mxu0 0.0
    %5617 = vmatpush1.msra.mxu0 %v5513
    %5618 = vmatprep.subr.mxu0 0.0
    %5619 = vmatpush1.msra.mxu0 %v5518
    %5620 = vmatprep.subr.mxu0 0.0
    %5621 = vmatpush1.msra.mxu0 %v5523
    %5622 = vmatprep.subr.mxu0 0.0
    %5623 = vmatpush1.msra.mxu0 %v5528
    %5624 = vmatprep.subr.mxu0 0.0
    %5625 = vmatpush1.msra.mxu0 %v5533
    %5626 = vmatprep.subr.mxu0 0.0
    %5627 = vmatpush1.msra.mxu0 %v5538
    %5628 = vmatprep.subr.mxu0 0.0
    %5629 = vmatpush1.msra.mxu0 %v5543
    %5630 = vmatprep.subr.mxu0 0.0
    %5631 = vmatpush1.msra.mxu0 %v5548
    %5632 = vmatprep.subr.mxu0 0.0
    %5633 = vmatpush1.msra.mxu0 0.0
    %5634 = vmatprep.subr.mxu0 0.0
    %5635 = vmatpush1.msra.mxu0 0.0
    %5636 = vmatprep.subr.mxu0 0.0
    %5637 = vmatpush1.msra.mxu0 0.0
    %5638 = vmatprep.subr.mxu0 0.0
    %5639 = vmatpush1.msra.mxu0 0.0
    %5640 = vmatprep.subr.mxu0 0.0
    %5641 = vmatpush1.msra.mxu0 0.0
    %5642 = vmatprep.subr.mxu0 0.0
    %5643 = vmatpush1.msra.mxu0 0.0
    %5644 = vmatprep.subr.mxu0 0.0
    %5645 = vmatpush1.msra.mxu0 0.0
    %5646 = vmatprep.subr.mxu0 0.0
    %5647 = vmatpush1.msra.mxu0 0.0
    %5648 = vmatprep.subr.mxu0 0.0
    %5649 = vmatpush1.msra.mxu0 0.0
    %5650 = vmatprep.subr.mxu0 0.0
    %5651 = vmatpush1.msra.mxu0 0.0
    %5652 = vmatprep.subr.mxu0 0.0
    %5653 = vmatpush1.msra.mxu0 0.0
    %5654 = vmatprep.subr.mxu0 0.0
    %5655 = vmatpush1.msra.mxu0 0.0
    %5656 = vmatprep.subr.mxu0 0.0
    %5657 = vmatpush1.msra.mxu0 0.0
    %5658 = vmatprep.subr.mxu0 0.0
    %5659 = vmatpush1.msra.mxu0 0.0
    %5660 = vmatprep.subr.mxu0 0.0
    %5661 = vmatpush1.msra.mxu0 0.0
    %5662 = vmatprep.subr.mxu0 0.0
    %5663 = vmatpush1.msra.mxu0 0.0
    %5664 = vmatprep.subr.mxu0 0.0
    %5665 = vmatpush1.msra.mxu0 0.0
    %5666 = vmatprep.subr.mxu0 0.0
    %5667 = vmatpush1.msra.mxu0 0.0
    %5668 = vmatprep.subr.mxu0 0.0
    %5669 = vmatpush1.msra.mxu0 0.0
    %5670 = vmatprep.subr.mxu0 0.0
    %5671 = vmatpush1.msra.mxu0 0.0
    %5672 = vmatprep.subr.mxu0 0.0
    %5673 = vmatpush1.msra.mxu0 0.0
    %5674 = vmatprep.subr.mxu0 0.0
    %5675 = vmatpush1.msra.mxu0 0.0
    %5676 = vmatprep.subr.mxu0 0.0
    %5677 = vmatpush1.msra.mxu0 0.0
    %5678 = vmatprep.subr.mxu0 0.0
    %5679 = vmatpush1.msra.mxu0 0.0
    %5680 = vmatprep.mubr.f32.mxu0 0.0
    %5681 = vmatmul.mubr.f32.gmra.mrb[0].mxu0 %v5569
    %v5682 = vpop.f32.mrb[0].mxu0
    %v5683 = vadd.f32 0.0, %v5682
    %v5684 = vpop.f32.mrb[0].mxu0
    %5685 = vmatprep.mubr.f32.mxu0 0.0
    %5686 = vmatmul.mubr.f32.gmra.mrb[0].mxu0 %v5572
    %v5687 = vpop.f32.mrb[0].mxu0
    %v5688 = vadd.f32 0.0, %v5687
    %v5689 = vpop.f32.mrb[0].mxu0
    %5690 = vmatprep.mubr.f32.mxu0 0.0
    %5691 = vmatmul.mubr.f32.gmra.mrb[0].mxu0 %v5575
    %v5692 = vpop.f32.mrb[0].mxu0
    %v5693 = vadd.f32 0.0, %v5692
    %v5694 = vpop.f32.mrb[0].mxu0
    %5695 = vmatprep.mubr.f32.mxu0 0.0
    %5696 = vmatmul.mubr.f32.gmra.mrb[0].mxu0 %v5578
    %v5697 = vpop.f32.mrb[0].mxu0
    %v5698 = vadd.f32 0.0, %v5697
    %v5699 = vpop.f32.mrb[0].mxu0
    %5700 = vmatprep.mubr.f32.mxu0 0.0
    %5701 = vmatmul.mubr.f32.gmra.mrb[0].mxu0 %v5581
    %v5702 = vpop.f32.mrb[0].mxu0
    %v5703 = vadd.f32 0.0, %v5702
    %v5704 = vpop.f32.mrb[0].mxu0
    %5705 = vmatprep.mubr.f32.mxu0 0.0
    %5706 = vmatmul.mubr.f32.gmra.mrb[0].mxu0 %v5584
    %v5707 = vpop.f32.mrb[0].mxu0
    %v5708 = vadd.f32 0.0, %v5707
    %v5709 = vpop.f32.mrb[0].mxu0
    %5710 = vmatprep.mubr.f32.mxu0 0.0
    %5711 = vmatmul.mubr.f32.gmra.mrb[0].mxu0 %v5587
    %v5712 = vpop.f32.mrb[0].mxu0
    %v5713 = vadd.f32 0.0, %v5712
    %v5714 = vpop.f32.mrb[0].mxu0
    %5715 = vmatprep.mubr.f32.mxu0 0.0
    %5716 = vmatmul.mubr.f32.gmra.mrb[0].mxu0 %v5590
    %v5717 = vpop.f32.mrb[0].mxu0
    %v5718 = vadd.f32 0.0, %v5717
    %v5719 = vpop.f32.mrb[0].mxu0
    %5720 = vmatprep.mubr.f32.mxu0 0.0
    %5721 = vmatmul.mubr.f32.gmra.mrb[0].mxu0 %v5593
    %v5722 = vpop.f32.mrb[0].mxu0
    %v5723 = vadd.f32 0.0, %v5722
    %v5724 = vpop.f32.mrb[0].mxu0
    %5725 = vmatprep.mubr.f32.mxu0 0.0
    %5726 = vmatmul.mubr.f32.gmra.mrb[0].mxu0 %v5596
    %v5727 = vpop.f32.mrb[0].mxu0
    %v5728 = vadd.f32 0.0, %v5727
    %v5729 = vpop.f32.mrb[0].mxu0
    %5730 = vmatprep.mubr.f32.mxu0 0.0
    %5731 = vmatmul.mubr.f32.gmra.mrb[0].mxu0 %v5599
    %v5732 = vpop.f32.mrb[0].mxu0
    %v5733 = vadd.f32 0.0, %v5732
    %v5734 = vpop.f32.mrb[0].mxu0
    %5735 = vmatprep.mubr.f32.mxu0 0.0
    %5736 = vmatmul.mubr.f32.gmra.mrb[0].mxu0 %v5602
    %v5737 = vpop.f32.mrb[0].mxu0
    %v5738 = vadd.f32 0.0, %v5737
    %v5739 = vpop.f32.mrb[0].mxu0
    %5740 = vmatprep.mubr.f32.mxu0 0.0
    %5741 = vmatmul.mubr.f32.gmra.mrb[0].mxu0 %v5605
    %v5742 = vpop.f32.mrb[0].mxu0
    %v5743 = vadd.f32 0.0, %v5742
    %v5744 = vpop.f32.mrb[0].mxu0
    %5745 = vmatprep.mubr.f32.mxu0 0.0
    %5746 = vmatmul.mubr.f32.gmra.mrb[0].mxu0 %v5608
    %v5747 = vpop.f32.mrb[0].mxu0
    %v5748 = vadd.f32 0.0, %v5747
    %v5749 = vpop.f32.mrb[0].mxu0
    %5750 = vmatprep.mubr.f32.mxu0 0.0
    %5751 = vmatmul.mubr.f32.gmra.mrb[0].mxu0 %v5611
    %v5752 = vpop.f32.mrb[0].mxu0
    %v5753 = vadd.f32 0.0, %v5752
    %v5754 = vpop.f32.mrb[0].mxu0
    %5755 = vmatprep.mubr.f32.mxu0 0.0
    %5756 = vmatmul.mubr.f32.gmra.mrb[0].mxu0 %v5614
    %v5757 = vpop.f32.mrb[0].mxu0
    %v5758 = vadd.f32 0.0, %v5757
    %v5759 = vpop.f32.mrb[0].mxu0
    %5760 = vdwg.mxu0
    %v5761 = vadd.f32 %v5413, %v5683
    %v5762 = vadd.f32 %v5414, %v5688
    %v5763 = vadd.f32 %v5415, %v5693
    %v5764 = vadd.f32 %v5416, %v5698
    %v5765 = vadd.f32 %v5417, %v5703
    %v5766 = vadd.f32 %v5418, %v5708
    %v5767 = vadd.f32 %v5419, %v5713
    %v5768 = vadd.f32 %v5420, %v5718
    %v5769 = vadd.f32 %v5421, %v5723
    %v5770 = vadd.f32 %v5422, %v5728
    %v5771 = vadd.f32 %v5423, %v5733
    %v5772 = vadd.f32 %v5424, %v5738
    %v5773 = vadd.f32 %v5425, %v5743
    %v5774 = vadd.f32 %v5426, %v5748
    %v5775 = vadd.f32 %v5427, %v5753
    %v5776 = vadd.f32 %v5428, %v5758
    %s5777 = scalar_lea.vmem %s5, 1920
    %v5778 = vld [vmem:[%s5777] sm:$0xff]
    %v5779 = vld [vmem:[%s5777 + $0x8] sm:$0xff]
    %v5780 = vld [vmem:[%s5777 + $0x10] sm:$0xff]
    %v5781 = vld [vmem:[%s5777 + $0x18] sm:$0xff]
    %v5782 = vld [vmem:[%s5777 + $0x20] sm:$0xff]
    %v5783 = vld [vmem:[%s5777 + $0x28] sm:$0xff]
    %v5784 = vld [vmem:[%s5777 + $0x30] sm:$0xff]
    %v5785 = vld [vmem:[%s5777 + $0x38] sm:$0xff]
    %v5786 = vld [vmem:[%s5777 + $0x40] sm:$0xff]
    %v5787 = vld [vmem:[%s5777 + $0x48] sm:$0xff]
    %v5788 = vld [vmem:[%s5777 + $0x50] sm:$0xff]
    %v5789 = vld [vmem:[%s5777 + $0x58] sm:$0xff]
    %v5790 = vld [vmem:[%s5777 + $0x60] sm:$0xff]
    %v5791 = vld [vmem:[%s5777 + $0x68] sm:$0xff]
    %v5792 = vld [vmem:[%s5777 + $0x70] sm:$0xff]
    %v5793 = vld [vmem:[%s5777 + $0x78] sm:$0xff]
    %5794 = vmatprep.subr.mxu0 0.0
    %5795 = vmatpush1.msra.mxu0 %v5778
    %5796 = vmatprep.subr.mxu0 0.0
    %5797 = vmatpush1.msra.mxu0 %v5779
    %5798 = vmatprep.subr.mxu0 0.0
    %5799 = vmatpush1.msra.mxu0 %v5780
    %5800 = vmatprep.subr.mxu0 0.0
    %5801 = vmatpush1.msra.mxu0 %v5781
    %5802 = vmatprep.subr.mxu0 0.0
    %5803 = vmatpush1.msra.mxu0 %v5782
    %5804 = vmatprep.subr.mxu0 0.0
    %5805 = vmatpush1.msra.mxu0 %v5783
    %5806 = vmatprep.subr.mxu0 0.0
    %5807 = vmatpush1.msra.mxu0 %v5784
    %5808 = vmatprep.subr.mxu0 0.0
    %5809 = vmatpush1.msra.mxu0 %v5785
    %5810 = vmatprep.subr.mxu0 0.0
    %5811 = vmatpush1.msra.mxu0 %v5786
    %5812 = vmatprep.subr.mxu0 0.0
    %5813 = vmatpush1.msra.mxu0 %v5787
    %5814 = vmatprep.subr.mxu0 0.0
    %5815 = vmatpush1.msra.mxu0 %v5788
    %5816 = vmatprep.subr.mxu0 0.0
    %5817 = vmatpush1.msra.mxu0 %v5789
    %5818 = vmatprep.subr.mxu0 0.0
    %5819 = vmatpush1.msra.mxu0 %v5790
    %5820 = vmatprep.subr.mxu0 0.0
    %5821 = vmatpush1.msra.mxu0 %v5791
    %5822 = vmatprep.subr.mxu0 0.0
    %5823 = vmatpush1.msra.mxu0 %v5792
    %5824 = vmatprep.subr.mxu0 0.0
    %5825 = vmatpush1.msra.mxu0 %v5793
    %5826 = vmatprep.subr.mxu0 0.0
    %5827 = vmatpush1.msra.mxu0 0.0
    %5828 = vmatprep.subr.mxu0 0.0
    %5829 = vmatpush1.msra.mxu0 0.0
    %5830 = vmatprep.subr.mxu0 0.0
    %5831 = vmatpush1.msra.mxu0 0.0
    %5832 = vmatprep.subr.mxu0 0.0
    %5833 = vmatpush1.msra.mxu0 0.0
    %5834 = vmatprep.subr.mxu0 0.0
    %5835 = vmatpush1.msra.mxu0 0.0
    %5836 = vmatprep.subr.mxu0 0.0
    %5837 = vmatpush1.msra.mxu0 0.0
    %5838 = vmatprep.subr.mxu0 0.0
    %5839 = vmatpush1.msra.mxu0 0.0
    %5840 = vmatprep.subr.mxu0 0.0
    %5841 = vmatpush1.msra.mxu0 0.0
    %5842 = vmatprep.subr.mxu0 0.0
    %5843 = vmatpush1.msra.mxu0 0.0
    %5844 = vmatprep.subr.mxu0 0.0
    %5845 = vmatpush1.msra.mxu0 0.0
    %5846 = vmatprep.subr.mxu0 0.0
    %5847 = vmatpush1.msra.mxu0 0.0
    %5848 = vmatprep.subr.mxu0 0.0
    %5849 = vmatpush1.msra.mxu0 0.0
    %5850 = vmatprep.subr.mxu0 0.0
    %5851 = vmatpush1.msra.mxu0 0.0
    %5852 = vmatprep.subr.mxu0 0.0
    %5853 = vmatpush1.msra.mxu0 0.0
    %5854 = vmatprep.subr.mxu0 0.0
    %5855 = vmatpush1.msra.mxu0 0.0
    %5856 = vmatprep.subr.mxu0 0.0
    %5857 = vmatpush1.msra.mxu0 0.0
    %5858 = vmatprep.mubr.f32.mxu0 0.0
    %5859 = vmatmul.mubr.f32.gmra.mrb[0].mxu0 %v582
    %v5860 = vpop.f32.mrb[0].mxu0
    %v5861 = vadd.f32 0.0, %v5860
    %v5862 = vpop.f32.mrb[0].mxu0
    %5863 = vmatprep.mubr.f32.mxu0 0.0
    %5864 = vmatmul.mubr.f32.gmra.mrb[0].mxu0 %v583
    %v5865 = vpop.f32.mrb[0].mxu0
    %v5866 = vadd.f32 0.0, %v5865
    %v5867 = vpop.f32.mrb[0].mxu0
    %5868 = vmatprep.mubr.f32.mxu0 0.0
    %5869 = vmatmul.mubr.f32.gmra.mrb[0].mxu0 %v584
    %v5870 = vpop.f32.mrb[0].mxu0
    %v5871 = vadd.f32 0.0, %v5870
    %v5872 = vpop.f32.mrb[0].mxu0
    %5873 = vmatprep.mubr.f32.mxu0 0.0
    %5874 = vmatmul.mubr.f32.gmra.mrb[0].mxu0 %v585
    %v5875 = vpop.f32.mrb[0].mxu0
    %v5876 = vadd.f32 0.0, %v5875
    %v5877 = vpop.f32.mrb[0].mxu0
    %5878 = vmatprep.mubr.f32.mxu0 0.0
    %5879 = vmatmul.mubr.f32.gmra.mrb[0].mxu0 %v586
    %v5880 = vpop.f32.mrb[0].mxu0
    %v5881 = vadd.f32 0.0, %v5880
    %v5882 = vpop.f32.mrb[0].mxu0
    %5883 = vmatprep.mubr.f32.mxu0 0.0
    %5884 = vmatmul.mubr.f32.gmra.mrb[0].mxu0 %v587
    %v5885 = vpop.f32.mrb[0].mxu0
    %v5886 = vadd.f32 0.0, %v5885
    %v5887 = vpop.f32.mrb[0].mxu0
    %5888 = vmatprep.mubr.f32.mxu0 0.0
    %5889 = vmatmul.mubr.f32.gmra.mrb[0].mxu0 %v588
    %v5890 = vpop.f32.mrb[0].mxu0
    %v5891 = vadd.f32 0.0, %v5890
    %v5892 = vpop.f32.mrb[0].mxu0
    %5893 = vmatprep.mubr.f32.mxu0 0.0
    %5894 = vmatmul.mubr.f32.gmra.mrb[0].mxu0 %v589
    %v5895 = vpop.f32.mrb[0].mxu0
    %v5896 = vadd.f32 0.0, %v5895
    %v5897 = vpop.f32.mrb[0].mxu0
    %5898 = vdwg.mxu0
    %s5899 = scalar_lea.vmem %s4, 1920
    %v5900 = vld [vmem:[%s5899] sm:$0xff]
    %v5901 = vld [vmem:[%s5899 + $0x8] sm:$0xff]
    %v5902 = vld [vmem:[%s5899 + $0x10] sm:$0xff]
    %v5903 = vld [vmem:[%s5899 + $0x18] sm:$0xff]
    %v5904 = vld [vmem:[%s5899 + $0x20] sm:$0xff]
    %v5905 = vld [vmem:[%s5899 + $0x28] sm:$0xff]
    %v5906 = vld [vmem:[%s5899 + $0x30] sm:$0xff]
    %v5907 = vld [vmem:[%s5899 + $0x38] sm:$0xff]
    %v5908 = vld [vmem:[%s5899 + $0x40] sm:$0xff]
    %v5909 = vld [vmem:[%s5899 + $0x48] sm:$0xff]
    %v5910 = vld [vmem:[%s5899 + $0x50] sm:$0xff]
    %v5911 = vld [vmem:[%s5899 + $0x58] sm:$0xff]
    %v5912 = vld [vmem:[%s5899 + $0x60] sm:$0xff]
    %v5913 = vld [vmem:[%s5899 + $0x68] sm:$0xff]
    %v5914 = vld [vmem:[%s5899 + $0x70] sm:$0xff]
    %v5915 = vld [vmem:[%s5899 + $0x78] sm:$0xff]
    %v5917 = vsel %vm866, %v5900, 0
    %v5920 = vsel %vm866, %v5901, 0
    %v5923 = vsel %vm866, %v5902, 0
    %v5926 = vsel %vm866, %v5903, 0
    %v5929 = vsel %vm866, %v5904, 0
    %v5932 = vsel %vm866, %v5905, 0
    %v5935 = vsel %vm866, %v5906, 0
    %v5938 = vsel %vm866, %v5907, 0
    %v5941 = vsel %vm866, %v5908, 0
    %v5944 = vsel %vm866, %v5909, 0
    %v5947 = vsel %vm866, %v5910, 0
    %v5950 = vsel %vm866, %v5911, 0
    %v5953 = vsel %vm866, %v5912, 0
    %v5956 = vsel %vm866, %v5913, 0
    %v5959 = vsel %vm866, %v5914, 0
    %v5962 = vsel %vm866, %v5915, 0
    %5964 = vmatprep.subr.mxu0 0.0
    %5965 = vmatpush1.msra.mxu0 %v5861
    %5966 = vmatprep.subr.mxu0 0.0
    %5967 = vmatpush1.msra.mxu0 %v5866
    %5968 = vmatprep.subr.mxu0 0.0
    %5969 = vmatpush1.msra.mxu0 %v5871
    %5970 = vmatprep.subr.mxu0 0.0
    %5971 = vmatpush1.msra.mxu0 %v5876
    %5972 = vmatprep.subr.mxu0 0.0
    %5973 = vmatpush1.msra.mxu0 %v5881
    %5974 = vmatprep.subr.mxu0 0.0
    %5975 = vmatpush1.msra.mxu0 %v5886
    %5976 = vmatprep.subr.mxu0 0.0
    %5977 = vmatpush1.msra.mxu0 %v5891
    %5978 = vmatprep.subr.mxu0 0.0
    %5979 = vmatpush1.msra.mxu0 %v5896
    %5980 = vmatprep.subr.mxu0 0.0
    %5981 = vmatpush1.msra.mxu0 0.0
    %5982 = vmatprep.subr.mxu0 0.0
    %5983 = vmatpush1.msra.mxu0 0.0
    %5984 = vmatprep.subr.mxu0 0.0
    %5985 = vmatpush1.msra.mxu0 0.0
    %5986 = vmatprep.subr.mxu0 0.0
    %5987 = vmatpush1.msra.mxu0 0.0
    %5988 = vmatprep.subr.mxu0 0.0
    %5989 = vmatpush1.msra.mxu0 0.0
    %5990 = vmatprep.subr.mxu0 0.0
    %5991 = vmatpush1.msra.mxu0 0.0
    %5992 = vmatprep.subr.mxu0 0.0
    %5993 = vmatpush1.msra.mxu0 0.0
    %5994 = vmatprep.subr.mxu0 0.0
    %5995 = vmatpush1.msra.mxu0 0.0
    %5996 = vmatprep.subr.mxu0 0.0
    %5997 = vmatpush1.msra.mxu0 0.0
    %5998 = vmatprep.subr.mxu0 0.0
    %5999 = vmatpush1.msra.mxu0 0.0
    %6000 = vmatprep.subr.mxu0 0.0
    %6001 = vmatpush1.msra.mxu0 0.0
    %6002 = vmatprep.subr.mxu0 0.0
    %6003 = vmatpush1.msra.mxu0 0.0
    %6004 = vmatprep.subr.mxu0 0.0
    %6005 = vmatpush1.msra.mxu0 0.0
    %6006 = vmatprep.subr.mxu0 0.0
    %6007 = vmatpush1.msra.mxu0 0.0
    %6008 = vmatprep.subr.mxu0 0.0
    %6009 = vmatpush1.msra.mxu0 0.0
    %6010 = vmatprep.subr.mxu0 0.0
    %6011 = vmatpush1.msra.mxu0 0.0
    %6012 = vmatprep.subr.mxu0 0.0
    %6013 = vmatpush1.msra.mxu0 0.0
    %6014 = vmatprep.subr.mxu0 0.0
    %6015 = vmatpush1.msra.mxu0 0.0
    %6016 = vmatprep.subr.mxu0 0.0
    %6017 = vmatpush1.msra.mxu0 0.0
    %6018 = vmatprep.subr.mxu0 0.0
    %6019 = vmatpush1.msra.mxu0 0.0
    %6020 = vmatprep.subr.mxu0 0.0
    %6021 = vmatpush1.msra.mxu0 0.0
    %6022 = vmatprep.subr.mxu0 0.0
    %6023 = vmatpush1.msra.mxu0 0.0
    %6024 = vmatprep.subr.mxu0 0.0
    %6025 = vmatpush1.msra.mxu0 0.0
    %6026 = vmatprep.subr.mxu0 0.0
    %6027 = vmatpush1.msra.mxu0 0.0
    %6028 = vmatprep.mubr.f32.mxu0 0.0
    %6029 = vmatmul.mubr.f32.gmra.mrb[0].mxu0 %v5917
    %v6030 = vpop.f32.mrb[0].mxu0
    %v6031 = vadd.f32 0.0, %v6030
    %v6032 = vpop.f32.mrb[0].mxu0
    %6033 = vmatprep.mubr.f32.mxu0 0.0
    %6034 = vmatmul.mubr.f32.gmra.mrb[0].mxu0 %v5920
    %v6035 = vpop.f32.mrb[0].mxu0
    %v6036 = vadd.f32 0.0, %v6035
    %v6037 = vpop.f32.mrb[0].mxu0
    %6038 = vmatprep.mubr.f32.mxu0 0.0
    %6039 = vmatmul.mubr.f32.gmra.mrb[0].mxu0 %v5923
    %v6040 = vpop.f32.mrb[0].mxu0
    %v6041 = vadd.f32 0.0, %v6040
    %v6042 = vpop.f32.mrb[0].mxu0
    %6043 = vmatprep.mubr.f32.mxu0 0.0
    %6044 = vmatmul.mubr.f32.gmra.mrb[0].mxu0 %v5926
    %v6045 = vpop.f32.mrb[0].mxu0
    %v6046 = vadd.f32 0.0, %v6045
    %v6047 = vpop.f32.mrb[0].mxu0
    %6048 = vmatprep.mubr.f32.mxu0 0.0
    %6049 = vmatmul.mubr.f32.gmra.mrb[0].mxu0 %v5929
    %v6050 = vpop.f32.mrb[0].mxu0
    %v6051 = vadd.f32 0.0, %v6050
    %v6052 = vpop.f32.mrb[0].mxu0
    %6053 = vmatprep.mubr.f32.mxu0 0.0
    %6054 = vmatmul.mubr.f32.gmra.mrb[0].mxu0 %v5932
    %v6055 = vpop.f32.mrb[0].mxu0
    %v6056 = vadd.f32 0.0, %v6055
    %v6057 = vpop.f32.mrb[0].mxu0
    %6058 = vmatprep.mubr.f32.mxu0 0.0
    %6059 = vmatmul.mubr.f32.gmra.mrb[0].mxu0 %v5935
    %v6060 = vpop.f32.mrb[0].mxu0
    %v6061 = vadd.f32 0.0, %v6060
    %v6062 = vpop.f32.mrb[0].mxu0
    %6063 = vmatprep.mubr.f32.mxu0 0.0
    %6064 = vmatmul.mubr.f32.gmra.mrb[0].mxu0 %v5938
    %v6065 = vpop.f32.mrb[0].mxu0
    %v6066 = vadd.f32 0.0, %v6065
    %v6067 = vpop.f32.mrb[0].mxu0
    %6068 = vmatprep.mubr.f32.mxu0 0.0
    %6069 = vmatmul.mubr.f32.gmra.mrb[0].mxu0 %v5941
    %v6070 = vpop.f32.mrb[0].mxu0
    %v6071 = vadd.f32 0.0, %v6070
    %v6072 = vpop.f32.mrb[0].mxu0
    %6073 = vmatprep.mubr.f32.mxu0 0.0
    %6074 = vmatmul.mubr.f32.gmra.mrb[0].mxu0 %v5944
    %v6075 = vpop.f32.mrb[0].mxu0
    %v6076 = vadd.f32 0.0, %v6075
    %v6077 = vpop.f32.mrb[0].mxu0
    %6078 = vmatprep.mubr.f32.mxu0 0.0
    %6079 = vmatmul.mubr.f32.gmra.mrb[0].mxu0 %v5947
    %v6080 = vpop.f32.mrb[0].mxu0
    %v6081 = vadd.f32 0.0, %v6080
    %v6082 = vpop.f32.mrb[0].mxu0
    %6083 = vmatprep.mubr.f32.mxu0 0.0
    %6084 = vmatmul.mubr.f32.gmra.mrb[0].mxu0 %v5950
    %v6085 = vpop.f32.mrb[0].mxu0
    %v6086 = vadd.f32 0.0, %v6085
    %v6087 = vpop.f32.mrb[0].mxu0
    %6088 = vmatprep.mubr.f32.mxu0 0.0
    %6089 = vmatmul.mubr.f32.gmra.mrb[0].mxu0 %v5953
    %v6090 = vpop.f32.mrb[0].mxu0
    %v6091 = vadd.f32 0.0, %v6090
    %v6092 = vpop.f32.mrb[0].mxu0
    %6093 = vmatprep.mubr.f32.mxu0 0.0
    %6094 = vmatmul.mubr.f32.gmra.mrb[0].mxu0 %v5956
    %v6095 = vpop.f32.mrb[0].mxu0
    %v6096 = vadd.f32 0.0, %v6095
    %v6097 = vpop.f32.mrb[0].mxu0
    %6098 = vmatprep.mubr.f32.mxu0 0.0
    %6099 = vmatmul.mubr.f32.gmra.mrb[0].mxu0 %v5959
    %v6100 = vpop.f32.mrb[0].mxu0
    %v6101 = vadd.f32 0.0, %v6100
    %v6102 = vpop.f32.mrb[0].mxu0
    %6103 = vmatprep.mubr.f32.mxu0 0.0
    %6104 = vmatmul.mubr.f32.gmra.mrb[0].mxu0 %v5962
    %v6105 = vpop.f32.mrb[0].mxu0
    %v6106 = vadd.f32 0.0, %v6105
    %v6107 = vpop.f32.mrb[0].mxu0
    %6108 = vdwg.mxu0
    %v6109 = vadd.f32 %v5761, %v6031
    %v6110 = vadd.f32 %v5762, %v6036
    %v6111 = vadd.f32 %v5763, %v6041
    %v6112 = vadd.f32 %v5764, %v6046
    %v6113 = vadd.f32 %v5765, %v6051
    %v6114 = vadd.f32 %v5766, %v6056
    %v6115 = vadd.f32 %v5767, %v6061
    %v6116 = vadd.f32 %v5768, %v6066
    %v6117 = vadd.f32 %v5769, %v6071
    %v6118 = vadd.f32 %v5770, %v6076
    %v6119 = vadd.f32 %v5771, %v6081
    %v6120 = vadd.f32 %v5772, %v6086
    %v6121 = vadd.f32 %v5773, %v6091
    %v6122 = vadd.f32 %v5774, %v6096
    %v6123 = vadd.f32 %v5775, %v6101
    %v6124 = vadd.f32 %v5776, %v6106
    %v6125 = vld [vmem:[%s6] sm:$0xff]
    %v6126 = vld [vmem:[%s6 + $0x8] sm:$0xff]
    %v6127 = vld [vmem:[%s6 + $0x10] sm:$0xff]
    %v6128 = vld [vmem:[%s6 + $0x18] sm:$0xff]
    %v6129 = vld [vmem:[%s6 + $0x20] sm:$0xff]
    %v6130 = vld [vmem:[%s6 + $0x28] sm:$0xff]
    %v6131 = vld [vmem:[%s6 + $0x30] sm:$0xff]
    %v6132 = vld [vmem:[%s6 + $0x38] sm:$0xff]
    %v6133 = vld [vmem:[%s6 + $0x40] sm:$0xff]
    %v6134 = vld [vmem:[%s6 + $0x48] sm:$0xff]
    %v6135 = vld [vmem:[%s6 + $0x50] sm:$0xff]
    %v6136 = vld [vmem:[%s6 + $0x58] sm:$0xff]
    %v6137 = vld [vmem:[%s6 + $0x60] sm:$0xff]
    %v6138 = vld [vmem:[%s6 + $0x68] sm:$0xff]
    %v6139 = vld [vmem:[%s6 + $0x70] sm:$0xff]
    %v6140 = vld [vmem:[%s6 + $0x78] sm:$0xff]
    %v6141 = vld [vmem:[%s7] sm:$0xff]
    %v6142 = vld [vmem:[%s7 + $0x8] sm:$0xff]
    %v6143 = vld [vmem:[%s7 + $0x10] sm:$0xff]
    %v6144 = vld [vmem:[%s7 + $0x18] sm:$0xff]
    %v6145 = vld [vmem:[%s7 + $0x20] sm:$0xff]
    %v6146 = vld [vmem:[%s7 + $0x28] sm:$0xff]
    %v6147 = vld [vmem:[%s7 + $0x30] sm:$0xff]
    %v6148 = vld [vmem:[%s7 + $0x38] sm:$0xff]
    %v6149 = vld [vmem:[%s7 + $0x40] sm:$0xff]
    %v6150 = vld [vmem:[%s7 + $0x48] sm:$0xff]
    %v6151 = vld [vmem:[%s7 + $0x50] sm:$0xff]
    %v6152 = vld [vmem:[%s7 + $0x58] sm:$0xff]
    %v6153 = vld [vmem:[%s7 + $0x60] sm:$0xff]
    %v6154 = vld [vmem:[%s7 + $0x68] sm:$0xff]
    %v6155 = vld [vmem:[%s7 + $0x70] sm:$0xff]
    %v6156 = vld [vmem:[%s7 + $0x78] sm:$0xff]
    %vm6157 = vcmask 261120
    %v6158 = vsel %vm6157, %v6109, 0.0
    %6159 = vadd.xlane.f32.xlu0 %v6158
    %v6160 = vpop.xlane.xlu0 %6159
    %v6161 = vsel %vm6157, %v6110, 0.0
    %6162 = vadd.xlane.f32.xlu0 %v6161
    %v6163 = vpop.xlane.xlu0 %6162
    %v6164 = vsel %vm6157, %v6111, 0.0
    %6165 = vadd.xlane.f32.xlu0 %v6164
    %v6166 = vpop.xlane.xlu0 %6165
    %v6167 = vsel %vm6157, %v6112, 0.0
    %6168 = vadd.xlane.f32.xlu0 %v6167
    %v6169 = vpop.xlane.xlu0 %6168
    %v6170 = vsel %vm6157, %v6113, 0.0
    %6171 = vadd.xlane.f32.xlu0 %v6170
    %v6172 = vpop.xlane.xlu0 %6171
    %v6173 = vsel %vm6157, %v6114, 0.0
    %6174 = vadd.xlane.f32.xlu0 %v6173
    %v6175 = vpop.xlane.xlu0 %6174
    %v6176 = vsel %vm6157, %v6115, 0.0
    %6177 = vadd.xlane.f32.xlu0 %v6176
    %v6178 = vpop.xlane.xlu0 %6177
    %v6179 = vsel %vm6157, %v6116, 0.0
    %6180 = vadd.xlane.f32.xlu0 %v6179
    %v6181 = vpop.xlane.xlu0 %6180
    %v6182 = vsel %vm6157, %v6117, 0.0
    %6183 = vadd.xlane.f32.xlu0 %v6182
    %v6184 = vpop.xlane.xlu0 %6183
    %v6185 = vsel %vm6157, %v6118, 0.0
    %6186 = vadd.xlane.f32.xlu0 %v6185
    %v6187 = vpop.xlane.xlu0 %6186
    %v6188 = vsel %vm6157, %v6119, 0.0
    %6189 = vadd.xlane.f32.xlu0 %v6188
    %v6190 = vpop.xlane.xlu0 %6189
    %v6191 = vsel %vm6157, %v6120, 0.0
    %6192 = vadd.xlane.f32.xlu0 %v6191
    %v6193 = vpop.xlane.xlu0 %6192
    %v6194 = vsel %vm6157, %v6121, 0.0
    %6195 = vadd.xlane.f32.xlu0 %v6194
    %v6196 = vpop.xlane.xlu0 %6195
    %v6197 = vsel %vm6157, %v6122, 0.0
    %6198 = vadd.xlane.f32.xlu0 %v6197
    %v6199 = vpop.xlane.xlu0 %6198
    %v6200 = vsel %vm6157, %v6123, 0.0
    %6201 = vadd.xlane.f32.xlu0 %v6200
    %v6202 = vpop.xlane.xlu0 %6201
    %v6203 = vsel %vm6157, %v6124, 0.0
    %6204 = vadd.xlane.f32.xlu0 %v6203
    %v6205 = vpop.xlane.xlu0 %6204
    %v6206 = vmul.f32 %v6160, 0.03125
    %v6207 = vmul.f32 %v6163, 0.03125
    %v6208 = vmul.f32 %v6166, 0.03125
    %v6209 = vmul.f32 %v6169, 0.03125
    %v6210 = vmul.f32 %v6172, 0.03125
    %v6211 = vmul.f32 %v6175, 0.03125
    %v6212 = vmul.f32 %v6178, 0.03125
    %v6213 = vmul.f32 %v6181, 0.03125
    %v6214 = vmul.f32 %v6184, 0.03125
    %v6215 = vmul.f32 %v6187, 0.03125
    %v6216 = vmul.f32 %v6190, 0.03125
    %v6217 = vmul.f32 %v6193, 0.03125
    %v6218 = vmul.f32 %v6196, 0.03125
    %v6219 = vmul.f32 %v6199, 0.03125
    %v6220 = vmul.f32 %v6202, 0.03125
    %v6221 = vmul.f32 %v6205, 0.03125
    %v6222 = vmul.f32 %v6109, %v6109
    %v6223 = vmul.f32 %v6110, %v6110
    %v6224 = vmul.f32 %v6111, %v6111
    %v6225 = vmul.f32 %v6112, %v6112
    %v6226 = vmul.f32 %v6113, %v6113
    %v6227 = vmul.f32 %v6114, %v6114
    %v6228 = vmul.f32 %v6115, %v6115
    %v6229 = vmul.f32 %v6116, %v6116
    %v6230 = vmul.f32 %v6117, %v6117
    %v6231 = vmul.f32 %v6118, %v6118
    %v6232 = vmul.f32 %v6119, %v6119
    %v6233 = vmul.f32 %v6120, %v6120
    %v6234 = vmul.f32 %v6121, %v6121
    %v6235 = vmul.f32 %v6122, %v6122
    %v6236 = vmul.f32 %v6123, %v6123
    %v6237 = vmul.f32 %v6124, %v6124
    %v6238 = vsel %vm6157, %v6222, 0.0
    %6239 = vadd.xlane.f32.xlu0 %v6238
    %v6240 = vpop.xlane.xlu0 %6239
    %v6241 = vsel %vm6157, %v6223, 0.0
    %6242 = vadd.xlane.f32.xlu0 %v6241
    %v6243 = vpop.xlane.xlu0 %6242
    %v6244 = vsel %vm6157, %v6224, 0.0
    %6245 = vadd.xlane.f32.xlu0 %v6244
    %v6246 = vpop.xlane.xlu0 %6245
    %v6247 = vsel %vm6157, %v6225, 0.0
    %6248 = vadd.xlane.f32.xlu0 %v6247
    %v6249 = vpop.xlane.xlu0 %6248
    %v6250 = vsel %vm6157, %v6226, 0.0
    %6251 = vadd.xlane.f32.xlu0 %v6250
    %v6252 = vpop.xlane.xlu0 %6251
    %v6253 = vsel %vm6157, %v6227, 0.0
    %6254 = vadd.xlane.f32.xlu0 %v6253
    %v6255 = vpop.xlane.xlu0 %6254
    %v6256 = vsel %vm6157, %v6228, 0.0
    %6257 = vadd.xlane.f32.xlu0 %v6256
    %v6258 = vpop.xlane.xlu0 %6257
    %v6259 = vsel %vm6157, %v6229, 0.0
    %6260 = vadd.xlane.f32.xlu0 %v6259
    %v6261 = vpop.xlane.xlu0 %6260
    %v6262 = vsel %vm6157, %v6230, 0.0
    %6263 = vadd.xlane.f32.xlu0 %v6262
    %v6264 = vpop.xlane.xlu0 %6263
    %v6265 = vsel %vm6157, %v6231, 0.0
    %6266 = vadd.xlane.f32.xlu0 %v6265
    %v6267 = vpop.xlane.xlu0 %6266
    %v6268 = vsel %vm6157, %v6232, 0.0
    %6269 = vadd.xlane.f32.xlu0 %v6268
    %v6270 = vpop.xlane.xlu0 %6269
    %v6271 = vsel %vm6157, %v6233, 0.0
    %6272 = vadd.xlane.f32.xlu0 %v6271
    %v6273 = vpop.xlane.xlu0 %6272
    %v6274 = vsel %vm6157, %v6234, 0.0
    %6275 = vadd.xlane.f32.xlu0 %v6274
    %v6276 = vpop.xlane.xlu0 %6275
    %v6277 = vsel %vm6157, %v6235, 0.0
    %6278 = vadd.xlane.f32.xlu0 %v6277
    %v6279 = vpop.xlane.xlu0 %6278
    %v6280 = vsel %vm6157, %v6236, 0.0
    %6281 = vadd.xlane.f32.xlu0 %v6280
    %v6282 = vpop.xlane.xlu0 %6281
    %v6283 = vsel %vm6157, %v6237, 0.0
    %6284 = vadd.xlane.f32.xlu0 %v6283
    %v6285 = vpop.xlane.xlu0 %6284
    %v6286 = vmul.f32 %v6240, 0.03125
    %v6287 = vmul.f32 %v6243, 0.03125
    %v6288 = vmul.f32 %v6246, 0.03125
    %v6289 = vmul.f32 %v6249, 0.03125
    %v6290 = vmul.f32 %v6252, 0.03125
    %v6291 = vmul.f32 %v6255, 0.03125
    %v6292 = vmul.f32 %v6258, 0.03125
    %v6293 = vmul.f32 %v6261, 0.03125
    %v6294 = vmul.f32 %v6264, 0.03125
    %v6295 = vmul.f32 %v6267, 0.03125
    %v6296 = vmul.f32 %v6270, 0.03125
    %v6297 = vmul.f32 %v6273, 0.03125
    %v6298 = vmul.f32 %v6276, 0.03125
    %v6299 = vmul.f32 %v6279, 0.03125
    %v6300 = vmul.f32 %v6282, 0.03125
    %v6301 = vmul.f32 %v6285, 0.03125
    %v6302 = vmul.f32 %v6206, %v6206
    %v6303 = vmul.f32 %v6207, %v6207
    %v6304 = vmul.f32 %v6208, %v6208
    %v6305 = vmul.f32 %v6209, %v6209
    %v6306 = vmul.f32 %v6210, %v6210
    %v6307 = vmul.f32 %v6211, %v6211
    %v6308 = vmul.f32 %v6212, %v6212
    %v6309 = vmul.f32 %v6213, %v6213
    %v6310 = vmul.f32 %v6214, %v6214
    %v6311 = vmul.f32 %v6215, %v6215
    %v6312 = vmul.f32 %v6216, %v6216
    %v6313 = vmul.f32 %v6217, %v6217
    %v6314 = vmul.f32 %v6218, %v6218
    %v6315 = vmul.f32 %v6219, %v6219
    %v6316 = vmul.f32 %v6220, %v6220
    %v6317 = vmul.f32 %v6221, %v6221
    %v6318 = vsub.f32 %v6286, %v6302
    %v6319 = vsub.f32 %v6287, %v6303
    %v6320 = vsub.f32 %v6288, %v6304
    %v6321 = vsub.f32 %v6289, %v6305
    %v6322 = vsub.f32 %v6290, %v6306
    %v6323 = vsub.f32 %v6291, %v6307
    %v6324 = vsub.f32 %v6292, %v6308
    %v6325 = vsub.f32 %v6293, %v6309
    %v6326 = vsub.f32 %v6294, %v6310
    %v6327 = vsub.f32 %v6295, %v6311
    %v6328 = vsub.f32 %v6296, %v6312
    %v6329 = vsub.f32 %v6297, %v6313
    %v6330 = vsub.f32 %v6298, %v6314
    %v6331 = vsub.f32 %v6299, %v6315
    %v6332 = vsub.f32 %v6300, %v6316
    %v6333 = vsub.f32 %v6301, %v6317
    %v6334 = vadd.f32 %v6318, 1e-05
    %v6335 = vadd.f32 %v6319, 1e-05
    %v6336 = vadd.f32 %v6320, 1e-05
    %v6337 = vadd.f32 %v6321, 1e-05
    %v6338 = vadd.f32 %v6322, 1e-05
    %v6339 = vadd.f32 %v6323, 1e-05
    %v6340 = vadd.f32 %v6324, 1e-05
    %v6341 = vadd.f32 %v6325, 1e-05
    %v6342 = vadd.f32 %v6326, 1e-05
    %v6343 = vadd.f32 %v6327, 1e-05
    %v6344 = vadd.f32 %v6328, 1e-05
    %v6345 = vadd.f32 %v6329, 1e-05
    %v6346 = vadd.f32 %v6330, 1e-05
    %v6347 = vadd.f32 %v6331, 1e-05
    %v6348 = vadd.f32 %v6332, 1e-05
    %v6349 = vadd.f32 %v6333, 1e-05
    %v6350 = vrsqrt.pop %v6334
    %v6351 = vrsqrt.pop %v6335
    %v6352 = vrsqrt.pop %v6336
    %v6353 = vrsqrt.pop %v6337
    %v6354 = vrsqrt.pop %v6338
    %v6355 = vrsqrt.pop %v6339
    %v6356 = vrsqrt.pop %v6340
    %v6357 = vrsqrt.pop %v6341
    %v6358 = vrsqrt.pop %v6342
    %v6359 = vrsqrt.pop %v6343
    %v6360 = vrsqrt.pop %v6344
    %v6361 = vrsqrt.pop %v6345
    %v6362 = vrsqrt.pop %v6346
    %v6363 = vrsqrt.pop %v6347
    %v6364 = vrsqrt.pop %v6348
    %v6365 = vrsqrt.pop %v6349
    %v6366 = vmul.f32 %v6350, %v6125
    %v6367 = vmul.f32 %v6351, %v6126
    %v6368 = vmul.f32 %v6352, %v6127
    %v6369 = vmul.f32 %v6353, %v6128
    %v6370 = vmul.f32 %v6354, %v6129
    %v6371 = vmul.f32 %v6355, %v6130
    %v6372 = vmul.f32 %v6356, %v6131
    %v6373 = vmul.f32 %v6357, %v6132
    %v6374 = vmul.f32 %v6358, %v6133
    %v6375 = vmul.f32 %v6359, %v6134
    %v6376 = vmul.f32 %v6360, %v6135
    %v6377 = vmul.f32 %v6361, %v6136
    %v6378 = vmul.f32 %v6362, %v6137
    %v6379 = vmul.f32 %v6363, %v6138
    %v6380 = vmul.f32 %v6364, %v6139
    %v6381 = vmul.f32 %v6365, %v6140
    %v6382 = vmul.f32 %v6206, %v6366
    %v6383 = vmul.f32 %v6207, %v6367
    %v6384 = vmul.f32 %v6208, %v6368
    %v6385 = vmul.f32 %v6209, %v6369
    %v6386 = vmul.f32 %v6210, %v6370
    %v6387 = vmul.f32 %v6211, %v6371
    %v6388 = vmul.f32 %v6212, %v6372
    %v6389 = vmul.f32 %v6213, %v6373
    %v6390 = vmul.f32 %v6214, %v6374
    %v6391 = vmul.f32 %v6215, %v6375
    %v6392 = vmul.f32 %v6216, %v6376
    %v6393 = vmul.f32 %v6217, %v6377
    %v6394 = vmul.f32 %v6218, %v6378
    %v6395 = vmul.f32 %v6219, %v6379
    %v6396 = vmul.f32 %v6220, %v6380
    %v6397 = vmul.f32 %v6221, %v6381
    %v6398 = vsub.f32 %v6141, %v6382
    %v6399 = vsub.f32 %v6142, %v6383
    %v6400 = vsub.f32 %v6143, %v6384
    %v6401 = vsub.f32 %v6144, %v6385
    %v6402 = vsub.f32 %v6145, %v6386
    %v6403 = vsub.f32 %v6146, %v6387
    %v6404 = vsub.f32 %v6147, %v6388
    %v6405 = vsub.f32 %v6148, %v6389
    %v6406 = vsub.f32 %v6149, %v6390
    %v6407 = vsub.f32 %v6150, %v6391
    %v6408 = vsub.f32 %v6151, %v6392
    %v6409 = vsub.f32 %v6152, %v6393
    %v6410 = vsub.f32 %v6153, %v6394
    %v6411 = vsub.f32 %v6154, %v6395
    %v6412 = vsub.f32 %v6155, %v6396
    %v6413 = vsub.f32 %v6156, %v6397
    %6415 = vset.pattern.permute.xlu0 0
    %6416 = vperm.xlu0 %6415, %v6366
    %v6417 = vpop.permute.xlu0 %6416
    %6420 = vset.pattern.permute.xlu0 0
    %6421 = vperm.xlu0 %6420, %v6367
    %v6422 = vpop.permute.xlu0 %6421
    %6425 = vset.pattern.permute.xlu0 0
    %6426 = vperm.xlu0 %6425, %v6368
    %v6427 = vpop.permute.xlu0 %6426
    %6430 = vset.pattern.permute.xlu0 0
    %6431 = vperm.xlu0 %6430, %v6369
    %v6432 = vpop.permute.xlu0 %6431
    %6435 = vset.pattern.permute.xlu0 0
    %6436 = vperm.xlu0 %6435, %v6370
    %v6437 = vpop.permute.xlu0 %6436
    %6440 = vset.pattern.permute.xlu0 0
    %6441 = vperm.xlu0 %6440, %v6371
    %v6442 = vpop.permute.xlu0 %6441
    %6445 = vset.pattern.permute.xlu0 0
    %6446 = vperm.xlu0 %6445, %v6372
    %v6447 = vpop.permute.xlu0 %6446
    %6450 = vset.pattern.permute.xlu0 0
    %6451 = vperm.xlu0 %6450, %v6373
    %v6452 = vpop.permute.xlu0 %6451
    %6455 = vset.pattern.permute.xlu0 0
    %6456 = vperm.xlu0 %6455, %v6374
    %v6457 = vpop.permute.xlu0 %6456
    %6460 = vset.pattern.permute.xlu0 0
    %6461 = vperm.xlu0 %6460, %v6375
    %v6462 = vpop.permute.xlu0 %6461
    %6465 = vset.pattern.permute.xlu0 0
    %6466 = vperm.xlu0 %6465, %v6376
    %v6467 = vpop.permute.xlu0 %6466
    %6470 = vset.pattern.permute.xlu0 0
    %6471 = vperm.xlu0 %6470, %v6377
    %v6472 = vpop.permute.xlu0 %6471
    %6475 = vset.pattern.permute.xlu0 0
    %6476 = vperm.xlu0 %6475, %v6378
    %v6477 = vpop.permute.xlu0 %6476
    %6480 = vset.pattern.permute.xlu0 0
    %6481 = vperm.xlu0 %6480, %v6379
    %v6482 = vpop.permute.xlu0 %6481
    %6485 = vset.pattern.permute.xlu0 0
    %6486 = vperm.xlu0 %6485, %v6380
    %v6487 = vpop.permute.xlu0 %6486
    %6490 = vset.pattern.permute.xlu0 0
    %6491 = vperm.xlu0 %6490, %v6381
    %v6492 = vpop.permute.xlu0 %6491
    %v6494 = vmul.f32 %v6109, %v6417
    %v6495 = vmul.f32 %v6110, %v6422
    %v6496 = vmul.f32 %v6111, %v6427
    %v6497 = vmul.f32 %v6112, %v6432
    %v6498 = vmul.f32 %v6113, %v6437
    %v6499 = vmul.f32 %v6114, %v6442
    %v6500 = vmul.f32 %v6115, %v6447
    %v6501 = vmul.f32 %v6116, %v6452
    %v6502 = vmul.f32 %v6117, %v6457
    %v6503 = vmul.f32 %v6118, %v6462
    %v6504 = vmul.f32 %v6119, %v6467
    %v6505 = vmul.f32 %v6120, %v6472
    %v6506 = vmul.f32 %v6121, %v6477
    %v6507 = vmul.f32 %v6122, %v6482
    %v6508 = vmul.f32 %v6123, %v6487
    %v6509 = vmul.f32 %v6124, %v6492
    %6511 = vset.pattern.permute.xlu0 0
    %6512 = vperm.xlu0 %6511, %v6398
    %v6513 = vpop.permute.xlu0 %6512
    %6516 = vset.pattern.permute.xlu0 0
    %6517 = vperm.xlu0 %6516, %v6399
    %v6518 = vpop.permute.xlu0 %6517
    %6521 = vset.pattern.permute.xlu0 0
    %6522 = vperm.xlu0 %6521, %v6400
    %v6523 = vpop.permute.xlu0 %6522
    %6526 = vset.pattern.permute.xlu0 0
    %6527 = vperm.xlu0 %6526, %v6401
    %v6528 = vpop.permute.xlu0 %6527
    %6531 = vset.pattern.permute.xlu0 0
    %6532 = vperm.xlu0 %6531, %v6402
    %v6533 = vpop.permute.xlu0 %6532
    %6536 = vset.pattern.permute.xlu0 0
    %6537 = vperm.xlu0 %6536, %v6403
    %v6538 = vpop.permute.xlu0 %6537
    %6541 = vset.pattern.permute.xlu0 0
    %6542 = vperm.xlu0 %6541, %v6404
    %v6543 = vpop.permute.xlu0 %6542
    %6546 = vset.pattern.permute.xlu0 0
    %6547 = vperm.xlu0 %6546, %v6405
    %v6548 = vpop.permute.xlu0 %6547
    %6551 = vset.pattern.permute.xlu0 0
    %6552 = vperm.xlu0 %6551, %v6406
    %v6553 = vpop.permute.xlu0 %6552
    %6556 = vset.pattern.permute.xlu0 0
    %6557 = vperm.xlu0 %6556, %v6407
    %v6558 = vpop.permute.xlu0 %6557
    %6561 = vset.pattern.permute.xlu0 0
    %6562 = vperm.xlu0 %6561, %v6408
    %v6563 = vpop.permute.xlu0 %6562
    %6566 = vset.pattern.permute.xlu0 0
    %6567 = vperm.xlu0 %6566, %v6409
    %v6568 = vpop.permute.xlu0 %6567
    %6571 = vset.pattern.permute.xlu0 0
    %6572 = vperm.xlu0 %6571, %v6410
    %v6573 = vpop.permute.xlu0 %6572
    %6576 = vset.pattern.permute.xlu0 0
    %6577 = vperm.xlu0 %6576, %v6411
    %v6578 = vpop.permute.xlu0 %6577
    %6581 = vset.pattern.permute.xlu0 0
    %6582 = vperm.xlu0 %6581, %v6412
    %v6583 = vpop.permute.xlu0 %6582
    %6586 = vset.pattern.permute.xlu0 0
    %6587 = vperm.xlu0 %6586, %v6413
    %v6588 = vpop.permute.xlu0 %6587
    %v6590 = vadd.f32 %v6494, %v6513
    %v6591 = vadd.f32 %v6495, %v6518
    %v6592 = vadd.f32 %v6496, %v6523
    %v6593 = vadd.f32 %v6497, %v6528
    %v6594 = vadd.f32 %v6498, %v6533
    %v6595 = vadd.f32 %v6499, %v6538
    %v6596 = vadd.f32 %v6500, %v6543
    %v6597 = vadd.f32 %v6501, %v6548
    %v6598 = vadd.f32 %v6502, %v6553
    %v6599 = vadd.f32 %v6503, %v6558
    %v6600 = vadd.f32 %v6504, %v6563
    %v6601 = vadd.f32 %v6505, %v6568
    %v6602 = vadd.f32 %v6506, %v6573
    %v6603 = vadd.f32 %v6507, %v6578
    %v6604 = vadd.f32 %v6508, %v6583
    %v6605 = vadd.f32 %v6509, %v6588
    %vm6606 = vcmp.ge.f32.partialorder %v6590, 0.0
    %vm6607 = vcmp.ge.f32.partialorder %v6591, 0.0
    %vm6608 = vcmp.ge.f32.partialorder %v6592, 0.0
    %vm6609 = vcmp.ge.f32.partialorder %v6593, 0.0
    %vm6610 = vcmp.ge.f32.partialorder %v6594, 0.0
    %vm6611 = vcmp.ge.f32.partialorder %v6595, 0.0
    %vm6612 = vcmp.ge.f32.partialorder %v6596, 0.0
    %vm6613 = vcmp.ge.f32.partialorder %v6597, 0.0
    %vm6614 = vcmp.ge.f32.partialorder %v6598, 0.0
    %vm6615 = vcmp.ge.f32.partialorder %v6599, 0.0
    %vm6616 = vcmp.ge.f32.partialorder %v6600, 0.0
    %vm6617 = vcmp.ge.f32.partialorder %v6601, 0.0
    %vm6618 = vcmp.ge.f32.partialorder %v6602, 0.0
    %vm6619 = vcmp.ge.f32.partialorder %v6603, 0.0
    %vm6620 = vcmp.ge.f32.partialorder %v6604, 0.0
    %vm6621 = vcmp.ge.f32.partialorder %v6605, 0.0
    %v6622 = vmul.f32 %v6590, 0.2
    %v6623 = vmul.f32 %v6591, 0.2
    %v6624 = vmul.f32 %v6592, 0.2
    %v6625 = vmul.f32 %v6593, 0.2
    %v6626 = vmul.f32 %v6594, 0.2
    %v6627 = vmul.f32 %v6595, 0.2
    %v6628 = vmul.f32 %v6596, 0.2
    %v6629 = vmul.f32 %v6597, 0.2
    %v6630 = vmul.f32 %v6598, 0.2
    %v6631 = vmul.f32 %v6599, 0.2
    %v6632 = vmul.f32 %v6600, 0.2
    %v6633 = vmul.f32 %v6601, 0.2
    %v6634 = vmul.f32 %v6602, 0.2
    %v6635 = vmul.f32 %v6603, 0.2
    %v6636 = vmul.f32 %v6604, 0.2
    %v6637 = vmul.f32 %v6605, 0.2
    %v6638 = vsel %vm6606, %v6590, %v6622
    %v6639 = vsel %vm6607, %v6591, %v6623
    %v6640 = vsel %vm6608, %v6592, %v6624
    %v6641 = vsel %vm6609, %v6593, %v6625
    %v6642 = vsel %vm6610, %v6594, %v6626
    %v6643 = vsel %vm6611, %v6595, %v6627
    %v6644 = vsel %vm6612, %v6596, %v6628
    %v6645 = vsel %vm6613, %v6597, %v6629
    %v6646 = vsel %vm6614, %v6598, %v6630
    %v6647 = vsel %vm6615, %v6599, %v6631
    %v6648 = vsel %vm6616, %v6600, %v6632
    %v6649 = vsel %vm6617, %v6601, %v6633
    %v6650 = vsel %vm6618, %v6602, %v6634
    %v6651 = vsel %vm6619, %v6603, %v6635
    %v6652 = vsel %vm6620, %v6604, %v6636
    %v6653 = vsel %vm6621, %v6605, %v6637
    %v6654 = vld [vmem:[%s8] sm:$0xff]
    %v6655 = vld [vmem:[%s8 + $0x8] sm:$0xff]
    %v6656 = vld [vmem:[%s8 + $0x10] sm:$0xff]
    %v6657 = vld [vmem:[%s8 + $0x18] sm:$0xff]
    %v6658 = vld [vmem:[%s8 + $0x20] sm:$0xff]
    %v6659 = vld [vmem:[%s8 + $0x28] sm:$0xff]
    %v6660 = vld [vmem:[%s8 + $0x30] sm:$0xff]
    %v6661 = vld [vmem:[%s8 + $0x38] sm:$0xff]
    %v6662 = vld [vmem:[%s8 + $0x40] sm:$0xff]
    %v6663 = vld [vmem:[%s8 + $0x48] sm:$0xff]
    %v6664 = vld [vmem:[%s8 + $0x50] sm:$0xff]
    %v6665 = vld [vmem:[%s8 + $0x58] sm:$0xff]
    %v6666 = vld [vmem:[%s8 + $0x60] sm:$0xff]
    %v6667 = vld [vmem:[%s8 + $0x68] sm:$0xff]
    %v6668 = vld [vmem:[%s8 + $0x70] sm:$0xff]
    %v6669 = vld [vmem:[%s8 + $0x78] sm:$0xff]
    %v6670 = vmul.f32 %v6638, %v6654
    %v6671 = vmul.f32 %v6639, %v6655
    %v6672 = vmul.f32 %v6640, %v6656
    %v6673 = vmul.f32 %v6641, %v6657
    %v6674 = vmul.f32 %v6642, %v6658
    %v6675 = vmul.f32 %v6643, %v6659
    %v6676 = vmul.f32 %v6644, %v6660
    %v6677 = vmul.f32 %v6645, %v6661
    %v6678 = vmul.f32 %v6646, %v6662
    %v6679 = vmul.f32 %v6647, %v6663
    %v6680 = vmul.f32 %v6648, %v6664
    %v6681 = vmul.f32 %v6649, %v6665
    %v6682 = vmul.f32 %v6650, %v6666
    %v6683 = vmul.f32 %v6651, %v6667
    %v6684 = vmul.f32 %v6652, %v6668
    %v6685 = vmul.f32 %v6653, %v6669
    %v6686 = vsel %vm6157, %v6670, 0.0
    %v6687 = vsel %vm6157, %v6671, 0.0
    %v6688 = vadd.f32 %v6686, %v6687
    %v6689 = vsel %vm6157, %v6672, 0.0
    %v6690 = vadd.f32 %v6688, %v6689
    %v6691 = vsel %vm6157, %v6673, 0.0
    %v6692 = vadd.f32 %v6690, %v6691
    %v6693 = vsel %vm6157, %v6674, 0.0
    %v6694 = vadd.f32 %v6692, %v6693
    %v6695 = vsel %vm6157, %v6675, 0.0
    %v6696 = vadd.f32 %v6694, %v6695
    %v6697 = vsel %vm6157, %v6676, 0.0
    %v6698 = vadd.f32 %v6696, %v6697
    %v6699 = vsel %vm6157, %v6677, 0.0
    %v6700 = vadd.f32 %v6698, %v6699
    %v6701 = vsel %vm6157, %v6678, 0.0
    %v6702 = vadd.f32 %v6700, %v6701
    %v6703 = vsel %vm6157, %v6679, 0.0
    %v6704 = vadd.f32 %v6702, %v6703
    %v6705 = vsel %vm6157, %v6680, 0.0
    %v6706 = vadd.f32 %v6704, %v6705
    %v6707 = vsel %vm6157, %v6681, 0.0
    %v6708 = vadd.f32 %v6706, %v6707
    %v6709 = vsel %vm6157, %v6682, 0.0
    %v6710 = vadd.f32 %v6708, %v6709
    %v6711 = vsel %vm6157, %v6683, 0.0
    %v6712 = vadd.f32 %v6710, %v6711
    %v6713 = vsel %vm6157, %v6684, 0.0
    %v6714 = vadd.f32 %v6712, %v6713
    %v6715 = vsel %vm6157, %v6685, 0.0
    %v6716 = vadd.f32 %v6714, %v6715
    %v6717 = vrot.slane %v6716, 4
    %v6718 = vadd.f32 %v6716, %v6717
    %v6719 = vrot.slane %v6718, 2
    %v6720 = vadd.f32 %v6718, %v6719
    %v6721 = vrot.slane %v6720, 1
    %v6722 = vadd.f32 %v6720, %v6721
    %v6723 = vld [vmem:[%s9] sm:$0xff]
    %v6724 = vld [vmem:[%s9 + $0x8] sm:$0xff]
    %v6725 = vld [vmem:[%s9 + $0x10] sm:$0xff]
    %v6726 = vld [vmem:[%s9 + $0x18] sm:$0xff]
    %v6728 = vsel %vm6157, %v6722, 0
    %6730 = vmatprep.subr.mxu0 0.0
    %6731 = vmatpush1.msra.mxu0 %v6723
    %6732 = vmatprep.subr.mxu0 0.0
    %6733 = vmatpush1.msra.mxu0 %v6724
    %6734 = vmatprep.subr.mxu0 0.0
    %6735 = vmatpush1.msra.mxu0 %v6725
    %6736 = vmatprep.subr.mxu0 0.0
    %6737 = vmatpush1.msra.mxu0 %v6726
    %6738 = vmatprep.subr.mxu0 0.0
    %6739 = vmatpush1.msra.mxu0 0.0
    %6740 = vmatprep.subr.mxu0 0.0
    %6741 = vmatpush1.msra.mxu0 0.0
    %6742 = vmatprep.subr.mxu0 0.0
    %6743 = vmatpush1.msra.mxu0 0.0
    %6744 = vmatprep.subr.mxu0 0.0
    %6745 = vmatpush1.msra.mxu0 0.0
    %6746 = vmatprep.subr.mxu0 0.0
    %6747 = vmatpush1.msra.mxu0 0.0
    %6748 = vmatprep.subr.mxu0 0.0
    %6749 = vmatpush1.msra.mxu0 0.0
    %6750 = vmatprep.subr.mxu0 0.0
    %6751 = vmatpush1.msra.mxu0 0.0
    %6752 = vmatprep.subr.mxu0 0.0
    %6753 = vmatpush1.msra.mxu0 0.0
    %6754 = vmatprep.subr.mxu0 0.0
    %6755 = vmatpush1.msra.mxu0 0.0
    %6756 = vmatprep.subr.mxu0 0.0
    %6757 = vmatpush1.msra.mxu0 0.0
    %6758 = vmatprep.subr.mxu0 0.0
    %6759 = vmatpush1.msra.mxu0 0.0
    %6760 = vmatprep.subr.mxu0 0.0
    %6761 = vmatpush1.msra.mxu0 0.0
    %6762 = vmatprep.subr.mxu0 0.0
    %6763 = vmatpush1.msra.mxu0 0.0
    %6764 = vmatprep.subr.mxu0 0.0
    %6765 = vmatpush1.msra.mxu0 0.0
    %6766 = vmatprep.subr.mxu0 0.0
    %6767 = vmatpush1.msra.mxu0 0.0
    %6768 = vmatprep.subr.mxu0 0.0
    %6769 = vmatpush1.msra.mxu0 0.0
    %6770 = vmatprep.subr.mxu0 0.0
    %6771 = vmatpush1.msra.mxu0 0.0
    %6772 = vmatprep.subr.mxu0 0.0
    %6773 = vmatpush1.msra.mxu0 0.0
    %6774 = vmatprep.subr.mxu0 0.0
    %6775 = vmatpush1.msra.mxu0 0.0
    %6776 = vmatprep.subr.mxu0 0.0
    %6777 = vmatpush1.msra.mxu0 0.0
    %6778 = vmatprep.subr.mxu0 0.0
    %6779 = vmatpush1.msra.mxu0 0.0
    %6780 = vmatprep.subr.mxu0 0.0
    %6781 = vmatpush1.msra.mxu0 0.0
    %6782 = vmatprep.subr.mxu0 0.0
    %6783 = vmatpush1.msra.mxu0 0.0
    %6784 = vmatprep.subr.mxu0 0.0
    %6785 = vmatpush1.msra.mxu0 0.0
    %6786 = vmatprep.subr.mxu0 0.0
    %6787 = vmatpush1.msra.mxu0 0.0
    %6788 = vmatprep.subr.mxu0 0.0
    %6789 = vmatpush1.msra.mxu0 0.0
    %6790 = vmatprep.subr.mxu0 0.0
    %6791 = vmatpush1.msra.mxu0 0.0
    %6792 = vmatprep.subr.mxu0 0.0
    %6793 = vmatpush1.msra.mxu0 0.0
    %6794 = vmatprep.mubr.f32.mxu0 0.0
    %6795 = vmatmul.mubr.f32.gmra.mrb[0].mxu0 %v6728
    %v6796 = vpop.f32.mrb[0].mxu0
    %v6797 = vadd.f32 0.0, %v6796
    %v6798 = vpop.f32.mrb[0].mxu0
    %6799 = vdwg.mxu0
    %vm6800 = vcmask 8192
    %6801 = vst.msk [vmem:[#allocation2] sm:$0x1] %vm6800, %v6797
    // Predicated region
    $region42: #{conv_discriminator_forward.5} parent=1 // pred_check
      _
    $region43: #{conv_discriminator_forward.5} parent=1 // pred_check_branch
      %6803 = sbr.rel (0) target = $region45
    $region44: #{conv_discriminator_forward.5} parent=1 // pred_region
      %s6805 = ssub.s32 16, 16
      %6806 = vsyncadd [#allocation3], %s6805
      %s6808 = sshll.u32 [#allocation2], 4
      %s6809 = int_to_ptr.vmem [resolvable:$true] %s6808
      %6811 = dma.vmem_to_hbm [thread:$0]  %s6809, 16, %s10, [#allocation3]
    $region45: #{conv_discriminator_forward.5} parent=1 // pred_fallthru
      _
    // Predicated region
    $region46: #{conv_discriminator_forward.5} parent=1 // pred_check
      _
    $region47: #{conv_discriminator_forward.5} parent=1 // pred_check_branch
      %6813 = sbr.rel (0) target = $region49
    $region48: #{conv_discriminator_forward.5} parent=1 // pred_region
      %6814 = dma.done [#allocation3], 16
    $region49: #{conv_discriminator_forward.5} parent=1 // pred_fallthru
      _
    %6815 = vsyncpa [#allocation3], 1

</llo_original>
